<compile_context>
chip_gen: v7x
topology: tpu7x:2x2x1
jax: 0.10.0
libtpu: 0.0.40
codegen_flags: <defaults>
</compile_context>

<pallas_src>
import functools
import numpy as np
import jax
import jax.numpy as jnp
from jax.experimental import pallas as pl
from jax.experimental.pallas import tpu as pltpu

# ----------------------------- configuration (synthetic cfg) -----------------
PATCH_SIZE = 8
EMBED_DIMS = (32, 64)          # per stage
DEPTHS = (1, 1)
NUM_HEADS = (2, 4)
INIT_VALUES = (2.0, 2.0)
HEAD_RANGES = (4.0, 4.0)
MLP_RATIOS = (2, 2)
COMBINE_TOKEN_MODE = "direct"  # concat template tokens then search tokens
LN_EPS = 1e-5

_VMEM = pl.BlockSpec(memory_space=pltpu.MemorySpace.VMEM)


def _ln(v, g, b):
    mu = jnp.mean(v, axis=-1, keepdims=True)
    vc = v - mu
    var = jnp.mean(vc * vc, axis=-1, keepdims=True)
    return vc * jax.lax.rsqrt(var + LN_EPS) * g + b


# --------------- front-end: 4x patch-embed + score + softmax + fuse ----------

def _frontend_kernel(cols_ref, pw_ref, pb_ref, sw_ref, sb_ref, o_ref, *, n_rgb):
    # one matmul embeds all four streams; rows [0:n_rgb] = rgb, [n_rgb:] = modal
    emb = jnp.dot(cols_ref[...].astype(jnp.bfloat16), pw_ref[...],
                  preferred_element_type=jnp.float32) + pb_ref[...]
    rgb, modal = emb[:n_rgb], emb[n_rgb:]
    # TODO(synk): exact ScoreLayerUseConv definition unavailable; 1x1 conv -> 3-way softmax masks.
    logits = jnp.dot(rgb.astype(jnp.bfloat16), sw_ref[...],
                     preferred_element_type=jnp.float32) + sb_ref[...]
    s0, s1, s2 = logits[:, 0:1], logits[:, 1:2], logits[:, 2:3]
    mx = jnp.maximum(jnp.maximum(s0, s1), s2)
    e0, e1, e2 = jnp.exp(s0 - mx), jnp.exp(s1 - mx), jnp.exp(s2 - mx)
    inv = pl.reciprocal(e0 + e1 + e2, approx=True)
    pos, unc, neg = e0 * inv, e1 * inv, e2 * inv
    o_ref[...] = (pos * (0.9 * rgb + 0.1 * modal)
                  + unc * (0.5 * rgb + 0.5 * modal)
                  + neg * (0.1 * rgb + 0.9 * modal))


def frontend(cols, fp, n_rgb):
    return pl.pallas_call(
        functools.partial(_frontend_kernel, n_rgb=n_rgb),
        out_shape=jax.ShapeDtypeStruct((n_rgb, EMBED_DIMS[0]), jnp.float32),
        in_specs=[_VMEM] * 5,
        out_specs=_VMEM,
    )(cols, fp["patch_w"], fp["patch_b"], fp["score_w"], fp["score_b"])


# --------------- fused RetBlock: LN1 + QKV + MaSA + proj + LN2 + FFN ---------

def _ret_block_kernel(x_ref, mask_ref,
                      ln1_g_ref, ln1_b_ref,
                      wqkv_ref, bqkv_ref,
                      wo_ref, bo_ref,
                      ln2_g_ref, ln2_b_ref,
                      w1_ref, b1_ref, w2_ref, b2_ref,
                      o_ref, *, num_heads, scale):
    xt = x_ref[...]                                # (L, D) f32
    D = xt.shape[-1]
    hd = D // num_heads

    # TODO(synk): CPE (3x3 depthwise conv positional encoding) omitted; DropPath = identity.
    h = _ln(xt, ln1_g_ref[...], ln1_b_ref[...])
    qkv = jnp.dot(h.astype(jnp.bfloat16), wqkv_ref[...],
                  preferred_element_type=jnp.float32) + bqkv_ref[...]
    q = qkv[:, :D] * scale
    k = qkv[:, D:2 * D]
    v = qkv[:, 2 * D:]

    # MaSA retention: softmax(Q K^T * scale + manhattan_decay) V, per head.
    # TODO(synk): LePE depthwise-conv term on V omitted (definition not in the snippet).
    heads = []
    for hh in range(num_heads):
        sl = slice(hh * hd, (hh + 1) * hd)
        qh = q[:, sl].astype(jnp.bfloat16)
        kh = k[:, sl].astype(jnp.bfloat16)
        vh = v[:, sl].astype(jnp.bfloat16)
        s = jnp.dot(qh, kh.T, preferred_element_type=jnp.float32) + mask_ref[hh]
        s = s - jnp.max(s, axis=-1, keepdims=True)
        p = jnp.exp(s)
        p = p * pl.reciprocal(jnp.sum(p, axis=-1, keepdims=True), approx=True)
        heads.append(jnp.dot(p.astype(jnp.bfloat16), vh,
                             preferred_element_type=jnp.float32))
    attn = jnp.concatenate(heads, axis=-1)         # (L, D)

    proj = jnp.dot(attn.astype(jnp.bfloat16), wo_ref[...],
                   preferred_element_type=jnp.float32) + bo_ref[...]
    xt = xt + proj

    h2 = _ln(xt, ln2_g_ref[...], ln2_b_ref[...])
    f = jnp.dot(h2.astype(jnp.bfloat16), w1_ref[...],
                preferred_element_type=jnp.float32) + b1_ref[...]
    f = jax.nn.gelu(f, approximate=True)
    f = jnp.dot(f.astype(jnp.bfloat16), w2_ref[...],
                preferred_element_type=jnp.float32) + b2_ref[...]
    o_ref[...] = xt + f


def ret_block(x_tokens, blk, mask, num_heads):
    B, L, D = x_tokens.shape
    hd = D // num_heads
    scale = float(hd) ** -0.5
    tok_spec = pl.BlockSpec((None, L, D), lambda b: (b, 0, 0))

    weights = (mask,
               blk["ln1_g"], blk["ln1_b"],
               blk["wqkv"], blk["bqkv"],
               blk["wo"], blk["bo"],
               blk["ln2_g"], blk["ln2_b"],
               blk["w1"], blk["b1"], blk["w2"], blk["b2"])

    def full_spec(arr):
        return pl.BlockSpec(arr.shape, lambda b, n=arr.ndim: (0,) * n)

    return pl.pallas_call(
        functools.partial(_ret_block_kernel, num_heads=num_heads, scale=scale),
        out_shape=jax.ShapeDtypeStruct((B, L, D), jnp.float32),
        grid=(B,),
        in_specs=[tok_spec] + [full_spec(w) for w in weights],
        out_specs=tok_spec,
        compiler_params=pltpu.CompilerParams(dimension_semantics=("parallel",)),
    )(x_tokens, *weights)


# --------------- patch merging: 2x2 merge + linear + LayerNorm (fused) -------

def _merge_kernel(x_ref, w_ref, b_ref, g_ref, beta_ref, o_ref):
    y = jnp.dot(x_ref[...].astype(jnp.bfloat16), w_ref[...],
                preferred_element_type=jnp.float32) + b_ref[...]
    o_ref[...] = _ln(y, g_ref[...], beta_ref[...])


def patch_merging(x_map, stage):
    # TODO(synk): RMT PatchMerging is a 3x3 stride-2 conv; approximated as 2x2 merge + linear + LN.
    B, H, W, D = x_map.shape
    x = x_map.reshape(B, H // 2, 2, W // 2, 2, D).transpose(0, 1, 3, 2, 4, 5)
    x = x.reshape(B * (H // 2) * (W // 2), 4 * D)
    n_out = stage["red_w"].shape[1]
    y = pl.pallas_call(
        _merge_kernel,
        out_shape=jax.ShapeDtypeStruct((x.shape[0], n_out), jnp.float32),
        in_specs=[_VMEM] * 5,
        out_specs=_VMEM,
    )(x, stage["red_w"], stage["red_b"], stage["ln_g"], stage["ln_b"])
    return y.reshape(B, H // 2, W // 2, n_out)


# ----------------------------- glue / parameters -----------------------------

@functools.lru_cache(maxsize=None)
def rel_pos_decay_mask(H, W, num_heads, init_value, heads_range):
    # TODO(synk): log-space Manhattan decay added pre-softmax; verify vs published MaSA (Softmax(QK^T) ⊙ D).
    decay = np.log(
        1.0 - 2.0 ** (-init_value - heads_range * np.arange(num_heads, dtype=np.float64) / num_heads)
    )
    idx = np.stack(np.meshgrid(np.arange(H), np.arange(W), indexing="ij"), axis=-1).reshape(H * W, 2)
    dist = np.abs(idx[:, None, :] - idx[None, :, :]).sum(-1).astype(np.float64)
    mask = dist[None, :, :] * decay[:, None, None]          # (num_heads, L, L)
    return jnp.asarray(mask, dtype=jnp.float32)


def _dense_params(key, fan_in, fan_out):
    w = 0.02 * jax.random.normal(key, (fan_in, fan_out), jnp.float32)
    b = jnp.zeros((1, fan_out), jnp.float32)
    return w, b


def init_params(key):
    keys = iter(jax.random.split(key, 64))
    params = {}
    params["patch_w"], params["patch_b"] = _dense_params(next(keys), 3 * PATCH_SIZE * PATCH_SIZE, EMBED_DIMS[0])
    params["score_w"], params["score_b"] = _dense_params(next(keys), EMBED_DIMS[0], 3)
    stages = []
    for i, dim in enumerate(EMBED_DIMS):
        blocks = []
        for _ in range(DEPTHS[i]):
            blk = {}
            blk["ln1_g"] = jnp.ones((1, dim), jnp.float32)
            blk["ln1_b"] = jnp.zeros((1, dim), jnp.float32)
            blk["wq"], blk["bq"] = _dense_params(next(keys), dim, dim)
            blk["wk"], blk["bk"] = _dense_params(next(keys), dim, dim)
            blk["wv"], blk["bv"] = _dense_params(next(keys), dim, dim)
            blk["wo"], blk["bo"] = _dense_params(next(keys), dim, dim)
            blk["ln2_g"] = jnp.ones((1, dim), jnp.float32)
            blk["ln2_b"] = jnp.zeros((1, dim), jnp.float32)
            hidden = int(MLP_RATIOS[i] * dim)
            blk["w1"], blk["b1"] = _dense_params(next(keys), dim, hidden)
            blk["w2"], blk["b2"] = _dense_params(next(keys), hidden, dim)
            blocks.append(blk)
        stage = {"blocks": blocks}
        if i < len(EMBED_DIMS) - 1:
            stage["red_w"], stage["red_b"] = _dense_params(next(keys), 4 * dim, EMBED_DIMS[i + 1])
            stage["ln_g"] = jnp.ones((1, EMBED_DIMS[i + 1]), jnp.float32)
            stage["ln_b"] = jnp.zeros((1, EMBED_DIMS[i + 1]), jnp.float32)
        stages.append(stage)
    params["stages"] = stages
    return params


def prepare_params(p):
    """Fuse QKV weights and pre-cast matmul weights to bf16 (f32 master kept in `p`)."""
    bf = lambda w: w.astype(jnp.bfloat16)
    fp = {"patch_w": bf(p["patch_w"]), "patch_b": p["patch_b"],
          "score_w": bf(p["score_w"]), "score_b": p["score_b"], "stages": []}
    for stage in p["stages"]:
        blocks = []
        for blk in stage["blocks"]:
            blocks.append({
                "ln1_g": blk["ln1_g"], "ln1_b": blk["ln1_b"],
                "wqkv": bf(jnp.concatenate([blk["wq"], blk["wk"], blk["wv"]], axis=1)),
                "bqkv": jnp.concatenate([blk["bq"], blk["bk"], blk["bv"]], axis=1),
                "wo": bf(blk["wo"]), "bo": blk["bo"],
                "ln2_g": blk["ln2_g"], "ln2_b": blk["ln2_b"],
                "w1": bf(blk["w1"]), "b1": blk["b1"],
                "w2": bf(blk["w2"]), "b2": blk["b2"],
            })
        fstage = {"blocks": blocks}
        if "red_w" in stage:
            fstage["red_w"] = bf(stage["red_w"])
            fstage["red_b"] = stage["red_b"]
            fstage["ln_g"] = stage["ln_g"]
            fstage["ln_b"] = stage["ln_b"]
        fp["stages"].append(fstage)
    return fp


# ----------------------------- forward pieces --------------------------------

def im2col(img_nchw):
    # Conv2d(3, D, kernel=patch, stride=patch) rewritten as im2col rows.
    B, C, H, W = img_nchw.shape
    ph, pw = H // PATCH_SIZE, W // PATCH_SIZE
    x = img_nchw.reshape(B, C, ph, PATCH_SIZE, pw, PATCH_SIZE)
    return x.transpose(0, 2, 4, 1, 3, 5).reshape(B * ph * pw, C * PATCH_SIZE * PATCH_SIZE)


def basic_layer(x_map, stage, i_stage):
    B, H, W, D = x_map.shape
    nh = NUM_HEADS[i_stage]
    mask = rel_pos_decay_mask(H, W, nh, INIT_VALUES[i_stage], HEAD_RANGES[i_stage])
    xt = x_map.reshape(B, H * W, D)
    for blk in stage["blocks"]:
        xt = ret_block(xt, blk, mask, nh)
    x_map = xt.reshape(B, H, W, D)
    if "red_w" in stage:
        x_map = patch_merging(x_map, stage)
    return x_map


def pure_rmt_forward(fp, z, x):
    # z, x: NCHW float32, 6 channels (RGB + 3-channel modal), shared patch_embed.
    B = z.shape[0]
    Hz, Wz = z.shape[2] // PATCH_SIZE, z.shape[3] // PATCH_SIZE
    Hx, Wx = x.shape[2] // PATCH_SIZE, x.shape[3] // PATCH_SIZE

    cols = jnp.concatenate([im2col(z[:, :3]), im2col(x[:, :3]),
                            im2col(z[:, 3:6]), im2col(x[:, 3:6])], axis=0)
    n_z = B * Hz * Wz
    n_x = B * Hx * Wx
    n_rgb = n_z + n_x

    fused = frontend(cols, fp, n_rgb)                       # (n_rgb, D0)
    z_f = fused[:n_z].reshape(B, Hz, Wz, EMBED_DIMS[0])
    x_f = fused[n_z:].reshape(B, Hx, Wx, EMBED_DIMS[0])

    for i, stage in enumerate(fp["stages"]):
        z_f = basic_layer(z_f, stage, i)
        x_f = basic_layer(x_f, stage, i)

    x_tok = x_f.reshape(B, -1, x_f.shape[-1])
    z_tok = z_f.reshape(B, -1, z_f.shape[-1])
    if COMBINE_TOKEN_MODE == "direct":
        return jnp.concatenate([z_tok, x_tok], axis=1)
    raise NotImplementedError(COMBINE_TOKEN_MODE)


if __name__ == "__main__":
    key = jax.random.PRNGKey(0)
    pkey, zkey, xkey = jax.random.split(key, 3)
    params = init_params(pkey)
    fast_params = prepare_params(params)
    z = jax.random.normal(zkey, (2, 6, 32, 32), jnp.float32)   # template (RGB + modal)
    x = jax.random.normal(xkey, (2, 6, 64, 64), jnp.float32)   # search   (RGB + modal)

    forward = jax.jit(pure_rmt_forward)
    out = forward(fast_params, z, x)
    out = jax.block_until_ready(out)
    # template: 32/8=4 -> 4x4 -> merge -> 2x2 = 4 tokens; search: 8x8 -> 4x4 = 16 tokens
    assert out.shape == (2, 4 + 16, EMBED_DIMS[-1]), out.shape
    assert bool(jnp.all(jnp.isfinite(out)))
    print("KERNEL_OK")
</pallas_src>

<mosaic_0001>
module attributes {stable_mosaic.version = 11 : i64} {
  func.func @_frontend_kernel(%arg0: memref<320x192xf32, #tpu.memory_space<vmem>>, %arg1: memref<192x32xbf16, #tpu.memory_space<vmem>>, %arg2: memref<1x32xf32, #tpu.memory_space<vmem>>, %arg3: memref<32x3xbf16, #tpu.memory_space<vmem>>, %arg4: memref<1x3xf32, #tpu.memory_space<vmem>>, %arg5: memref<160x32xf32, #tpu.memory_space<vmem>>) attributes {dimension_semantics = [], scalar_prefetch = 0 : i64, scratch_operands = 0 : i64, tpu.core_type = #tpu.core_type<tc>} {
    %c0 = arith.constant 0 : index
    %c0_0 = arith.constant 0 : index
    %0 = vector.load %arg0[%c0, %c0_0] : memref<320x192xf32, #tpu.memory_space<vmem>>, vector<320x192xf32>
    %1 = arith.truncf %0 : vector<320x192xf32> to vector<320x192xbf16>
    %c0_1 = arith.constant 0 : index
    %c0_2 = arith.constant 0 : index
    %2 = vector.load %arg1[%c0_1, %c0_2] : memref<192x32xbf16, #tpu.memory_space<vmem>>, vector<192x32xbf16>
    %cst = arith.constant dense<0.000000e+00> : vector<320x32xf32>
    %3 = tpu.matmul %1, %2, %cst {dimension_numbers = #tpu.dot_dimension_numbers<[1], [0], [0], [1], [0, 0, 1, 1], [], []>} : vector<320x192xbf16>, vector<192x32xbf16>, vector<320x32xf32> -> vector<320x32xf32>
    %c0_3 = arith.constant 0 : index
    %c0_4 = arith.constant 0 : index
    %4 = vector.load %arg2[%c0_3, %c0_4] : memref<1x32xf32, #tpu.memory_space<vmem>>, vector<1x32xf32>
    %5 = vector.broadcast %4 : vector<1x32xf32> to vector<320x32xf32>
    %6 = arith.addf %3, %5 : vector<320x32xf32>
    %7 = vector.extract_strided_slice %6 {offsets = [0, 0], sizes = [160, 32], strides = [1, 1]} : vector<320x32xf32> to vector<160x32xf32>
    %8 = vector.extract_strided_slice %6 {offsets = [160, 0], sizes = [160, 32], strides = [1, 1]} : vector<320x32xf32> to vector<160x32xf32>
    %9 = arith.truncf %7 : vector<160x32xf32> to vector<160x32xbf16>
    %c0_5 = arith.constant 0 : index
    %c0_6 = arith.constant 0 : index
    %10 = vector.load %arg3[%c0_5, %c0_6] : memref<32x3xbf16, #tpu.memory_space<vmem>>, vector<32x3xbf16>
    %cst_7 = arith.constant dense<0.000000e+00> : vector<160x3xf32>
    %11 = tpu.matmul %9, %10, %cst_7 {dimension_numbers = #tpu.dot_dimension_numbers<[1], [0], [0], [1], [0, 0, 1, 1], [], []>} : vector<160x32xbf16>, vector<32x3xbf16>, vector<160x3xf32> -> vector<160x3xf32>
    %c0_8 = arith.constant 0 : index
    %c0_9 = arith.constant 0 : index
    %12 = vector.load %arg4[%c0_8, %c0_9] : memref<1x3xf32, #tpu.memory_space<vmem>>, vector<1x3xf32>
    %13 = vector.broadcast %12 : vector<1x3xf32> to vector<160x3xf32>
    %14 = arith.addf %11, %13 : vector<160x3xf32>
    %15 = vector.extract_strided_slice %14 {offsets = [0, 0], sizes = [160, 1], strides = [1, 1]} : vector<160x3xf32> to vector<160x1xf32>
    %16 = vector.extract_strided_slice %14 {offsets = [0, 1], sizes = [160, 1], strides = [1, 1]} : vector<160x3xf32> to vector<160x1xf32>
    %17 = vector.extract_strided_slice %14 {offsets = [0, 2], sizes = [160, 1], strides = [1, 1]} : vector<160x3xf32> to vector<160x1xf32>
    %18 = arith.maximumf %15, %16 : vector<160x1xf32>
    %19 = arith.maximumf %18, %17 : vector<160x1xf32>
    %20 = arith.subf %15, %19 : vector<160x1xf32>
    %21 = math.exp %20 : vector<160x1xf32>
    %22 = arith.subf %16, %19 : vector<160x1xf32>
    %23 = math.exp %22 : vector<160x1xf32>
    %24 = arith.subf %17, %19 : vector<160x1xf32>
    %25 = math.exp %24 : vector<160x1xf32>
    %26 = arith.addf %21, %23 : vector<160x1xf32>
    %27 = arith.addf %26, %25 : vector<160x1xf32>
    %28 = tpu.reciprocal %27 {approx = true} : vector<160x1xf32> -> vector<160x1xf32>
    %29 = arith.mulf %21, %28 : vector<160x1xf32>
    %30 = arith.mulf %23, %28 : vector<160x1xf32>
    %31 = arith.mulf %25, %28 : vector<160x1xf32>
    %cst_10 = arith.constant 0.899999976 : f32
    %32 = vector.broadcast %cst_10 : f32 to vector<160x32xf32>
    %33 = arith.mulf %32, %7 : vector<160x32xf32>
    %cst_11 = arith.constant 1.000000e-01 : f32
    %34 = vector.broadcast %cst_11 : f32 to vector<160x32xf32>
    %35 = arith.mulf %34, %8 : vector<160x32xf32>
    %36 = arith.addf %33, %35 : vector<160x32xf32>
    %37 = vector.broadcast %29 : vector<160x1xf32> to vector<160x32xf32>
    %38 = arith.mulf %37, %36 : vector<160x32xf32>
    %cst_12 = arith.constant 5.000000e-01 : f32
    %39 = vector.broadcast %cst_12 : f32 to vector<160x32xf32>
    %40 = arith.mulf %39, %7 : vector<160x32xf32>
    %cst_13 = arith.constant 5.000000e-01 : f32
    %41 = vector.broadcast %cst_13 : f32 to vector<160x32xf32>
    %42 = arith.mulf %41, %8 : vector<160x32xf32>
    %43 = arith.addf %40, %42 : vector<160x32xf32>
    %44 = vector.broadcast %30 : vector<160x1xf32> to vector<160x32xf32>
    %45 = arith.mulf %44, %43 : vector<160x32xf32>
    %46 = arith.addf %38, %45 : vector<160x32xf32>
    %cst_14 = arith.constant 1.000000e-01 : f32
    %47 = vector.broadcast %cst_14 : f32 to vector<160x32xf32>
    %48 = arith.mulf %47, %7 : vector<160x32xf32>
    %cst_15 = arith.constant 0.899999976 : f32
    %49 = vector.broadcast %cst_15 : f32 to vector<160x32xf32>
    %50 = arith.mulf %49, %8 : vector<160x32xf32>
    %51 = arith.addf %48, %50 : vector<160x32xf32>
    %52 = vector.broadcast %31 : vector<160x1xf32> to vector<160x32xf32>
    %53 = arith.mulf %52, %51 : vector<160x32xf32>
    %54 = arith.addf %46, %53 : vector<160x32xf32>
    %c0_16 = arith.constant 0 : index
    %c0_17 = arith.constant 0 : index
    %55 = vector.load %arg5[%c0_16, %c0_17] : memref<160x32xf32, #tpu.memory_space<vmem>>, vector<160x32xf32>
    tpu.vector_store %arg5[%c0_16, %c0_17], %54 {strides = array<i32>} : memref<160x32xf32, #tpu.memory_space<vmem>>, vector<160x32xf32>,
    return
  }
}

module attributes {stable_mosaic.version = 11 : i64} {
  func.func @_ret_block_kernel(%arg0: i32, %arg1: memref<1x64x32xf32, #tpu.memory_space<vmem>>, %arg2: memref<2x64x64xf32, #tpu.memory_space<vmem>>, %arg3: memref<1x32xf32, #tpu.memory_space<vmem>>, %arg4: memref<1x32xf32, #tpu.memory_space<vmem>>, %arg5: memref<32x96xbf16, #tpu.memory_space<vmem>>, %arg6: memref<1x96xf32, #tpu.memory_space<vmem>>, %arg7: memref<32x32xbf16, #tpu.memory_space<vmem>>, %arg8: memref<1x32xf32, #tpu.memory_space<vmem>>, %arg9: memref<1x32xf32, #tpu.memory_space<vmem>>, %arg10: memref<1x32xf32, #tpu.memory_space<vmem>>, %arg11: memref<32x64xbf16, #tpu.memory_space<vmem>>, %arg12: memref<1x64xf32, #tpu.memory_space<vmem>>, %arg13: memref<64x32xbf16, #tpu.memory_space<vmem>>, %arg14: memref<1x32xf32, #tpu.memory_space<vmem>>, %arg15: memref<1x64x32xf32, #tpu.memory_space<vmem>>) attributes {dimension_semantics = [#tpu.dimension_semantics<parallel>], iteration_bounds = array<i64: 2>, scalar_prefetch = 0 : i64, scratch_operands = 0 : i64, tpu.core_type = #tpu.core_type<tc>, window_params = [{transform_indices = @transform_0, window_bounds = array<i64: 1, 64, 32>}, {pipeline_mode = #tpu.pipeline_mode<synchronous>, transform_indices = @transform_1, window_bounds = array<i64: 2, 64, 64>}, {pipeline_mode = #tpu.pipeline_mode<synchronous>, transform_indices = @transform_2, window_bounds = array<i64: 1, 32>}, {pipeline_mode = #tpu.pipeline_mode<synchronous>, transform_indices = @transform_3, window_bounds = array<i64: 1, 32>}, {pipeline_mode = #tpu.pipeline_mode<synchronous>, transform_indices = @transform_4, window_bounds = array<i64: 32, 96>}, {pipeline_mode = #tpu.pipeline_mode<synchronous>, transform_indices = @transform_5, window_bounds = array<i64: 1, 96>}, {pipeline_mode = #tpu.pipeline_mode<synchronous>, transform_indices = @transform_6, window_bounds = array<i64: 32, 32>}, {pipeline_mode = #tpu.pipeline_mode<synchronous>, transform_indices = @transform_7, window_bounds = array<i64: 1, 32>}, {pipeline_mode = #tpu.pipeline_mode<synchronous>, transform_indices = @transform_8, window_bounds = array<i64: 1, 32>}, {pipeline_mode = #tpu.pipeline_mode<synchronous>, transform_indices = @transform_9, window_bounds = array<i64: 1, 32>}, {pipeline_mode = #tpu.pipeline_mode<synchronous>, transform_indices = @transform_10, window_bounds = array<i64: 32, 64>}, {pipeline_mode = #tpu.pipeline_mode<synchronous>, transform_indices = @transform_11, window_bounds = array<i64: 1, 64>}, {pipeline_mode = #tpu.pipeline_mode<synchronous>, transform_indices = @transform_12, window_bounds = array<i64: 64, 32>}, {pipeline_mode = #tpu.pipeline_mode<synchronous>, transform_indices = @transform_13, window_bounds = array<i64: 1, 32>}, {transform_indices = @transform_14, window_bounds = array<i64: 1, 64, 32>}]} {
    %c0 = arith.constant 0 : index
    %c0_0 = arith.constant 0 : index
    %c0_1 = arith.constant 0 : index
    %0 = vector.load %arg1[%c0, %c0_0, %c0_1] : memref<1x64x32xf32, #tpu.memory_space<vmem>>, vector<1x64x32xf32>
    %1 = vector.shape_cast %0 : vector<1x64x32xf32> to vector<64x32xf32>
    %c0_2 = arith.constant 0 : index
    %c0_3 = arith.constant 0 : index
    %2 = vector.load %arg3[%c0_2, %c0_3] : memref<1x32xf32, #tpu.memory_space<vmem>>, vector<1x32xf32>
    %c0_4 = arith.constant 0 : index
    %c0_5 = arith.constant 0 : index
    %3 = vector.load %arg4[%c0_4, %c0_5] : memref<1x32xf32, #tpu.memory_space<vmem>>, vector<1x32xf32>
    %cst = arith.constant dense<0.000000e+00> : vector<64xf32>
    %4 = vector.multi_reduction <add>, %1, %cst [1] : vector<64x32xf32> to vector<64xf32>
    %5 = vector.shape_cast %4 : vector<64xf32> to vector<64x1xf32>
    %cst_6 = arith.constant 3.200000e+01 : f32
    %6 = vector.broadcast %cst_6 : f32 to vector<64x1xf32>
    %7 = arith.divf %5, %6 : vector<64x1xf32>
    %8 = vector.broadcast %7 : vector<64x1xf32> to vector<64x32xf32>
    %9 = arith.subf %1, %8 : vector<64x32xf32>
    %10 = arith.mulf %9, %9 : vector<64x32xf32>
    %cst_7 = arith.constant dense<0.000000e+00> : vector<64xf32>
    %11 = vector.multi_reduction <add>, %10, %cst_7 [1] : vector<64x32xf32> to vector<64xf32>
    %12 = vector.shape_cast %11 : vector<64xf32> to vector<64x1xf32>
    %cst_8 = arith.constant 3.200000e+01 : f32
    %13 = vector.broadcast %cst_8 : f32 to vector<64x1xf32>
    %14 = arith.divf %12, %13 : vector<64x1xf32>
    %cst_9 = arith.constant 9.99999974E-6 : f32
    %15 = vector.broadcast %cst_9 : f32 to vector<64x1xf32>
    %16 = arith.addf %14, %15 : vector<64x1xf32>
    %17 = math.rsqrt %16 : vector<64x1xf32>
    %18 = vector.broadcast %17 : vector<64x1xf32> to vector<64x32xf32>
    %19 = arith.mulf %9, %18 : vector<64x32xf32>
    %20 = vector.broadcast %2 : vector<1x32xf32> to vector<64x32xf32>
    %21 = arith.mulf %19, %20 : vector<64x32xf32>
    %22 = vector.broadcast %3 : vector<1x32xf32> to vector<64x32xf32>
    %23 = arith.addf %21, %22 : vector<64x32xf32>
    %24 = arith.truncf %23 : vector<64x32xf32> to vector<64x32xbf16>
    %c0_10 = arith.constant 0 : index
    %c0_11 = arith.constant 0 : index
    %25 = vector.load %arg5[%c0_10, %c0_11] : memref<32x96xbf16, #tpu.memory_space<vmem>>, vector<32x96xbf16>
    %cst_12 = arith.constant dense<0.000000e+00> : vector<64x96xf32>
    %26 = tpu.matmul %24, %25, %cst_12 {dimension_numbers = #tpu.dot_dimension_numbers<[1], [0], [0], [1], [0, 0, 1, 1], [], []>} : vector<64x32xbf16>, vector<32x96xbf16>, vector<64x96xf32> -> vector<64x96xf32>
    %c0_13 = arith.constant 0 : index
    %c0_14 = arith.constant 0 : index
    %27 = vector.load %arg6[%c0_13, %c0_14] : memref<1x96xf32, #tpu.memory_space<vmem>>, vector<1x96xf32>
    %28 = vector.broadcast %27 : vector<1x96xf32> to vector<64x96xf32>
    %29 = arith.addf %26, %28 : vector<64x96xf32>
    %30 = vector.extract_strided_slice %29 {offsets = [0, 0], sizes = [64, 32], strides = [1, 1]} : vector<64x96xf32> to vector<64x32xf32>
    %cst_15 = arith.constant 2.500000e-01 : f32
    %31 = vector.broadcast %cst_15 : f32 to vector<64x32xf32>
    %32 = arith.mulf %30, %31 : vector<64x32xf32>
    %33 = vector.extract_strided_slice %29 {offsets = [0, 32], sizes = [64, 32], strides = [1, 1]} : vector<64x96xf32> to vector<64x32xf32>
    %34 = vector.extract_strided_slice %29 {offsets = [0, 64], sizes = [64, 32], strides = [1, 1]} : vector<64x96xf32> to vector<64x32xf32>
    %35 = vector.extract_strided_slice %32 {offsets = [0, 0], sizes = [64, 16], strides = [1, 1]} : vector<64x32xf32> to vector<64x16xf32>
    %36 = arith.truncf %35 : vector<64x16xf32> to vector<64x16xbf16>
    %37 = vector.extract_strided_slice %33 {offsets = [0, 0], sizes = [64, 16], strides = [1, 1]} : vector<64x32xf32> to vector<64x16xf32>
    %38 = arith.truncf %37 : vector<64x16xf32> to vector<64x16xbf16>
    %39 = vector.extract_strided_slice %34 {offsets = [0, 0], sizes = [64, 16], strides = [1, 1]} : vector<64x32xf32> to vector<64x16xf32>
    %40 = arith.truncf %39 : vector<64x16xf32> to vector<64x16xbf16>
    %41 = tpu.transpose %38, [1, 0] : vector<64x16xbf16> -> vector<16x64xbf16>
    %cst_16 = arith.constant dense<0.000000e+00> : vector<64x64xf32>
    %42 = tpu.matmul %36, %41, %cst_16 {dimension_numbers = #tpu.dot_dimension_numbers<[1], [0], [0], [1], [0, 0, 1, 1], [], []>} : vector<64x16xbf16>, vector<16x64xbf16>, vector<64x64xf32> -> vector<64x64xf32>
    %c0_17 = arith.constant 0 : index
    %c0_18 = arith.constant 0 : index
    %c0_19 = arith.constant 0 : index
    %43 = vector.load %arg2[%c0_17, %c0_18, %c0_19] : memref<2x64x64xf32, #tpu.memory_space<vmem>>, vector<1x64x64xf32>
    %44 = vector.shape_cast %43 : vector<1x64x64xf32> to vector<64x64xf32>
    %45 = arith.addf %42, %44 : vector<64x64xf32>
    %cst_20 = arith.constant dense<0xFF800000> : vector<64xf32>
    %46 = vector.multi_reduction <maximumf>, %45, %cst_20 [1] : vector<64x64xf32> to vector<64xf32>
    %47 = vector.shape_cast %46 : vector<64xf32> to vector<64x1xf32>
    %48 = vector.broadcast %47 : vector<64x1xf32> to vector<64x64xf32>
    %49 = arith.subf %45, %48 : vector<64x64xf32>
    %50 = math.exp %49 : vector<64x64xf32>
    %cst_21 = arith.constant dense<0.000000e+00> : vector<64xf32>
    %51 = vector.multi_reduction <add>, %50, %cst_21 [1] : vector<64x64xf32> to vector<64xf32>
    %52 = vector.shape_cast %51 : vector<64xf32> to vector<64x1xf32>
    %53 = tpu.reciprocal %52 {approx = true} : vector<64x1xf32> -> vector<64x1xf32>
    %54 = vector.broadcast %53 : vector<64x1xf32> to vector<64x64xf32>
    %55 = arith.mulf %50, %54 : vector<64x64xf32>
    %56 = arith.truncf %55 : vector<64x64xf32> to vector<64x64xbf16>
    %cst_22 = arith.constant dense<0.000000e+00> : vector<64x16xf32>
    %57 = tpu.matmul %56, %40, %cst_22 {dimension_numbers = #tpu.dot_dimension_numbers<[1], [0], [0], [1], [0, 0, 1, 1], [], []>} : vector<64x64xbf16>, vector<64x16xbf16>, vector<64x16xf32> -> vector<64x16xf32>
    %58 = vector.extract_strided_slice %32 {offsets = [0, 16], sizes = [64, 16], strides = [1, 1]} : vector<64x32xf32> to vector<64x16xf32>
    %59 = arith.truncf %58 : vector<64x16xf32> to vector<64x16xbf16>
    %60 = vector.extract_strided_slice %33 {offsets = [0, 16], sizes = [64, 16], strides = [1, 1]} : vector<64x32xf32> to vector<64x16xf32>
    %61 = arith.truncf %60 : vector<64x16xf32> to vector<64x16xbf16>
    %62 = vector.extract_strided_slice %34 {offsets = [0, 16], sizes = [64, 16], strides = [1, 1]} : vector<64x32xf32> to vector<64x16xf32>
    %63 = arith.truncf %62 : vector<64x16xf32> to vector<64x16xbf16>
    %64 = tpu.transpose %61, [1, 0] : vector<64x16xbf16> -> vector<16x64xbf16>
    %cst_23 = arith.constant dense<0.000000e+00> : vector<64x64xf32>
    %65 = tpu.matmul %59, %64, %cst_23 {dimension_numbers = #tpu.dot_dimension_numbers<[1], [0], [0], [1], [0, 0, 1, 1], [], []>} : vector<64x16xbf16>, vector<16x64xbf16>, vector<64x64xf32> -> vector<64x64xf32>
    %c1 = arith.constant 1 : index
    %c0_24 = arith.constant 0 : index
    %c0_25 = arith.constant 0 : index
    %66 = vector.load %arg2[%c1, %c0_24, %c0_25] : memref<2x64x64xf32, #tpu.memory_space<vmem>>, vector<1x64x64xf32>
    %67 = vector.shape_cast %66 : vector<1x64x64xf32> to vector<64x64xf32>
    %68 = arith.addf %65, %67 : vector<64x64xf32>
    %cst_26 = arith.constant dense<0xFF800000> : vector<64xf32>
    %69 = vector.multi_reduction <maximumf>, %68, %cst_26 [1] : vector<64x64xf32> to vector<64xf32>
    %70 = vector.shape_cast %69 : vector<64xf32> to vector<64x1xf32>
    %71 = vector.broadcast %70 : vector<64x1xf32> to vector<64x64xf32>
    %72 = arith.subf %68, %71 : vector<64x64xf32>
    %73 = math.exp %72 : vector<64x64xf32>
    %cst_27 = arith.constant dense<0.000000e+00> : vector<64xf32>
    %74 = vector.multi_reduction <add>, %73, %cst_27 [1] : vector<64x64xf32> to vector<64xf32>
    %75 = vector.shape_cast %74 : vector<64xf32> to vector<64x1xf32>
    %76 = tpu.reciprocal %75 {approx = true} : vector<64x1xf32> -> vector<64x1xf32>
    %77 = vector.broadcast %76 : vector<64x1xf32> to vector<64x64xf32>
    %78 = arith.mulf %73, %77 : vector<64x64xf32>
    %79 = arith.truncf %78 : vector<64x64xf32> to vector<64x64xbf16>
    %cst_28 = arith.constant dense<0.000000e+00> : vector<64x16xf32>
    %80 = tpu.matmul %79, %63, %cst_28 {dimension_numbers = #tpu.dot_dimension_numbers<[1], [0], [0], [1], [0, 0, 1, 1], [], []>} : vector<64x64xbf16>, vector<64x16xbf16>, vector<64x16xf32> -> vector<64x16xf32>
    %81 = tpu.concatenate %57, %80 in 1 : vector<64x16xf32>, vector<64x16xf32> -> vector<64x32xf32>
    %82 = arith.truncf %81 : vector<64x32xf32> to vector<64x32xbf16>
    %c0_29 = arith.constant 0 : index
    %c0_30 = arith.constant 0 : index
    %83 = vector.load %arg7[%c0_29, %c0_30] : memref<32x32xbf16, #tpu.memory_space<vmem>>, vector<32x32xbf16>
    %cst_31 = arith.constant dense<0.000000e+00> : vector<64x32xf32>
    %84 = tpu.matmul %82, %83, %cst_31 {dimension_numbers = #tpu.dot_dimension_numbers<[1], [0], [0], [1], [0, 0, 1, 1], [], []>} : vector<64x32xbf16>, vector<32x32xbf16>, vector<64x32xf32> -> vector<64x32xf32>
    %c0_32 = arith.constant 0 : index
    %c0_33 = arith.constant 0 : index
    %85 = vector.load %arg8[%c0_32, %c0_33] : memref<1x32xf32, #tpu.memory_space<vmem>>, vector<1x32xf32>
    %86 = vector.broadcast %85 : vector<1x32xf32> to vector<64x32xf32>
    %87 = arith.addf %84, %86 : vector<64x32xf32>
    %88 = arith.addf %1, %87 : vector<64x32xf32>
    %c0_34 = arith.constant 0 : index
    %c0_35 = arith.constant 0 : index
    %89 = vector.load %arg9[%c0_34, %c0_35] : memref<1x32xf32, #tpu.memory_space<vmem>>, vector<1x32xf32>
    %c0_36 = arith.constant 0 : index
    %c0_37 = arith.constant 0 : index
    %90 = vector.load %arg10[%c0_36, %c0_37] : memref<1x32xf32, #tpu.memory_space<vmem>>, vector<1x32xf32>
    %cst_38 = arith.constant dense<0.000000e+00> : vector<64xf32>
    %91 = vector.multi_reduction <add>, %88, %cst_38 [1] : vector<64x32xf32> to vector<64xf32>
    %92 = vector.shape_cast %91 : vector<64xf32> to vector<64x1xf32>
    %cst_39 = arith.constant 3.200000e+01 : f32
    %93 = vector.broadcast %cst_39 : f32 to vector<64x1xf32>
    %94 = arith.divf %92, %93 : vector<64x1xf32>
    %95 = vector.broadcast %94 : vector<64x1xf32> to vector<64x32xf32>
    %96 = arith.subf %88, %95 : vector<64x32xf32>
    %97 = arith.mulf %96, %96 : vector<64x32xf32>
    %cst_40 = arith.constant dense<0.000000e+00> : vector<64xf32>
    %98 = vector.multi_reduction <add>, %97, %cst_40 [1] : vector<64x32xf32> to vector<64xf32>
    %99 = vector.shape_cast %98 : vector<64xf32> to vector<64x1xf32>
    %cst_41 = arith.constant 3.200000e+01 : f32
    %100 = vector.broadcast %cst_41 : f32 to vector<64x1xf32>
    %101 = arith.divf %99, %100 : vector<64x1xf32>
    %cst_42 = arith.constant 9.99999974E-6 : f32
    %102 = vector.broadcast %cst_42 : f32 to vector<64x1xf32>
    %103 = arith.addf %101, %102 : vector<64x1xf32>
    %104 = math.rsqrt %103 : vector<64x1xf32>
    %105 = vector.broadcast %104 : vector<64x1xf32> to vector<64x32xf32>
    %106 = arith.mulf %96, %105 : vector<64x32xf32>
    %107 = vector.broadcast %89 : vector<1x32xf32> to vector<64x32xf32>
    %108 = arith.mulf %106, %107 : vector<64x32xf32>
    %109 = vector.broadcast %90 : vector<1x32xf32> to vector<64x32xf32>
    %110 = arith.addf %108, %109 : vector<64x32xf32>
    %111 = arith.truncf %110 : vector<64x32xf32> to vector<64x32xbf16>
    %c0_43 = arith.constant 0 : index
    %c0_44 = arith.constant 0 : index
    %112 = vector.load %arg11[%c0_43, %c0_44] : memref<32x64xbf16, #tpu.memory_space<vmem>>, vector<32x64xbf16>
    %cst_45 = arith.constant dense<0.000000e+00> : vector<64x64xf32>
    %113 = tpu.matmul %111, %112, %cst_45 {dimension_numbers = #tpu.dot_dimension_numbers<[1], [0], [0], [1], [0, 0, 1, 1], [], []>} : vector<64x32xbf16>, vector<32x64xbf16>, vector<64x64xf32> -> vector<64x64xf32>
    %c0_46 = arith.constant 0 : index
    %c0_47 = arith.constant 0 : index
    %114 = vector.load %arg12[%c0_46, %c0_47] : memref<1x64xf32, #tpu.memory_space<vmem>>, vector<1x64xf32>
    %115 = vector.broadcast %114 : vector<1x64xf32> to vector<64x64xf32>
    %116 = arith.addf %113, %115 : vector<64x64xf32>
    %117 = arith.mulf %116, %116 : vector<64x64xf32>
    %118 = arith.mulf %116, %117 : vector<64x64xf32>
    %cst_48 = arith.constant 4.471500e-02 : f32
    %119 = vector.broadcast %cst_48 : f32 to vector<64x64xf32>
    %120 = arith.mulf %119, %118 : vector<64x64xf32>
    %121 = arith.addf %116, %120 : vector<64x64xf32>
    %cst_49 = arith.constant 0.797884583 : f32
    %122 = vector.broadcast %cst_49 : f32 to vector<64x64xf32>
    %123 = arith.mulf %122, %121 : vector<64x64xf32>
    %124 = math.tanh %123 : vector<64x64xf32>
    %cst_50 = arith.constant 1.000000e+00 : f32
    %125 = vector.broadcast %cst_50 : f32 to vector<64x64xf32>
    %126 = arith.addf %125, %124 : vector<64x64xf32>
    %cst_51 = arith.constant 5.000000e-01 : f32
    %127 = vector.broadcast %cst_51 : f32 to vector<64x64xf32>
    %128 = arith.mulf %127, %126 : vector<64x64xf32>
    %129 = arith.mulf %116, %128 : vector<64x64xf32>
    %130 = arith.truncf %129 : vector<64x64xf32> to vector<64x64xbf16>
    %c0_52 = arith.constant 0 : index
    %c0_53 = arith.constant 0 : index
    %131 = vector.load %arg13[%c0_52, %c0_53] : memref<64x32xbf16, #tpu.memory_space<vmem>>, vector<64x32xbf16>
    %cst_54 = arith.constant dense<0.000000e+00> : vector<64x32xf32>
    %132 = tpu.matmul %130, %131, %cst_54 {dimension_numbers = #tpu.dot_dimension_numbers<[1], [0], [0], [1], [0, 0, 1, 1], [], []>} : vector<64x64xbf16>, vector<64x32xbf16>, vector<64x32xf32> -> vector<64x32xf32>
    %c0_55 = arith.constant 0 : index
    %c0_56 = arith.constant 0 : index
    %133 = vector.load %arg14[%c0_55, %c0_56] : memref<1x32xf32, #tpu.memory_space<vmem>>, vector<1x32xf32>
    %134 = vector.broadcast %133 : vector<1x32xf32> to vector<64x32xf32>
    %135 = arith.addf %132, %134 : vector<64x32xf32>
    %136 = arith.addf %88, %135 : vector<64x32xf32>
    %c0_57 = arith.constant 0 : index
    %c0_58 = arith.constant 0 : index
    %c0_59 = arith.constant 0 : index
    %137 = vector.load %arg15[%c0_57, %c0_58, %c0_59] : memref<1x64x32xf32, #tpu.memory_space<vmem>>, vector<1x64x32xf32>
    %138 = vector.shape_cast %137 : vector<1x64x32xf32> to vector<64x32xf32>
    %139 = vector.shape_cast %136 : vector<64x32xf32> to vector<1x64x32xf32>
    tpu.vector_store %arg15[%c0_57, %c0_58, %c0_59], %139 {strides = array<i32>} : memref<1x64x32xf32, #tpu.memory_space<vmem>>, vector<1x64x32xf32>,
    return
  }
  func.func @transform_0(%arg0: i32) -> (i32, i32, i32) {
    %c0_i32 = arith.constant 0 : i32
    %c0_i32_0 = arith.constant 0 : i32
    %c0_i32_1 = arith.constant 0 : i32
    return %arg0, %c0_i32, %c0_i32_0 : i32, i32, i32
  }
  func.func @transform_1(%arg0: i32) -> (i32, i32, i32) {
    %c0_i32 = arith.constant 0 : i32
    %c0_i32_0 = arith.constant 0 : i32
    %c0_i32_1 = arith.constant 0 : i32
    %c0_i32_2 = arith.constant 0 : i32
    return %c0_i32, %c0_i32_0, %c0_i32_1 : i32, i32, i32
  }
  func.func @transform_2(%arg0: i32) -> (i32, i32) {
    %c0_i32 = arith.constant 0 : i32
    %c0_i32_0 = arith.constant 0 : i32
    %c0_i32_1 = arith.constant 0 : i32
    return %c0_i32, %c0_i32_0 : i32, i32
  }
  func.func @transform_3(%arg0: i32) -> (i32, i32) {
    %c0_i32 = arith.constant 0 : i32
    %c0_i32_0 = arith.constant 0 : i32
    %c0_i32_1 = arith.constant 0 : i32
    return %c0_i32, %c0_i32_0 : i32, i32
  }
  func.func @transform_4(%arg0: i32) -> (i32, i32) {
    %c0_i32 = arith.constant 0 : i32
    %c0_i32_0 = arith.constant 0 : i32
    %c0_i32_1 = arith.constant 0 : i32
    return %c0_i32, %c0_i32_0 : i32, i32
  }
  func.func @transform_5(%arg0: i32) -> (i32, i32) {
    %c0_i32 = arith.constant 0 : i32
    %c0_i32_0 = arith.constant 0 : i32
    %c0_i32_1 = arith.constant 0 : i32
    return %c0_i32, %c0_i32_0 : i32, i32
  }
  func.func @transform_6(%arg0: i32) -> (i32, i32) {
    %c0_i32 = arith.constant 0 : i32
    %c0_i32_0 = arith.constant 0 : i32
    %c0_i32_1 = arith.constant 0 : i32
    return %c0_i32, %c0_i32_0 : i32, i32
  }
  func.func @transform_7(%arg0: i32) -> (i32, i32) {
    %c0_i32 = arith.constant 0 : i32
    %c0_i32_0 = arith.constant 0 : i32
    %c0_i32_1 = arith.constant 0 : i32
    return %c0_i32, %c0_i32_0 : i32, i32
  }
  func.func @transform_8(%arg0: i32) -> (i32, i32) {
    %c0_i32 = arith.constant 0 : i32
    %c0_i32_0 = arith.constant 0 : i32
    %c0_i32_1 = arith.constant 0 : i32
    return %c0_i32, %c0_i32_0 : i32, i32
  }
  func.func @transform_9(%arg0: i32) -> (i32, i32) {
    %c0_i32 = arith.constant 0 : i32
    %c0_i32_0 = arith.constant 0 : i32
    %c0_i32_1 = arith.constant 0 : i32
    return %c0_i32, %c0_i32_0 : i32, i32
  }
  func.func @transform_10(%arg0: i32) -> (i32, i32) {
    %c0_i32 = arith.constant 0 : i32
    %c0_i32_0 = arith.constant 0 : i32
    %c0_i32_1 = arith.constant 0 : i32
    return %c0_i32, %c0_i32_0 : i32, i32
  }
  func.func @transform_11(%arg0: i32) -> (i32, i32) {
    %c0_i32 = arith.constant 0 : i32
    %c0_i32_0 = arith.constant 0 : i32
    %c0_i32_1 = arith.constant 0 : i32
    return %c0_i32, %c0_i32_0 : i32, i32
  }
  func.func @transform_12(%arg0: i32) -> (i32, i32) {
    %c0_i32 = arith.constant 0 : i32
    %c0_i32_0 = arith.constant 0 : i32
    %c0_i32_1 = arith.constant 0 : i32
    return %c0_i32, %c0_i32_0 : i32, i32
  }
  func.func @transform_13(%arg0: i32) -> (i32, i32) {
    %c0_i32 = arith.constant 0 : i32
    %c0_i32_0 = arith.constant 0 : i32
    %c0_i32_1 = arith.constant 0 : i32
    return %c0_i32, %c0_i32_0 : i32, i32
  }
  func.func @transform_14(%arg0: i32) -> (i32, i32, i32) {
    %c0_i32 = arith.constant 0 : i32
    %c0_i32_0 = arith.constant 0 : i32
    %c0_i32_1 = arith.constant 0 : i32
    return %arg0, %c0_i32, %c0_i32_0 : i32, i32, i32
  }
}

module attributes {stable_mosaic.version = 11 : i64} {
  func.func @_merge_kernel(%arg0: memref<32x128xf32, #tpu.memory_space<vmem>>, %arg1: memref<128x64xbf16, #tpu.memory_space<vmem>>, %arg2: memref<1x64xf32, #tpu.memory_space<vmem>>, %arg3: memref<1x64xf32, #tpu.memory_space<vmem>>, %arg4: memref<1x64xf32, #tpu.memory_space<vmem>>, %arg5: memref<32x64xf32, #tpu.memory_space<vmem>>) attributes {dimension_semantics = [], scalar_prefetch = 0 : i64, scratch_operands = 0 : i64, tpu.core_type = #tpu.core_type<tc>} {
    %c0 = arith.constant 0 : index
    %c0_0 = arith.constant 0 : index
    %0 = vector.load %arg0[%c0, %c0_0] : memref<32x128xf32, #tpu.memory_space<vmem>>, vector<32x128xf32>
    %1 = arith.truncf %0 : vector<32x128xf32> to vector<32x128xbf16>
    %c0_1 = arith.constant 0 : index
    %c0_2 = arith.constant 0 : index
    %2 = vector.load %arg1[%c0_1, %c0_2] : memref<128x64xbf16, #tpu.memory_space<vmem>>, vector<128x64xbf16>
    %cst = arith.constant dense<0.000000e+00> : vector<32x64xf32>
    %3 = tpu.matmul %1, %2, %cst {dimension_numbers = #tpu.dot_dimension_numbers<[1], [0], [0], [1], [0, 0, 1, 1], [], []>} : vector<32x128xbf16>, vector<128x64xbf16>, vector<32x64xf32> -> vector<32x64xf32>
    %c0_3 = arith.constant 0 : index
    %c0_4 = arith.constant 0 : index
    %4 = vector.load %arg2[%c0_3, %c0_4] : memref<1x64xf32, #tpu.memory_space<vmem>>, vector<1x64xf32>
    %5 = vector.broadcast %4 : vector<1x64xf32> to vector<32x64xf32>
    %6 = arith.addf %3, %5 : vector<32x64xf32>
    %c0_5 = arith.constant 0 : index
    %c0_6 = arith.constant 0 : index
    %7 = vector.load %arg3[%c0_5, %c0_6] : memref<1x64xf32, #tpu.memory_space<vmem>>, vector<1x64xf32>
    %c0_7 = arith.constant 0 : index
    %c0_8 = arith.constant 0 : index
    %8 = vector.load %arg4[%c0_7, %c0_8] : memref<1x64xf32, #tpu.memory_space<vmem>>, vector<1x64xf32>
    %cst_9 = arith.constant dense<0.000000e+00> : vector<32xf32>
    %9 = vector.multi_reduction <add>, %6, %cst_9 [1] : vector<32x64xf32> to vector<32xf32>
    %10 = vector.shape_cast %9 : vector<32xf32> to vector<32x1xf32>
    %cst_10 = arith.constant 6.400000e+01 : f32
    %11 = vector.broadcast %cst_10 : f32 to vector<32x1xf32>
    %12 = arith.divf %10, %11 : vector<32x1xf32>
    %13 = vector.broadcast %12 : vector<32x1xf32> to vector<32x64xf32>
    %14 = arith.subf %6, %13 : vector<32x64xf32>
    %15 = arith.mulf %14, %14 : vector<32x64xf32>
    %cst_11 = arith.constant dense<0.000000e+00> : vector<32xf32>
    %16 = vector.multi_reduction <add>, %15, %cst_11 [1] : vector<32x64xf32> to vector<32xf32>
    %17 = vector.shape_cast %16 : vector<32xf32> to vector<32x1xf32>
    %cst_12 = arith.constant 6.400000e+01 : f32
    %18 = vector.broadcast %cst_12 : f32 to vector<32x1xf32>
    %19 = arith.divf %17, %18 : vector<32x1xf32>
    %cst_13 = arith.constant 9.99999974E-6 : f32
    %20 = vector.broadcast %cst_13 : f32 to vector<32x1xf32>
    %21 = arith.addf %19, %20 : vector<32x1xf32>
    %22 = math.rsqrt %21 : vector<32x1xf32>
    %23 = vector.broadcast %22 : vector<32x1xf32> to vector<32x64xf32>
    %24 = arith.mulf %14, %23 : vector<32x64xf32>
    %25 = vector.broadcast %7 : vector<1x64xf32> to vector<32x64xf32>
    %26 = arith.mulf %24, %25 : vector<32x64xf32>
    %27 = vector.broadcast %8 : vector<1x64xf32> to vector<32x64xf32>
    %28 = arith.addf %26, %27 : vector<32x64xf32>
    %c0_14 = arith.constant 0 : index
    %c0_15 = arith.constant 0 : index
    %29 = vector.load %arg5[%c0_14, %c0_15] : memref<32x64xf32, #tpu.memory_space<vmem>>, vector<32x64xf32>
    tpu.vector_store %arg5[%c0_14, %c0_15], %28 {strides = array<i32>} : memref<32x64xf32, #tpu.memory_space<vmem>>, vector<32x64xf32>,
    return
  }
}

module attributes {stable_mosaic.version = 11 : i64} {
  func.func @_ret_block_kernel(%arg0: i32, %arg1: memref<1x16x64xf32, #tpu.memory_space<vmem>>, %arg2: memref<4x16x16xf32, #tpu.memory_space<vmem>>, %arg3: memref<1x64xf32, #tpu.memory_space<vmem>>, %arg4: memref<1x64xf32, #tpu.memory_space<vmem>>, %arg5: memref<64x192xbf16, #tpu.memory_space<vmem>>, %arg6: memref<1x192xf32, #tpu.memory_space<vmem>>, %arg7: memref<64x64xbf16, #tpu.memory_space<vmem>>, %arg8: memref<1x64xf32, #tpu.memory_space<vmem>>, %arg9: memref<1x64xf32, #tpu.memory_space<vmem>>, %arg10: memref<1x64xf32, #tpu.memory_space<vmem>>, %arg11: memref<64x128xbf16, #tpu.memory_space<vmem>>, %arg12: memref<1x128xf32, #tpu.memory_space<vmem>>, %arg13: memref<128x64xbf16, #tpu.memory_space<vmem>>, %arg14: memref<1x64xf32, #tpu.memory_space<vmem>>, %arg15: memref<1x16x64xf32, #tpu.memory_space<vmem>>) attributes {dimension_semantics = [#tpu.dimension_semantics<parallel>], iteration_bounds = array<i64: 2>, scalar_prefetch = 0 : i64, scratch_operands = 0 : i64, tpu.core_type = #tpu.core_type<tc>, window_params = [{transform_indices = @transform_0, window_bounds = array<i64: 1, 16, 64>}, {pipeline_mode = #tpu.pipeline_mode<synchronous>, transform_indices = @transform_1, window_bounds = array<i64: 4, 16, 16>}, {pipeline_mode = #tpu.pipeline_mode<synchronous>, transform_indices = @transform_2, window_bounds = array<i64: 1, 64>}, {pipeline_mode = #tpu.pipeline_mode<synchronous>, transform_indices = @transform_3, window_bounds = array<i64: 1, 64>}, {pipeline_mode = #tpu.pipeline_mode<synchronous>, transform_indices = @transform_4, window_bounds = array<i64: 64, 192>}, {pipeline_mode = #tpu.pipeline_mode<synchronous>, transform_indices = @transform_5, window_bounds = array<i64: 1, 192>}, {pipeline_mode = #tpu.pipeline_mode<synchronous>, transform_indices = @transform_6, window_bounds = array<i64: 64, 64>}, {pipeline_mode = #tpu.pipeline_mode<synchronous>, transform_indices = @transform_7, window_bounds = array<i64: 1, 64>}, {pipeline_mode = #tpu.pipeline_mode<synchronous>, transform_indices = @transform_8, window_bounds = array<i64: 1, 64>}, {pipeline_mode = #tpu.pipeline_mode<synchronous>, transform_indices = @transform_9, window_bounds = array<i64: 1, 64>}, {pipeline_mode = #tpu.pipeline_mode<synchronous>, transform_indices = @transform_10, window_bounds = array<i64: 64, 128>}, {pipeline_mode = #tpu.pipeline_mode<synchronous>, transform_indices = @transform_11, window_bounds = array<i64: 1, 128>}, {pipeline_mode = #tpu.pipeline_mode<synchronous>, transform_indices = @transform_12, window_bounds = array<i64: 128, 64>}, {pipeline_mode = #tpu.pipeline_mode<synchronous>, transform_indices = @transform_13, window_bounds = array<i64: 1, 64>}, {transform_indices = @transform_14, window_bounds = array<i64: 1, 16, 64>}]} {
    %c0 = arith.constant 0 : index
    %c0_0 = arith.constant 0 : index
    %c0_1 = arith.constant 0 : index
    %0 = vector.load %arg1[%c0, %c0_0, %c0_1] : memref<1x16x64xf32, #tpu.memory_space<vmem>>, vector<1x16x64xf32>
    %1 = vector.shape_cast %0 : vector<1x16x64xf32> to vector<16x64xf32>
    %c0_2 = arith.constant 0 : index
    %c0_3 = arith.constant 0 : index
    %2 = vector.load %arg3[%c0_2, %c0_3] : memref<1x64xf32, #tpu.memory_space<vmem>>, vector<1x64xf32>
    %c0_4 = arith.constant 0 : index
    %c0_5 = arith.constant 0 : index
    %3 = vector.load %arg4[%c0_4, %c0_5] : memref<1x64xf32, #tpu.memory_space<vmem>>, vector<1x64xf32>
    %cst = arith.constant dense<0.000000e+00> : vector<16xf32>
    %4 = vector.multi_reduction <add>, %1, %cst [1] : vector<16x64xf32> to vector<16xf32>
    %5 = vector.shape_cast %4 : vector<16xf32> to vector<16x1xf32>
    %cst_6 = arith.constant 6.400000e+01 : f32
    %6 = vector.broadcast %cst_6 : f32 to vector<16x1xf32>
    %7 = arith.divf %5, %6 : vector<16x1xf32>
    %8 = vector.broadcast %7 : vector<16x1xf32> to vector<16x64xf32>
    %9 = arith.subf %1, %8 : vector<16x64xf32>
    %10 = arith.mulf %9, %9 : vector<16x64xf32>
    %cst_7 = arith.constant dense<0.000000e+00> : vector<16xf32>
    %11 = vector.multi_reduction <add>, %10, %cst_7 [1] : vector<16x64xf32> to vector<16xf32>
    %12 = vector.shape_cast %11 : vector<16xf32> to vector<16x1xf32>
    %cst_8 = arith.constant 6.400000e+01 : f32
    %13 = vector.broadcast %cst_8 : f32 to vector<16x1xf32>
    %14 = arith.divf %12, %13 : vector<16x1xf32>
    %cst_9 = arith.constant 9.99999974E-6 : f32
    %15 = vector.broadcast %cst_9 : f32 to vector<16x1xf32>
    %16 = arith.addf %14, %15 : vector<16x1xf32>
    %17 = math.rsqrt %16 : vector<16x1xf32>
    %18 = vector.broadcast %17 : vector<16x1xf32> to vector<16x64xf32>
    %19 = arith.mulf %9, %18 : vector<16x64xf32>
    %20 = vector.broadcast %2 : vector<1x64xf32> to vector<16x64xf32>
    %21 = arith.mulf %19, %20 : vector<16x64xf32>
    %22 = vector.broadcast %3 : vector<1x64xf32> to vector<16x64xf32>
    %23 = arith.addf %21, %22 : vector<16x64xf32>
    %24 = arith.truncf %23 : vector<16x64xf32> to vector<16x64xbf16>
    %c0_10 = arith.constant 0 : index
    %c0_11 = arith.constant 0 : index
    %25 = vector.load %arg5[%c0_10, %c0_11] : memref<64x192xbf16, #tpu.memory_space<vmem>>, vector<64x192xbf16>
    %cst_12 = arith.constant dense<0.000000e+00> : vector<16x192xf32>
    %26 = tpu.matmul %24, %25, %cst_12 {dimension_numbers = #tpu.dot_dimension_numbers<[1], [0], [0], [1], [0, 0, 1, 1], [], []>} : vector<16x64xbf16>, vector<64x192xbf16>, vector<16x192xf32> -> vector<16x192xf32>
    %c0_13 = arith.constant 0 : index
    %c0_14 = arith.constant 0 : index
    %27 = vector.load %arg6[%c0_13, %c0_14] : memref<1x192xf32, #tpu.memory_space<vmem>>, vector<1x192xf32>
    %28 = vector.broadcast %27 : vector<1x192xf32> to vector<16x192xf32>
    %29 = arith.addf %26, %28 : vector<16x192xf32>
    %30 = vector.extract_strided_slice %29 {offsets = [0, 0], sizes = [16, 64], strides = [1, 1]} : vector<16x192xf32> to vector<16x64xf32>
    %cst_15 = arith.constant 2.500000e-01 : f32
    %31 = vector.broadcast %cst_15 : f32 to vector<16x64xf32>
    %32 = arith.mulf %30, %31 : vector<16x64xf32>
    %33 = vector.extract_strided_slice %29 {offsets = [0, 64], sizes = [16, 64], strides = [1, 1]} : vector<16x192xf32> to vector<16x64xf32>
    %34 = vector.extract_strided_slice %29 {offsets = [0, 128], sizes = [16, 64], strides = [1, 1]} : vector<16x192xf32> to vector<16x64xf32>
    %35 = vector.extract_strided_slice %32 {offsets = [0, 0], sizes = [16, 16], strides = [1, 1]} : vector<16x64xf32> to vector<16x16xf32>
    %36 = arith.truncf %35 : vector<16x16xf32> to vector<16x16xbf16>
    %37 = vector.extract_strided_slice %33 {offsets = [0, 0], sizes = [16, 16], strides = [1, 1]} : vector<16x64xf32> to vector<16x16xf32>
    %38 = arith.truncf %37 : vector<16x16xf32> to vector<16x16xbf16>
    %39 = vector.extract_strided_slice %34 {offsets = [0, 0], sizes = [16, 16], strides = [1, 1]} : vector<16x64xf32> to vector<16x16xf32>
    %40 = arith.truncf %39 : vector<16x16xf32> to vector<16x16xbf16>
    %41 = tpu.transpose %38, [1, 0] : vector<16x16xbf16> -> vector<16x16xbf16>
    %cst_16 = arith.constant dense<0.000000e+00> : vector<16x16xf32>
    %42 = tpu.matmul %36, %41, %cst_16 {dimension_numbers = #tpu.dot_dimension_numbers<[1], [0], [0], [1], [0, 0, 1, 1], [], []>} : vector<16x16xbf16>, vector<16x16xbf16>, vector<16x16xf32> -> vector<16x16xf32>
    %c0_17 = arith.constant 0 : index
    %c0_18 = arith.constant 0 : index
    %c0_19 = arith.constant 0 : index
    %43 = vector.load %arg2[%c0_17, %c0_18, %c0_19] : memref<4x16x16xf32, #tpu.memory_space<vmem>>, vector<1x16x16xf32>
    %44 = vector.shape_cast %43 : vector<1x16x16xf32> to vector<16x16xf32>
    %45 = arith.addf %42, %44 : vector<16x16xf32>
    %cst_20 = arith.constant dense<0xFF800000> : vector<16xf32>
    %46 = vector.multi_reduction <maximumf>, %45, %cst_20 [1] : vector<16x16xf32> to vector<16xf32>
    %47 = vector.shape_cast %46 : vector<16xf32> to vector<16x1xf32>
    %48 = vector.broadcast %47 : vector<16x1xf32> to vector<16x16xf32>
    %49 = arith.subf %45, %48 : vector<16x16xf32>
    %50 = math.exp %49 : vector<16x16xf32>
    %cst_21 = arith.constant dense<0.000000e+00> : vector<16xf32>
    %51 = vector.multi_reduction <add>, %50, %cst_21 [1] : vector<16x16xf32> to vector<16xf32>
    %52 = vector.shape_cast %51 : vector<16xf32> to vector<16x1xf32>
    %53 = tpu.reciprocal %52 {approx = true} : vector<16x1xf32> -> vector<16x1xf32>
    %54 = vector.broadcast %53 : vector<16x1xf32> to vector<16x16xf32>
    %55 = arith.mulf %50, %54 : vector<16x16xf32>
    %56 = arith.truncf %55 : vector<16x16xf32> to vector<16x16xbf16>
    %cst_22 = arith.constant dense<0.000000e+00> : vector<16x16xf32>
    %57 = tpu.matmul %56, %40, %cst_22 {dimension_numbers = #tpu.dot_dimension_numbers<[1], [0], [0], [1], [0, 0, 1, 1], [], []>} : vector<16x16xbf16>, vector<16x16xbf16>, vector<16x16xf32> -> vector<16x16xf32>
    %58 = vector.extract_strided_slice %32 {offsets = [0, 16], sizes = [16, 16], strides = [1, 1]} : vector<16x64xf32> to vector<16x16xf32>
    %59 = arith.truncf %58 : vector<16x16xf32> to vector<16x16xbf16>
    %60 = vector.extract_strided_slice %33 {offsets = [0, 16], sizes = [16, 16], strides = [1, 1]} : vector<16x64xf32> to vector<16x16xf32>
    %61 = arith.truncf %60 : vector<16x16xf32> to vector<16x16xbf16>
    %62 = vector.extract_strided_slice %34 {offsets = [0, 16], sizes = [16, 16], strides = [1, 1]} : vector<16x64xf32> to vector<16x16xf32>
    %63 = arith.truncf %62 : vector<16x16xf32> to vector<16x16xbf16>
    %64 = tpu.transpose %61, [1, 0] : vector<16x16xbf16> -> vector<16x16xbf16>
    %cst_23 = arith.constant dense<0.000000e+00> : vector<16x16xf32>
    %65 = tpu.matmul %59, %64, %cst_23 {dimension_numbers = #tpu.dot_dimension_numbers<[1], [0], [0], [1], [0, 0, 1, 1], [], []>} : vector<16x16xbf16>, vector<16x16xbf16>, vector<16x16xf32> -> vector<16x16xf32>
    %c1 = arith.constant 1 : index
    %c0_24 = arith.constant 0 : index
    %c0_25 = arith.constant 0 : index
    %66 = vector.load %arg2[%c1, %c0_24, %c0_25] : memref<4x16x16xf32, #tpu.memory_space<vmem>>, vector<1x16x16xf32>
    %67 = vector.shape_cast %66 : vector<1x16x16xf32> to vector<16x16xf32>
    %68 = arith.addf %65, %67 : vector<16x16xf32>
    %cst_26 = arith.constant dense<0xFF800000> : vector<16xf32>
    %69 = vector.multi_reduction <maximumf>, %68, %cst_26 [1] : vector<16x16xf32> to vector<16xf32>
    %70 = vector.shape_cast %69 : vector<16xf32> to vector<16x1xf32>
    %71 = vector.broadcast %70 : vector<16x1xf32> to vector<16x16xf32>
    %72 = arith.subf %68, %71 : vector<16x16xf32>
    %73 = math.exp %72 : vector<16x16xf32>
    %cst_27 = arith.constant dense<0.000000e+00> : vector<16xf32>
    %74 = vector.multi_reduction <add>, %73, %cst_27 [1] : vector<16x16xf32> to vector<16xf32>
    %75 = vector.shape_cast %74 : vector<16xf32> to vector<16x1xf32>
    %76 = tpu.reciprocal %75 {approx = true} : vector<16x1xf32> -> vector<16x1xf32>
    %77 = vector.broadcast %76 : vector<16x1xf32> to vector<16x16xf32>
    %78 = arith.mulf %73, %77 : vector<16x16xf32>
    %79 = arith.truncf %78 : vector<16x16xf32> to vector<16x16xbf16>
    %cst_28 = arith.constant dense<0.000000e+00> : vector<16x16xf32>
    %80 = tpu.matmul %79, %63, %cst_28 {dimension_numbers = #tpu.dot_dimension_numbers<[1], [0], [0], [1], [0, 0, 1, 1], [], []>} : vector<16x16xbf16>, vector<16x16xbf16>, vector<16x16xf32> -> vector<16x16xf32>
    %81 = vector.extract_strided_slice %32 {offsets = [0, 32], sizes = [16, 16], strides = [1, 1]} : vector<16x64xf32> to vector<16x16xf32>
    %82 = arith.truncf %81 : vector<16x16xf32> to vector<16x16xbf16>
    %83 = vector.extract_strided_slice %33 {offsets = [0, 32], sizes = [16, 16], strides = [1, 1]} : vector<16x64xf32> to vector<16x16xf32>
    %84 = arith.truncf %83 : vector<16x16xf32> to vector<16x16xbf16>
    %85 = vector.extract_strided_slice %34 {offsets = [0, 32], sizes = [16, 16], strides = [1, 1]} : vector<16x64xf32> to vector<16x16xf32>
    %86 = arith.truncf %85 : vector<16x16xf32> to vector<16x16xbf16>
    %87 = tpu.transpose %84, [1, 0] : vector<16x16xbf16> -> vector<16x16xbf16>
    %cst_29 = arith.constant dense<0.000000e+00> : vector<16x16xf32>
    %88 = tpu.matmul %82, %87, %cst_29 {dimension_numbers = #tpu.dot_dimension_numbers<[1], [0], [0], [1], [0, 0, 1, 1], [], []>} : vector<16x16xbf16>, vector<16x16xbf16>, vector<16x16xf32> -> vector<16x16xf32>
    %c2 = arith.constant 2 : index
    %c0_30 = arith.constant 0 : index
    %c0_31 = arith.constant 0 : index
    %89 = vector.load %arg2[%c2, %c0_30, %c0_31] : memref<4x16x16xf32, #tpu.memory_space<vmem>>, vector<1x16x16xf32>
    %90 = vector.shape_cast %89 : vector<1x16x16xf32> to vector<16x16xf32>
    %91 = arith.addf %88, %90 : vector<16x16xf32>
    %cst_32 = arith.constant dense<0xFF800000> : vector<16xf32>
    %92 = vector.multi_reduction <maximumf>, %91, %cst_32 [1] : vector<16x16xf32> to vector<16xf32>
    %93 = vector.shape_cast %92 : vector<16xf32> to vector<16x1xf32>
    %94 = vector.broadcast %93 : vector<16x1xf32> to vector<16x16xf32>
    %95 = arith.subf %91, %94 : vector<16x16xf32>
    %96 = math.exp %95 : vector<16x16xf32>
    %cst_33 = arith.constant dense<0.000000e+00> : vector<16xf32>
    %97 = vector.multi_reduction <add>, %96, %cst_33 [1] : vector<16x16xf32> to vector<16xf32>
    %98 = vector.shape_cast %97 : vector<16xf32> to vector<16x1xf32>
    %99 = tpu.reciprocal %98 {approx = true} : vector<16x1xf32> -> vector<16x1xf32>
    %100 = vector.broadcast %99 : vector<16x1xf32> to vector<16x16xf32>
    %101 = arith.mulf %96, %100 : vector<16x16xf32>
    %102 = arith.truncf %101 : vector<16x16xf32> to vector<16x16xbf16>
    %cst_34 = arith.constant dense<0.000000e+00> : vector<16x16xf32>
    %103 = tpu.matmul %102, %86, %cst_34 {dimension_numbers = #tpu.dot_dimension_numbers<[1], [0], [0], [1], [0, 0, 1, 1], [], []>} : vector<16x16xbf16>, vector<16x16xbf16>, vector<16x16xf32> -> vector<16x16xf32>
    %104 = vector.extract_strided_slice %32 {offsets = [0, 48], sizes = [16, 16], strides = [1, 1]} : vector<16x64xf32> to vector<16x16xf32>
    %105 = arith.truncf %104 : vector<16x16xf32> to vector<16x16xbf16>
    %106 = vector.extract_strided_slice %33 {offsets = [0, 48], sizes = [16, 16], strides = [1, 1]} : vector<16x64xf32> to vector<16x16xf32>
    %107 = arith.truncf %106 : vector<16x16xf32> to vector<16x16xbf16>
    %108 = vector.extract_strided_slice %34 {offsets = [0, 48], sizes = [16, 16], strides = [1, 1]} : vector<16x64xf32> to vector<16x16xf32>
    %109 = arith.truncf %108 : vector<16x16xf32> to vector<16x16xbf16>
    %110 = tpu.transpose %107, [1, 0] : vector<16x16xbf16> -> vector<16x16xbf16>
    %cst_35 = arith.constant dense<0.000000e+00> : vector<16x16xf32>
    %111 = tpu.matmul %105, %110, %cst_35 {dimension_numbers = #tpu.dot_dimension_numbers<[1], [0], [0], [1], [0, 0, 1, 1], [], []>} : vector<16x16xbf16>, vector<16x16xbf16>, vector<16x16xf32> -> vector<16x16xf32>
    %c3 = arith.constant 3 : index
    %c0_36 = arith.constant 0 : index
    %c0_37 = arith.constant 0 : index
    %112 = vector.load %arg2[%c3, %c0_36, %c0_37] : memref<4x16x16xf32, #tpu.memory_space<vmem>>, vector<1x16x16xf32>
    %113 = vector.shape_cast %112 : vector<1x16x16xf32> to vector<16x16xf32>
    %114 = arith.addf %111, %113 : vector<16x16xf32>
    %cst_38 = arith.constant dense<0xFF800000> : vector<16xf32>
    %115 = vector.multi_reduction <maximumf>, %114, %cst_38 [1] : vector<16x16xf32> to vector<16xf32>
    %116 = vector.shape_cast %115 : vector<16xf32> to vector<16x1xf32>
    %117 = vector.broadcast %116 : vector<16x1xf32> to vector<16x16xf32>
    %118 = arith.subf %114, %117 : vector<16x16xf32>
    %119 = math.exp %118 : vector<16x16xf32>
    %cst_39 = arith.constant dense<0.000000e+00> : vector<16xf32>
    %120 = vector.multi_reduction <add>, %119, %cst_39 [1] : vector<16x16xf32> to vector<16xf32>
    %121 = vector.shape_cast %120 : vector<16xf32> to vector<16x1xf32>
    %122 = tpu.reciprocal %121 {approx = true} : vector<16x1xf32> -> vector<16x1xf32>
    %123 = vector.broadcast %122 : vector<16x1xf32> to vector<16x16xf32>
    %124 = arith.mulf %119, %123 : vector<16x16xf32>
    %125 = arith.truncf %124 : vector<16x16xf32> to vector<16x16xbf16>
    %cst_40 = arith.constant dense<0.000000e+00> : vector<16x16xf32>
    %126 = tpu.matmul %125, %109, %cst_40 {dimension_numbers = #tpu.dot_dimension_numbers<[1], [0], [0], [1], [0, 0, 1, 1], [], []>} : vector<16x16xbf16>, vector<16x16xbf16>, vector<16x16xf32> -> vector<16x16xf32>
    %127 = tpu.concatenate %57, %80, %103, %126 in 1 : vector<16x16xf32>, vector<16x16xf32>, vector<16x16xf32>, vector<16x16xf32> -> vector<16x64xf32>
    %128 = arith.truncf %127 : vector<16x64xf32> to vector<16x64xbf16>
    %c0_41 = arith.constant 0 : index
    %c0_42 = arith.constant 0 : index
    %129 = vector.load %arg7[%c0_41, %c0_42] : memref<64x64xbf16, #tpu.memory_space<vmem>>, vector<64x64xbf16>
    %cst_43 = arith.constant dense<0.000000e+00> : vector<16x64xf32>
    %130 = tpu.matmul %128, %129, %cst_43 {dimension_numbers = #tpu.dot_dimension_numbers<[1], [0], [0], [1], [0, 0, 1, 1], [], []>} : vector<16x64xbf16>, vector<64x64xbf16>, vector<16x64xf32> -> vector<16x64xf32>
    %c0_44 = arith.constant 0 : index
    %c0_45 = arith.constant 0 : index
    %131 = vector.load %arg8[%c0_44, %c0_45] : memref<1x64xf32, #tpu.memory_space<vmem>>, vector<1x64xf32>
    %132 = vector.broadcast %131 : vector<1x64xf32> to vector<16x64xf32>
    %133 = arith.addf %130, %132 : vector<16x64xf32>
    %134 = arith.addf %1, %133 : vector<16x64xf32>
    %c0_46 = arith.constant 0 : index
    %c0_47 = arith.constant 0 : index
    %135 = vector.load %arg9[%c0_46, %c0_47] : memref<1x64xf32, #tpu.memory_space<vmem>>, vector<1x64xf32>
    %c0_48 = arith.constant 0 : index
    %c0_49 = arith.constant 0 : index
    %136 = vector.load %arg10[%c0_48, %c0_49] : memref<1x64xf32, #tpu.memory_space<vmem>>, vector<1x64xf32>
    %cst_50 = arith.constant dense<0.000000e+00> : vector<16xf32>
    %137 = vector.multi_reduction <add>, %134, %cst_50 [1] : vector<16x64xf32> to vector<16xf32>
    %138 = vector.shape_cast %137 : vector<16xf32> to vector<16x1xf32>
    %cst_51 = arith.constant 6.400000e+01 : f32
    %139 = vector.broadcast %cst_51 : f32 to vector<16x1xf32>
    %140 = arith.divf %138, %139 : vector<16x1xf32>
    %141 = vector.broadcast %140 : vector<16x1xf32> to vector<16x64xf32>
    %142 = arith.subf %134, %141 : vector<16x64xf32>
    %143 = arith.mulf %142, %142 : vector<16x64xf32>
    %cst_52 = arith.constant dense<0.000000e+00> : vector<16xf32>
    %144 = vector.multi_reduction <add>, %143, %cst_52 [1] : vector<16x64xf32> to vector<16xf32>
    %145 = vector.shape_cast %144 : vector<16xf32> to vector<16x1xf32>
    %cst_53 = arith.constant 6.400000e+01 : f32
    %146 = vector.broadcast %cst_53 : f32 to vector<16x1xf32>
    %147 = arith.divf %145, %146 : vector<16x1xf32>
    %cst_54 = arith.constant 9.99999974E-6 : f32
    %148 = vector.broadcast %cst_54 : f32 to vector<16x1xf32>
    %149 = arith.addf %147, %148 : vector<16x1xf32>
    %150 = math.rsqrt %149 : vector<16x1xf32>
    %151 = vector.broadcast %150 : vector<16x1xf32> to vector<16x64xf32>
    %152 = arith.mulf %142, %151 : vector<16x64xf32>
    %153 = vector.broadcast %135 : vector<1x64xf32> to vector<16x64xf32>
    %154 = arith.mulf %152, %153 : vector<16x64xf32>
    %155 = vector.broadcast %136 : vector<1x64xf32> to vector<16x64xf32>
    %156 = arith.addf %154, %155 : vector<16x64xf32>
    %157 = arith.truncf %156 : vector<16x64xf32> to vector<16x64xbf16>
    %c0_55 = arith.constant 0 : index
    %c0_56 = arith.constant 0 : index
    %158 = vector.load %arg11[%c0_55, %c0_56] : memref<64x128xbf16, #tpu.memory_space<vmem>>, vector<64x128xbf16>
    %cst_57 = arith.constant dense<0.000000e+00> : vector<16x128xf32>
    %159 = tpu.matmul %157, %158, %cst_57 {dimension_numbers = #tpu.dot_dimension_numbers<[1], [0], [0], [1], [0, 0, 1, 1], [], []>} : vector<16x64xbf16>, vector<64x128xbf16>, vector<16x128xf32> -> vector<16x128xf32>
    %c0_58 = arith.constant 0 : index
    %c0_59 = arith.constant 0 : index
    %160 = vector.load %arg12[%c0_58, %c0_59] : memref<1x128xf32, #tpu.memory_space<vmem>>, vector<1x128xf32>
    %161 = vector.broadcast %160 : vector<1x128xf32> to vector<16x128xf32>
    %162 = arith.addf %159, %161 : vector<16x128xf32>
    %163 = arith.mulf %162, %162 : vector<16x128xf32>
    %164 = arith.mulf %162, %163 : vector<16x128xf32>
    %cst_60 = arith.constant 4.471500e-02 : f32
    %165 = vector.broadcast %cst_60 : f32 to vector<16x128xf32>
    %166 = arith.mulf %165, %164 : vector<16x128xf32>
    %167 = arith.addf %162, %166 : vector<16x128xf32>
    %cst_61 = arith.constant 0.797884583 : f32
    %168 = vector.broadcast %cst_61 : f32 to vector<16x128xf32>
    %169 = arith.mulf %168, %167 : vector<16x128xf32>
    %170 = math.tanh %169 : vector<16x128xf32>
    %cst_62 = arith.constant 1.000000e+00 : f32
    %171 = vector.broadcast %cst_62 : f32 to vector<16x128xf32>
    %172 = arith.addf %171, %170 : vector<16x128xf32>
    %cst_63 = arith.constant 5.000000e-01 : f32
    %173 = vector.broadcast %cst_63 : f32 to vector<16x128xf32>
    %174 = arith.mulf %173, %172 : vector<16x128xf32>
    %175 = arith.mulf %162, %174 : vector<16x128xf32>
    %176 = arith.truncf %175 : vector<16x128xf32> to vector<16x128xbf16>
    %c0_64 = arith.constant 0 : index
    %c0_65 = arith.constant 0 : index
    %177 = vector.load %arg13[%c0_64, %c0_65] : memref<128x64xbf16, #tpu.memory_space<vmem>>, vector<128x64xbf16>
    %cst_66 = arith.constant dense<0.000000e+00> : vector<16x64xf32>
    %178 = tpu.matmul %176, %177, %cst_66 {dimension_numbers = #tpu.dot_dimension_numbers<[1], [0], [0], [1], [0, 0, 1, 1], [], []>} : vector<16x128xbf16>, vector<128x64xbf16>, vector<16x64xf32> -> vector<16x64xf32>
    %c0_67 = arith.constant 0 : index
    %c0_68 = arith.constant 0 : index
    %179 = vector.load %arg14[%c0_67, %c0_68] : memref<1x64xf32, #tpu.memory_space<vmem>>, vector<1x64xf32>
    %180 = vector.broadcast %179 : vector<1x64xf32> to vector<16x64xf32>
    %181 = arith.addf %178, %180 : vector<16x64xf32>
    %182 = arith.addf %134, %181 : vector<16x64xf32>
    %c0_69 = arith.constant 0 : index
    %c0_70 = arith.constant 0 : index
    %c0_71 = arith.constant 0 : index
    %183 = vector.load %arg15[%c0_69, %c0_70, %c0_71] : memref<1x16x64xf32, #tpu.memory_space<vmem>>, vector<1x16x64xf32>
    %184 = vector.shape_cast %183 : vector<1x16x64xf32> to vector<16x64xf32>
    %185 = vector.shape_cast %182 : vector<16x64xf32> to vector<1x16x64xf32>
    tpu.vector_store %arg15[%c0_69, %c0_70, %c0_71], %185 {strides = array<i32>} : memref<1x16x64xf32, #tpu.memory_space<vmem>>, vector<1x16x64xf32>,
    return
  }
  func.func @transform_0(%arg0: i32) -> (i32, i32, i32) {
    %c0_i32 = arith.constant 0 : i32
    %c0_i32_0 = arith.constant 0 : i32
    %c0_i32_1 = arith.constant 0 : i32
    return %arg0, %c0_i32, %c0_i32_0 : i32, i32, i32
  }
  func.func @transform_1(%arg0: i32) -> (i32, i32, i32) {
    %c0_i32 = arith.constant 0 : i32
    %c0_i32_0 = arith.constant 0 : i32
    %c0_i32_1 = arith.constant 0 : i32
    %c0_i32_2 = arith.constant 0 : i32
    return %c0_i32, %c0_i32_0, %c0_i32_1 : i32, i32, i32
  }
  func.func @transform_2(%arg0: i32) -> (i32, i32) {
    %c0_i32 = arith.constant 0 : i32
    %c0_i32_0 = arith.constant 0 : i32
    %c0_i32_1 = arith.constant 0 : i32
    return %c0_i32, %c0_i32_0 : i32, i32
  }
  func.func @transform_3(%arg0: i32) -> (i32, i32) {
    %c0_i32 = arith.constant 0 : i32
    %c0_i32_0 = arith.constant 0 : i32
    %c0_i32_1 = arith.constant 0 : i32
    return %c0_i32, %c0_i32_0 : i32, i32
  }
  func.func @transform_4(%arg0: i32) -> (i32, i32) {
    %c0_i32 = arith.constant 0 : i32
    %c0_i32_0 = arith.constant 0 : i32
    %c0_i32_1 = arith.constant 0 : i32
    return %c0_i32, %c0_i32_0 : i32, i32
  }
  func.func @transform_5(%arg0: i32) -> (i32, i32) {
    %c0_i32 = arith.constant 0 : i32
    %c0_i32_0 = arith.constant 0 : i32
    %c0_i32_1 = arith.constant 0 : i32
    return %c0_i32, %c0_i32_0 : i32, i32
  }
  func.func @transform_6(%arg0: i32) -> (i32, i32) {
    %c0_i32 = arith.constant 0 : i32
    %c0_i32_0 = arith.constant 0 : i32
    %c0_i32_1 = arith.constant 0 : i32
    return %c0_i32, %c0_i32_0 : i32, i32
  }
  func.func @transform_7(%arg0: i32) -> (i32, i32) {
    %c0_i32 = arith.constant 0 : i32
    %c0_i32_0 = arith.constant 0 : i32
    %c0_i32_1 = arith.constant 0 : i32
    return %c0_i32, %c0_i32_0 : i32, i32
  }
  func.func @transform_8(%arg0: i32) -> (i32, i32) {
    %c0_i32 = arith.constant 0 : i32
    %c0_i32_0 = arith.constant 0 : i32
    %c0_i32_1 = arith.constant 0 : i32
    return %c0_i32, %c0_i32_0 : i32, i32
  }
  func.func @transform_9(%arg0: i32) -> (i32, i32) {
    %c0_i32 = arith.constant 0 : i32
    %c0_i32_0 = arith.constant 0 : i32
    %c0_i32_1 = arith.constant 0 : i32
    return %c0_i32, %c0_i32_0 : i32, i32
  }
  func.func @transform_10(%arg0: i32) -> (i32, i32) {
    %c0_i32 = arith.constant 0 : i32
    %c0_i32_0 = arith.constant 0 : i32
    %c0_i32_1 = arith.constant 0 : i32
    return %c0_i32, %c0_i32_0 : i32, i32
  }
  func.func @transform_11(%arg0: i32) -> (i32, i32) {
    %c0_i32 = arith.constant 0 : i32
    %c0_i32_0 = arith.constant 0 : i32
    %c0_i32_1 = arith.constant 0 : i32
    return %c0_i32, %c0_i32_0 : i32, i32
  }
  func.func @transform_12(%arg0: i32) -> (i32, i32) {
    %c0_i32 = arith.constant 0 : i32
    %c0_i32_0 = arith.constant 0 : i32
    %c0_i32_1 = arith.constant 0 : i32
    return %c0_i32, %c0_i32_0 : i32, i32
  }
  func.func @transform_13(%arg0: i32) -> (i32, i32) {
    %c0_i32 = arith.constant 0 : i32
    %c0_i32_0 = arith.constant 0 : i32
    %c0_i32_1 = arith.constant 0 : i32
    return %c0_i32, %c0_i32_0 : i32, i32
  }
  func.func @transform_14(%arg0: i32) -> (i32, i32, i32) {
    %c0_i32 = arith.constant 0 : i32
    %c0_i32_0 = arith.constant 0 : i32
    %c0_i32_1 = arith.constant 0 : i32
    return %arg0, %c0_i32, %c0_i32_0 : i32, i32, i32
  }
}

module attributes {stable_mosaic.version = 11 : i64} {
  func.func @_merge_kernel(%arg0: memref<8x128xf32, #tpu.memory_space<vmem>>, %arg1: memref<128x64xbf16, #tpu.memory_space<vmem>>, %arg2: memref<1x64xf32, #tpu.memory_space<vmem>>, %arg3: memref<1x64xf32, #tpu.memory_space<vmem>>, %arg4: memref<1x64xf32, #tpu.memory_space<vmem>>, %arg5: memref<8x64xf32, #tpu.memory_space<vmem>>) attributes {dimension_semantics = [], scalar_prefetch = 0 : i64, scratch_operands = 0 : i64, tpu.core_type = #tpu.core_type<tc>} {
    %c0 = arith.constant 0 : index
    %c0_0 = arith.constant 0 : index
    %0 = vector.load %arg0[%c0, %c0_0] : memref<8x128xf32, #tpu.memory_space<vmem>>, vector<8x128xf32>
    %1 = arith.truncf %0 : vector<8x128xf32> to vector<8x128xbf16>
    %c0_1 = arith.constant 0 : index
    %c0_2 = arith.constant 0 : index
    %2 = vector.load %arg1[%c0_1, %c0_2] : memref<128x64xbf16, #tpu.memory_space<vmem>>, vector<128x64xbf16>
    %cst = arith.constant dense<0.000000e+00> : vector<8x64xf32>
    %3 = tpu.matmul %1, %2, %cst {dimension_numbers = #tpu.dot_dimension_numbers<[1], [0], [0], [1], [0, 0, 1, 1], [], []>} : vector<8x128xbf16>, vector<128x64xbf16>, vector<8x64xf32> -> vector<8x64xf32>
    %c0_3 = arith.constant 0 : index
    %c0_4 = arith.constant 0 : index
    %4 = vector.load %arg2[%c0_3, %c0_4] : memref<1x64xf32, #tpu.memory_space<vmem>>, vector<1x64xf32>
    %5 = vector.broadcast %4 : vector<1x64xf32> to vector<8x64xf32>
    %6 = arith.addf %3, %5 : vector<8x64xf32>
    %c0_5 = arith.constant 0 : index
    %c0_6 = arith.constant 0 : index
    %7 = vector.load %arg3[%c0_5, %c0_6] : memref<1x64xf32, #tpu.memory_space<vmem>>, vector<1x64xf32>
    %c0_7 = arith.constant 0 : index
    %c0_8 = arith.constant 0 : index
    %8 = vector.load %arg4[%c0_7, %c0_8] : memref<1x64xf32, #tpu.memory_space<vmem>>, vector<1x64xf32>
    %cst_9 = arith.constant dense<0.000000e+00> : vector<8xf32>
    %9 = vector.multi_reduction <add>, %6, %cst_9 [1] : vector<8x64xf32> to vector<8xf32>
    %10 = vector.shape_cast %9 : vector<8xf32> to vector<8x1xf32>
    %cst_10 = arith.constant 6.400000e+01 : f32
    %11 = vector.broadcast %cst_10 : f32 to vector<8x1xf32>
    %12 = arith.divf %10, %11 : vector<8x1xf32>
    %13 = vector.broadcast %12 : vector<8x1xf32> to vector<8x64xf32>
    %14 = arith.subf %6, %13 : vector<8x64xf32>
    %15 = arith.mulf %14, %14 : vector<8x64xf32>
    %cst_11 = arith.constant dense<0.000000e+00> : vector<8xf32>
    %16 = vector.multi_reduction <add>, %15, %cst_11 [1] : vector<8x64xf32> to vector<8xf32>
    %17 = vector.shape_cast %16 : vector<8xf32> to vector<8x1xf32>
    %cst_12 = arith.constant 6.400000e+01 : f32
    %18 = vector.broadcast %cst_12 : f32 to vector<8x1xf32>
    %19 = arith.divf %17, %18 : vector<8x1xf32>
    %cst_13 = arith.constant 9.99999974E-6 : f32
    %20 = vector.broadcast %cst_13 : f32 to vector<8x1xf32>
    %21 = arith.addf %19, %20 : vector<8x1xf32>
    %22 = math.rsqrt %21 : vector<8x1xf32>
    %23 = vector.broadcast %22 : vector<8x1xf32> to vector<8x64xf32>
    %24 = arith.mulf %14, %23 : vector<8x64xf32>
    %25 = vector.broadcast %7 : vector<1x64xf32> to vector<8x64xf32>
    %26 = arith.mulf %24, %25 : vector<8x64xf32>
    %27 = vector.broadcast %8 : vector<1x64xf32> to vector<8x64xf32>
    %28 = arith.addf %26, %27 : vector<8x64xf32>
    %c0_14 = arith.constant 0 : index
    %c0_15 = arith.constant 0 : index
    %29 = vector.load %arg5[%c0_14, %c0_15] : memref<8x64xf32, #tpu.memory_space<vmem>>, vector<8x64xf32>
    tpu.vector_store %arg5[%c0_14, %c0_15], %28 {strides = array<i32>} : memref<8x64xf32, #tpu.memory_space<vmem>>, vector<8x64xf32>,
    return
  }
}

module attributes {stable_mosaic.version = 11 : i64} {
  func.func @_ret_block_kernel(%arg0: i32, %arg1: memref<1x16x32xf32, #tpu.memory_space<vmem>>, %arg2: memref<2x16x16xf32, #tpu.memory_space<vmem>>, %arg3: memref<1x32xf32, #tpu.memory_space<vmem>>, %arg4: memref<1x32xf32, #tpu.memory_space<vmem>>, %arg5: memref<32x96xbf16, #tpu.memory_space<vmem>>, %arg6: memref<1x96xf32, #tpu.memory_space<vmem>>, %arg7: memref<32x32xbf16, #tpu.memory_space<vmem>>, %arg8: memref<1x32xf32, #tpu.memory_space<vmem>>, %arg9: memref<1x32xf32, #tpu.memory_space<vmem>>, %arg10: memref<1x32xf32, #tpu.memory_space<vmem>>, %arg11: memref<32x64xbf16, #tpu.memory_space<vmem>>, %arg12: memref<1x64xf32, #tpu.memory_space<vmem>>, %arg13: memref<64x32xbf16, #tpu.memory_space<vmem>>, %arg14: memref<1x32xf32, #tpu.memory_space<vmem>>, %arg15: memref<1x16x32xf32, #tpu.memory_space<vmem>>) attributes {dimension_semantics = [#tpu.dimension_semantics<parallel>], iteration_bounds = array<i64: 2>, scalar_prefetch = 0 : i64, scratch_operands = 0 : i64, tpu.core_type = #tpu.core_type<tc>, window_params = [{transform_indices = @transform_0, window_bounds = array<i64: 1, 16, 32>}, {pipeline_mode = #tpu.pipeline_mode<synchronous>, transform_indices = @transform_1, window_bounds = array<i64: 2, 16, 16>}, {pipeline_mode = #tpu.pipeline_mode<synchronous>, transform_indices = @transform_2, window_bounds = array<i64: 1, 32>}, {pipeline_mode = #tpu.pipeline_mode<synchronous>, transform_indices = @transform_3, window_bounds = array<i64: 1, 32>}, {pipeline_mode = #tpu.pipeline_mode<synchronous>, transform_indices = @transform_4, window_bounds = array<i64: 32, 96>}, {pipeline_mode = #tpu.pipeline_mode<synchronous>, transform_indices = @transform_5, window_bounds = array<i64: 1, 96>}, {pipeline_mode = #tpu.pipeline_mode<synchronous>, transform_indices = @transform_6, window_bounds = array<i64: 32, 32>}, {pipeline_mode = #tpu.pipeline_mode<synchronous>, transform_indices = @transform_7, window_bounds = array<i64: 1, 32>}, {pipeline_mode = #tpu.pipeline_mode<synchronous>, transform_indices = @transform_8, window_bounds = array<i64: 1, 32>}, {pipeline_mode = #tpu.pipeline_mode<synchronous>, transform_indices = @transform_9, window_bounds = array<i64: 1, 32>}, {pipeline_mode = #tpu.pipeline_mode<synchronous>, transform_indices = @transform_10, window_bounds = array<i64: 32, 64>}, {pipeline_mode = #tpu.pipeline_mode<synchronous>, transform_indices = @transform_11, window_bounds = array<i64: 1, 64>}, {pipeline_mode = #tpu.pipeline_mode<synchronous>, transform_indices = @transform_12, window_bounds = array<i64: 64, 32>}, {pipeline_mode = #tpu.pipeline_mode<synchronous>, transform_indices = @transform_13, window_bounds = array<i64: 1, 32>}, {transform_indices = @transform_14, window_bounds = array<i64: 1, 16, 32>}]} {
    %c0 = arith.constant 0 : index
    %c0_0 = arith.constant 0 : index
    %c0_1 = arith.constant 0 : index
    %0 = vector.load %arg1[%c0, %c0_0, %c0_1] : memref<1x16x32xf32, #tpu.memory_space<vmem>>, vector<1x16x32xf32>
    %1 = vector.shape_cast %0 : vector<1x16x32xf32> to vector<16x32xf32>
    %c0_2 = arith.constant 0 : index
    %c0_3 = arith.constant 0 : index
    %2 = vector.load %arg3[%c0_2, %c0_3] : memref<1x32xf32, #tpu.memory_space<vmem>>, vector<1x32xf32>
    %c0_4 = arith.constant 0 : index
    %c0_5 = arith.constant 0 : index
    %3 = vector.load %arg4[%c0_4, %c0_5] : memref<1x32xf32, #tpu.memory_space<vmem>>, vector<1x32xf32>
    %cst = arith.constant dense<0.000000e+00> : vector<16xf32>
    %4 = vector.multi_reduction <add>, %1, %cst [1] : vector<16x32xf32> to vector<16xf32>
    %5 = vector.shape_cast %4 : vector<16xf32> to vector<16x1xf32>
    %cst_6 = arith.constant 3.200000e+01 : f32
    %6 = vector.broadcast %cst_6 : f32 to vector<16x1xf32>
    %7 = arith.divf %5, %6 : vector<16x1xf32>
    %8 = vector.broadcast %7 : vector<16x1xf32> to vector<16x32xf32>
    %9 = arith.subf %1, %8 : vector<16x32xf32>
    %10 = arith.mulf %9, %9 : vector<16x32xf32>
    %cst_7 = arith.constant dense<0.000000e+00> : vector<16xf32>
    %11 = vector.multi_reduction <add>, %10, %cst_7 [1] : vector<16x32xf32> to vector<16xf32>
    %12 = vector.shape_cast %11 : vector<16xf32> to vector<16x1xf32>
    %cst_8 = arith.constant 3.200000e+01 : f32
    %13 = vector.broadcast %cst_8 : f32 to vector<16x1xf32>
    %14 = arith.divf %12, %13 : vector<16x1xf32>
    %cst_9 = arith.constant 9.99999974E-6 : f32
    %15 = vector.broadcast %cst_9 : f32 to vector<16x1xf32>
    %16 = arith.addf %14, %15 : vector<16x1xf32>
    %17 = math.rsqrt %16 : vector<16x1xf32>
    %18 = vector.broadcast %17 : vector<16x1xf32> to vector<16x32xf32>
    %19 = arith.mulf %9, %18 : vector<16x32xf32>
    %20 = vector.broadcast %2 : vector<1x32xf32> to vector<16x32xf32>
    %21 = arith.mulf %19, %20 : vector<16x32xf32>
    %22 = vector.broadcast %3 : vector<1x32xf32> to vector<16x32xf32>
    %23 = arith.addf %21, %22 : vector<16x32xf32>
    %24 = arith.truncf %23 : vector<16x32xf32> to vector<16x32xbf16>
    %c0_10 = arith.constant 0 : index
    %c0_11 = arith.constant 0 : index
    %25 = vector.load %arg5[%c0_10, %c0_11] : memref<32x96xbf16, #tpu.memory_space<vmem>>, vector<32x96xbf16>
    %cst_12 = arith.constant dense<0.000000e+00> : vector<16x96xf32>
    %26 = tpu.matmul %24, %25, %cst_12 {dimension_numbers = #tpu.dot_dimension_numbers<[1], [0], [0], [1], [0, 0, 1, 1], [], []>} : vector<16x32xbf16>, vector<32x96xbf16>, vector<16x96xf32> -> vector<16x96xf32>
    %c0_13 = arith.constant 0 : index
    %c0_14 = arith.constant 0 : index
    %27 = vector.load %arg6[%c0_13, %c0_14] : memref<1x96xf32, #tpu.memory_space<vmem>>, vector<1x96xf32>
    %28 = vector.broadcast %27 : vector<1x96xf32> to vector<16x96xf32>
    %29 = arith.addf %26, %28 : vector<16x96xf32>
    %30 = vector.extract_strided_slice %29 {offsets = [0, 0], sizes = [16, 32], strides = [1, 1]} : vector<16x96xf32> to vector<16x32xf32>
    %cst_15 = arith.constant 2.500000e-01 : f32
    %31 = vector.broadcast %cst_15 : f32 to vector<16x32xf32>
    %32 = arith.mulf %30, %31 : vector<16x32xf32>
    %33 = vector.extract_strided_slice %29 {offsets = [0, 32], sizes = [16, 32], strides = [1, 1]} : vector<16x96xf32> to vector<16x32xf32>
    %34 = vector.extract_strided_slice %29 {offsets = [0, 64], sizes = [16, 32], strides = [1, 1]} : vector<16x96xf32> to vector<16x32xf32>
    %35 = vector.extract_strided_slice %32 {offsets = [0, 0], sizes = [16, 16], strides = [1, 1]} : vector<16x32xf32> to vector<16x16xf32>
    %36 = arith.truncf %35 : vector<16x16xf32> to vector<16x16xbf16>
    %37 = vector.extract_strided_slice %33 {offsets = [0, 0], sizes = [16, 16], strides = [1, 1]} : vector<16x32xf32> to vector<16x16xf32>
    %38 = arith.truncf %37 : vector<16x16xf32> to vector<16x16xbf16>
    %39 = vector.extract_strided_slice %34 {offsets = [0, 0], sizes = [16, 16], strides = [1, 1]} : vector<16x32xf32> to vector<16x16xf32>
    %40 = arith.truncf %39 : vector<16x16xf32> to vector<16x16xbf16>
    %41 = tpu.transpose %38, [1, 0] : vector<16x16xbf16> -> vector<16x16xbf16>
    %cst_16 = arith.constant dense<0.000000e+00> : vector<16x16xf32>
    %42 = tpu.matmul %36, %41, %cst_16 {dimension_numbers = #tpu.dot_dimension_numbers<[1], [0], [0], [1], [0, 0, 1, 1], [], []>} : vector<16x16xbf16>, vector<16x16xbf16>, vector<16x16xf32> -> vector<16x16xf32>
    %c0_17 = arith.constant 0 : index
    %c0_18 = arith.constant 0 : index
    %c0_19 = arith.constant 0 : index
    %43 = vector.load %arg2[%c0_17, %c0_18, %c0_19] : memref<2x16x16xf32, #tpu.memory_space<vmem>>, vector<1x16x16xf32>
    %44 = vector.shape_cast %43 : vector<1x16x16xf32> to vector<16x16xf32>
    %45 = arith.addf %42, %44 : vector<16x16xf32>
    %cst_20 = arith.constant dense<0xFF800000> : vector<16xf32>
    %46 = vector.multi_reduction <maximumf>, %45, %cst_20 [1] : vector<16x16xf32> to vector<16xf32>
    %47 = vector.shape_cast %46 : vector<16xf32> to vector<16x1xf32>
    %48 = vector.broadcast %47 : vector<16x1xf32> to vector<16x16xf32>
    %49 = arith.subf %45, %48 : vector<16x16xf32>
    %50 = math.exp %49 : vector<16x16xf32>
    %cst_21 = arith.constant dense<0.000000e+00> : vector<16xf32>
    %51 = vector.multi_reduction <add>, %50, %cst_21 [1] : vector<16x16xf32> to vector<16xf32>
    %52 = vector.shape_cast %51 : vector<16xf32> to vector<16x1xf32>
    %53 = tpu.reciprocal %52 {approx = true} : vector<16x1xf32> -> vector<16x1xf32>
    %54 = vector.broadcast %53 : vector<16x1xf32> to vector<16x16xf32>
    %55 = arith.mulf %50, %54 : vector<16x16xf32>
    %56 = arith.truncf %55 : vector<16x16xf32> to vector<16x16xbf16>
    %cst_22 = arith.constant dense<0.000000e+00> : vector<16x16xf32>
    %57 = tpu.matmul %56, %40, %cst_22 {dimension_numbers = #tpu.dot_dimension_numbers<[1], [0], [0], [1], [0, 0, 1, 1], [], []>} : vector<16x16xbf16>, vector<16x16xbf16>, vector<16x16xf32> -> vector<16x16xf32>
    %58 = vector.extract_strided_slice %32 {offsets = [0, 16], sizes = [16, 16], strides = [1, 1]} : vector<16x32xf32> to vector<16x16xf32>
    %59 = arith.truncf %58 : vector<16x16xf32> to vector<16x16xbf16>
    %60 = vector.extract_strided_slice %33 {offsets = [0, 16], sizes = [16, 16], strides = [1, 1]} : vector<16x32xf32> to vector<16x16xf32>
    %61 = arith.truncf %60 : vector<16x16xf32> to vector<16x16xbf16>
    %62 = vector.extract_strided_slice %34 {offsets = [0, 16], sizes = [16, 16], strides = [1, 1]} : vector<16x32xf32> to vector<16x16xf32>
    %63 = arith.truncf %62 : vector<16x16xf32> to vector<16x16xbf16>
    %64 = tpu.transpose %61, [1, 0] : vector<16x16xbf16> -> vector<16x16xbf16>
    %cst_23 = arith.constant dense<0.000000e+00> : vector<16x16xf32>
    %65 = tpu.matmul %59, %64, %cst_23 {dimension_numbers = #tpu.dot_dimension_numbers<[1], [0], [0], [1], [0, 0, 1, 1], [], []>} : vector<16x16xbf16>, vector<16x16xbf16>, vector<16x16xf32> -> vector<16x16xf32>
    %c1 = arith.constant 1 : index
    %c0_24 = arith.constant 0 : index
    %c0_25 = arith.constant 0 : index
    %66 = vector.load %arg2[%c1, %c0_24, %c0_25] : memref<2x16x16xf32, #tpu.memory_space<vmem>>, vector<1x16x16xf32>
    %67 = vector.shape_cast %66 : vector<1x16x16xf32> to vector<16x16xf32>
    %68 = arith.addf %65, %67 : vector<16x16xf32>
    %cst_26 = arith.constant dense<0xFF800000> : vector<16xf32>
    %69 = vector.multi_reduction <maximumf>, %68, %cst_26 [1] : vector<16x16xf32> to vector<16xf32>
    %70 = vector.shape_cast %69 : vector<16xf32> to vector<16x1xf32>
    %71 = vector.broadcast %70 : vector<16x1xf32> to vector<16x16xf32>
    %72 = arith.subf %68, %71 : vector<16x16xf32>
    %73 = math.exp %72 : vector<16x16xf32>
    %cst_27 = arith.constant dense<0.000000e+00> : vector<16xf32>
    %74 = vector.multi_reduction <add>, %73, %cst_27 [1] : vector<16x16xf32> to vector<16xf32>
    %75 = vector.shape_cast %74 : vector<16xf32> to vector<16x1xf32>
    %76 = tpu.reciprocal %75 {approx = true} : vector<16x1xf32> -> vector<16x1xf32>
    %77 = vector.broadcast %76 : vector<16x1xf32> to vector<16x16xf32>
    %78 = arith.mulf %73, %77 : vector<16x16xf32>
    %79 = arith.truncf %78 : vector<16x16xf32> to vector<16x16xbf16>
    %cst_28 = arith.constant dense<0.000000e+00> : vector<16x16xf32>
    %80 = tpu.matmul %79, %63, %cst_28 {dimension_numbers = #tpu.dot_dimension_numbers<[1], [0], [0], [1], [0, 0, 1, 1], [], []>} : vector<16x16xbf16>, vector<16x16xbf16>, vector<16x16xf32> -> vector<16x16xf32>
    %81 = tpu.concatenate %57, %80 in 1 : vector<16x16xf32>, vector<16x16xf32> -> vector<16x32xf32>
    %82 = arith.truncf %81 : vector<16x32xf32> to vector<16x32xbf16>
    %c0_29 = arith.constant 0 : index
    %c0_30 = arith.constant 0 : index
    %83 = vector.load %arg7[%c0_29, %c0_30] : memref<32x32xbf16, #tpu.memory_space<vmem>>, vector<32x32xbf16>
    %cst_31 = arith.constant dense<0.000000e+00> : vector<16x32xf32>
    %84 = tpu.matmul %82, %83, %cst_31 {dimension_numbers = #tpu.dot_dimension_numbers<[1], [0], [0], [1], [0, 0, 1, 1], [], []>} : vector<16x32xbf16>, vector<32x32xbf16>, vector<16x32xf32> -> vector<16x32xf32>
    %c0_32 = arith.constant 0 : index
    %c0_33 = arith.constant 0 : index
    %85 = vector.load %arg8[%c0_32, %c0_33] : memref<1x32xf32, #tpu.memory_space<vmem>>, vector<1x32xf32>
    %86 = vector.broadcast %85 : vector<1x32xf32> to vector<16x32xf32>
    %87 = arith.addf %84, %86 : vector<16x32xf32>
    %88 = arith.addf %1, %87 : vector<16x32xf32>
    %c0_34 = arith.constant 0 : index
    %c0_35 = arith.constant 0 : index
    %89 = vector.load %arg9[%c0_34, %c0_35] : memref<1x32xf32, #tpu.memory_space<vmem>>, vector<1x32xf32>
    %c0_36 = arith.constant 0 : index
    %c0_37 = arith.constant 0 : index
    %90 = vector.load %arg10[%c0_36, %c0_37] : memref<1x32xf32, #tpu.memory_space<vmem>>, vector<1x32xf32>
    %cst_38 = arith.constant dense<0.000000e+00> : vector<16xf32>
    %91 = vector.multi_reduction <add>, %88, %cst_38 [1] : vector<16x32xf32> to vector<16xf32>
    %92 = vector.shape_cast %91 : vector<16xf32> to vector<16x1xf32>
    %cst_39 = arith.constant 3.200000e+01 : f32
    %93 = vector.broadcast %cst_39 : f32 to vector<16x1xf32>
    %94 = arith.divf %92, %93 : vector<16x1xf32>
    %95 = vector.broadcast %94 : vector<16x1xf32> to vector<16x32xf32>
    %96 = arith.subf %88, %95 : vector<16x32xf32>
    %97 = arith.mulf %96, %96 : vector<16x32xf32>
    %cst_40 = arith.constant dense<0.000000e+00> : vector<16xf32>
    %98 = vector.multi_reduction <add>, %97, %cst_40 [1] : vector<16x32xf32> to vector<16xf32>
    %99 = vector.shape_cast %98 : vector<16xf32> to vector<16x1xf32>
    %cst_41 = arith.constant 3.200000e+01 : f32
    %100 = vector.broadcast %cst_41 : f32 to vector<16x1xf32>
    %101 = arith.divf %99, %100 : vector<16x1xf32>
    %cst_42 = arith.constant 9.99999974E-6 : f32
    %102 = vector.broadcast %cst_42 : f32 to vector<16x1xf32>
    %103 = arith.addf %101, %102 : vector<16x1xf32>
    %104 = math.rsqrt %103 : vector<16x1xf32>
    %105 = vector.broadcast %104 : vector<16x1xf32> to vector<16x32xf32>
    %106 = arith.mulf %96, %105 : vector<16x32xf32>
    %107 = vector.broadcast %89 : vector<1x32xf32> to vector<16x32xf32>
    %108 = arith.mulf %106, %107 : vector<16x32xf32>
    %109 = vector.broadcast %90 : vector<1x32xf32> to vector<16x32xf32>
    %110 = arith.addf %108, %109 : vector<16x32xf32>
    %111 = arith.truncf %110 : vector<16x32xf32> to vector<16x32xbf16>
    %c0_43 = arith.constant 0 : index
    %c0_44 = arith.constant 0 : index
    %112 = vector.load %arg11[%c0_43, %c0_44] : memref<32x64xbf16, #tpu.memory_space<vmem>>, vector<32x64xbf16>
    %cst_45 = arith.constant dense<0.000000e+00> : vector<16x64xf32>
    %113 = tpu.matmul %111, %112, %cst_45 {dimension_numbers = #tpu.dot_dimension_numbers<[1], [0], [0], [1], [0, 0, 1, 1], [], []>} : vector<16x32xbf16>, vector<32x64xbf16>, vector<16x64xf32> -> vector<16x64xf32>
    %c0_46 = arith.constant 0 : index
    %c0_47 = arith.constant 0 : index
    %114 = vector.load %arg12[%c0_46, %c0_47] : memref<1x64xf32, #tpu.memory_space<vmem>>, vector<1x64xf32>
    %115 = vector.broadcast %114 : vector<1x64xf32> to vector<16x64xf32>
    %116 = arith.addf %113, %115 : vector<16x64xf32>
    %117 = arith.mulf %116, %116 : vector<16x64xf32>
    %118 = arith.mulf %116, %117 : vector<16x64xf32>
    %cst_48 = arith.constant 4.471500e-02 : f32
    %119 = vector.broadcast %cst_48 : f32 to vector<16x64xf32>
    %120 = arith.mulf %119, %118 : vector<16x64xf32>
    %121 = arith.addf %116, %120 : vector<16x64xf32>
    %cst_49 = arith.constant 0.797884583 : f32
    %122 = vector.broadcast %cst_49 : f32 to vector<16x64xf32>
    %123 = arith.mulf %122, %121 : vector<16x64xf32>
    %124 = math.tanh %123 : vector<16x64xf32>
    %cst_50 = arith.constant 1.000000e+00 : f32
    %125 = vector.broadcast %cst_50 : f32 to vector<16x64xf32>
    %126 = arith.addf %125, %124 : vector<16x64xf32>
    %cst_51 = arith.constant 5.000000e-01 : f32
    %127 = vector.broadcast %cst_51 : f32 to vector<16x64xf32>
    %128 = arith.mulf %127, %126 : vector<16x64xf32>
    %129 = arith.mulf %116, %128 : vector<16x64xf32>
    %130 = arith.truncf %129 : vector<16x64xf32> to vector<16x64xbf16>
    %c0_52 = arith.constant 0 : index
    %c0_53 = arith.constant 0 : index
    %131 = vector.load %arg13[%c0_52, %c0_53] : memref<64x32xbf16, #tpu.memory_space<vmem>>, vector<64x32xbf16>
    %cst_54 = arith.constant dense<0.000000e+00> : vector<16x32xf32>
    %132 = tpu.matmul %130, %131, %cst_54 {dimension_numbers = #tpu.dot_dimension_numbers<[1], [0], [0], [1], [0, 0, 1, 1], [], []>} : vector<16x64xbf16>, vector<64x32xbf16>, vector<16x32xf32> -> vector<16x32xf32>
    %c0_55 = arith.constant 0 : index
    %c0_56 = arith.constant 0 : index
    %133 = vector.load %arg14[%c0_55, %c0_56] : memref<1x32xf32, #tpu.memory_space<vmem>>, vector<1x32xf32>
    %134 = vector.broadcast %133 : vector<1x32xf32> to vector<16x32xf32>
    %135 = arith.addf %132, %134 : vector<16x32xf32>
    %136 = arith.addf %88, %135 : vector<16x32xf32>
    %c0_57 = arith.constant 0 : index
    %c0_58 = arith.constant 0 : index
    %c0_59 = arith.constant 0 : index
    %137 = vector.load %arg15[%c0_57, %c0_58, %c0_59] : memref<1x16x32xf32, #tpu.memory_space<vmem>>, vector<1x16x32xf32>
    %138 = vector.shape_cast %137 : vector<1x16x32xf32> to vector<16x32xf32>
    %139 = vector.shape_cast %136 : vector<16x32xf32> to vector<1x16x32xf32>
    tpu.vector_store %arg15[%c0_57, %c0_58, %c0_59], %139 {strides = array<i32>} : memref<1x16x32xf32, #tpu.memory_space<vmem>>, vector<1x16x32xf32>,
    return
  }
  func.func @transform_0(%arg0: i32) -> (i32, i32, i32) {
    %c0_i32 = arith.constant 0 : i32
    %c0_i32_0 = arith.constant 0 : i32
    %c0_i32_1 = arith.constant 0 : i32
    return %arg0, %c0_i32, %c0_i32_0 : i32, i32, i32
  }
  func.func @transform_1(%arg0: i32) -> (i32, i32, i32) {
    %c0_i32 = arith.constant 0 : i32
    %c0_i32_0 = arith.constant 0 : i32
    %c0_i32_1 = arith.constant 0 : i32
    %c0_i32_2 = arith.constant 0 : i32
    return %c0_i32, %c0_i32_0, %c0_i32_1 : i32, i32, i32
  }
  func.func @transform_2(%arg0: i32) -> (i32, i32) {
    %c0_i32 = arith.constant 0 : i32
    %c0_i32_0 = arith.constant 0 : i32
    %c0_i32_1 = arith.constant 0 : i32
    return %c0_i32, %c0_i32_0 : i32, i32
  }
  func.func @transform_3(%arg0: i32) -> (i32, i32) {
    %c0_i32 = arith.constant 0 : i32
    %c0_i32_0 = arith.constant 0 : i32
    %c0_i32_1 = arith.constant 0 : i32
    return %c0_i32, %c0_i32_0 : i32, i32
  }
  func.func @transform_4(%arg0: i32) -> (i32, i32) {
    %c0_i32 = arith.constant 0 : i32
    %c0_i32_0 = arith.constant 0 : i32
    %c0_i32_1 = arith.constant 0 : i32
    return %c0_i32, %c0_i32_0 : i32, i32
  }
  func.func @transform_5(%arg0: i32) -> (i32, i32) {
    %c0_i32 = arith.constant 0 : i32
    %c0_i32_0 = arith.constant 0 : i32
    %c0_i32_1 = arith.constant 0 : i32
    return %c0_i32, %c0_i32_0 : i32, i32
  }
  func.func @transform_6(%arg0: i32) -> (i32, i32) {
    %c0_i32 = arith.constant 0 : i32
    %c0_i32_0 = arith.constant 0 : i32
    %c0_i32_1 = arith.constant 0 : i32
    return %c0_i32, %c0_i32_0 : i32, i32
  }
  func.func @transform_7(%arg0: i32) -> (i32, i32) {
    %c0_i32 = arith.constant 0 : i32
    %c0_i32_0 = arith.constant 0 : i32
    %c0_i32_1 = arith.constant 0 : i32
    return %c0_i32, %c0_i32_0 : i32, i32
  }
  func.func @transform_8(%arg0: i32) -> (i32, i32) {
    %c0_i32 = arith.constant 0 : i32
    %c0_i32_0 = arith.constant 0 : i32
    %c0_i32_1 = arith.constant 0 : i32
    return %c0_i32, %c0_i32_0 : i32, i32
  }
  func.func @transform_9(%arg0: i32) -> (i32, i32) {
    %c0_i32 = arith.constant 0 : i32
    %c0_i32_0 = arith.constant 0 : i32
    %c0_i32_1 = arith.constant 0 : i32
    return %c0_i32, %c0_i32_0 : i32, i32
  }
  func.func @transform_10(%arg0: i32) -> (i32, i32) {
    %c0_i32 = arith.constant 0 : i32
    %c0_i32_0 = arith.constant 0 : i32
    %c0_i32_1 = arith.constant 0 : i32
    return %c0_i32, %c0_i32_0 : i32, i32
  }
  func.func @transform_11(%arg0: i32) -> (i32, i32) {
    %c0_i32 = arith.constant 0 : i32
    %c0_i32_0 = arith.constant 0 : i32
    %c0_i32_1 = arith.constant 0 : i32
    return %c0_i32, %c0_i32_0 : i32, i32
  }
  func.func @transform_12(%arg0: i32) -> (i32, i32) {
    %c0_i32 = arith.constant 0 : i32
    %c0_i32_0 = arith.constant 0 : i32
    %c0_i32_1 = arith.constant 0 : i32
    return %c0_i32, %c0_i32_0 : i32, i32
  }
  func.func @transform_13(%arg0: i32) -> (i32, i32) {
    %c0_i32 = arith.constant 0 : i32
    %c0_i32_0 = arith.constant 0 : i32
    %c0_i32_1 = arith.constant 0 : i32
    return %c0_i32, %c0_i32_0 : i32, i32
  }
  func.func @transform_14(%arg0: i32) -> (i32, i32, i32) {
    %c0_i32 = arith.constant 0 : i32
    %c0_i32_0 = arith.constant 0 : i32
    %c0_i32_1 = arith.constant 0 : i32
    return %arg0, %c0_i32, %c0_i32_0 : i32, i32, i32
  }
}

module attributes {stable_mosaic.version = 11 : i64} {
  func.func @_ret_block_kernel(%arg0: i32, %arg1: memref<1x4x64xf32, #tpu.memory_space<vmem>>, %arg2: memref<4x4x4xf32, #tpu.memory_space<vmem>>, %arg3: memref<1x64xf32, #tpu.memory_space<vmem>>, %arg4: memref<1x64xf32, #tpu.memory_space<vmem>>, %arg5: memref<64x192xbf16, #tpu.memory_space<vmem>>, %arg6: memref<1x192xf32, #tpu.memory_space<vmem>>, %arg7: memref<64x64xbf16, #tpu.memory_space<vmem>>, %arg8: memref<1x64xf32, #tpu.memory_space<vmem>>, %arg9: memref<1x64xf32, #tpu.memory_space<vmem>>, %arg10: memref<1x64xf32, #tpu.memory_space<vmem>>, %arg11: memref<64x128xbf16, #tpu.memory_space<vmem>>, %arg12: memref<1x128xf32, #tpu.memory_space<vmem>>, %arg13: memref<128x64xbf16, #tpu.memory_space<vmem>>, %arg14: memref<1x64xf32, #tpu.memory_space<vmem>>, %arg15: memref<1x4x64xf32, #tpu.memory_space<vmem>>) attributes {dimension_semantics = [#tpu.dimension_semantics<parallel>], iteration_bounds = array<i64: 2>, scalar_prefetch = 0 : i64, scratch_operands = 0 : i64, tpu.core_type = #tpu.core_type<tc>, window_params = [{transform_indices = @transform_0, window_bounds = array<i64: 1, 4, 64>}, {pipeline_mode = #tpu.pipeline_mode<synchronous>, transform_indices = @transform_1, window_bounds = array<i64: 4, 4, 4>}, {pipeline_mode = #tpu.pipeline_mode<synchronous>, transform_indices = @transform_2, window_bounds = array<i64: 1, 64>}, {pipeline_mode = #tpu.pipeline_mode<synchronous>, transform_indices = @transform_3, window_bounds = array<i64: 1, 64>}, {pipeline_mode = #tpu.pipeline_mode<synchronous>, transform_indices = @transform_4, window_bounds = array<i64: 64, 192>}, {pipeline_mode = #tpu.pipeline_mode<synchronous>, transform_indices = @transform_5, window_bounds = array<i64: 1, 192>}, {pipeline_mode = #tpu.pipeline_mode<synchronous>, transform_indices = @transform_6, window_bounds = array<i64: 64, 64>}, {pipeline_mode = #tpu.pipeline_mode<synchronous>, transform_indices = @transform_7, window_bounds = array<i64: 1, 64>}, {pipeline_mode = #tpu.pipeline_mode<synchronous>, transform_indices = @transform_8, window_bounds = array<i64: 1, 64>}, {pipeline_mode = #tpu.pipeline_mode<synchronous>, transform_indices = @transform_9, window_bounds = array<i64: 1, 64>}, {pipeline_mode = #tpu.pipeline_mode<synchronous>, transform_indices = @transform_10, window_bounds = array<i64: 64, 128>}, {pipeline_mode = #tpu.pipeline_mode<synchronous>, transform_indices = @transform_11, window_bounds = array<i64: 1, 128>}, {pipeline_mode = #tpu.pipeline_mode<synchronous>, transform_indices = @transform_12, window_bounds = array<i64: 128, 64>}, {pipeline_mode = #tpu.pipeline_mode<synchronous>, transform_indices = @transform_13, window_bounds = array<i64: 1, 64>}, {transform_indices = @transform_14, window_bounds = array<i64: 1, 4, 64>}]} {
    %c0 = arith.constant 0 : index
    %c0_0 = arith.constant 0 : index
    %c0_1 = arith.constant 0 : index
    %0 = vector.load %arg1[%c0, %c0_0, %c0_1] : memref<1x4x64xf32, #tpu.memory_space<vmem>>, vector<1x4x64xf32>
    %1 = vector.shape_cast %0 : vector<1x4x64xf32> to vector<4x64xf32>
    %c0_2 = arith.constant 0 : index
    %c0_3 = arith.constant 0 : index
    %2 = vector.load %arg3[%c0_2, %c0_3] : memref<1x64xf32, #tpu.memory_space<vmem>>, vector<1x64xf32>
    %c0_4 = arith.constant 0 : index
    %c0_5 = arith.constant 0 : index
    %3 = vector.load %arg4[%c0_4, %c0_5] : memref<1x64xf32, #tpu.memory_space<vmem>>, vector<1x64xf32>
    %cst = arith.constant dense<0.000000e+00> : vector<4xf32>
    %4 = vector.multi_reduction <add>, %1, %cst [1] : vector<4x64xf32> to vector<4xf32>
    %5 = vector.shape_cast %4 : vector<4xf32> to vector<4x1xf32>
    %cst_6 = arith.constant 6.400000e+01 : f32
    %6 = vector.broadcast %cst_6 : f32 to vector<4x1xf32>
    %7 = arith.divf %5, %6 : vector<4x1xf32>
    %8 = vector.broadcast %7 : vector<4x1xf32> to vector<4x64xf32>
    %9 = arith.subf %1, %8 : vector<4x64xf32>
    %10 = arith.mulf %9, %9 : vector<4x64xf32>
    %cst_7 = arith.constant dense<0.000000e+00> : vector<4xf32>
    %11 = vector.multi_reduction <add>, %10, %cst_7 [1] : vector<4x64xf32> to vector<4xf32>
    %12 = vector.shape_cast %11 : vector<4xf32> to vector<4x1xf32>
    %cst_8 = arith.constant 6.400000e+01 : f32
    %13 = vector.broadcast %cst_8 : f32 to vector<4x1xf32>
    %14 = arith.divf %12, %13 : vector<4x1xf32>
    %cst_9 = arith.constant 9.99999974E-6 : f32
    %15 = vector.broadcast %cst_9 : f32 to vector<4x1xf32>
    %16 = arith.addf %14, %15 : vector<4x1xf32>
    %17 = math.rsqrt %16 : vector<4x1xf32>
    %18 = vector.broadcast %17 : vector<4x1xf32> to vector<4x64xf32>
    %19 = arith.mulf %9, %18 : vector<4x64xf32>
    %20 = vector.broadcast %2 : vector<1x64xf32> to vector<4x64xf32>
    %21 = arith.mulf %19, %20 : vector<4x64xf32>
    %22 = vector.broadcast %3 : vector<1x64xf32> to vector<4x64xf32>
    %23 = arith.addf %21, %22 : vector<4x64xf32>
    %24 = arith.truncf %23 : vector<4x64xf32> to vector<4x64xbf16>
    %c0_10 = arith.constant 0 : index
    %c0_11 = arith.constant 0 : index
    %25 = vector.load %arg5[%c0_10, %c0_11] : memref<64x192xbf16, #tpu.memory_space<vmem>>, vector<64x192xbf16>
    %cst_12 = arith.constant dense<0.000000e+00> : vector<4x192xf32>
    %26 = tpu.matmul %24, %25, %cst_12 {dimension_numbers = #tpu.dot_dimension_numbers<[1], [0], [0], [1], [0, 0, 1, 1], [], []>} : vector<4x64xbf16>, vector<64x192xbf16>, vector<4x192xf32> -> vector<4x192xf32>
    %c0_13 = arith.constant 0 : index
    %c0_14 = arith.constant 0 : index
    %27 = vector.load %arg6[%c0_13, %c0_14] : memref<1x192xf32, #tpu.memory_space<vmem>>, vector<1x192xf32>
    %28 = vector.broadcast %27 : vector<1x192xf32> to vector<4x192xf32>
    %29 = arith.addf %26, %28 : vector<4x192xf32>
    %30 = vector.extract_strided_slice %29 {offsets = [0, 0], sizes = [4, 64], strides = [1, 1]} : vector<4x192xf32> to vector<4x64xf32>
    %cst_15 = arith.constant 2.500000e-01 : f32
    %31 = vector.broadcast %cst_15 : f32 to vector<4x64xf32>
    %32 = arith.mulf %30, %31 : vector<4x64xf32>
    %33 = vector.extract_strided_slice %29 {offsets = [0, 64], sizes = [4, 64], strides = [1, 1]} : vector<4x192xf32> to vector<4x64xf32>
    %34 = vector.extract_strided_slice %29 {offsets = [0, 128], sizes = [4, 64], strides = [1, 1]} : vector<4x192xf32> to vector<4x64xf32>
    %35 = vector.extract_strided_slice %32 {offsets = [0, 0], sizes = [4, 16], strides = [1, 1]} : vector<4x64xf32> to vector<4x16xf32>
    %36 = arith.truncf %35 : vector<4x16xf32> to vector<4x16xbf16>
    %37 = vector.extract_strided_slice %33 {offsets = [0, 0], sizes = [4, 16], strides = [1, 1]} : vector<4x64xf32> to vector<4x16xf32>
    %38 = arith.truncf %37 : vector<4x16xf32> to vector<4x16xbf16>
    %39 = vector.extract_strided_slice %34 {offsets = [0, 0], sizes = [4, 16], strides = [1, 1]} : vector<4x64xf32> to vector<4x16xf32>
    %40 = arith.truncf %39 : vector<4x16xf32> to vector<4x16xbf16>
    %41 = tpu.transpose %38, [1, 0] : vector<4x16xbf16> -> vector<16x4xbf16>
    %cst_16 = arith.constant dense<0.000000e+00> : vector<4x4xf32>
    %42 = tpu.matmul %36, %41, %cst_16 {dimension_numbers = #tpu.dot_dimension_numbers<[1], [0], [0], [1], [0, 0, 1, 1], [], []>} : vector<4x16xbf16>, vector<16x4xbf16>, vector<4x4xf32> -> vector<4x4xf32>
    %c0_17 = arith.constant 0 : index
    %c0_18 = arith.constant 0 : index
    %c0_19 = arith.constant 0 : index
    %43 = vector.load %arg2[%c0_17, %c0_18, %c0_19] : memref<4x4x4xf32, #tpu.memory_space<vmem>>, vector<1x4x4xf32>
    %44 = vector.shape_cast %43 : vector<1x4x4xf32> to vector<4x4xf32>
    %45 = arith.addf %42, %44 : vector<4x4xf32>
    %cst_20 = arith.constant dense<0xFF800000> : vector<4xf32>
    %46 = vector.multi_reduction <maximumf>, %45, %cst_20 [1] : vector<4x4xf32> to vector<4xf32>
    %47 = vector.shape_cast %46 : vector<4xf32> to vector<4x1xf32>
    %48 = vector.broadcast %47 : vector<4x1xf32> to vector<4x4xf32>
    %49 = arith.subf %45, %48 : vector<4x4xf32>
    %50 = math.exp %49 : vector<4x4xf32>
    %cst_21 = arith.constant dense<0.000000e+00> : vector<4xf32>
    %51 = vector.multi_reduction <add>, %50, %cst_21 [1] : vector<4x4xf32> to vector<4xf32>
    %52 = vector.shape_cast %51 : vector<4xf32> to vector<4x1xf32>
    %53 = tpu.reciprocal %52 {approx = true} : vector<4x1xf32> -> vector<4x1xf32>
    %54 = vector.broadcast %53 : vector<4x1xf32> to vector<4x4xf32>
    %55 = arith.mulf %50, %54 : vector<4x4xf32>
    %56 = arith.truncf %55 : vector<4x4xf32> to vector<4x4xbf16>
    %cst_22 = arith.constant dense<0.000000e+00> : vector<4x16xf32>
    %57 = tpu.matmul %56, %40, %cst_22 {dimension_numbers = #tpu.dot_dimension_numbers<[1], [0], [0], [1], [0, 0, 1, 1], [], []>} : vector<4x4xbf16>, vector<4x16xbf16>, vector<4x16xf32> -> vector<4x16xf32>
    %58 = vector.extract_strided_slice %32 {offsets = [0, 16], sizes = [4, 16], strides = [1, 1]} : vector<4x64xf32> to vector<4x16xf32>
    %59 = arith.truncf %58 : vector<4x16xf32> to vector<4x16xbf16>
    %60 = vector.extract_strided_slice %33 {offsets = [0, 16], sizes = [4, 16], strides = [1, 1]} : vector<4x64xf32> to vector<4x16xf32>
    %61 = arith.truncf %60 : vector<4x16xf32> to vector<4x16xbf16>
    %62 = vector.extract_strided_slice %34 {offsets = [0, 16], sizes = [4, 16], strides = [1, 1]} : vector<4x64xf32> to vector<4x16xf32>
    %63 = arith.truncf %62 : vector<4x16xf32> to vector<4x16xbf16>
    %64 = tpu.transpose %61, [1, 0] : vector<4x16xbf16> -> vector<16x4xbf16>
    %cst_23 = arith.constant dense<0.000000e+00> : vector<4x4xf32>
    %65 = tpu.matmul %59, %64, %cst_23 {dimension_numbers = #tpu.dot_dimension_numbers<[1], [0], [0], [1], [0, 0, 1, 1], [], []>} : vector<4x16xbf16>, vector<16x4xbf16>, vector<4x4xf32> -> vector<4x4xf32>
    %c1 = arith.constant 1 : index
    %c0_24 = arith.constant 0 : index
    %c0_25 = arith.constant 0 : index
    %66 = vector.load %arg2[%c1, %c0_24, %c0_25] : memref<4x4x4xf32, #tpu.memory_space<vmem>>, vector<1x4x4xf32>
    %67 = vector.shape_cast %66 : vector<1x4x4xf32> to vector<4x4xf32>
    %68 = arith.addf %65, %67 : vector<4x4xf32>
    %cst_26 = arith.constant dense<0xFF800000> : vector<4xf32>
    %69 = vector.multi_reduction <maximumf>, %68, %cst_26 [1] : vector<4x4xf32> to vector<4xf32>
    %70 = vector.shape_cast %69 : vector<4xf32> to vector<4x1xf32>
    %71 = vector.broadcast %70 : vector<4x1xf32> to vector<4x4xf32>
    %72 = arith.subf %68, %71 : vector<4x4xf32>
    %73 = math.exp %72 : vector<4x4xf32>
    %cst_27 = arith.constant dense<0.000000e+00> : vector<4xf32>
    %74 = vector.multi_reduction <add>, %73, %cst_27 [1] : vector<4x4xf32> to vector<4xf32>
    %75 = vector.shape_cast %74 : vector<4xf32> to vector<4x1xf32>
    %76 = tpu.reciprocal %75 {approx = true} : vector<4x1xf32> -> vector<4x1xf32>
    %77 = vector.broadcast %76 : vector<4x1xf32> to vector<4x4xf32>
    %78 = arith.mulf %73, %77 : vector<4x4xf32>
    %79 = arith.truncf %78 : vector<4x4xf32> to vector<4x4xbf16>
    %cst_28 = arith.constant dense<0.000000e+00> : vector<4x16xf32>
    %80 = tpu.matmul %79, %63, %cst_28 {dimension_numbers = #tpu.dot_dimension_numbers<[1], [0], [0], [1], [0, 0, 1, 1], [], []>} : vector<4x4xbf16>, vector<4x16xbf16>, vector<4x16xf32> -> vector<4x16xf32>
    %81 = vector.extract_strided_slice %32 {offsets = [0, 32], sizes = [4, 16], strides = [1, 1]} : vector<4x64xf32> to vector<4x16xf32>
    %82 = arith.truncf %81 : vector<4x16xf32> to vector<4x16xbf16>
    %83 = vector.extract_strided_slice %33 {offsets = [0, 32], sizes = [4, 16], strides = [1, 1]} : vector<4x64xf32> to vector<4x16xf32>
    %84 = arith.truncf %83 : vector<4x16xf32> to vector<4x16xbf16>
    %85 = vector.extract_strided_slice %34 {offsets = [0, 32], sizes = [4, 16], strides = [1, 1]} : vector<4x64xf32> to vector<4x16xf32>
    %86 = arith.truncf %85 : vector<4x16xf32> to vector<4x16xbf16>
    %87 = tpu.transpose %84, [1, 0] : vector<4x16xbf16> -> vector<16x4xbf16>
    %cst_29 = arith.constant dense<0.000000e+00> : vector<4x4xf32>
    %88 = tpu.matmul %82, %87, %cst_29 {dimension_numbers = #tpu.dot_dimension_numbers<[1], [0], [0], [1], [0, 0, 1, 1], [], []>} : vector<4x16xbf16>, vector<16x4xbf16>, vector<4x4xf32> -> vector<4x4xf32>
    %c2 = arith.constant 2 : index
    %c0_30 = arith.constant 0 : index
    %c0_31 = arith.constant 0 : index
    %89 = vector.load %arg2[%c2, %c0_30, %c0_31] : memref<4x4x4xf32, #tpu.memory_space<vmem>>, vector<1x4x4xf32>
    %90 = vector.shape_cast %89 : vector<1x4x4xf32> to vector<4x4xf32>
    %91 = arith.addf %88, %90 : vector<4x4xf32>
    %cst_32 = arith.constant dense<0xFF800000> : vector<4xf32>
    %92 = vector.multi_reduction <maximumf>, %91, %cst_32 [1] : vector<4x4xf32> to vector<4xf32>
    %93 = vector.shape_cast %92 : vector<4xf32> to vector<4x1xf32>
    %94 = vector.broadcast %93 : vector<4x1xf32> to vector<4x4xf32>
    %95 = arith.subf %91, %94 : vector<4x4xf32>
    %96 = math.exp %95 : vector<4x4xf32>
    %cst_33 = arith.constant dense<0.000000e+00> : vector<4xf32>
    %97 = vector.multi_reduction <add>, %96, %cst_33 [1] : vector<4x4xf32> to vector<4xf32>
    %98 = vector.shape_cast %97 : vector<4xf32> to vector<4x1xf32>
    %99 = tpu.reciprocal %98 {approx = true} : vector<4x1xf32> -> vector<4x1xf32>
    %100 = vector.broadcast %99 : vector<4x1xf32> to vector<4x4xf32>
    %101 = arith.mulf %96, %100 : vector<4x4xf32>
    %102 = arith.truncf %101 : vector<4x4xf32> to vector<4x4xbf16>
    %cst_34 = arith.constant dense<0.000000e+00> : vector<4x16xf32>
    %103 = tpu.matmul %102, %86, %cst_34 {dimension_numbers = #tpu.dot_dimension_numbers<[1], [0], [0], [1], [0, 0, 1, 1], [], []>} : vector<4x4xbf16>, vector<4x16xbf16>, vector<4x16xf32> -> vector<4x16xf32>
    %104 = vector.extract_strided_slice %32 {offsets = [0, 48], sizes = [4, 16], strides = [1, 1]} : vector<4x64xf32> to vector<4x16xf32>
    %105 = arith.truncf %104 : vector<4x16xf32> to vector<4x16xbf16>
    %106 = vector.extract_strided_slice %33 {offsets = [0, 48], sizes = [4, 16], strides = [1, 1]} : vector<4x64xf32> to vector<4x16xf32>
    %107 = arith.truncf %106 : vector<4x16xf32> to vector<4x16xbf16>
    %108 = vector.extract_strided_slice %34 {offsets = [0, 48], sizes = [4, 16], strides = [1, 1]} : vector<4x64xf32> to vector<4x16xf32>
    %109 = arith.truncf %108 : vector<4x16xf32> to vector<4x16xbf16>
    %110 = tpu.transpose %107, [1, 0] : vector<4x16xbf16> -> vector<16x4xbf16>
    %cst_35 = arith.constant dense<0.000000e+00> : vector<4x4xf32>
    %111 = tpu.matmul %105, %110, %cst_35 {dimension_numbers = #tpu.dot_dimension_numbers<[1], [0], [0], [1], [0, 0, 1, 1], [], []>} : vector<4x16xbf16>, vector<16x4xbf16>, vector<4x4xf32> -> vector<4x4xf32>
    %c3 = arith.constant 3 : index
    %c0_36 = arith.constant 0 : index
    %c0_37 = arith.constant 0 : index
    %112 = vector.load %arg2[%c3, %c0_36, %c0_37] : memref<4x4x4xf32, #tpu.memory_space<vmem>>, vector<1x4x4xf32>
    %113 = vector.shape_cast %112 : vector<1x4x4xf32> to vector<4x4xf32>
    %114 = arith.addf %111, %113 : vector<4x4xf32>
    %cst_38 = arith.constant dense<0xFF800000> : vector<4xf32>
    %115 = vector.multi_reduction <maximumf>, %114, %cst_38 [1] : vector<4x4xf32> to vector<4xf32>
    %116 = vector.shape_cast %115 : vector<4xf32> to vector<4x1xf32>
    %117 = vector.broadcast %116 : vector<4x1xf32> to vector<4x4xf32>
    %118 = arith.subf %114, %117 : vector<4x4xf32>
    %119 = math.exp %118 : vector<4x4xf32>
    %cst_39 = arith.constant dense<0.000000e+00> : vector<4xf32>
    %120 = vector.multi_reduction <add>, %119, %cst_39 [1] : vector<4x4xf32> to vector<4xf32>
    %121 = vector.shape_cast %120 : vector<4xf32> to vector<4x1xf32>
    %122 = tpu.reciprocal %121 {approx = true} : vector<4x1xf32> -> vector<4x1xf32>
    %123 = vector.broadcast %122 : vector<4x1xf32> to vector<4x4xf32>
    %124 = arith.mulf %119, %123 : vector<4x4xf32>
    %125 = arith.truncf %124 : vector<4x4xf32> to vector<4x4xbf16>
    %cst_40 = arith.constant dense<0.000000e+00> : vector<4x16xf32>
    %126 = tpu.matmul %125, %109, %cst_40 {dimension_numbers = #tpu.dot_dimension_numbers<[1], [0], [0], [1], [0, 0, 1, 1], [], []>} : vector<4x4xbf16>, vector<4x16xbf16>, vector<4x16xf32> -> vector<4x16xf32>
    %127 = tpu.concatenate %57, %80, %103, %126 in 1 : vector<4x16xf32>, vector<4x16xf32>, vector<4x16xf32>, vector<4x16xf32> -> vector<4x64xf32>
    %128 = arith.truncf %127 : vector<4x64xf32> to vector<4x64xbf16>
    %c0_41 = arith.constant 0 : index
    %c0_42 = arith.constant 0 : index
    %129 = vector.load %arg7[%c0_41, %c0_42] : memref<64x64xbf16, #tpu.memory_space<vmem>>, vector<64x64xbf16>
    %cst_43 = arith.constant dense<0.000000e+00> : vector<4x64xf32>
    %130 = tpu.matmul %128, %129, %cst_43 {dimension_numbers = #tpu.dot_dimension_numbers<[1], [0], [0], [1], [0, 0, 1, 1], [], []>} : vector<4x64xbf16>, vector<64x64xbf16>, vector<4x64xf32> -> vector<4x64xf32>
    %c0_44 = arith.constant 0 : index
    %c0_45 = arith.constant 0 : index
    %131 = vector.load %arg8[%c0_44, %c0_45] : memref<1x64xf32, #tpu.memory_space<vmem>>, vector<1x64xf32>
    %132 = vector.broadcast %131 : vector<1x64xf32> to vector<4x64xf32>
    %133 = arith.addf %130, %132 : vector<4x64xf32>
    %134 = arith.addf %1, %133 : vector<4x64xf32>
    %c0_46 = arith.constant 0 : index
    %c0_47 = arith.constant 0 : index
    %135 = vector.load %arg9[%c0_46, %c0_47] : memref<1x64xf32, #tpu.memory_space<vmem>>, vector<1x64xf32>
    %c0_48 = arith.constant 0 : index
    %c0_49 = arith.constant 0 : index
    %136 = vector.load %arg10[%c0_48, %c0_49] : memref<1x64xf32, #tpu.memory_space<vmem>>, vector<1x64xf32>
    %cst_50 = arith.constant dense<0.000000e+00> : vector<4xf32>
    %137 = vector.multi_reduction <add>, %134, %cst_50 [1] : vector<4x64xf32> to vector<4xf32>
    %138 = vector.shape_cast %137 : vector<4xf32> to vector<4x1xf32>
    %cst_51 = arith.constant 6.400000e+01 : f32
    %139 = vector.broadcast %cst_51 : f32 to vector<4x1xf32>
    %140 = arith.divf %138, %139 : vector<4x1xf32>
    %141 = vector.broadcast %140 : vector<4x1xf32> to vector<4x64xf32>
    %142 = arith.subf %134, %141 : vector<4x64xf32>
    %143 = arith.mulf %142, %142 : vector<4x64xf32>
    %cst_52 = arith.constant dense<0.000000e+00> : vector<4xf32>
    %144 = vector.multi_reduction <add>, %143, %cst_52 [1] : vector<4x64xf32> to vector<4xf32>
    %145 = vector.shape_cast %144 : vector<4xf32> to vector<4x1xf32>
    %cst_53 = arith.constant 6.400000e+01 : f32
    %146 = vector.broadcast %cst_53 : f32 to vector<4x1xf32>
    %147 = arith.divf %145, %146 : vector<4x1xf32>
    %cst_54 = arith.constant 9.99999974E-6 : f32
    %148 = vector.broadcast %cst_54 : f32 to vector<4x1xf32>
    %149 = arith.addf %147, %148 : vector<4x1xf32>
    %150 = math.rsqrt %149 : vector<4x1xf32>
    %151 = vector.broadcast %150 : vector<4x1xf32> to vector<4x64xf32>
    %152 = arith.mulf %142, %151 : vector<4x64xf32>
    %153 = vector.broadcast %135 : vector<1x64xf32> to vector<4x64xf32>
    %154 = arith.mulf %152, %153 : vector<4x64xf32>
    %155 = vector.broadcast %136 : vector<1x64xf32> to vector<4x64xf32>
    %156 = arith.addf %154, %155 : vector<4x64xf32>
    %157 = arith.truncf %156 : vector<4x64xf32> to vector<4x64xbf16>
    %c0_55 = arith.constant 0 : index
    %c0_56 = arith.constant 0 : index
    %158 = vector.load %arg11[%c0_55, %c0_56] : memref<64x128xbf16, #tpu.memory_space<vmem>>, vector<64x128xbf16>
    %cst_57 = arith.constant dense<0.000000e+00> : vector<4x128xf32>
    %159 = tpu.matmul %157, %158, %cst_57 {dimension_numbers = #tpu.dot_dimension_numbers<[1], [0], [0], [1], [0, 0, 1, 1], [], []>} : vector<4x64xbf16>, vector<64x128xbf16>, vector<4x128xf32> -> vector<4x128xf32>
    %c0_58 = arith.constant 0 : index
    %c0_59 = arith.constant 0 : index
    %160 = vector.load %arg12[%c0_58, %c0_59] : memref<1x128xf32, #tpu.memory_space<vmem>>, vector<1x128xf32>
    %161 = vector.broadcast %160 : vector<1x128xf32> to vector<4x128xf32>
    %162 = arith.addf %159, %161 : vector<4x128xf32>
    %163 = arith.mulf %162, %162 : vector<4x128xf32>
    %164 = arith.mulf %162, %163 : vector<4x128xf32>
    %cst_60 = arith.constant 4.471500e-02 : f32
    %165 = vector.broadcast %cst_60 : f32 to vector<4x128xf32>
    %166 = arith.mulf %165, %164 : vector<4x128xf32>
    %167 = arith.addf %162, %166 : vector<4x128xf32>
    %cst_61 = arith.constant 0.797884583 : f32
    %168 = vector.broadcast %cst_61 : f32 to vector<4x128xf32>
    %169 = arith.mulf %168, %167 : vector<4x128xf32>
    %170 = math.tanh %169 : vector<4x128xf32>
    %cst_62 = arith.constant 1.000000e+00 : f32
    %171 = vector.broadcast %cst_62 : f32 to vector<4x128xf32>
    %172 = arith.addf %171, %170 : vector<4x128xf32>
    %cst_63 = arith.constant 5.000000e-01 : f32
    %173 = vector.broadcast %cst_63 : f32 to vector<4x128xf32>
    %174 = arith.mulf %173, %172 : vector<4x128xf32>
    %175 = arith.mulf %162, %174 : vector<4x128xf32>
    %176 = arith.truncf %175 : vector<4x128xf32> to vector<4x128xbf16>
    %c0_64 = arith.constant 0 : index
    %c0_65 = arith.constant 0 : index
    %177 = vector.load %arg13[%c0_64, %c0_65] : memref<128x64xbf16, #tpu.memory_space<vmem>>, vector<128x64xbf16>
    %cst_66 = arith.constant dense<0.000000e+00> : vector<4x64xf32>
    %178 = tpu.matmul %176, %177, %cst_66 {dimension_numbers = #tpu.dot_dimension_numbers<[1], [0], [0], [1], [0, 0, 1, 1], [], []>} : vector<4x128xbf16>, vector<128x64xbf16>, vector<4x64xf32> -> vector<4x64xf32>
    %c0_67 = arith.constant 0 : index
    %c0_68 = arith.constant 0 : index
    %179 = vector.load %arg14[%c0_67, %c0_68] : memref<1x64xf32, #tpu.memory_space<vmem>>, vector<1x64xf32>
    %180 = vector.broadcast %179 : vector<1x64xf32> to vector<4x64xf32>
    %181 = arith.addf %178, %180 : vector<4x64xf32>
    %182 = arith.addf %134, %181 : vector<4x64xf32>
    %c0_69 = arith.constant 0 : index
    %c0_70 = arith.constant 0 : index
    %c0_71 = arith.constant 0 : index
    %183 = vector.load %arg15[%c0_69, %c0_70, %c0_71] : memref<1x4x64xf32, #tpu.memory_space<vmem>>, vector<1x4x64xf32>
    %184 = vector.shape_cast %183 : vector<1x4x64xf32> to vector<4x64xf32>
    %185 = vector.shape_cast %182 : vector<4x64xf32> to vector<1x4x64xf32>
    tpu.vector_store %arg15[%c0_69, %c0_70, %c0_71], %185 {strides = array<i32>} : memref<1x4x64xf32, #tpu.memory_space<vmem>>, vector<1x4x64xf32>,
    return
  }
  func.func @transform_0(%arg0: i32) -> (i32, i32, i32) {
    %c0_i32 = arith.constant 0 : i32
    %c0_i32_0 = arith.constant 0 : i32
    %c0_i32_1 = arith.constant 0 : i32
    return %arg0, %c0_i32, %c0_i32_0 : i32, i32, i32
  }
  func.func @transform_1(%arg0: i32) -> (i32, i32, i32) {
    %c0_i32 = arith.constant 0 : i32
    %c0_i32_0 = arith.constant 0 : i32
    %c0_i32_1 = arith.constant 0 : i32
    %c0_i32_2 = arith.constant 0 : i32
    return %c0_i32, %c0_i32_0, %c0_i32_1 : i32, i32, i32
  }
  func.func @transform_2(%arg0: i32) -> (i32, i32) {
    %c0_i32 = arith.constant 0 : i32
    %c0_i32_0 = arith.constant 0 : i32
    %c0_i32_1 = arith.constant 0 : i32
    return %c0_i32, %c0_i32_0 : i32, i32
  }
  func.func @transform_3(%arg0: i32) -> (i32, i32) {
    %c0_i32 = arith.constant 0 : i32
    %c0_i32_0 = arith.constant 0 : i32
    %c0_i32_1 = arith.constant 0 : i32
    return %c0_i32, %c0_i32_0 : i32, i32
  }
  func.func @transform_4(%arg0: i32) -> (i32, i32) {
    %c0_i32 = arith.constant 0 : i32
    %c0_i32_0 = arith.constant 0 : i32
    %c0_i32_1 = arith.constant 0 : i32
    return %c0_i32, %c0_i32_0 : i32, i32
  }
  func.func @transform_5(%arg0: i32) -> (i32, i32) {
    %c0_i32 = arith.constant 0 : i32
    %c0_i32_0 = arith.constant 0 : i32
    %c0_i32_1 = arith.constant 0 : i32
    return %c0_i32, %c0_i32_0 : i32, i32
  }
  func.func @transform_6(%arg0: i32) -> (i32, i32) {
    %c0_i32 = arith.constant 0 : i32
    %c0_i32_0 = arith.constant 0 : i32
    %c0_i32_1 = arith.constant 0 : i32
    return %c0_i32, %c0_i32_0 : i32, i32
  }
  func.func @transform_7(%arg0: i32) -> (i32, i32) {
    %c0_i32 = arith.constant 0 : i32
    %c0_i32_0 = arith.constant 0 : i32
    %c0_i32_1 = arith.constant 0 : i32
    return %c0_i32, %c0_i32_0 : i32, i32
  }
  func.func @transform_8(%arg0: i32) -> (i32, i32) {
    %c0_i32 = arith.constant 0 : i32
    %c0_i32_0 = arith.constant 0 : i32
    %c0_i32_1 = arith.constant 0 : i32
    return %c0_i32, %c0_i32_0 : i32, i32
  }
  func.func @transform_9(%arg0: i32) -> (i32, i32) {
    %c0_i32 = arith.constant 0 : i32
    %c0_i32_0 = arith.constant 0 : i32
    %c0_i32_1 = arith.constant 0 : i32
    return %c0_i32, %c0_i32_0 : i32, i32
  }
  func.func @transform_10(%arg0: i32) -> (i32, i32) {
    %c0_i32 = arith.constant 0 : i32
    %c0_i32_0 = arith.constant 0 : i32
    %c0_i32_1 = arith.constant 0 : i32
    return %c0_i32, %c0_i32_0 : i32, i32
  }
  func.func @transform_11(%arg0: i32) -> (i32, i32) {
    %c0_i32 = arith.constant 0 : i32
    %c0_i32_0 = arith.constant 0 : i32
    %c0_i32_1 = arith.constant 0 : i32
    return %c0_i32, %c0_i32_0 : i32, i32
  }
  func.func @transform_12(%arg0: i32) -> (i32, i32) {
    %c0_i32 = arith.constant 0 : i32
    %c0_i32_0 = arith.constant 0 : i32
    %c0_i32_1 = arith.constant 0 : i32
    return %c0_i32, %c0_i32_0 : i32, i32
  }
  func.func @transform_13(%arg0: i32) -> (i32, i32) {
    %c0_i32 = arith.constant 0 : i32
    %c0_i32_0 = arith.constant 0 : i32
    %c0_i32_1 = arith.constant 0 : i32
    return %c0_i32, %c0_i32_0 : i32, i32
  }
  func.func @transform_14(%arg0: i32) -> (i32, i32, i32) {
    %c0_i32 = arith.constant 0 : i32
    %c0_i32_0 = arith.constant 0 : i32
    %c0_i32_1 = arith.constant 0 : i32
    return %arg0, %c0_i32, %c0_i32_0 : i32, i32, i32
  }
}

</mosaic_0001>

<llo_original>
// kernel: pure_rmt_forward.10
$region0: #{pure_rmt_forward.10}
  #allocation0 [shape = 'u32[]', space=smem, size = 0x4, offset = 0x4, fixed_abs, tag = 'smem constant byte address 0x4 - core index']
  #allocation1 [shape = 'u32[144,128]{1,0:T(1,128)}', space=vmem, size = 0x12000, scoped, tag = 'internal scratch']
  %s0 = inlined_call_operand.vmem [shape: f32[2,64,32], index: 0, kind: input, shape index: {}]
  %s1 = inlined_call_operand.vmem [shape: f32[2,64,64], index: 1, kind: input, shape index: {}]
  %s2 = inlined_call_operand.vmem [shape: f32[1,32], index: 2, kind: input, shape index: {}]
  %s3 = inlined_call_operand.vmem [shape: f32[1,32], index: 3, kind: input, shape index: {}]
  %s4 = inlined_call_operand.vmem [shape: bf16[32,96], index: 4, kind: input, shape index: {}]
  %s5 = inlined_call_operand.vmem [shape: f32[1,96], index: 5, kind: input, shape index: {}]
  %s6 = inlined_call_operand.vmem [shape: bf16[32,32], index: 6, kind: input, shape index: {}]
  %s7 = inlined_call_operand.vmem [shape: f32[1,32], index: 7, kind: input, shape index: {}]
  %s8 = inlined_call_operand.vmem [shape: f32[1,32], index: 8, kind: input, shape index: {}]
  %s9 = inlined_call_operand.vmem [shape: f32[1,32], index: 9, kind: input, shape index: {}]
  %s10 = inlined_call_operand.vmem [shape: bf16[32,64], index: 10, kind: input, shape index: {}]
  %s11 = inlined_call_operand.vmem [shape: f32[1,64], index: 11, kind: input, shape index: {}]
  %s12 = inlined_call_operand.vmem [shape: bf16[64,32], index: 12, kind: input, shape index: {}]
  %s13 = inlined_call_operand.vmem [shape: f32[1,32], index: 13, kind: input, shape index: {}]
  %s14 = inlined_call_operand.vmem [shape: f32[2,64,32], index: 14, kind: output, shape index: {}]
  %s15 = sld [smem:[#allocation0]]
  $region89: #{pure_rmt_forward.10} parent=0
    _
  %s17 = ssub.s32 1, %s15
  %s18 = scalar_select 0, %s17, %s15
  loop: start=0, step=1, limit=4
  $region2: #{pure_rmt_forward.10} parent=0 // loop_pre_header
    _
  $region3: #{pure_rmt_forward.10} parent=0 // loop_header
    %s20 = sphi 0, %s24
    %p21 = scmp.ge.s32.totalorder %s20, 4
    %s30 = sphi 0, %s32
    %s33 = sphi 0, %s30
    %s34 = sphi 0, %s33
    %s50 = sphi 0, %s34
    %s54 = sphi 0, %s54
    %s56 = sphi 0, %s54
    %s57 = sphi 0, %s56
    %s71 = sphi 0, %s57
    %s75 = sphi 0, %s75
    %s77 = sphi 0, %s75
    %s78 = sphi 0, %s77
    %s92 = sphi 0, %s78
    %s96 = sphi 0, %s96
    %s98 = sphi 0, %s96
    %s99 = sphi 0, %s98
    %s113 = sphi 0, %s99
    %s117 = sphi 0, %s117
    %s119 = sphi 0, %s117
    %s120 = sphi 0, %s119
    %s134 = sphi 0, %s120
    %s138 = sphi 0, %s138
    %s140 = sphi 0, %s138
    %s141 = sphi 0, %s140
    %s155 = sphi 0, %s141
    %s159 = sphi 0, %s159
    %s161 = sphi 0, %s159
    %s162 = sphi 0, %s161
    %s176 = sphi 0, %s162
    %s180 = sphi 0, %s180
    %s182 = sphi 0, %s180
    %s183 = sphi 0, %s182
    %s197 = sphi 0, %s183
    %s201 = sphi 0, %s201
    %s203 = sphi 0, %s201
    %s204 = sphi 0, %s203
    %s218 = sphi 0, %s204
    %s222 = sphi 0, %s222
    %s224 = sphi 0, %s222
    %s225 = sphi 0, %s224
    %s239 = sphi 0, %s225
    %s243 = sphi 0, %s243
    %s245 = sphi 0, %s243
    %s246 = sphi 0, %s245
    %s260 = sphi 0, %s246
    %s264 = sphi 0, %s264
    %s266 = sphi 0, %s264
    %s267 = sphi 0, %s266
    %s281 = sphi 0, %s267
    %s285 = sphi 0, %s285
    %s287 = sphi 0, %s285
    %s288 = sphi 0, %s287
    %s302 = sphi 0, %s288
    %s306 = sphi 0, %s306
    %s308 = sphi 0, %s306
    %s309 = sphi 0, %s308
    %s323 = sphi 0, %s309
    %s329 = sphi 0, %s331
    %s332 = sphi 0, %s329
    %s333 = sphi 0, %s332
    %s349 = sphi 0, %s333
  $region4: #{pure_rmt_forward.10} parent=0 // loop_header_branch
    %23 = sbr.rel (%p21) target = $region8
  $region5: #{pure_rmt_forward.10} parent=0 // loop_body
    %s25 = ssub.s32 %s20, 1
    %s26 = ssub.s32 %s20, 2
    %s27 = sadd.s32 %s20, 1
    %s28 = ssub.s32 %s20, %s27
    %p29 = scmp.eq.s32.totalorder %s28, 0
    %s31 = sadd.s32 %s30, 1
    %s32 = scalar_select %p29, %s30, %s31
    %p35 = pneg %p29
    %p36 = scmp.eq.s32.totalorder %s20, 1
    %p37 = por %p35, %p36
    %p38 = scmp.ne.s32.totalorder %s30, %s33
    %p39 = scmp.eq.s32.totalorder %s20, 0
    %p40 = por %p38, %p39
    %p41 = scmp.ne.s32.totalorder %s30, %s33
    %p42 = scmp.eq.s32.totalorder %s25, 1
    %p43 = por %p41, %p42
    %p44 = scmp.ne.s32.totalorder %s33, %s34
    %p45 = scmp.eq.s32.totalorder %s25, 0
    %p46 = por %p44, %p45
    %p47 = scmp.ne.s32.totalorder %s33, %s34
    %p48 = scmp.eq.s32.totalorder %s26, 1
    %p49 = por %p47, %p48
    %p51 = scmp.ne.s32.totalorder %s34, %s50
    %p52 = scmp.eq.s32.totalorder %s26, 0
    %p53 = por %p51, %p52
    %s55 = sadd.s32 %s54, 1
    %p58 = scmp.eq.s32.totalorder %s20, 1
    %p59 = scmp.ne.s32.totalorder %s54, %s56
    %p60 = scmp.eq.s32.totalorder %s20, 0
    %p61 = por %p59, %p60
    %p62 = scmp.ne.s32.totalorder %s54, %s56
    %p63 = scmp.eq.s32.totalorder %s25, 1
    %p64 = por %p62, %p63
    %p65 = scmp.ne.s32.totalorder %s56, %s57
    %p66 = scmp.eq.s32.totalorder %s25, 0
    %p67 = por %p65, %p66
    %p68 = scmp.ne.s32.totalorder %s56, %s57
    %p69 = scmp.eq.s32.totalorder %s26, 1
    %p70 = por %p68, %p69
    %p72 = scmp.ne.s32.totalorder %s57, %s71
    %p73 = scmp.eq.s32.totalorder %s26, 0
    %p74 = por %p72, %p73
    %s76 = sadd.s32 %s75, 1
    %p79 = scmp.eq.s32.totalorder %s20, 1
    %p80 = scmp.ne.s32.totalorder %s75, %s77
    %p81 = scmp.eq.s32.totalorder %s20, 0
    %p82 = por %p80, %p81
    %p83 = scmp.ne.s32.totalorder %s75, %s77
    %p84 = scmp.eq.s32.totalorder %s25, 1
    %p85 = por %p83, %p84
    %p86 = scmp.ne.s32.totalorder %s77, %s78
    %p87 = scmp.eq.s32.totalorder %s25, 0
    %p88 = por %p86, %p87
    %p89 = scmp.ne.s32.totalorder %s77, %s78
    %p90 = scmp.eq.s32.totalorder %s26, 1
    %p91 = por %p89, %p90
    %p93 = scmp.ne.s32.totalorder %s78, %s92
    %p94 = scmp.eq.s32.totalorder %s26, 0
    %p95 = por %p93, %p94
    %s97 = sadd.s32 %s96, 1
    %p100 = scmp.eq.s32.totalorder %s20, 1
    %p101 = scmp.ne.s32.totalorder %s96, %s98
    %p102 = scmp.eq.s32.totalorder %s20, 0
    %p103 = por %p101, %p102
    %p104 = scmp.ne.s32.totalorder %s96, %s98
    %p105 = scmp.eq.s32.totalorder %s25, 1
    %p106 = por %p104, %p105
    %p107 = scmp.ne.s32.totalorder %s98, %s99
    %p108 = scmp.eq.s32.totalorder %s25, 0
    %p109 = por %p107, %p108
    %p110 = scmp.ne.s32.totalorder %s98, %s99
    %p111 = scmp.eq.s32.totalorder %s26, 1
    %p112 = por %p110, %p111
    %p114 = scmp.ne.s32.totalorder %s99, %s113
    %p115 = scmp.eq.s32.totalorder %s26, 0
    %p116 = por %p114, %p115
    %s118 = sadd.s32 %s117, 1
    %p121 = scmp.eq.s32.totalorder %s20, 1
    %p122 = scmp.ne.s32.totalorder %s117, %s119
    %p123 = scmp.eq.s32.totalorder %s20, 0
    %p124 = por %p122, %p123
    %p125 = scmp.ne.s32.totalorder %s117, %s119
    %p126 = scmp.eq.s32.totalorder %s25, 1
    %p127 = por %p125, %p126
    %p128 = scmp.ne.s32.totalorder %s119, %s120
    %p129 = scmp.eq.s32.totalorder %s25, 0
    %p130 = por %p128, %p129
    %p131 = scmp.ne.s32.totalorder %s119, %s120
    %p132 = scmp.eq.s32.totalorder %s26, 1
    %p133 = por %p131, %p132
    %p135 = scmp.ne.s32.totalorder %s120, %s134
    %p136 = scmp.eq.s32.totalorder %s26, 0
    %p137 = por %p135, %p136
    %s139 = sadd.s32 %s138, 1
    %p142 = scmp.eq.s32.totalorder %s20, 1
    %p143 = scmp.ne.s32.totalorder %s138, %s140
    %p144 = scmp.eq.s32.totalorder %s20, 0
    %p145 = por %p143, %p144
    %p146 = scmp.ne.s32.totalorder %s138, %s140
    %p147 = scmp.eq.s32.totalorder %s25, 1
    %p148 = por %p146, %p147
    %p149 = scmp.ne.s32.totalorder %s140, %s141
    %p150 = scmp.eq.s32.totalorder %s25, 0
    %p151 = por %p149, %p150
    %p152 = scmp.ne.s32.totalorder %s140, %s141
    %p153 = scmp.eq.s32.totalorder %s26, 1
    %p154 = por %p152, %p153
    %p156 = scmp.ne.s32.totalorder %s141, %s155
    %p157 = scmp.eq.s32.totalorder %s26, 0
    %p158 = por %p156, %p157
    %s160 = sadd.s32 %s159, 1
    %p163 = scmp.eq.s32.totalorder %s20, 1
    %p164 = scmp.ne.s32.totalorder %s159, %s161
    %p165 = scmp.eq.s32.totalorder %s20, 0
    %p166 = por %p164, %p165
    %p167 = scmp.ne.s32.totalorder %s159, %s161
    %p168 = scmp.eq.s32.totalorder %s25, 1
    %p169 = por %p167, %p168
    %p170 = scmp.ne.s32.totalorder %s161, %s162
    %p171 = scmp.eq.s32.totalorder %s25, 0
    %p172 = por %p170, %p171
    %p173 = scmp.ne.s32.totalorder %s161, %s162
    %p174 = scmp.eq.s32.totalorder %s26, 1
    %p175 = por %p173, %p174
    %p177 = scmp.ne.s32.totalorder %s162, %s176
    %p178 = scmp.eq.s32.totalorder %s26, 0
    %p179 = por %p177, %p178
    %s181 = sadd.s32 %s180, 1
    %p184 = scmp.eq.s32.totalorder %s20, 1
    %p185 = scmp.ne.s32.totalorder %s180, %s182
    %p186 = scmp.eq.s32.totalorder %s20, 0
    %p187 = por %p185, %p186
    %p188 = scmp.ne.s32.totalorder %s180, %s182
    %p189 = scmp.eq.s32.totalorder %s25, 1
    %p190 = por %p188, %p189
    %p191 = scmp.ne.s32.totalorder %s182, %s183
    %p192 = scmp.eq.s32.totalorder %s25, 0
    %p193 = por %p191, %p192
    %p194 = scmp.ne.s32.totalorder %s182, %s183
    %p195 = scmp.eq.s32.totalorder %s26, 1
    %p196 = por %p194, %p195
    %p198 = scmp.ne.s32.totalorder %s183, %s197
    %p199 = scmp.eq.s32.totalorder %s26, 0
    %p200 = por %p198, %p199
    %s202 = sadd.s32 %s201, 1
    %p205 = scmp.eq.s32.totalorder %s20, 1
    %p206 = scmp.ne.s32.totalorder %s201, %s203
    %p207 = scmp.eq.s32.totalorder %s20, 0
    %p208 = por %p206, %p207
    %p209 = scmp.ne.s32.totalorder %s201, %s203
    %p210 = scmp.eq.s32.totalorder %s25, 1
    %p211 = por %p209, %p210
    %p212 = scmp.ne.s32.totalorder %s203, %s204
    %p213 = scmp.eq.s32.totalorder %s25, 0
    %p214 = por %p212, %p213
    %p215 = scmp.ne.s32.totalorder %s203, %s204
    %p216 = scmp.eq.s32.totalorder %s26, 1
    %p217 = por %p215, %p216
    %p219 = scmp.ne.s32.totalorder %s204, %s218
    %p220 = scmp.eq.s32.totalorder %s26, 0
    %p221 = por %p219, %p220
    %s223 = sadd.s32 %s222, 1
    %p226 = scmp.eq.s32.totalorder %s20, 1
    %p227 = scmp.ne.s32.totalorder %s222, %s224
    %p228 = scmp.eq.s32.totalorder %s20, 0
    %p229 = por %p227, %p228
    %p230 = scmp.ne.s32.totalorder %s222, %s224
    %p231 = scmp.eq.s32.totalorder %s25, 1
    %p232 = por %p230, %p231
    %p233 = scmp.ne.s32.totalorder %s224, %s225
    %p234 = scmp.eq.s32.totalorder %s25, 0
    %p235 = por %p233, %p234
    %p236 = scmp.ne.s32.totalorder %s224, %s225
    %p237 = scmp.eq.s32.totalorder %s26, 1
    %p238 = por %p236, %p237
    %p240 = scmp.ne.s32.totalorder %s225, %s239
    %p241 = scmp.eq.s32.totalorder %s26, 0
    %p242 = por %p240, %p241
    %s244 = sadd.s32 %s243, 1
    %p247 = scmp.eq.s32.totalorder %s20, 1
    %p248 = scmp.ne.s32.totalorder %s243, %s245
    %p249 = scmp.eq.s32.totalorder %s20, 0
    %p250 = por %p248, %p249
    %p251 = scmp.ne.s32.totalorder %s243, %s245
    %p252 = scmp.eq.s32.totalorder %s25, 1
    %p253 = por %p251, %p252
    %p254 = scmp.ne.s32.totalorder %s245, %s246
    %p255 = scmp.eq.s32.totalorder %s25, 0
    %p256 = por %p254, %p255
    %p257 = scmp.ne.s32.totalorder %s245, %s246
    %p258 = scmp.eq.s32.totalorder %s26, 1
    %p259 = por %p257, %p258
    %p261 = scmp.ne.s32.totalorder %s246, %s260
    %p262 = scmp.eq.s32.totalorder %s26, 0
    %p263 = por %p261, %p262
    %s265 = sadd.s32 %s264, 1
    %p268 = scmp.eq.s32.totalorder %s20, 1
    %p269 = scmp.ne.s32.totalorder %s264, %s266
    %p270 = scmp.eq.s32.totalorder %s20, 0
    %p271 = por %p269, %p270
    %p272 = scmp.ne.s32.totalorder %s264, %s266
    %p273 = scmp.eq.s32.totalorder %s25, 1
    %p274 = por %p272, %p273
    %p275 = scmp.ne.s32.totalorder %s266, %s267
    %p276 = scmp.eq.s32.totalorder %s25, 0
    %p277 = por %p275, %p276
    %p278 = scmp.ne.s32.totalorder %s266, %s267
    %p279 = scmp.eq.s32.totalorder %s26, 1
    %p280 = por %p278, %p279
    %p282 = scmp.ne.s32.totalorder %s267, %s281
    %p283 = scmp.eq.s32.totalorder %s26, 0
    %p284 = por %p282, %p283
    %s286 = sadd.s32 %s285, 1
    %p289 = scmp.eq.s32.totalorder %s20, 1
    %p290 = scmp.ne.s32.totalorder %s285, %s287
    %p291 = scmp.eq.s32.totalorder %s20, 0
    %p292 = por %p290, %p291
    %p293 = scmp.ne.s32.totalorder %s285, %s287
    %p294 = scmp.eq.s32.totalorder %s25, 1
    %p295 = por %p293, %p294
    %p296 = scmp.ne.s32.totalorder %s287, %s288
    %p297 = scmp.eq.s32.totalorder %s25, 0
    %p298 = por %p296, %p297
    %p299 = scmp.ne.s32.totalorder %s287, %s288
    %p300 = scmp.eq.s32.totalorder %s26, 1
    %p301 = por %p299, %p300
    %p303 = scmp.ne.s32.totalorder %s288, %s302
    %p304 = scmp.eq.s32.totalorder %s26, 0
    %p305 = por %p303, %p304
    %s307 = sadd.s32 %s306, 1
    %p310 = scmp.eq.s32.totalorder %s20, 1
    %p311 = scmp.ne.s32.totalorder %s306, %s308
    %p312 = scmp.eq.s32.totalorder %s20, 0
    %p313 = por %p311, %p312
    %p314 = scmp.ne.s32.totalorder %s306, %s308
    %p315 = scmp.eq.s32.totalorder %s25, 1
    %p316 = por %p314, %p315
    %p317 = scmp.ne.s32.totalorder %s308, %s309
    %p318 = scmp.eq.s32.totalorder %s25, 0
    %p319 = por %p317, %p318
    %p320 = scmp.ne.s32.totalorder %s308, %s309
    %p321 = scmp.eq.s32.totalorder %s26, 1
    %p322 = por %p320, %p321
    %p324 = scmp.ne.s32.totalorder %s309, %s323
    %p325 = scmp.eq.s32.totalorder %s26, 0
    %p326 = por %p324, %p325
    %s327 = ssub.s32 %s20, %s27
    %p328 = scmp.eq.s32.totalorder %s327, 0
    %s330 = sadd.s32 %s329, 1
    %s331 = scalar_select %p328, %s329, %s330
    %p334 = pneg %p328
    %p335 = scmp.eq.s32.totalorder %s20, 1
    %p336 = por %p334, %p335
    %p337 = scmp.ne.s32.totalorder %s329, %s332
    %p338 = scmp.eq.s32.totalorder %s20, 0
    %p339 = por %p337, %p338
    %p340 = scmp.ne.s32.totalorder %s329, %s332
    %p341 = scmp.eq.s32.totalorder %s25, 1
    %p342 = por %p340, %p341
    %p343 = scmp.ne.s32.totalorder %s332, %s333
    %p344 = scmp.eq.s32.totalorder %s25, 0
    %p345 = por %p343, %p344
    %p346 = scmp.ne.s32.totalorder %s332, %s333
    %p347 = scmp.eq.s32.totalorder %s26, 1
    %p348 = por %p346, %p347
    %p350 = scmp.ne.s32.totalorder %s333, %s349
    %p351 = scmp.eq.s32.totalorder %s26, 0
    %p352 = por %p350, %p351
    %p353 = scmp.le.s32.totalorder 1, %s20
    %p354 = scmp.lt.s32.totalorder %s20, 3
    %p355 = pnand %p353, %p354
    %p356 = pneg %p355
    // Predicated region
    $region9: #{pure_rmt_forward.10} parent=5 // pred_check
      _
    $region10: #{pure_rmt_forward.10} parent=5 // pred_check_branch
      %358 = sbr.rel (%p355) target = $region12
    $region11: #{pure_rmt_forward.10} parent=5 // pred_region
      %s359 = ssub.s32 %s20, 1
      // Predicated region
      $region13: #{pure_rmt_forward.10} parent=11 // pred_check
        %p360 = pneg %p67
      $region14: #{pure_rmt_forward.10} parent=11 // pred_check_branch
        %362 = sbr.rel (%p360) target = $region16
      $region15: #{pure_rmt_forward.10} parent=11 // pred_region
        _
      $region16: #{pure_rmt_forward.10} parent=11 // pred_fallthru
        _
      // Predicated region
      $region17: #{pure_rmt_forward.10} parent=11 // pred_check
        %p363 = pneg %p88
      $region18: #{pure_rmt_forward.10} parent=11 // pred_check_branch
        %365 = sbr.rel (%p363) target = $region20
      $region19: #{pure_rmt_forward.10} parent=11 // pred_region
        _
      $region20: #{pure_rmt_forward.10} parent=11 // pred_fallthru
        _
      // Predicated region
      $region21: #{pure_rmt_forward.10} parent=11 // pred_check
        %p366 = pneg %p109
      $region22: #{pure_rmt_forward.10} parent=11 // pred_check_branch
        %368 = sbr.rel (%p366) target = $region24
      $region23: #{pure_rmt_forward.10} parent=11 // pred_region
        _
      $region24: #{pure_rmt_forward.10} parent=11 // pred_fallthru
        _
      // Predicated region
      $region25: #{pure_rmt_forward.10} parent=11 // pred_check
        %p369 = pneg %p130
      $region26: #{pure_rmt_forward.10} parent=11 // pred_check_branch
        %371 = sbr.rel (%p369) target = $region28
      $region27: #{pure_rmt_forward.10} parent=11 // pred_region
        _
      $region28: #{pure_rmt_forward.10} parent=11 // pred_fallthru
        _
      // Predicated region
      $region29: #{pure_rmt_forward.10} parent=11 // pred_check
        %p372 = pneg %p151
      $region30: #{pure_rmt_forward.10} parent=11 // pred_check_branch
        %374 = sbr.rel (%p372) target = $region32
      $region31: #{pure_rmt_forward.10} parent=11 // pred_region
        _
      $region32: #{pure_rmt_forward.10} parent=11 // pred_fallthru
        _
      // Predicated region
      $region33: #{pure_rmt_forward.10} parent=11 // pred_check
        %p375 = pneg %p172
      $region34: #{pure_rmt_forward.10} parent=11 // pred_check_branch
        %377 = sbr.rel (%p375) target = $region36
      $region35: #{pure_rmt_forward.10} parent=11 // pred_region
        _
      $region36: #{pure_rmt_forward.10} parent=11 // pred_fallthru
        _
      // Predicated region
      $region37: #{pure_rmt_forward.10} parent=11 // pred_check
        %p378 = pneg %p193
      $region38: #{pure_rmt_forward.10} parent=11 // pred_check_branch
        %380 = sbr.rel (%p378) target = $region40
      $region39: #{pure_rmt_forward.10} parent=11 // pred_region
        _
      $region40: #{pure_rmt_forward.10} parent=11 // pred_fallthru
        _
      // Predicated region
      $region41: #{pure_rmt_forward.10} parent=11 // pred_check
        %p381 = pneg %p214
      $region42: #{pure_rmt_forward.10} parent=11 // pred_check_branch
        %383 = sbr.rel (%p381) target = $region44
      $region43: #{pure_rmt_forward.10} parent=11 // pred_region
        _
      $region44: #{pure_rmt_forward.10} parent=11 // pred_fallthru
        _
      // Predicated region
      $region45: #{pure_rmt_forward.10} parent=11 // pred_check
        %p384 = pneg %p235
      $region46: #{pure_rmt_forward.10} parent=11 // pred_check_branch
        %386 = sbr.rel (%p384) target = $region48
      $region47: #{pure_rmt_forward.10} parent=11 // pred_region
        _
      $region48: #{pure_rmt_forward.10} parent=11 // pred_fallthru
        _
      // Predicated region
      $region49: #{pure_rmt_forward.10} parent=11 // pred_check
        %p387 = pneg %p256
      $region50: #{pure_rmt_forward.10} parent=11 // pred_check_branch
        %389 = sbr.rel (%p387) target = $region52
      $region51: #{pure_rmt_forward.10} parent=11 // pred_region
        _
      $region52: #{pure_rmt_forward.10} parent=11 // pred_fallthru
        _
      // Predicated region
      $region53: #{pure_rmt_forward.10} parent=11 // pred_check
        %p390 = pneg %p277
      $region54: #{pure_rmt_forward.10} parent=11 // pred_check_branch
        %392 = sbr.rel (%p390) target = $region56
      $region55: #{pure_rmt_forward.10} parent=11 // pred_region
        _
      $region56: #{pure_rmt_forward.10} parent=11 // pred_fallthru
        _
      // Predicated region
      $region57: #{pure_rmt_forward.10} parent=11 // pred_check
        %p393 = pneg %p298
      $region58: #{pure_rmt_forward.10} parent=11 // pred_check_branch
        %395 = sbr.rel (%p393) target = $region60
      $region59: #{pure_rmt_forward.10} parent=11 // pred_region
        _
      $region60: #{pure_rmt_forward.10} parent=11 // pred_fallthru
        _
      // Predicated region
      $region61: #{pure_rmt_forward.10} parent=11 // pred_check
        %p396 = pneg %p319
      $region62: #{pure_rmt_forward.10} parent=11 // pred_check_branch
        %398 = sbr.rel (%p396) target = $region64
      $region63: #{pure_rmt_forward.10} parent=11 // pred_region
        _
      $region64: #{pure_rmt_forward.10} parent=11 // pred_fallthru
        _
    $region12: #{pure_rmt_forward.10} parent=5 // pred_fallthru
      _
    %p399 = scmp.lt.s32.totalorder %s20, 2
    // Predicated region
    $region65: #{pure_rmt_forward.10} parent=5 // pred_check
      %p400 = pneg %p399
    $region66: #{pure_rmt_forward.10} parent=5 // pred_check_branch
      %402 = sbr.rel (%p400) target = $region68
    $region67: #{pure_rmt_forward.10} parent=5 // pred_region
      // Predicated region
      $region69: #{pure_rmt_forward.10} parent=67 // pred_check
        %p403 = pneg %p40
      $region70: #{pure_rmt_forward.10} parent=67 // pred_check_branch
        %405 = sbr.rel (%p403) target = $region72
      $region71: #{pure_rmt_forward.10} parent=67 // pred_region
        %p406 = scmp.lt.s32.totalorder %s20, 1
        %s407 = scalar_select %p406, %s20, 1
        %s408 = smul.addr %s407, 8
        %s409 = smul.addr %s408, 8
        %s410 = scalar_lea.vmem %s0, %s409
      $region72: #{pure_rmt_forward.10} parent=67 // pred_fallthru
        _
    $region68: #{pure_rmt_forward.10} parent=5 // pred_fallthru
      _
    %p411 = scmp.le.s32.totalorder 1, %s20
    %p412 = scmp.lt.s32.totalorder %s20, 3
    %p413 = pnand %p411, %p412
    %p414 = pneg %p413
    // Predicated region
    $region73: #{pure_rmt_forward.10} parent=5 // pred_check
      _
    $region74: #{pure_rmt_forward.10} parent=5 // pred_check_branch
      %416 = sbr.rel (%p413) target = $region76
    $region75: #{pure_rmt_forward.10} parent=5 // pred_region
      %s417 = ssub.s32 %s20, 1
      %p418 = scmp.lt.s32.totalorder %s25, 1
      %s419 = scalar_select %p418, %s25, 1
      %s420 = smul.addr %s419, 8
      %s421 = smul.addr %s420, 8
      %s422 = scalar_lea.vmem %s0, %s421
      %p423 = pneg %p46
      %p424 = pneg %p43
      %p425 = pneg %p67
      %p426 = pneg %p64
      %p427 = pneg %p88
      %p428 = pneg %p85
      %p429 = pneg %p109
      %p430 = pneg %p106
      %p431 = pneg %p130
      %p432 = pneg %p127
      %p433 = pneg %p151
      %p434 = pneg %p148
      %p435 = pneg %p172
      %p436 = pneg %p169
      %p437 = pneg %p193
      %p438 = pneg %p190
      %p439 = pneg %p214
      %p440 = pneg %p211
      %p441 = pneg %p235
      %p442 = pneg %p232
      %p443 = pneg %p256
      %p444 = pneg %p253
      %p445 = pneg %p277
      %p446 = pneg %p274
      %p447 = pneg %p298
      %p448 = pneg %p295
      %p449 = pneg %p319
      %p450 = pneg %p316
      %p451 = pneg %p345
      %p452 = pneg %p342
      %p453 = scmp.lt.s32.totalorder %s25, 1
      %s454 = scalar_select %p453, %s25, 1
      %s455 = smul.addr %s454, 8
      %s456 = smul.addr %s455, 8
      %s457 = scalar_lea.vmem %s14, %s456
      %p458 = scmp.lt.s32.totalorder %s25, 1
      %s459 = scalar_select %p458, %s25, 1
      %s460 = smul.addr %s459, 8
      %s461 = smul.addr %s460, 8
      %s462 = scalar_lea.vmem %s0, %s461
      %p463 = scmp.lt.s32.totalorder %s25, 1
      %s464 = scalar_select %p463, %s25, 1
      %s465 = smul.addr %s464, 8
      %s466 = smul.addr %s465, 8
      %s467 = scalar_lea.vmem %s14, %s466
      %v469 = vld [vmem:[%s462] sm:$0xff]
      %v470 = vld [vmem:[%s462 + $0x8] sm:$0xff]
      %v471 = vld [vmem:[%s462 + $0x10] sm:$0xff]
      %v472 = vld [vmem:[%s462 + $0x18] sm:$0xff]
      %v473 = vld [vmem:[%s462 + $0x20] sm:$0xff]
      %v474 = vld [vmem:[%s462 + $0x28] sm:$0xff]
      %v475 = vld [vmem:[%s462 + $0x30] sm:$0xff]
      %v476 = vld [vmem:[%s462 + $0x38] sm:$0xff]
      %v477 = vld [vmem:[%s2] sm:$0x1]
      %v478 = vld [vmem:[%s3] sm:$0x1]
      %vm479 = vcmask 261120
      %v480 = vsel %vm479, %v469, 0.0
      %481 = vadd.xlane.f32.xlu0 %v480
      %v482 = vpop.xlane.xlu0 %481
      %v483 = vsel %vm479, %v470, 0.0
      %484 = vadd.xlane.f32.xlu0 %v483
      %v485 = vpop.xlane.xlu0 %484
      %v486 = vsel %vm479, %v471, 0.0
      %487 = vadd.xlane.f32.xlu0 %v486
      %v488 = vpop.xlane.xlu0 %487
      %v489 = vsel %vm479, %v472, 0.0
      %490 = vadd.xlane.f32.xlu0 %v489
      %v491 = vpop.xlane.xlu0 %490
      %v492 = vsel %vm479, %v473, 0.0
      %493 = vadd.xlane.f32.xlu0 %v492
      %v494 = vpop.xlane.xlu0 %493
      %v495 = vsel %vm479, %v474, 0.0
      %496 = vadd.xlane.f32.xlu0 %v495
      %v497 = vpop.xlane.xlu0 %496
      %v498 = vsel %vm479, %v475, 0.0
      %499 = vadd.xlane.f32.xlu0 %v498
      %v500 = vpop.xlane.xlu0 %499
      %v501 = vsel %vm479, %v476, 0.0
      %502 = vadd.xlane.f32.xlu0 %v501
      %v503 = vpop.xlane.xlu0 %502
      %v504 = vrcp.pop 32.0
      %v505 = vmul.f32 %v482, %v504
      %v506 = vmul.f32 %v485, %v504
      %v507 = vmul.f32 %v488, %v504
      %v508 = vmul.f32 %v491, %v504
      %v509 = vmul.f32 %v494, %v504
      %v510 = vmul.f32 %v497, %v504
      %v511 = vmul.f32 %v500, %v504
      %v512 = vmul.f32 %v503, %v504
      %v513 = vsub.f32 %v469, %v505
      %v514 = vsub.f32 %v470, %v506
      %v515 = vsub.f32 %v471, %v507
      %v516 = vsub.f32 %v472, %v508
      %v517 = vsub.f32 %v473, %v509
      %v518 = vsub.f32 %v474, %v510
      %v519 = vsub.f32 %v475, %v511
      %v520 = vsub.f32 %v476, %v512
      %v521 = vmul.f32 %v513, %v513
      %v522 = vmul.f32 %v514, %v514
      %v523 = vmul.f32 %v515, %v515
      %v524 = vmul.f32 %v516, %v516
      %v525 = vmul.f32 %v517, %v517
      %v526 = vmul.f32 %v518, %v518
      %v527 = vmul.f32 %v519, %v519
      %v528 = vmul.f32 %v520, %v520
      %v529 = vsel %vm479, %v521, 0.0
      %530 = vadd.xlane.f32.xlu0 %v529
      %v531 = vpop.xlane.xlu0 %530
      %v532 = vsel %vm479, %v522, 0.0
      %533 = vadd.xlane.f32.xlu0 %v532
      %v534 = vpop.xlane.xlu0 %533
      %v535 = vsel %vm479, %v523, 0.0
      %536 = vadd.xlane.f32.xlu0 %v535
      %v537 = vpop.xlane.xlu0 %536
      %v538 = vsel %vm479, %v524, 0.0
      %539 = vadd.xlane.f32.xlu0 %v538
      %v540 = vpop.xlane.xlu0 %539
      %v541 = vsel %vm479, %v525, 0.0
      %542 = vadd.xlane.f32.xlu0 %v541
      %v543 = vpop.xlane.xlu0 %542
      %v544 = vsel %vm479, %v526, 0.0
      %545 = vadd.xlane.f32.xlu0 %v544
      %v546 = vpop.xlane.xlu0 %545
      %v547 = vsel %vm479, %v527, 0.0
      %548 = vadd.xlane.f32.xlu0 %v547
      %v549 = vpop.xlane.xlu0 %548
      %v550 = vsel %vm479, %v528, 0.0
      %551 = vadd.xlane.f32.xlu0 %v550
      %v552 = vpop.xlane.xlu0 %551
      %v553 = vmul.f32 %v531, %v504
      %v554 = vmul.f32 %v534, %v504
      %v555 = vmul.f32 %v537, %v504
      %v556 = vmul.f32 %v540, %v504
      %v557 = vmul.f32 %v543, %v504
      %v558 = vmul.f32 %v546, %v504
      %v559 = vmul.f32 %v549, %v504
      %v560 = vmul.f32 %v552, %v504
      %v561 = vadd.f32 %v553, 1e-05
      %v562 = vadd.f32 %v554, 1e-05
      %v563 = vadd.f32 %v555, 1e-05
      %v564 = vadd.f32 %v556, 1e-05
      %v565 = vadd.f32 %v557, 1e-05
      %v566 = vadd.f32 %v558, 1e-05
      %v567 = vadd.f32 %v559, 1e-05
      %v568 = vadd.f32 %v560, 1e-05
      %v569 = vrsqrt.pop %v561
      %v570 = vrsqrt.pop %v562
      %v571 = vrsqrt.pop %v563
      %v572 = vrsqrt.pop %v564
      %v573 = vrsqrt.pop %v565
      %v574 = vrsqrt.pop %v566
      %v575 = vrsqrt.pop %v567
      %v576 = vrsqrt.pop %v568
      %v577 = vmul.f32 %v513, %v569
      %v578 = vmul.f32 %v514, %v570
      %v579 = vmul.f32 %v515, %v571
      %v580 = vmul.f32 %v516, %v572
      %v581 = vmul.f32 %v517, %v573
      %v582 = vmul.f32 %v518, %v574
      %v583 = vmul.f32 %v519, %v575
      %v584 = vmul.f32 %v520, %v576
      %v586 = vlaneseq
      %v587 = vshrl.u32 %v586, 7
      %v588 = vsub.s32 0, %v587
      %v589 = vrot.slane %v477, %v588
      %v591 = vmul.f32 %v577, %v589
      %v592 = vmul.f32 %v578, %v589
      %v593 = vmul.f32 %v579, %v589
      %v594 = vmul.f32 %v580, %v589
      %v595 = vmul.f32 %v581, %v589
      %v596 = vmul.f32 %v582, %v589
      %v597 = vmul.f32 %v583, %v589
      %v598 = vmul.f32 %v584, %v589
      %v600 = vlaneseq
      %v601 = vshrl.u32 %v600, 7
      %v602 = vsub.s32 0, %v601
      %v603 = vrot.slane %v478, %v602
      %v605 = vadd.f32 %v591, %v603
      %v606 = vadd.f32 %v592, %v603
      %v607 = vadd.f32 %v593, %v603
      %v608 = vadd.f32 %v594, %v603
      %v609 = vadd.f32 %v595, %v603
      %v610 = vadd.f32 %v596, %v603
      %v611 = vadd.f32 %v597, %v603
      %v612 = vadd.f32 %v598, %v603
      %v613 = vpack.c.bf16 %v606, %v605
      %v614 = vpack.c.bf16 %v608, %v607
      %v615 = vpack.c.bf16 %v610, %v609
      %v616 = vpack.c.bf16 %v612, %v611
      %v617 = vld [vmem:[%s4] sm:$0xf]
      %v618 = vld [vmem:[%s4 + $0x4] sm:$0xf]
      %v619 = vld [vmem:[%s4 + $0x8] sm:$0xf]
      %v620 = vld [vmem:[%s4 + $0xc] sm:$0xf]
      %v621 = vld [vmem:[%s5] sm:$0x1]
      %v623 = vlaneseq
      %v624 = vshrl.u32 %v623, 7
      %v625 = vsub.s32 0, %v624
      %v626 = vrot.slane %v621, %v625
      %v632 = vunpack.c.l.b16 %v617
      %v633 = vunpack.c.l.b16 %v618
      %v634 = vunpack.c.l.b16 %v619
      %v635 = vunpack.c.l.b16 %v620
      %v636 = vpack.c.b16 %v633, %v632
      %v637 = vpack.c.b16 %v635, %v634
      %v641 = vsel %vm479, %v613, 0
      %v644 = vsel %vm479, %v614, 0
      %v647 = vsel %vm479, %v615, 0
      %v650 = vsel %vm479, %v616, 0
      %652 = vmatprep.subr.bf16.mxu0 0
      %653 = vmatpush1.bf16.msra.mxu0 %v636
      %654 = vmatprep.subr.bf16.mxu0 0
      %655 = vmatpush1.bf16.msra.mxu0 %v637
      %656 = vmatprep.subr.bf16.mxu0 0
      %657 = vmatpush1.bf16.msra.mxu0 0
      %658 = vmatprep.subr.bf16.mxu0 0
      %659 = vmatpush1.bf16.msra.mxu0 0
      %660 = vmatprep.subr.bf16.mxu0 0
      %661 = vmatpush1.bf16.msra.mxu0 0
      %662 = vmatprep.subr.bf16.mxu0 0
      %663 = vmatpush1.bf16.msra.mxu0 0
      %664 = vmatprep.subr.bf16.mxu0 0
      %665 = vmatpush1.bf16.msra.mxu0 0
      %666 = vmatprep.subr.bf16.mxu0 0
      %667 = vmatpush1.bf16.msra.mxu0 0
      %668 = vmatprep.subr.bf16.mxu0 0
      %669 = vmatpush1.bf16.msra.mxu0 0
      %670 = vmatprep.subr.bf16.mxu0 0
      %671 = vmatpush1.bf16.msra.mxu0 0
      %672 = vmatprep.subr.bf16.mxu0 0
      %673 = vmatpush1.bf16.msra.mxu0 0
      %674 = vmatprep.subr.bf16.mxu0 0
      %675 = vmatpush1.bf16.msra.mxu0 0
      %676 = vmatprep.subr.bf16.mxu0 0
      %677 = vmatpush1.bf16.msra.mxu0 0
      %678 = vmatprep.subr.bf16.mxu0 0
      %679 = vmatpush1.bf16.msra.mxu0 0
      %680 = vmatprep.subr.bf16.mxu0 0
      %681 = vmatpush1.bf16.msra.mxu0 0
      %682 = vmatprep.subr.bf16.mxu0 0
      %683 = vmatpush1.bf16.msra.mxu0 0
      %684 = vmatprep.mubr.bf16.mxu0 0
      %685 = vmatmul.mubr.bf16.gmra.mrb[0].mxu0 %v641
      %v686 = vpop.f32.mrb[0].mxu0
      %v687 = vadd.f32 %v626, %v686
      %v688 = vpop.f32.mrb[0].mxu0
      %v689 = vpop.f32.mrb[0].mxu0
      %v690 = vadd.f32 %v626, %v689
      %v691 = vpop.f32.mrb[0].mxu0
      %692 = vmatprep.mubr.bf16.mxu0 0
      %693 = vmatmul.mubr.bf16.gmra.mrb[0].mxu0 %v644
      %v694 = vpop.f32.mrb[0].mxu0
      %v695 = vadd.f32 %v626, %v694
      %v696 = vpop.f32.mrb[0].mxu0
      %v697 = vpop.f32.mrb[0].mxu0
      %v698 = vadd.f32 %v626, %v697
      %v699 = vpop.f32.mrb[0].mxu0
      %700 = vmatprep.mubr.bf16.mxu0 0
      %701 = vmatmul.mubr.bf16.gmra.mrb[0].mxu0 %v647
      %v702 = vpop.f32.mrb[0].mxu0
      %v703 = vadd.f32 %v626, %v702
      %v704 = vpop.f32.mrb[0].mxu0
      %v705 = vpop.f32.mrb[0].mxu0
      %v706 = vadd.f32 %v626, %v705
      %v707 = vpop.f32.mrb[0].mxu0
      %708 = vmatprep.mubr.bf16.mxu0 0
      %709 = vmatmul.mubr.bf16.gmra.mrb[0].mxu0 %v650
      %v710 = vpop.f32.mrb[0].mxu0
      %v711 = vadd.f32 %v626, %v710
      %v712 = vpop.f32.mrb[0].mxu0
      %v713 = vpop.f32.mrb[0].mxu0
      %v714 = vadd.f32 %v626, %v713
      %v715 = vpop.f32.mrb[0].mxu0
      %716 = vdwg.mxu0
      %v717 = vmul.f32 %v687, 0.25
      %v718 = vmul.f32 %v690, 0.25
      %v719 = vmul.f32 %v695, 0.25
      %v720 = vmul.f32 %v698, 0.25
      %v721 = vmul.f32 %v703, 0.25
      %v722 = vmul.f32 %v706, 0.25
      %v723 = vmul.f32 %v711, 0.25
      %v724 = vmul.f32 %v714, 0.25
      %v725 = vpack.c.bf16 %v718, %v717
      %v726 = vpack.c.bf16 %v720, %v719
      %v727 = vpack.c.bf16 %v722, %v721
      %v728 = vpack.c.bf16 %v724, %v723
      %v729 = vpack.c.bf16 %v690, %v687
      %v730 = vpack.c.bf16 %v698, %v695
      %v731 = vpack.c.bf16 %v706, %v703
      %v732 = vpack.c.bf16 %v714, %v711
      %v733 = vld [vmem:[%s1] sm:$0xff]
      %v734 = vld [vmem:[%s1 + $0x8] sm:$0xff]
      %v735 = vld [vmem:[%s1 + $0x10] sm:$0xff]
      %v736 = vld [vmem:[%s1 + $0x18] sm:$0xff]
      %v737 = vld [vmem:[%s1 + $0x20] sm:$0xff]
      %v738 = vld [vmem:[%s1 + $0x28] sm:$0xff]
      %v739 = vld [vmem:[%s1 + $0x30] sm:$0xff]
      %v740 = vld [vmem:[%s1 + $0x38] sm:$0xff]
      %745 = vrot.lane.b32.xlu0 %v729, 96
      %v746 = vpop.permute.xlu0 %745
      %747 = vrot.lane.b32.xlu0 %v730, 96
      %v748 = vpop.permute.xlu0 %747
      %749 = vrot.lane.b32.xlu0 %v731, 96
      %v750 = vpop.permute.xlu0 %749
      %751 = vrot.lane.b32.xlu0 %v732, 96
      %v752 = vpop.permute.xlu0 %751
      %vm753 = vcmask 130048
      %v755 = vsel %vm753, %v725, 0
      %v758 = vsel %vm753, %v726, 0
      %v761 = vsel %vm753, %v727, 0
      %v764 = vsel %vm753, %v728, 0
      %v767 = vsel %vm753, %v746, 0
      %v770 = vsel %vm753, %v748, 0
      %v773 = vsel %vm753, %v750, 0
      %v776 = vsel %vm753, %v752, 0
      %778 = vmatprep.subr.bf16.mxu0 0
      %779 = vmatpush1.bf16.xpose.msra.mxu0 %v767
      %780 = vmatprep.subr.bf16.mxu0 0
      %781 = vmatpush1.bf16.xpose.msra.mxu0 %v770
      %782 = vmatprep.subr.bf16.mxu0 0
      %783 = vmatpush1.bf16.xpose.msra.mxu0 %v773
      %784 = vmatprep.subr.bf16.mxu0 0
      %785 = vmatpush1.bf16.xpose.msra.mxu0 %v776
      %786 = vmatprep.subr.bf16.mxu0 0
      %787 = vmatpush1.bf16.xpose.msra.mxu0 0
      %788 = vmatprep.subr.bf16.mxu0 0
      %789 = vmatpush1.bf16.xpose.msra.mxu0 0
      %790 = vmatprep.subr.bf16.mxu0 0
      %791 = vmatpush1.bf16.xpose.msra.mxu0 0
      %792 = vmatprep.subr.bf16.mxu0 0
      %793 = vmatpush1.bf16.xpose.msra.mxu0 0
      %794 = vmatprep.subr.bf16.mxu0 0
      %795 = vmatpush1.bf16.xpose.msra.mxu0 0
      %796 = vmatprep.subr.bf16.mxu0 0
      %797 = vmatpush1.bf16.xpose.msra.mxu0 0
      %798 = vmatprep.subr.bf16.mxu0 0
      %799 = vmatpush1.bf16.xpose.msra.mxu0 0
      %800 = vmatprep.subr.bf16.mxu0 0
      %801 = vmatpush1.bf16.xpose.msra.mxu0 0
      %802 = vmatprep.subr.bf16.mxu0 0
      %803 = vmatpush1.bf16.xpose.msra.mxu0 0
      %804 = vmatprep.subr.bf16.mxu0 0
      %805 = vmatpush1.bf16.xpose.msra.mxu0 0
      %806 = vmatprep.subr.bf16.mxu0 0
      %807 = vmatpush1.bf16.xpose.msra.mxu0 0
      %808 = vmatprep.subr.bf16.mxu0 0
      %809 = vmatpush1.bf16.xpose.msra.mxu0 0
      %810 = vmatprep.mubr.bf16.mxu0 0
      %811 = vmatmul.mubr.bf16.gmra.mrb[0].mxu0 %v755
      %v812 = vpop.f32.mrb[0].mxu0
      %v813 = vadd.f32 %v733, %v812
      %v814 = vpop.f32.mrb[0].mxu0
      %v815 = vpop.f32.mrb[0].mxu0
      %v816 = vadd.f32 %v734, %v815
      %v817 = vpop.f32.mrb[0].mxu0
      %818 = vmatprep.mubr.bf16.mxu0 0
      %819 = vmatmul.mubr.bf16.gmra.mrb[0].mxu0 %v758
      %v820 = vpop.f32.mrb[0].mxu0
      %v821 = vadd.f32 %v735, %v820
      %v822 = vpop.f32.mrb[0].mxu0
      %v823 = vpop.f32.mrb[0].mxu0
      %v824 = vadd.f32 %v736, %v823
      %v825 = vpop.f32.mrb[0].mxu0
      %826 = vmatprep.mubr.bf16.mxu0 0
      %827 = vmatmul.mubr.bf16.gmra.mrb[0].mxu0 %v761
      %v828 = vpop.f32.mrb[0].mxu0
      %v829 = vadd.f32 %v737, %v828
      %v830 = vpop.f32.mrb[0].mxu0
      %v831 = vpop.f32.mrb[0].mxu0
      %v832 = vadd.f32 %v738, %v831
      %v833 = vpop.f32.mrb[0].mxu0
      %834 = vmatprep.mubr.bf16.mxu0 0
      %835 = vmatmul.mubr.bf16.gmra.mrb[0].mxu0 %v764
      %v836 = vpop.f32.mrb[0].mxu0
      %v837 = vadd.f32 %v739, %v836
      %v838 = vpop.f32.mrb[0].mxu0
      %v839 = vpop.f32.mrb[0].mxu0
      %v840 = vadd.f32 %v740, %v839
      %v841 = vpop.f32.mrb[0].mxu0
      %842 = vdwg.mxu0
      %vm843 = vcmask 523264
      %v844 = vsel %vm843, %v813, -inf
      %845 = vmax.xlane.f32.xlu0 %v844
      %v846 = vpop.xlane.xlu0 %845
      %v847 = vsel %vm843, %v816, -inf
      %848 = vmax.xlane.f32.xlu0 %v847
      %v849 = vpop.xlane.xlu0 %848
      %v850 = vsel %vm843, %v821, -inf
      %851 = vmax.xlane.f32.xlu0 %v850
      %v852 = vpop.xlane.xlu0 %851
      %v853 = vsel %vm843, %v824, -inf
      %854 = vmax.xlane.f32.xlu0 %v853
      %v855 = vpop.xlane.xlu0 %854
      %v856 = vsel %vm843, %v829, -inf
      %857 = vmax.xlane.f32.xlu0 %v856
      %v858 = vpop.xlane.xlu0 %857
      %v859 = vsel %vm843, %v832, -inf
      %860 = vmax.xlane.f32.xlu0 %v859
      %v861 = vpop.xlane.xlu0 %860
      %v862 = vsel %vm843, %v837, -inf
      %863 = vmax.xlane.f32.xlu0 %v862
      %v864 = vpop.xlane.xlu0 %863
      %v865 = vsel %vm843, %v840, -inf
      %866 = vmax.xlane.f32.xlu0 %v865
      %v867 = vpop.xlane.xlu0 %866
      %v868 = vsub.f32 %v813, %v846
      %v869 = vsub.f32 %v816, %v849
      %v870 = vsub.f32 %v821, %v852
      %v871 = vsub.f32 %v824, %v855
      %v872 = vsub.f32 %v829, %v858
      %v873 = vsub.f32 %v832, %v861
      %v874 = vsub.f32 %v837, %v864
      %v875 = vsub.f32 %v840, %v867
      %v876 = vmul.f32 %v868, 1.442695
      %v877 = vpow.pop %v876
      %v878 = vmul.f32 %v869, 1.442695
      %v879 = vpow.pop %v878
      %v880 = vmul.f32 %v870, 1.442695
      %v881 = vpow.pop %v880
      %v882 = vmul.f32 %v871, 1.442695
      %v883 = vpow.pop %v882
      %v884 = vmul.f32 %v872, 1.442695
      %v885 = vpow.pop %v884
      %v886 = vmul.f32 %v873, 1.442695
      %v887 = vpow.pop %v886
      %v888 = vmul.f32 %v874, 1.442695
      %v889 = vpow.pop %v888
      %v890 = vmul.f32 %v875, 1.442695
      %v891 = vpow.pop %v890
      %v892 = vsel %vm843, %v877, 0.0
      %893 = vadd.xlane.f32.xlu0 %v892
      %v894 = vpop.xlane.xlu0 %893
      %v895 = vsel %vm843, %v879, 0.0
      %896 = vadd.xlane.f32.xlu0 %v895
      %v897 = vpop.xlane.xlu0 %896
      %v898 = vsel %vm843, %v881, 0.0
      %899 = vadd.xlane.f32.xlu0 %v898
      %v900 = vpop.xlane.xlu0 %899
      %v901 = vsel %vm843, %v883, 0.0
      %902 = vadd.xlane.f32.xlu0 %v901
      %v903 = vpop.xlane.xlu0 %902
      %v904 = vsel %vm843, %v885, 0.0
      %905 = vadd.xlane.f32.xlu0 %v904
      %v906 = vpop.xlane.xlu0 %905
      %v907 = vsel %vm843, %v887, 0.0
      %908 = vadd.xlane.f32.xlu0 %v907
      %v909 = vpop.xlane.xlu0 %908
      %v910 = vsel %vm843, %v889, 0.0
      %911 = vadd.xlane.f32.xlu0 %v910
      %v912 = vpop.xlane.xlu0 %911
      %v913 = vsel %vm843, %v891, 0.0
      %914 = vadd.xlane.f32.xlu0 %v913
      %v915 = vpop.xlane.xlu0 %914
      %v916 = vrcp.pop %v894
      %v917 = vrcp.pop %v897
      %v918 = vrcp.pop %v900
      %v919 = vrcp.pop %v903
      %v920 = vrcp.pop %v906
      %v921 = vrcp.pop %v909
      %v922 = vrcp.pop %v912
      %v923 = vrcp.pop %v915
      %v924 = vmul.f32 %v877, %v916
      %v925 = vmul.f32 %v879, %v917
      %v926 = vmul.f32 %v881, %v918
      %v927 = vmul.f32 %v883, %v919
      %v928 = vmul.f32 %v885, %v920
      %v929 = vmul.f32 %v887, %v921
      %v930 = vmul.f32 %v889, %v922
      %v931 = vmul.f32 %v891, %v923
      %v932 = vpack.c.bf16 %v925, %v924
      %v933 = vpack.c.bf16 %v927, %v926
      %v934 = vpack.c.bf16 %v929, %v928
      %v935 = vpack.c.bf16 %v931, %v930
      %936 = vrot.lane.b32.xlu0 %v729, 64
      %v937 = vpop.permute.xlu0 %936
      %938 = vrot.lane.b32.xlu0 %v730, 64
      %v939 = vpop.permute.xlu0 %938
      %940 = vrot.lane.b32.xlu0 %v731, 64
      %v941 = vpop.permute.xlu0 %940
      %942 = vrot.lane.b32.xlu0 %v732, 64
      %v943 = vpop.permute.xlu0 %942
      %v949 = vsel %vm843, %v932, 0
      %v952 = vsel %vm843, %v933, 0
      %v955 = vsel %vm843, %v934, 0
      %v958 = vsel %vm843, %v935, 0
      %960 = vmatprep.subr.bf16.mxu0 0
      %961 = vmatpush1.bf16.msra.mxu0 %v937
      %962 = vmatprep.subr.bf16.mxu0 0
      %963 = vmatpush1.bf16.msra.mxu0 %v939
      %964 = vmatprep.subr.bf16.mxu0 0
      %965 = vmatpush1.bf16.msra.mxu0 %v941
      %966 = vmatprep.subr.bf16.mxu0 0
      %967 = vmatpush1.bf16.msra.mxu0 %v943
      %968 = vmatprep.subr.bf16.mxu0 0
      %969 = vmatpush1.bf16.msra.mxu0 0
      %970 = vmatprep.subr.bf16.mxu0 0
      %971 = vmatpush1.bf16.msra.mxu0 0
      %972 = vmatprep.subr.bf16.mxu0 0
      %973 = vmatpush1.bf16.msra.mxu0 0
      %974 = vmatprep.subr.bf16.mxu0 0
      %975 = vmatpush1.bf16.msra.mxu0 0
      %976 = vmatprep.subr.bf16.mxu0 0
      %977 = vmatpush1.bf16.msra.mxu0 0
      %978 = vmatprep.subr.bf16.mxu0 0
      %979 = vmatpush1.bf16.msra.mxu0 0
      %980 = vmatprep.subr.bf16.mxu0 0
      %981 = vmatpush1.bf16.msra.mxu0 0
      %982 = vmatprep.subr.bf16.mxu0 0
      %983 = vmatpush1.bf16.msra.mxu0 0
      %984 = vmatprep.subr.bf16.mxu0 0
      %985 = vmatpush1.bf16.msra.mxu0 0
      %986 = vmatprep.subr.bf16.mxu0 0
      %987 = vmatpush1.bf16.msra.mxu0 0
      %988 = vmatprep.subr.bf16.mxu0 0
      %989 = vmatpush1.bf16.msra.mxu0 0
      %990 = vmatprep.subr.bf16.mxu0 0
      %991 = vmatpush1.bf16.msra.mxu0 0
      %992 = vmatprep.mubr.bf16.mxu0 0
      %993 = vmatmul.mubr.bf16.gmra.mrb[0].mxu0 %v949
      %v994 = vpop.f32.mrb[0].mxu0
      %v995 = vadd.f32 0.0, %v994
      %v996 = vpop.f32.mrb[0].mxu0
      %v997 = vpop.f32.mrb[0].mxu0
      %v998 = vadd.f32 0.0, %v997
      %v999 = vpop.f32.mrb[0].mxu0
      %1000 = vmatprep.mubr.bf16.mxu0 0
      %1001 = vmatmul.mubr.bf16.gmra.mrb[0].mxu0 %v952
      %v1002 = vpop.f32.mrb[0].mxu0
      %v1003 = vadd.f32 0.0, %v1002
      %v1004 = vpop.f32.mrb[0].mxu0
      %v1005 = vpop.f32.mrb[0].mxu0
      %v1006 = vadd.f32 0.0, %v1005
      %v1007 = vpop.f32.mrb[0].mxu0
      %1008 = vmatprep.mubr.bf16.mxu0 0
      %1009 = vmatmul.mubr.bf16.gmra.mrb[0].mxu0 %v955
      %v1010 = vpop.f32.mrb[0].mxu0
      %v1011 = vadd.f32 0.0, %v1010
      %v1012 = vpop.f32.mrb[0].mxu0
      %v1013 = vpop.f32.mrb[0].mxu0
      %v1014 = vadd.f32 0.0, %v1013
      %v1015 = vpop.f32.mrb[0].mxu0
      %1016 = vmatprep.mubr.bf16.mxu0 0
      %1017 = vmatmul.mubr.bf16.gmra.mrb[0].mxu0 %v958
      %v1018 = vpop.f32.mrb[0].mxu0
      %v1019 = vadd.f32 0.0, %v1018
      %v1020 = vpop.f32.mrb[0].mxu0
      %v1021 = vpop.f32.mrb[0].mxu0
      %v1022 = vadd.f32 0.0, %v1021
      %v1023 = vpop.f32.mrb[0].mxu0
      %1024 = vdwg.mxu0
      %s1025 = scalar_lea.vmem %s1, 64
      %v1026 = vld [vmem:[%s1025] sm:$0xff]
      %v1027 = vld [vmem:[%s1025 + $0x8] sm:$0xff]
      %v1028 = vld [vmem:[%s1025 + $0x10] sm:$0xff]
      %v1029 = vld [vmem:[%s1025 + $0x18] sm:$0xff]
      %v1030 = vld [vmem:[%s1025 + $0x20] sm:$0xff]
      %v1031 = vld [vmem:[%s1025 + $0x28] sm:$0xff]
      %v1032 = vld [vmem:[%s1025 + $0x30] sm:$0xff]
      %v1033 = vld [vmem:[%s1025 + $0x38] sm:$0xff]
      %1038 = vrot.lane.b32.xlu0 %v725, 112
      %v1039 = vpop.permute.xlu0 %1038
      %1040 = vrot.lane.b32.xlu0 %v726, 112
      %v1041 = vpop.permute.xlu0 %1040
      %1042 = vrot.lane.b32.xlu0 %v727, 112
      %v1043 = vpop.permute.xlu0 %1042
      %1044 = vrot.lane.b32.xlu0 %v728, 112
      %v1045 = vpop.permute.xlu0 %1044
      %1046 = vrot.lane.b32.xlu0 %v729, 80
      %v1047 = vpop.permute.xlu0 %1046
      %1048 = vrot.lane.b32.xlu0 %v730, 80
      %v1049 = vpop.permute.xlu0 %1048
      %1050 = vrot.lane.b32.xlu0 %v731, 80
      %v1051 = vpop.permute.xlu0 %1050
      %1052 = vrot.lane.b32.xlu0 %v732, 80
      %v1053 = vpop.permute.xlu0 %1052
      %v1055 = vsel %vm753, %v1039, 0
      %v1058 = vsel %vm753, %v1041, 0
      %v1061 = vsel %vm753, %v1043, 0
      %v1064 = vsel %vm753, %v1045, 0
      %v1067 = vsel %vm753, %v1047, 0
      %v1070 = vsel %vm753, %v1049, 0
      %v1073 = vsel %vm753, %v1051, 0
      %v1076 = vsel %vm753, %v1053, 0
      %1078 = vmatprep.subr.bf16.mxu0 0
      %1079 = vmatpush1.bf16.xpose.msra.mxu0 %v1067
      %1080 = vmatprep.subr.bf16.mxu0 0
      %1081 = vmatpush1.bf16.xpose.msra.mxu0 %v1070
      %1082 = vmatprep.subr.bf16.mxu0 0
      %1083 = vmatpush1.bf16.xpose.msra.mxu0 %v1073
      %1084 = vmatprep.subr.bf16.mxu0 0
      %1085 = vmatpush1.bf16.xpose.msra.mxu0 %v1076
      %1086 = vmatprep.subr.bf16.mxu0 0
      %1087 = vmatpush1.bf16.xpose.msra.mxu0 0
      %1088 = vmatprep.subr.bf16.mxu0 0
      %1089 = vmatpush1.bf16.xpose.msra.mxu0 0
      %1090 = vmatprep.subr.bf16.mxu0 0
      %1091 = vmatpush1.bf16.xpose.msra.mxu0 0
      %1092 = vmatprep.subr.bf16.mxu0 0
      %1093 = vmatpush1.bf16.xpose.msra.mxu0 0
      %1094 = vmatprep.subr.bf16.mxu0 0
      %1095 = vmatpush1.bf16.xpose.msra.mxu0 0
      %1096 = vmatprep.subr.bf16.mxu0 0
      %1097 = vmatpush1.bf16.xpose.msra.mxu0 0
      %1098 = vmatprep.subr.bf16.mxu0 0
      %1099 = vmatpush1.bf16.xpose.msra.mxu0 0
      %1100 = vmatprep.subr.bf16.mxu0 0
      %1101 = vmatpush1.bf16.xpose.msra.mxu0 0
      %1102 = vmatprep.subr.bf16.mxu0 0
      %1103 = vmatpush1.bf16.xpose.msra.mxu0 0
      %1104 = vmatprep.subr.bf16.mxu0 0
      %1105 = vmatpush1.bf16.xpose.msra.mxu0 0
      %1106 = vmatprep.subr.bf16.mxu0 0
      %1107 = vmatpush1.bf16.xpose.msra.mxu0 0
      %1108 = vmatprep.subr.bf16.mxu0 0
      %1109 = vmatpush1.bf16.xpose.msra.mxu0 0
      %1110 = vmatprep.mubr.bf16.mxu0 0
      %1111 = vmatmul.mubr.bf16.gmra.mrb[0].mxu0 %v1055
      %v1112 = vpop.f32.mrb[0].mxu0
      %v1113 = vadd.f32 %v1026, %v1112
      %v1114 = vpop.f32.mrb[0].mxu0
      %v1115 = vpop.f32.mrb[0].mxu0
      %v1116 = vadd.f32 %v1027, %v1115
      %v1117 = vpop.f32.mrb[0].mxu0
      %1118 = vmatprep.mubr.bf16.mxu0 0
      %1119 = vmatmul.mubr.bf16.gmra.mrb[0].mxu0 %v1058
      %v1120 = vpop.f32.mrb[0].mxu0
      %v1121 = vadd.f32 %v1028, %v1120
      %v1122 = vpop.f32.mrb[0].mxu0
      %v1123 = vpop.f32.mrb[0].mxu0
      %v1124 = vadd.f32 %v1029, %v1123
      %v1125 = vpop.f32.mrb[0].mxu0
      %1126 = vmatprep.mubr.bf16.mxu0 0
      %1127 = vmatmul.mubr.bf16.gmra.mrb[0].mxu0 %v1061
      %v1128 = vpop.f32.mrb[0].mxu0
      %v1129 = vadd.f32 %v1030, %v1128
      %v1130 = vpop.f32.mrb[0].mxu0
      %v1131 = vpop.f32.mrb[0].mxu0
      %v1132 = vadd.f32 %v1031, %v1131
      %v1133 = vpop.f32.mrb[0].mxu0
      %1134 = vmatprep.mubr.bf16.mxu0 0
      %1135 = vmatmul.mubr.bf16.gmra.mrb[0].mxu0 %v1064
      %v1136 = vpop.f32.mrb[0].mxu0
      %v1137 = vadd.f32 %v1032, %v1136
      %v1138 = vpop.f32.mrb[0].mxu0
      %v1139 = vpop.f32.mrb[0].mxu0
      %v1140 = vadd.f32 %v1033, %v1139
      %v1141 = vpop.f32.mrb[0].mxu0
      %1142 = vdwg.mxu0
      %v1143 = vsel %vm843, %v1113, -inf
      %1144 = vmax.xlane.f32.xlu0 %v1143
      %v1145 = vpop.xlane.xlu0 %1144
      %v1146 = vsel %vm843, %v1116, -inf
      %1147 = vmax.xlane.f32.xlu0 %v1146
      %v1148 = vpop.xlane.xlu0 %1147
      %v1149 = vsel %vm843, %v1121, -inf
      %1150 = vmax.xlane.f32.xlu0 %v1149
      %v1151 = vpop.xlane.xlu0 %1150
      %v1152 = vsel %vm843, %v1124, -inf
      %1153 = vmax.xlane.f32.xlu0 %v1152
      %v1154 = vpop.xlane.xlu0 %1153
      %v1155 = vsel %vm843, %v1129, -inf
      %1156 = vmax.xlane.f32.xlu0 %v1155
      %v1157 = vpop.xlane.xlu0 %1156
      %v1158 = vsel %vm843, %v1132, -inf
      %1159 = vmax.xlane.f32.xlu0 %v1158
      %v1160 = vpop.xlane.xlu0 %1159
      %v1161 = vsel %vm843, %v1137, -inf
      %1162 = vmax.xlane.f32.xlu0 %v1161
      %v1163 = vpop.xlane.xlu0 %1162
      %v1164 = vsel %vm843, %v1140, -inf
      %1165 = vmax.xlane.f32.xlu0 %v1164
      %v1166 = vpop.xlane.xlu0 %1165
      %v1167 = vsub.f32 %v1113, %v1145
      %v1168 = vsub.f32 %v1116, %v1148
      %v1169 = vsub.f32 %v1121, %v1151
      %v1170 = vsub.f32 %v1124, %v1154
      %v1171 = vsub.f32 %v1129, %v1157
      %v1172 = vsub.f32 %v1132, %v1160
      %v1173 = vsub.f32 %v1137, %v1163
      %v1174 = vsub.f32 %v1140, %v1166
      %v1175 = vmul.f32 %v1167, 1.442695
      %v1176 = vpow.pop %v1175
      %v1177 = vmul.f32 %v1168, 1.442695
      %v1178 = vpow.pop %v1177
      %v1179 = vmul.f32 %v1169, 1.442695
      %v1180 = vpow.pop %v1179
      %v1181 = vmul.f32 %v1170, 1.442695
      %v1182 = vpow.pop %v1181
      %v1183 = vmul.f32 %v1171, 1.442695
      %v1184 = vpow.pop %v1183
      %v1185 = vmul.f32 %v1172, 1.442695
      %v1186 = vpow.pop %v1185
      %v1187 = vmul.f32 %v1173, 1.442695
      %v1188 = vpow.pop %v1187
      %v1189 = vmul.f32 %v1174, 1.442695
      %v1190 = vpow.pop %v1189
      %v1191 = vsel %vm843, %v1176, 0.0
      %1192 = vadd.xlane.f32.xlu0 %v1191
      %v1193 = vpop.xlane.xlu0 %1192
      %v1194 = vsel %vm843, %v1178, 0.0
      %1195 = vadd.xlane.f32.xlu0 %v1194
      %v1196 = vpop.xlane.xlu0 %1195
      %v1197 = vsel %vm843, %v1180, 0.0
      %1198 = vadd.xlane.f32.xlu0 %v1197
      %v1199 = vpop.xlane.xlu0 %1198
      %v1200 = vsel %vm843, %v1182, 0.0
      %1201 = vadd.xlane.f32.xlu0 %v1200
      %v1202 = vpop.xlane.xlu0 %1201
      %v1203 = vsel %vm843, %v1184, 0.0
      %1204 = vadd.xlane.f32.xlu0 %v1203
      %v1205 = vpop.xlane.xlu0 %1204
      %v1206 = vsel %vm843, %v1186, 0.0
      %1207 = vadd.xlane.f32.xlu0 %v1206
      %v1208 = vpop.xlane.xlu0 %1207
      %v1209 = vsel %vm843, %v1188, 0.0
      %1210 = vadd.xlane.f32.xlu0 %v1209
      %v1211 = vpop.xlane.xlu0 %1210
      %v1212 = vsel %vm843, %v1190, 0.0
      %1213 = vadd.xlane.f32.xlu0 %v1212
      %v1214 = vpop.xlane.xlu0 %1213
      %v1215 = vrcp.pop %v1193
      %v1216 = vrcp.pop %v1196
      %v1217 = vrcp.pop %v1199
      %v1218 = vrcp.pop %v1202
      %v1219 = vrcp.pop %v1205
      %v1220 = vrcp.pop %v1208
      %v1221 = vrcp.pop %v1211
      %v1222 = vrcp.pop %v1214
      %v1223 = vmul.f32 %v1176, %v1215
      %v1224 = vmul.f32 %v1178, %v1216
      %v1225 = vmul.f32 %v1180, %v1217
      %v1226 = vmul.f32 %v1182, %v1218
      %v1227 = vmul.f32 %v1184, %v1219
      %v1228 = vmul.f32 %v1186, %v1220
      %v1229 = vmul.f32 %v1188, %v1221
      %v1230 = vmul.f32 %v1190, %v1222
      %v1231 = vpack.c.bf16 %v1224, %v1223
      %v1232 = vpack.c.bf16 %v1226, %v1225
      %v1233 = vpack.c.bf16 %v1228, %v1227
      %v1234 = vpack.c.bf16 %v1230, %v1229
      %1235 = vrot.lane.b32.xlu0 %v729, 48
      %v1236 = vpop.permute.xlu0 %1235
      %1237 = vrot.lane.b32.xlu0 %v730, 48
      %v1238 = vpop.permute.xlu0 %1237
      %1239 = vrot.lane.b32.xlu0 %v731, 48
      %v1240 = vpop.permute.xlu0 %1239
      %1241 = vrot.lane.b32.xlu0 %v732, 48
      %v1242 = vpop.permute.xlu0 %1241
      %v1248 = vsel %vm843, %v1231, 0
      %v1251 = vsel %vm843, %v1232, 0
      %v1254 = vsel %vm843, %v1233, 0
      %v1257 = vsel %vm843, %v1234, 0
      %1259 = vmatprep.subr.bf16.mxu0 0
      %1260 = vmatpush1.bf16.msra.mxu0 %v1236
      %1261 = vmatprep.subr.bf16.mxu0 0
      %1262 = vmatpush1.bf16.msra.mxu0 %v1238
      %1263 = vmatprep.subr.bf16.mxu0 0
      %1264 = vmatpush1.bf16.msra.mxu0 %v1240
      %1265 = vmatprep.subr.bf16.mxu0 0
      %1266 = vmatpush1.bf16.msra.mxu0 %v1242
      %1267 = vmatprep.subr.bf16.mxu0 0
      %1268 = vmatpush1.bf16.msra.mxu0 0
      %1269 = vmatprep.subr.bf16.mxu0 0
      %1270 = vmatpush1.bf16.msra.mxu0 0
      %1271 = vmatprep.subr.bf16.mxu0 0
      %1272 = vmatpush1.bf16.msra.mxu0 0
      %1273 = vmatprep.subr.bf16.mxu0 0
      %1274 = vmatpush1.bf16.msra.mxu0 0
      %1275 = vmatprep.subr.bf16.mxu0 0
      %1276 = vmatpush1.bf16.msra.mxu0 0
      %1277 = vmatprep.subr.bf16.mxu0 0
      %1278 = vmatpush1.bf16.msra.mxu0 0
      %1279 = vmatprep.subr.bf16.mxu0 0
      %1280 = vmatpush1.bf16.msra.mxu0 0
      %1281 = vmatprep.subr.bf16.mxu0 0
      %1282 = vmatpush1.bf16.msra.mxu0 0
      %1283 = vmatprep.subr.bf16.mxu0 0
      %1284 = vmatpush1.bf16.msra.mxu0 0
      %1285 = vmatprep.subr.bf16.mxu0 0
      %1286 = vmatpush1.bf16.msra.mxu0 0
      %1287 = vmatprep.subr.bf16.mxu0 0
      %1288 = vmatpush1.bf16.msra.mxu0 0
      %1289 = vmatprep.subr.bf16.mxu0 0
      %1290 = vmatpush1.bf16.msra.mxu0 0
      %1291 = vmatprep.mubr.bf16.mxu0 0
      %1292 = vmatmul.mubr.bf16.gmra.mrb[0].mxu0 %v1248
      %v1293 = vpop.f32.mrb[0].mxu0
      %v1294 = vadd.f32 0.0, %v1293
      %v1295 = vpop.f32.mrb[0].mxu0
      %v1296 = vpop.f32.mrb[0].mxu0
      %v1297 = vadd.f32 0.0, %v1296
      %v1298 = vpop.f32.mrb[0].mxu0
      %1299 = vmatprep.mubr.bf16.mxu0 0
      %1300 = vmatmul.mubr.bf16.gmra.mrb[0].mxu0 %v1251
      %v1301 = vpop.f32.mrb[0].mxu0
      %v1302 = vadd.f32 0.0, %v1301
      %v1303 = vpop.f32.mrb[0].mxu0
      %v1304 = vpop.f32.mrb[0].mxu0
      %v1305 = vadd.f32 0.0, %v1304
      %v1306 = vpop.f32.mrb[0].mxu0
      %1307 = vmatprep.mubr.bf16.mxu0 0
      %1308 = vmatmul.mubr.bf16.gmra.mrb[0].mxu0 %v1254
      %v1309 = vpop.f32.mrb[0].mxu0
      %v1310 = vadd.f32 0.0, %v1309
      %v1311 = vpop.f32.mrb[0].mxu0
      %v1312 = vpop.f32.mrb[0].mxu0
      %v1313 = vadd.f32 0.0, %v1312
      %v1314 = vpop.f32.mrb[0].mxu0
      %1315 = vmatprep.mubr.bf16.mxu0 0
      %1316 = vmatmul.mubr.bf16.gmra.mrb[0].mxu0 %v1257
      %v1317 = vpop.f32.mrb[0].mxu0
      %v1318 = vadd.f32 0.0, %v1317
      %v1319 = vpop.f32.mrb[0].mxu0
      %v1320 = vpop.f32.mrb[0].mxu0
      %v1321 = vadd.f32 0.0, %v1320
      %v1322 = vpop.f32.mrb[0].mxu0
      %1323 = vdwg.mxu0
      %1332 = vrot.lane.b32.xlu0 %v1294, 16
      %v1333 = vpop.permute.xlu0 %1332
      %1334 = vrot.lane.b32.xlu0 %v1297, 16
      %v1335 = vpop.permute.xlu0 %1334
      %1336 = vrot.lane.b32.xlu0 %v1302, 16
      %v1337 = vpop.permute.xlu0 %1336
      %1338 = vrot.lane.b32.xlu0 %v1305, 16
      %v1339 = vpop.permute.xlu0 %1338
      %1340 = vrot.lane.b32.xlu0 %v1310, 16
      %v1341 = vpop.permute.xlu0 %1340
      %1342 = vrot.lane.b32.xlu0 %v1313, 16
      %v1343 = vpop.permute.xlu0 %1342
      %1344 = vrot.lane.b32.xlu0 %v1318, 16
      %v1345 = vpop.permute.xlu0 %1344
      %1346 = vrot.lane.b32.xlu0 %v1321, 16
      %v1347 = vpop.permute.xlu0 %1346
      %v1356 = vsel %vm753, %v995, %v1333
      %v1357 = vsel %vm753, %v998, %v1335
      %v1358 = vsel %vm753, %v1003, %v1337
      %v1359 = vsel %vm753, %v1006, %v1339
      %v1360 = vsel %vm753, %v1011, %v1341
      %v1361 = vsel %vm753, %v1014, %v1343
      %v1362 = vsel %vm753, %v1019, %v1345
      %v1363 = vsel %vm753, %v1022, %v1347
      %v1364 = vpack.c.bf16 %v1357, %v1356
      %v1365 = vpack.c.bf16 %v1359, %v1358
      %v1366 = vpack.c.bf16 %v1361, %v1360
      %v1367 = vpack.c.bf16 %v1363, %v1362
      %v1368 = vld [vmem:[%s6] sm:$0xf]
      %v1369 = vld [vmem:[%s6 + $0x4] sm:$0xf]
      %v1370 = vld [vmem:[%s6 + $0x8] sm:$0xf]
      %v1371 = vld [vmem:[%s6 + $0xc] sm:$0xf]
      %v1372 = vld [vmem:[%s7] sm:$0x1]
      %v1374 = vlaneseq
      %v1375 = vshrl.u32 %v1374, 7
      %v1376 = vsub.s32 0, %v1375
      %v1377 = vrot.slane %v1372, %v1376
      %v1383 = vunpack.c.l.b16 %v1368
      %v1384 = vunpack.c.l.b16 %v1369
      %v1385 = vunpack.c.l.b16 %v1370
      %v1386 = vunpack.c.l.b16 %v1371
      %v1387 = vpack.c.b16 %v1384, %v1383
      %v1388 = vpack.c.b16 %v1386, %v1385
      %v1392 = vsel %vm479, %v1364, 0
      %v1395 = vsel %vm479, %v1365, 0
      %v1398 = vsel %vm479, %v1366, 0
      %v1401 = vsel %vm479, %v1367, 0
      %1403 = vmatprep.subr.bf16.mxu0 0
      %1404 = vmatpush1.bf16.msra.mxu0 %v1387
      %1405 = vmatprep.subr.bf16.mxu0 0
      %1406 = vmatpush1.bf16.msra.mxu0 %v1388
      %1407 = vmatprep.subr.bf16.mxu0 0
      %1408 = vmatpush1.bf16.msra.mxu0 0
      %1409 = vmatprep.subr.bf16.mxu0 0
      %1410 = vmatpush1.bf16.msra.mxu0 0
      %1411 = vmatprep.subr.bf16.mxu0 0
      %1412 = vmatpush1.bf16.msra.mxu0 0
      %1413 = vmatprep.subr.bf16.mxu0 0
      %1414 = vmatpush1.bf16.msra.mxu0 0
      %1415 = vmatprep.subr.bf16.mxu0 0
      %1416 = vmatpush1.bf16.msra.mxu0 0
      %1417 = vmatprep.subr.bf16.mxu0 0
      %1418 = vmatpush1.bf16.msra.mxu0 0
      %1419 = vmatprep.subr.bf16.mxu0 0
      %1420 = vmatpush1.bf16.msra.mxu0 0
      %1421 = vmatprep.subr.bf16.mxu0 0
      %1422 = vmatpush1.bf16.msra.mxu0 0
      %1423 = vmatprep.subr.bf16.mxu0 0
      %1424 = vmatpush1.bf16.msra.mxu0 0
      %1425 = vmatprep.subr.bf16.mxu0 0
      %1426 = vmatpush1.bf16.msra.mxu0 0
      %1427 = vmatprep.subr.bf16.mxu0 0
      %1428 = vmatpush1.bf16.msra.mxu0 0
      %1429 = vmatprep.subr.bf16.mxu0 0
      %1430 = vmatpush1.bf16.msra.mxu0 0
      %1431 = vmatprep.subr.bf16.mxu0 0
      %1432 = vmatpush1.bf16.msra.mxu0 0
      %1433 = vmatprep.subr.bf16.mxu0 0
      %1434 = vmatpush1.bf16.msra.mxu0 0
      %1435 = vmatprep.mubr.bf16.mxu0 0
      %1436 = vmatmul.mubr.bf16.gmra.mrb[0].mxu0 %v1392
      %v1437 = vpop.f32.mrb[0].mxu0
      %v1438 = vadd.f32 %v1377, %v1437
      %v1439 = vpop.f32.mrb[0].mxu0
      %v1440 = vpop.f32.mrb[0].mxu0
      %v1441 = vadd.f32 %v1377, %v1440
      %v1442 = vpop.f32.mrb[0].mxu0
      %1443 = vmatprep.mubr.bf16.mxu0 0
      %1444 = vmatmul.mubr.bf16.gmra.mrb[0].mxu0 %v1395
      %v1445 = vpop.f32.mrb[0].mxu0
      %v1446 = vadd.f32 %v1377, %v1445
      %v1447 = vpop.f32.mrb[0].mxu0
      %v1448 = vpop.f32.mrb[0].mxu0
      %v1449 = vadd.f32 %v1377, %v1448
      %v1450 = vpop.f32.mrb[0].mxu0
      %1451 = vmatprep.mubr.bf16.mxu0 0
      %1452 = vmatmul.mubr.bf16.gmra.mrb[0].mxu0 %v1398
      %v1453 = vpop.f32.mrb[0].mxu0
      %v1454 = vadd.f32 %v1377, %v1453
      %v1455 = vpop.f32.mrb[0].mxu0
      %v1456 = vpop.f32.mrb[0].mxu0
      %v1457 = vadd.f32 %v1377, %v1456
      %v1458 = vpop.f32.mrb[0].mxu0
      %1459 = vmatprep.mubr.bf16.mxu0 0
      %1460 = vmatmul.mubr.bf16.gmra.mrb[0].mxu0 %v1401
      %v1461 = vpop.f32.mrb[0].mxu0
      %v1462 = vadd.f32 %v1377, %v1461
      %v1463 = vpop.f32.mrb[0].mxu0
      %v1464 = vpop.f32.mrb[0].mxu0
      %v1465 = vadd.f32 %v1377, %v1464
      %v1466 = vpop.f32.mrb[0].mxu0
      %1467 = vdwg.mxu0
      %v1468 = vadd.f32 %v469, %v1438
      %v1469 = vadd.f32 %v470, %v1441
      %v1470 = vadd.f32 %v471, %v1446
      %v1471 = vadd.f32 %v472, %v1449
      %v1472 = vadd.f32 %v473, %v1454
      %v1473 = vadd.f32 %v474, %v1457
      %v1474 = vadd.f32 %v475, %v1462
      %v1475 = vadd.f32 %v476, %v1465
      %v1476 = vld [vmem:[%s8] sm:$0x1]
      %v1477 = vld [vmem:[%s9] sm:$0x1]
      %v1478 = vsel %vm479, %v1468, 0.0
      %1479 = vadd.xlane.f32.xlu0 %v1478
      %v1480 = vpop.xlane.xlu0 %1479
      %v1481 = vsel %vm479, %v1469, 0.0
      %1482 = vadd.xlane.f32.xlu0 %v1481
      %v1483 = vpop.xlane.xlu0 %1482
      %v1484 = vsel %vm479, %v1470, 0.0
      %1485 = vadd.xlane.f32.xlu0 %v1484
      %v1486 = vpop.xlane.xlu0 %1485
      %v1487 = vsel %vm479, %v1471, 0.0
      %1488 = vadd.xlane.f32.xlu0 %v1487
      %v1489 = vpop.xlane.xlu0 %1488
      %v1490 = vsel %vm479, %v1472, 0.0
      %1491 = vadd.xlane.f32.xlu0 %v1490
      %v1492 = vpop.xlane.xlu0 %1491
      %v1493 = vsel %vm479, %v1473, 0.0
      %1494 = vadd.xlane.f32.xlu0 %v1493
      %v1495 = vpop.xlane.xlu0 %1494
      %v1496 = vsel %vm479, %v1474, 0.0
      %1497 = vadd.xlane.f32.xlu0 %v1496
      %v1498 = vpop.xlane.xlu0 %1497
      %v1499 = vsel %vm479, %v1475, 0.0
      %1500 = vadd.xlane.f32.xlu0 %v1499
      %v1501 = vpop.xlane.xlu0 %1500
      %v1502 = vmul.f32 %v1480, %v504
      %v1503 = vmul.f32 %v1483, %v504
      %v1504 = vmul.f32 %v1486, %v504
      %v1505 = vmul.f32 %v1489, %v504
      %v1506 = vmul.f32 %v1492, %v504
      %v1507 = vmul.f32 %v1495, %v504
      %v1508 = vmul.f32 %v1498, %v504
      %v1509 = vmul.f32 %v1501, %v504
      %v1510 = vsub.f32 %v1468, %v1502
      %v1511 = vsub.f32 %v1469, %v1503
      %v1512 = vsub.f32 %v1470, %v1504
      %v1513 = vsub.f32 %v1471, %v1505
      %v1514 = vsub.f32 %v1472, %v1506
      %v1515 = vsub.f32 %v1473, %v1507
      %v1516 = vsub.f32 %v1474, %v1508
      %v1517 = vsub.f32 %v1475, %v1509
      %v1518 = vmul.f32 %v1510, %v1510
      %v1519 = vmul.f32 %v1511, %v1511
      %v1520 = vmul.f32 %v1512, %v1512
      %v1521 = vmul.f32 %v1513, %v1513
      %v1522 = vmul.f32 %v1514, %v1514
      %v1523 = vmul.f32 %v1515, %v1515
      %v1524 = vmul.f32 %v1516, %v1516
      %v1525 = vmul.f32 %v1517, %v1517
      %v1526 = vsel %vm479, %v1518, 0.0
      %1527 = vadd.xlane.f32.xlu0 %v1526
      %v1528 = vpop.xlane.xlu0 %1527
      %v1529 = vsel %vm479, %v1519, 0.0
      %1530 = vadd.xlane.f32.xlu0 %v1529
      %v1531 = vpop.xlane.xlu0 %1530
      %v1532 = vsel %vm479, %v1520, 0.0
      %1533 = vadd.xlane.f32.xlu0 %v1532
      %v1534 = vpop.xlane.xlu0 %1533
      %v1535 = vsel %vm479, %v1521, 0.0
      %1536 = vadd.xlane.f32.xlu0 %v1535
      %v1537 = vpop.xlane.xlu0 %1536
      %v1538 = vsel %vm479, %v1522, 0.0
      %1539 = vadd.xlane.f32.xlu0 %v1538
      %v1540 = vpop.xlane.xlu0 %1539
      %v1541 = vsel %vm479, %v1523, 0.0
      %1542 = vadd.xlane.f32.xlu0 %v1541
      %v1543 = vpop.xlane.xlu0 %1542
      %v1544 = vsel %vm479, %v1524, 0.0
      %1545 = vadd.xlane.f32.xlu0 %v1544
      %v1546 = vpop.xlane.xlu0 %1545
      %v1547 = vsel %vm479, %v1525, 0.0
      %1548 = vadd.xlane.f32.xlu0 %v1547
      %v1549 = vpop.xlane.xlu0 %1548
      %v1550 = vmul.f32 %v1528, %v504
      %v1551 = vmul.f32 %v1531, %v504
      %v1552 = vmul.f32 %v1534, %v504
      %v1553 = vmul.f32 %v1537, %v504
      %v1554 = vmul.f32 %v1540, %v504
      %v1555 = vmul.f32 %v1543, %v504
      %v1556 = vmul.f32 %v1546, %v504
      %v1557 = vmul.f32 %v1549, %v504
      %v1558 = vadd.f32 %v1550, 1e-05
      %v1559 = vadd.f32 %v1551, 1e-05
      %v1560 = vadd.f32 %v1552, 1e-05
      %v1561 = vadd.f32 %v1553, 1e-05
      %v1562 = vadd.f32 %v1554, 1e-05
      %v1563 = vadd.f32 %v1555, 1e-05
      %v1564 = vadd.f32 %v1556, 1e-05
      %v1565 = vadd.f32 %v1557, 1e-05
      %v1566 = vrsqrt.pop %v1558
      %v1567 = vrsqrt.pop %v1559
      %v1568 = vrsqrt.pop %v1560
      %v1569 = vrsqrt.pop %v1561
      %v1570 = vrsqrt.pop %v1562
      %v1571 = vrsqrt.pop %v1563
      %v1572 = vrsqrt.pop %v1564
      %v1573 = vrsqrt.pop %v1565
      %v1574 = vmul.f32 %v1510, %v1566
      %v1575 = vmul.f32 %v1511, %v1567
      %v1576 = vmul.f32 %v1512, %v1568
      %v1577 = vmul.f32 %v1513, %v1569
      %v1578 = vmul.f32 %v1514, %v1570
      %v1579 = vmul.f32 %v1515, %v1571
      %v1580 = vmul.f32 %v1516, %v1572
      %v1581 = vmul.f32 %v1517, %v1573
      %v1583 = vlaneseq
      %v1584 = vshrl.u32 %v1583, 7
      %v1585 = vsub.s32 0, %v1584
      %v1586 = vrot.slane %v1476, %v1585
      %v1588 = vmul.f32 %v1574, %v1586
      %v1589 = vmul.f32 %v1575, %v1586
      %v1590 = vmul.f32 %v1576, %v1586
      %v1591 = vmul.f32 %v1577, %v1586
      %v1592 = vmul.f32 %v1578, %v1586
      %v1593 = vmul.f32 %v1579, %v1586
      %v1594 = vmul.f32 %v1580, %v1586
      %v1595 = vmul.f32 %v1581, %v1586
      %v1597 = vlaneseq
      %v1598 = vshrl.u32 %v1597, 7
      %v1599 = vsub.s32 0, %v1598
      %v1600 = vrot.slane %v1477, %v1599
      %v1602 = vadd.f32 %v1588, %v1600
      %v1603 = vadd.f32 %v1589, %v1600
      %v1604 = vadd.f32 %v1590, %v1600
      %v1605 = vadd.f32 %v1591, %v1600
      %v1606 = vadd.f32 %v1592, %v1600
      %v1607 = vadd.f32 %v1593, %v1600
      %v1608 = vadd.f32 %v1594, %v1600
      %v1609 = vadd.f32 %v1595, %v1600
      %v1610 = vpack.c.bf16 %v1603, %v1602
      %v1611 = vpack.c.bf16 %v1605, %v1604
      %v1612 = vpack.c.bf16 %v1607, %v1606
      %v1613 = vpack.c.bf16 %v1609, %v1608
      %v1614 = vld [vmem:[%s10] sm:$0xf]
      %v1615 = vld [vmem:[%s10 + $0x4] sm:$0xf]
      %v1616 = vld [vmem:[%s10 + $0x8] sm:$0xf]
      %v1617 = vld [vmem:[%s10 + $0xc] sm:$0xf]
      %v1618 = vld [vmem:[%s11] sm:$0x1]
      %v1620 = vlaneseq
      %v1621 = vshrl.u32 %v1620, 7
      %v1622 = vsub.s32 0, %v1621
      %v1623 = vrot.slane %v1618, %v1622
      %v1629 = vunpack.c.l.b16 %v1614
      %v1630 = vunpack.c.l.b16 %v1615
      %v1631 = vunpack.c.l.b16 %v1616
      %v1632 = vunpack.c.l.b16 %v1617
      %v1633 = vpack.c.b16 %v1630, %v1629
      %v1634 = vpack.c.b16 %v1632, %v1631
      %v1638 = vsel %vm479, %v1610, 0
      %v1641 = vsel %vm479, %v1611, 0
      %v1644 = vsel %vm479, %v1612, 0
      %v1647 = vsel %vm479, %v1613, 0
      %1649 = vmatprep.subr.bf16.mxu0 0
      %1650 = vmatpush1.bf16.msra.mxu0 %v1633
      %1651 = vmatprep.subr.bf16.mxu0 0
      %1652 = vmatpush1.bf16.msra.mxu0 %v1634
      %1653 = vmatprep.subr.bf16.mxu0 0
      %1654 = vmatpush1.bf16.msra.mxu0 0
      %1655 = vmatprep.subr.bf16.mxu0 0
      %1656 = vmatpush1.bf16.msra.mxu0 0
      %1657 = vmatprep.subr.bf16.mxu0 0
      %1658 = vmatpush1.bf16.msra.mxu0 0
      %1659 = vmatprep.subr.bf16.mxu0 0
      %1660 = vmatpush1.bf16.msra.mxu0 0
      %1661 = vmatprep.subr.bf16.mxu0 0
      %1662 = vmatpush1.bf16.msra.mxu0 0
      %1663 = vmatprep.subr.bf16.mxu0 0
      %1664 = vmatpush1.bf16.msra.mxu0 0
      %1665 = vmatprep.subr.bf16.mxu0 0
      %1666 = vmatpush1.bf16.msra.mxu0 0
      %1667 = vmatprep.subr.bf16.mxu0 0
      %1668 = vmatpush1.bf16.msra.mxu0 0
      %1669 = vmatprep.subr.bf16.mxu0 0
      %1670 = vmatpush1.bf16.msra.mxu0 0
      %1671 = vmatprep.subr.bf16.mxu0 0
      %1672 = vmatpush1.bf16.msra.mxu0 0
      %1673 = vmatprep.subr.bf16.mxu0 0
      %1674 = vmatpush1.bf16.msra.mxu0 0
      %1675 = vmatprep.subr.bf16.mxu0 0
      %1676 = vmatpush1.bf16.msra.mxu0 0
      %1677 = vmatprep.subr.bf16.mxu0 0
      %1678 = vmatpush1.bf16.msra.mxu0 0
      %1679 = vmatprep.subr.bf16.mxu0 0
      %1680 = vmatpush1.bf16.msra.mxu0 0
      %1681 = vmatprep.mubr.bf16.mxu0 0
      %1682 = vmatmul.mubr.bf16.gmra.mrb[0].mxu0 %v1638
      %v1683 = vpop.f32.mrb[0].mxu0
      %v1684 = vadd.f32 %v1623, %v1683
      %v1685 = vpop.f32.mrb[0].mxu0
      %v1686 = vpop.f32.mrb[0].mxu0
      %v1687 = vadd.f32 %v1623, %v1686
      %v1688 = vpop.f32.mrb[0].mxu0
      %1689 = vmatprep.mubr.bf16.mxu0 0
      %1690 = vmatmul.mubr.bf16.gmra.mrb[0].mxu0 %v1641
      %v1691 = vpop.f32.mrb[0].mxu0
      %v1692 = vadd.f32 %v1623, %v1691
      %v1693 = vpop.f32.mrb[0].mxu0
      %v1694 = vpop.f32.mrb[0].mxu0
      %v1695 = vadd.f32 %v1623, %v1694
      %v1696 = vpop.f32.mrb[0].mxu0
      %1697 = vmatprep.mubr.bf16.mxu0 0
      %1698 = vmatmul.mubr.bf16.gmra.mrb[0].mxu0 %v1644
      %v1699 = vpop.f32.mrb[0].mxu0
      %v1700 = vadd.f32 %v1623, %v1699
      %v1701 = vpop.f32.mrb[0].mxu0
      %v1702 = vpop.f32.mrb[0].mxu0
      %v1703 = vadd.f32 %v1623, %v1702
      %v1704 = vpop.f32.mrb[0].mxu0
      %1705 = vmatprep.mubr.bf16.mxu0 0
      %1706 = vmatmul.mubr.bf16.gmra.mrb[0].mxu0 %v1647
      %v1707 = vpop.f32.mrb[0].mxu0
      %v1708 = vadd.f32 %v1623, %v1707
      %v1709 = vpop.f32.mrb[0].mxu0
      %v1710 = vpop.f32.mrb[0].mxu0
      %v1711 = vadd.f32 %v1623, %v1710
      %v1712 = vpop.f32.mrb[0].mxu0
      %1713 = vdwg.mxu0
      %v1714 = vmul.f32 %v1684, %v1684
      %v1715 = vmul.f32 %v1687, %v1687
      %v1716 = vmul.f32 %v1692, %v1692
      %v1717 = vmul.f32 %v1695, %v1695
      %v1718 = vmul.f32 %v1700, %v1700
      %v1719 = vmul.f32 %v1703, %v1703
      %v1720 = vmul.f32 %v1708, %v1708
      %v1721 = vmul.f32 %v1711, %v1711
      %v1722 = vmul.f32 %v1684, %v1714
      %v1723 = vmul.f32 %v1687, %v1715
      %v1724 = vmul.f32 %v1692, %v1716
      %v1725 = vmul.f32 %v1695, %v1717
      %v1726 = vmul.f32 %v1700, %v1718
      %v1727 = vmul.f32 %v1703, %v1719
      %v1728 = vmul.f32 %v1708, %v1720
      %v1729 = vmul.f32 %v1711, %v1721
      %v1730 = vmul.f32 %v1722, 0.044715
      %v1731 = vmul.f32 %v1723, 0.044715
      %v1732 = vmul.f32 %v1724, 0.044715
      %v1733 = vmul.f32 %v1725, 0.044715
      %v1734 = vmul.f32 %v1726, 0.044715
      %v1735 = vmul.f32 %v1727, 0.044715
      %v1736 = vmul.f32 %v1728, 0.044715
      %v1737 = vmul.f32 %v1729, 0.044715
      %v1738 = vadd.f32 %v1684, %v1730
      %v1739 = vadd.f32 %v1687, %v1731
      %v1740 = vadd.f32 %v1692, %v1732
      %v1741 = vadd.f32 %v1695, %v1733
      %v1742 = vadd.f32 %v1700, %v1734
      %v1743 = vadd.f32 %v1703, %v1735
      %v1744 = vadd.f32 %v1708, %v1736
      %v1745 = vadd.f32 %v1711, %v1737
      %v1746 = vmul.f32 %v1738, 0.7978846
      %v1747 = vmul.f32 %v1739, 0.7978846
      %v1748 = vmul.f32 %v1740, 0.7978846
      %v1749 = vmul.f32 %v1741, 0.7978846
      %v1750 = vmul.f32 %v1742, 0.7978846
      %v1751 = vmul.f32 %v1743, 0.7978846
      %v1752 = vmul.f32 %v1744, 0.7978846
      %v1753 = vmul.f32 %v1745, 0.7978846
      %v1754 = vtanh.pop %v1746
      %v1755 = vtanh.pop %v1747
      %v1756 = vtanh.pop %v1748
      %v1757 = vtanh.pop %v1749
      %v1758 = vtanh.pop %v1750
      %v1759 = vtanh.pop %v1751
      %v1760 = vtanh.pop %v1752
      %v1761 = vtanh.pop %v1753
      %v1762 = vadd.f32 %v1754, 1.0
      %v1763 = vadd.f32 %v1755, 1.0
      %v1764 = vadd.f32 %v1756, 1.0
      %v1765 = vadd.f32 %v1757, 1.0
      %v1766 = vadd.f32 %v1758, 1.0
      %v1767 = vadd.f32 %v1759, 1.0
      %v1768 = vadd.f32 %v1760, 1.0
      %v1769 = vadd.f32 %v1761, 1.0
      %v1770 = vmul.f32 %v1762, 0.5
      %v1771 = vmul.f32 %v1763, 0.5
      %v1772 = vmul.f32 %v1764, 0.5
      %v1773 = vmul.f32 %v1765, 0.5
      %v1774 = vmul.f32 %v1766, 0.5
      %v1775 = vmul.f32 %v1767, 0.5
      %v1776 = vmul.f32 %v1768, 0.5
      %v1777 = vmul.f32 %v1769, 0.5
      %v1778 = vmul.f32 %v1684, %v1770
      %v1779 = vmul.f32 %v1687, %v1771
      %v1780 = vmul.f32 %v1692, %v1772
      %v1781 = vmul.f32 %v1695, %v1773
      %v1782 = vmul.f32 %v1700, %v1774
      %v1783 = vmul.f32 %v1703, %v1775
      %v1784 = vmul.f32 %v1708, %v1776
      %v1785 = vmul.f32 %v1711, %v1777
      %v1786 = vpack.c.bf16 %v1779, %v1778
      %v1787 = vpack.c.bf16 %v1781, %v1780
      %v1788 = vpack.c.bf16 %v1783, %v1782
      %v1789 = vpack.c.bf16 %v1785, %v1784
      %v1790 = vld [vmem:[%s12] sm:$0xf]
      %v1791 = vld [vmem:[%s12 + $0x4] sm:$0xf]
      %v1792 = vld [vmem:[%s12 + $0x8] sm:$0xf]
      %v1793 = vld [vmem:[%s12 + $0xc] sm:$0xf]
      %v1794 = vld [vmem:[%s12 + $0x10] sm:$0xf]
      %v1795 = vld [vmem:[%s12 + $0x14] sm:$0xf]
      %v1796 = vld [vmem:[%s12 + $0x18] sm:$0xf]
      %v1797 = vld [vmem:[%s12 + $0x1c] sm:$0xf]
      %v1798 = vld [vmem:[%s13] sm:$0x1]
      %v1800 = vlaneseq
      %v1801 = vshrl.u32 %v1800, 7
      %v1802 = vsub.s32 0, %v1801
      %v1803 = vrot.slane %v1798, %v1802
      %v1813 = vunpack.c.l.b16 %v1790
      %v1814 = vunpack.c.l.b16 %v1791
      %v1815 = vunpack.c.l.b16 %v1792
      %v1816 = vunpack.c.l.b16 %v1793
      %v1817 = vunpack.c.l.b16 %v1794
      %v1818 = vunpack.c.l.b16 %v1795
      %v1819 = vunpack.c.l.b16 %v1796
      %v1820 = vunpack.c.l.b16 %v1797
      %v1821 = vpack.c.b16 %v1814, %v1813
      %v1822 = vpack.c.b16 %v1816, %v1815
      %v1823 = vpack.c.b16 %v1818, %v1817
      %v1824 = vpack.c.b16 %v1820, %v1819
      %v1830 = vsel %vm843, %v1786, 0
      %v1833 = vsel %vm843, %v1787, 0
      %v1836 = vsel %vm843, %v1788, 0
      %v1839 = vsel %vm843, %v1789, 0
      %1841 = vmatprep.subr.bf16.mxu0 0
      %1842 = vmatpush1.bf16.msra.mxu0 %v1821
      %1843 = vmatprep.subr.bf16.mxu0 0
      %1844 = vmatpush1.bf16.msra.mxu0 %v1822
      %1845 = vmatprep.subr.bf16.mxu0 0
      %1846 = vmatpush1.bf16.msra.mxu0 %v1823
      %1847 = vmatprep.subr.bf16.mxu0 0
      %1848 = vmatpush1.bf16.msra.mxu0 %v1824
      %1849 = vmatprep.subr.bf16.mxu0 0
      %1850 = vmatpush1.bf16.msra.mxu0 0
      %1851 = vmatprep.subr.bf16.mxu0 0
      %1852 = vmatpush1.bf16.msra.mxu0 0
      %1853 = vmatprep.subr.bf16.mxu0 0
      %1854 = vmatpush1.bf16.msra.mxu0 0
      %1855 = vmatprep.subr.bf16.mxu0 0
      %1856 = vmatpush1.bf16.msra.mxu0 0
      %1857 = vmatprep.subr.bf16.mxu0 0
      %1858 = vmatpush1.bf16.msra.mxu0 0
      %1859 = vmatprep.subr.bf16.mxu0 0
      %1860 = vmatpush1.bf16.msra.mxu0 0
      %1861 = vmatprep.subr.bf16.mxu0 0
      %1862 = vmatpush1.bf16.msra.mxu0 0
      %1863 = vmatprep.subr.bf16.mxu0 0
      %1864 = vmatpush1.bf16.msra.mxu0 0
      %1865 = vmatprep.subr.bf16.mxu0 0
      %1866 = vmatpush1.bf16.msra.mxu0 0
      %1867 = vmatprep.subr.bf16.mxu0 0
      %1868 = vmatpush1.bf16.msra.mxu0 0
      %1869 = vmatprep.subr.bf16.mxu0 0
      %1870 = vmatpush1.bf16.msra.mxu0 0
      %1871 = vmatprep.subr.bf16.mxu0 0
      %1872 = vmatpush1.bf16.msra.mxu0 0
      %1873 = vmatprep.mubr.bf16.mxu0 0
      %1874 = vmatmul.mubr.bf16.gmra.mrb[0].mxu0 %v1830
      %v1875 = vpop.f32.mrb[0].mxu0
      %v1876 = vadd.f32 %v1803, %v1875
      %v1877 = vpop.f32.mrb[0].mxu0
      %v1878 = vpop.f32.mrb[0].mxu0
      %v1879 = vadd.f32 %v1803, %v1878
      %v1880 = vpop.f32.mrb[0].mxu0
      %1881 = vmatprep.mubr.bf16.mxu0 0
      %1882 = vmatmul.mubr.bf16.gmra.mrb[0].mxu0 %v1833
      %v1883 = vpop.f32.mrb[0].mxu0
      %v1884 = vadd.f32 %v1803, %v1883
      %v1885 = vpop.f32.mrb[0].mxu0
      %v1886 = vpop.f32.mrb[0].mxu0
      %v1887 = vadd.f32 %v1803, %v1886
      %v1888 = vpop.f32.mrb[0].mxu0
      %1889 = vmatprep.mubr.bf16.mxu0 0
      %1890 = vmatmul.mubr.bf16.gmra.mrb[0].mxu0 %v1836
      %v1891 = vpop.f32.mrb[0].mxu0
      %v1892 = vadd.f32 %v1803, %v1891
      %v1893 = vpop.f32.mrb[0].mxu0
      %v1894 = vpop.f32.mrb[0].mxu0
      %v1895 = vadd.f32 %v1803, %v1894
      %v1896 = vpop.f32.mrb[0].mxu0
      %1897 = vmatprep.mubr.bf16.mxu0 0
      %1898 = vmatmul.mubr.bf16.gmra.mrb[0].mxu0 %v1839
      %v1899 = vpop.f32.mrb[0].mxu0
      %v1900 = vadd.f32 %v1803, %v1899
      %v1901 = vpop.f32.mrb[0].mxu0
      %v1902 = vpop.f32.mrb[0].mxu0
      %v1903 = vadd.f32 %v1803, %v1902
      %v1904 = vpop.f32.mrb[0].mxu0
      %1905 = vdwg.mxu0
      %v1906 = vadd.f32 %v1468, %v1876
      %v1907 = vadd.f32 %v1469, %v1879
      %v1908 = vadd.f32 %v1470, %v1884
      %v1909 = vadd.f32 %v1471, %v1887
      %v1910 = vadd.f32 %v1472, %v1892
      %v1911 = vadd.f32 %v1473, %v1895
      %v1912 = vadd.f32 %v1474, %v1900
      %v1913 = vadd.f32 %v1475, %v1903
      %1914 = vst.msk [vmem:[%s467] sm:$0xff] %vm479, %v1906
      %1915 = vst.msk [vmem:[%s467 + $0x8] sm:$0xff] %vm479, %v1907
      %1916 = vst.msk [vmem:[%s467 + $0x10] sm:$0xff] %vm479, %v1908
      %1917 = vst.msk [vmem:[%s467 + $0x18] sm:$0xff] %vm479, %v1909
      %1918 = vst.msk [vmem:[%s467 + $0x20] sm:$0xff] %vm479, %v1910
      %1919 = vst.msk [vmem:[%s467 + $0x28] sm:$0xff] %vm479, %v1911
      %1920 = vst.msk [vmem:[%s467 + $0x30] sm:$0xff] %vm479, %v1912
      %1921 = vst.msk [vmem:[%s467 + $0x38] sm:$0xff] %vm479, %v1913
      %p1922 = scmp.lt.s32.totalorder %s25, 1
      %s1923 = scalar_select %p1922, %s25, 1
      %s1924 = smul.addr %s1923, 8
      %s1925 = smul.addr %s1924, 8
      %s1926 = scalar_lea.vmem %s14, %s1925
      // Predicated region
      $region77: #{pure_rmt_forward.10} parent=75 // pred_check
        %p1927 = pneg %p342
      $region78: #{pure_rmt_forward.10} parent=75 // pred_check_branch
        %1929 = sbr.rel (%p1927) target = $region80
      $region79: #{pure_rmt_forward.10} parent=75 // pred_region
        _
      $region80: #{pure_rmt_forward.10} parent=75 // pred_fallthru
        _
    $region76: #{pure_rmt_forward.10} parent=5 // pred_fallthru
      _
    %p1930 = scmp.le.s32.totalorder 2, %s20
    // Predicated region
    $region81: #{pure_rmt_forward.10} parent=5 // pred_check
      %p1931 = pneg %p1930
    $region82: #{pure_rmt_forward.10} parent=5 // pred_check_branch
      %1933 = sbr.rel (%p1931) target = $region84
    $region83: #{pure_rmt_forward.10} parent=5 // pred_region
      %s1934 = ssub.s32 %s20, 2
      // Predicated region
      $region85: #{pure_rmt_forward.10} parent=83 // pred_check
        %p1935 = pneg %p348
      $region86: #{pure_rmt_forward.10} parent=83 // pred_check_branch
        %1937 = sbr.rel (%p1935) target = $region88
      $region87: #{pure_rmt_forward.10} parent=83 // pred_region
        %p1938 = scmp.lt.s32.totalorder %s26, 1
        %s1939 = scalar_select %p1938, %s26, 1
        %s1940 = smul.addr %s1939, 8
        %s1941 = smul.addr %s1940, 8
        %s1942 = scalar_lea.vmem %s14, %s1941
      $region88: #{pure_rmt_forward.10} parent=83 // pred_fallthru
        _
    $region84: #{pure_rmt_forward.10} parent=5 // pred_fallthru
      _
  $region6: #{pure_rmt_forward.10} parent=0 // loop_footer
    %s24 = sadd.s32 1, %s20
  $region7: #{pure_rmt_forward.10} parent=0 // loop_footer_branch
    %19 = sbr.rel target = $region3
  $region8: #{pure_rmt_forward.10} parent=0 // loop_exit
    _

// kernel: pure_rmt_forward.7
$region0: #{pure_rmt_forward.7}
  #allocation0 [shape = 'u32[]', space=smem, size = 0x4, offset = 0x4, fixed_abs, tag = 'smem constant byte address 0x4 - core index']
  #allocation1 [shape = 'u32[144,128]{1,0:T(1,128)}', space=vmem, size = 0x12000, scoped, tag = 'internal scratch']
  %s0 = inlined_call_operand.vmem [shape: f32[320,192], index: 0, kind: input, shape index: {}]
  %s1 = inlined_call_operand.vmem [shape: bf16[192,32], index: 1, kind: input, shape index: {}]
  %s2 = inlined_call_operand.vmem [shape: f32[1,32], index: 2, kind: input, shape index: {}]
  %s3 = inlined_call_operand.vmem [shape: bf16[32,3], index: 3, kind: input, shape index: {}]
  %s4 = inlined_call_operand.vmem [shape: f32[1,3], index: 4, kind: input, shape index: {}]
  %s5 = inlined_call_operand.vmem [shape: f32[160,32], index: 5, kind: output, shape index: {}]
  %s6 = sld [smem:[#allocation0]]
  $region30: #{pure_rmt_forward.7} parent=0
    _
  %s8 = ssub.s32 1, %s6
  %s9 = scalar_select 0, %s8, %s6
  // Predicated region
  $region2: #{pure_rmt_forward.7} parent=0 // pred_check
    _
  $region3: #{pure_rmt_forward.7} parent=0 // pred_check_branch
    %11 = sbr.rel (0) target = $region5
  $region4: #{pure_rmt_forward.7} parent=0 // pred_region
    _
  $region5: #{pure_rmt_forward.7} parent=0 // pred_fallthru
    _
  // Predicated region
  $region6: #{pure_rmt_forward.7} parent=0 // pred_check
    _
  $region7: #{pure_rmt_forward.7} parent=0 // pred_check_branch
    %13 = sbr.rel (0) target = $region9
  $region8: #{pure_rmt_forward.7} parent=0 // pred_region
    _
  $region9: #{pure_rmt_forward.7} parent=0 // pred_fallthru
    _
  // Predicated region
  $region10: #{pure_rmt_forward.7} parent=0 // pred_check
    _
  $region11: #{pure_rmt_forward.7} parent=0 // pred_check_branch
    %15 = sbr.rel (0) target = $region13
  $region12: #{pure_rmt_forward.7} parent=0 // pred_region
    _
  $region13: #{pure_rmt_forward.7} parent=0 // pred_fallthru
    _
  // Predicated region
  $region14: #{pure_rmt_forward.7} parent=0 // pred_check
    _
  $region15: #{pure_rmt_forward.7} parent=0 // pred_check_branch
    %17 = sbr.rel (0) target = $region17
  $region16: #{pure_rmt_forward.7} parent=0 // pred_region
    _
  $region17: #{pure_rmt_forward.7} parent=0 // pred_fallthru
    _
  // Predicated region
  $region18: #{pure_rmt_forward.7} parent=0 // pred_check
    _
  $region19: #{pure_rmt_forward.7} parent=0 // pred_check_branch
    %19 = sbr.rel (0) target = $region21
  $region20: #{pure_rmt_forward.7} parent=0 // pred_region
    _
  $region21: #{pure_rmt_forward.7} parent=0 // pred_fallthru
    _
  %v21 = vld [vmem:[%s0] sm:$0xff]
  %v22 = vld [vmem:[%s0 + $0x8] sm:$0xff]
  %v23 = vld [vmem:[%s0 + $0x10] sm:$0xff]
  %v24 = vld [vmem:[%s0 + $0x18] sm:$0xff]
  %v25 = vld [vmem:[%s0 + $0x20] sm:$0xff]
  %v26 = vld [vmem:[%s0 + $0x28] sm:$0xff]
  %v27 = vld [vmem:[%s0 + $0x30] sm:$0xff]
  %v28 = vld [vmem:[%s0 + $0x38] sm:$0xff]
  %v29 = vld [vmem:[%s0 + $0x40] sm:$0xff]
  %v30 = vld [vmem:[%s0 + $0x48] sm:$0xff]
  %v31 = vld [vmem:[%s0 + $0x50] sm:$0xff]
  %v32 = vld [vmem:[%s0 + $0x58] sm:$0xff]
  %v33 = vld [vmem:[%s0 + $0x60] sm:$0xff]
  %v34 = vld [vmem:[%s0 + $0x68] sm:$0xff]
  %v35 = vld [vmem:[%s0 + $0x70] sm:$0xff]
  %v36 = vld [vmem:[%s0 + $0x78] sm:$0xff]
  %v37 = vld [vmem:[%s0 + $0x80] sm:$0xff]
  %v38 = vld [vmem:[%s0 + $0x88] sm:$0xff]
  %v39 = vld [vmem:[%s0 + $0x90] sm:$0xff]
  %v40 = vld [vmem:[%s0 + $0x98] sm:$0xff]
  %v41 = vld [vmem:[%s0 + $0xa0] sm:$0xff]
  %v42 = vld [vmem:[%s0 + $0xa8] sm:$0xff]
  %v43 = vld [vmem:[%s0 + $0xb0] sm:$0xff]
  %v44 = vld [vmem:[%s0 + $0xb8] sm:$0xff]
  %v45 = vld [vmem:[%s0 + $0xc0] sm:$0xff]
  %v46 = vld [vmem:[%s0 + $0xc8] sm:$0xff]
  %v47 = vld [vmem:[%s0 + $0xd0] sm:$0xff]
  %v48 = vld [vmem:[%s0 + $0xd8] sm:$0xff]
  %v49 = vld [vmem:[%s0 + $0xe0] sm:$0xff]
  %v50 = vld [vmem:[%s0 + $0xe8] sm:$0xff]
  %v51 = vld [vmem:[%s0 + $0xf0] sm:$0xff]
  %v52 = vld [vmem:[%s0 + $0xf8] sm:$0xff]
  %v53 = vld [vmem:[%s0 + $0x100] sm:$0xff]
  %v54 = vld [vmem:[%s0 + $0x108] sm:$0xff]
  %v55 = vld [vmem:[%s0 + $0x110] sm:$0xff]
  %v56 = vld [vmem:[%s0 + $0x118] sm:$0xff]
  %v57 = vld [vmem:[%s0 + $0x120] sm:$0xff]
  %v58 = vld [vmem:[%s0 + $0x128] sm:$0xff]
  %v59 = vld [vmem:[%s0 + $0x130] sm:$0xff]
  %v60 = vld [vmem:[%s0 + $0x138] sm:$0xff]
  %v61 = vld [vmem:[%s0 + $0x140] sm:$0xff]
  %v62 = vld [vmem:[%s0 + $0x148] sm:$0xff]
  %v63 = vld [vmem:[%s0 + $0x150] sm:$0xff]
  %v64 = vld [vmem:[%s0 + $0x158] sm:$0xff]
  %v65 = vld [vmem:[%s0 + $0x160] sm:$0xff]
  %v66 = vld [vmem:[%s0 + $0x168] sm:$0xff]
  %v67 = vld [vmem:[%s0 + $0x170] sm:$0xff]
  %v68 = vld [vmem:[%s0 + $0x178] sm:$0xff]
  %v69 = vld [vmem:[%s0 + $0x180] sm:$0xff]
  %v70 = vld [vmem:[%s0 + $0x188] sm:$0xff]
  %v71 = vld [vmem:[%s0 + $0x190] sm:$0xff]
  %v72 = vld [vmem:[%s0 + $0x198] sm:$0xff]
  %v73 = vld [vmem:[%s0 + $0x1a0] sm:$0xff]
  %v74 = vld [vmem:[%s0 + $0x1a8] sm:$0xff]
  %v75 = vld [vmem:[%s0 + $0x1b0] sm:$0xff]
  %v76 = vld [vmem:[%s0 + $0x1b8] sm:$0xff]
  %v77 = vld [vmem:[%s0 + $0x1c0] sm:$0xff]
  %v78 = vld [vmem:[%s0 + $0x1c8] sm:$0xff]
  %v79 = vld [vmem:[%s0 + $0x1d0] sm:$0xff]
  %v80 = vld [vmem:[%s0 + $0x1d8] sm:$0xff]
  %v81 = vld [vmem:[%s0 + $0x1e0] sm:$0xff]
  %v82 = vld [vmem:[%s0 + $0x1e8] sm:$0xff]
  %v83 = vld [vmem:[%s0 + $0x1f0] sm:$0xff]
  %v84 = vld [vmem:[%s0 + $0x1f8] sm:$0xff]
  %v85 = vld [vmem:[%s0 + $0x200] sm:$0xff]
  %v86 = vld [vmem:[%s0 + $0x208] sm:$0xff]
  %v87 = vld [vmem:[%s0 + $0x210] sm:$0xff]
  %v88 = vld [vmem:[%s0 + $0x218] sm:$0xff]
  %v89 = vld [vmem:[%s0 + $0x220] sm:$0xff]
  %v90 = vld [vmem:[%s0 + $0x228] sm:$0xff]
  %v91 = vld [vmem:[%s0 + $0x230] sm:$0xff]
  %v92 = vld [vmem:[%s0 + $0x238] sm:$0xff]
  %v93 = vld [vmem:[%s0 + $0x240] sm:$0xff]
  %v94 = vld [vmem:[%s0 + $0x248] sm:$0xff]
  %v95 = vld [vmem:[%s0 + $0x250] sm:$0xff]
  %v96 = vld [vmem:[%s0 + $0x258] sm:$0xff]
  %v97 = vld [vmem:[%s0 + $0x260] sm:$0xff]
  %v98 = vld [vmem:[%s0 + $0x268] sm:$0xff]
  %v99 = vld [vmem:[%s0 + $0x270] sm:$0xff]
  %v100 = vld [vmem:[%s0 + $0x278] sm:$0xff]
  %v101 = vpack.c.bf16 %v23, %v21
  %v102 = vpack.c.bf16 %v24, %v22
  %v103 = vpack.c.bf16 %v27, %v25
  %v104 = vpack.c.bf16 %v28, %v26
  %v105 = vpack.c.bf16 %v31, %v29
  %v106 = vpack.c.bf16 %v32, %v30
  %v107 = vpack.c.bf16 %v35, %v33
  %v108 = vpack.c.bf16 %v36, %v34
  %v109 = vpack.c.bf16 %v39, %v37
  %v110 = vpack.c.bf16 %v40, %v38
  %v111 = vpack.c.bf16 %v43, %v41
  %v112 = vpack.c.bf16 %v44, %v42
  %v113 = vpack.c.bf16 %v47, %v45
  %v114 = vpack.c.bf16 %v48, %v46
  %v115 = vpack.c.bf16 %v51, %v49
  %v116 = vpack.c.bf16 %v52, %v50
  %v117 = vpack.c.bf16 %v55, %v53
  %v118 = vpack.c.bf16 %v56, %v54
  %v119 = vpack.c.bf16 %v59, %v57
  %v120 = vpack.c.bf16 %v60, %v58
  %v121 = vpack.c.bf16 %v63, %v61
  %v122 = vpack.c.bf16 %v64, %v62
  %v123 = vpack.c.bf16 %v67, %v65
  %v124 = vpack.c.bf16 %v68, %v66
  %v125 = vpack.c.bf16 %v71, %v69
  %v126 = vpack.c.bf16 %v72, %v70
  %v127 = vpack.c.bf16 %v75, %v73
  %v128 = vpack.c.bf16 %v76, %v74
  %v129 = vpack.c.bf16 %v79, %v77
  %v130 = vpack.c.bf16 %v80, %v78
  %v131 = vpack.c.bf16 %v83, %v81
  %v132 = vpack.c.bf16 %v84, %v82
  %v133 = vpack.c.bf16 %v87, %v85
  %v134 = vpack.c.bf16 %v88, %v86
  %v135 = vpack.c.bf16 %v91, %v89
  %v136 = vpack.c.bf16 %v92, %v90
  %v137 = vpack.c.bf16 %v95, %v93
  %v138 = vpack.c.bf16 %v96, %v94
  %v139 = vpack.c.bf16 %v99, %v97
  %v140 = vpack.c.bf16 %v100, %v98
  %v141 = vld [vmem:[%s1] sm:$0xf]
  %v142 = vld [vmem:[%s1 + $0x4] sm:$0xf]
  %v143 = vld [vmem:[%s1 + $0x8] sm:$0xf]
  %v144 = vld [vmem:[%s1 + $0xc] sm:$0xf]
  %v145 = vld [vmem:[%s1 + $0x10] sm:$0xf]
  %v146 = vld [vmem:[%s1 + $0x14] sm:$0xf]
  %v147 = vld [vmem:[%s1 + $0x18] sm:$0xf]
  %v148 = vld [vmem:[%s1 + $0x1c] sm:$0xf]
  %v149 = vld [vmem:[%s1 + $0x20] sm:$0xf]
  %v150 = vld [vmem:[%s1 + $0x24] sm:$0xf]
  %v151 = vld [vmem:[%s1 + $0x28] sm:$0xf]
  %v152 = vld [vmem:[%s1 + $0x2c] sm:$0xf]
  %v153 = vld [vmem:[%s1 + $0x30] sm:$0xf]
  %v154 = vld [vmem:[%s1 + $0x34] sm:$0xf]
  %v155 = vld [vmem:[%s1 + $0x38] sm:$0xf]
  %v156 = vld [vmem:[%s1 + $0x3c] sm:$0xf]
  %v157 = vld [vmem:[%s1 + $0x40] sm:$0xf]
  %v158 = vld [vmem:[%s1 + $0x44] sm:$0xf]
  %v159 = vld [vmem:[%s1 + $0x48] sm:$0xf]
  %v160 = vld [vmem:[%s1 + $0x4c] sm:$0xf]
  %v161 = vld [vmem:[%s1 + $0x50] sm:$0xf]
  %v162 = vld [vmem:[%s1 + $0x54] sm:$0xf]
  %v163 = vld [vmem:[%s1 + $0x58] sm:$0xf]
  %v164 = vld [vmem:[%s1 + $0x5c] sm:$0xf]
  %v165 = vld [vmem:[%s2] sm:$0x1]
  %v167 = vlaneseq
  %v168 = vshrl.u32 %v167, 7
  %v169 = vsub.s32 0, %v168
  %v170 = vrot.slane %v165, %v169
  %v196 = vunpack.c.l.b16 %v141
  %v197 = vunpack.c.l.b16 %v142
  %v198 = vunpack.c.l.b16 %v143
  %v199 = vunpack.c.l.b16 %v144
  %v200 = vunpack.c.l.b16 %v145
  %v201 = vunpack.c.l.b16 %v146
  %v202 = vunpack.c.l.b16 %v147
  %v203 = vunpack.c.l.b16 %v148
  %v204 = vunpack.c.l.b16 %v149
  %v205 = vunpack.c.l.b16 %v150
  %v206 = vunpack.c.l.b16 %v151
  %v207 = vunpack.c.l.b16 %v152
  %v208 = vunpack.c.l.b16 %v153
  %v209 = vunpack.c.l.b16 %v154
  %v210 = vunpack.c.l.b16 %v155
  %v211 = vunpack.c.l.b16 %v156
  %v212 = vunpack.c.l.b16 %v157
  %v213 = vunpack.c.l.b16 %v158
  %v214 = vunpack.c.l.b16 %v159
  %v215 = vunpack.c.l.b16 %v160
  %v216 = vunpack.c.l.b16 %v161
  %v217 = vunpack.c.l.b16 %v162
  %v218 = vunpack.c.l.b16 %v163
  %v219 = vunpack.c.l.b16 %v164
  %v220 = vpack.c.b16 %v197, %v196
  %v221 = vpack.c.b16 %v199, %v198
  %v222 = vpack.c.b16 %v201, %v200
  %v223 = vpack.c.b16 %v203, %v202
  %v224 = vpack.c.b16 %v205, %v204
  %v225 = vpack.c.b16 %v207, %v206
  %v226 = vpack.c.b16 %v209, %v208
  %v227 = vpack.c.b16 %v211, %v210
  %v228 = vpack.c.b16 %v213, %v212
  %v229 = vpack.c.b16 %v215, %v214
  %v230 = vpack.c.b16 %v217, %v216
  %v231 = vpack.c.b16 %v219, %v218
  %vm244 = vcmask 523264
  %v246 = vsel %vm244, %v102, 0
  %v249 = vsel %vm244, %v104, 0
  %v252 = vsel %vm244, %v106, 0
  %v255 = vsel %vm244, %v108, 0
  %v258 = vsel %vm244, %v110, 0
  %v261 = vsel %vm244, %v112, 0
  %v264 = vsel %vm244, %v114, 0
  %v267 = vsel %vm244, %v116, 0
  %v270 = vsel %vm244, %v118, 0
  %v273 = vsel %vm244, %v120, 0
  %v276 = vsel %vm244, %v122, 0
  %v279 = vsel %vm244, %v124, 0
  %v282 = vsel %vm244, %v126, 0
  %v285 = vsel %vm244, %v128, 0
  %v288 = vsel %vm244, %v130, 0
  %v291 = vsel %vm244, %v132, 0
  %v294 = vsel %vm244, %v134, 0
  %v297 = vsel %vm244, %v136, 0
  %v300 = vsel %vm244, %v138, 0
  %v303 = vsel %vm244, %v140, 0
  %305 = vmatprep.subr.bf16.mxu0 0
  %306 = vmatpush1.bf16.msra.mxu0 %v220
  %307 = vmatprep.subr.bf16.mxu0 0
  %308 = vmatpush1.bf16.msra.mxu0 %v221
  %309 = vmatprep.subr.bf16.mxu0 0
  %310 = vmatpush1.bf16.msra.mxu0 %v222
  %311 = vmatprep.subr.bf16.mxu0 0
  %312 = vmatpush1.bf16.msra.mxu0 %v223
  %313 = vmatprep.subr.bf16.mxu0 0
  %314 = vmatpush1.bf16.msra.mxu0 %v224
  %315 = vmatprep.subr.bf16.mxu0 0
  %316 = vmatpush1.bf16.msra.mxu0 %v225
  %317 = vmatprep.subr.bf16.mxu0 0
  %318 = vmatpush1.bf16.msra.mxu0 %v226
  %319 = vmatprep.subr.bf16.mxu0 0
  %320 = vmatpush1.bf16.msra.mxu0 %v227
  %321 = vmatprep.subr.bf16.mxu0 0
  %322 = vmatpush1.bf16.msra.mxu0 %v228
  %323 = vmatprep.subr.bf16.mxu0 0
  %324 = vmatpush1.bf16.msra.mxu0 %v229
  %325 = vmatprep.subr.bf16.mxu0 0
  %326 = vmatpush1.bf16.msra.mxu0 %v230
  %327 = vmatprep.subr.bf16.mxu0 0
  %328 = vmatpush1.bf16.msra.mxu0 %v231
  %329 = vmatprep.subr.bf16.mxu0 0
  %330 = vmatpush1.bf16.msra.mxu0 0
  %331 = vmatprep.subr.bf16.mxu0 0
  %332 = vmatpush1.bf16.msra.mxu0 0
  %333 = vmatprep.subr.bf16.mxu0 0
  %334 = vmatpush1.bf16.msra.mxu0 0
  %335 = vmatprep.subr.bf16.mxu0 0
  %336 = vmatpush1.bf16.msra.mxu0 0
  %337 = vmatprep.mubr.bf16.mxu0 %v246
  %338 = vmatmul.mubr.bf16.gmra.mrb[0].mxu0 %v101
  %v339 = vpop.f32.mrb[0].mxu0
  %v340 = vadd.f32 %v170, %v339
  %v341 = vpop.f32.mrb[0].mxu0
  %v342 = vpop.f32.mrb[0].mxu0
  %v343 = vadd.f32 %v170, %v342
  %v344 = vpop.f32.mrb[0].mxu0
  %345 = vmatprep.mubr.bf16.mxu0 %v249
  %346 = vmatmul.mubr.bf16.gmra.mrb[0].mxu0 %v103
  %v347 = vpop.f32.mrb[0].mxu0
  %v348 = vadd.f32 %v170, %v347
  %v349 = vpop.f32.mrb[0].mxu0
  %v350 = vpop.f32.mrb[0].mxu0
  %v351 = vadd.f32 %v170, %v350
  %v352 = vpop.f32.mrb[0].mxu0
  %353 = vmatprep.mubr.bf16.mxu0 %v252
  %354 = vmatmul.mubr.bf16.gmra.mrb[0].mxu0 %v105
  %v355 = vpop.f32.mrb[0].mxu0
  %v356 = vadd.f32 %v170, %v355
  %v357 = vpop.f32.mrb[0].mxu0
  %v358 = vpop.f32.mrb[0].mxu0
  %v359 = vadd.f32 %v170, %v358
  %v360 = vpop.f32.mrb[0].mxu0
  %361 = vmatprep.mubr.bf16.mxu0 %v255
  %362 = vmatmul.mubr.bf16.gmra.mrb[0].mxu0 %v107
  %v363 = vpop.f32.mrb[0].mxu0
  %v364 = vadd.f32 %v170, %v363
  %v365 = vpop.f32.mrb[0].mxu0
  %v366 = vpop.f32.mrb[0].mxu0
  %v367 = vadd.f32 %v170, %v366
  %v368 = vpop.f32.mrb[0].mxu0
  %369 = vmatprep.mubr.bf16.mxu0 %v258
  %370 = vmatmul.mubr.bf16.gmra.mrb[0].mxu0 %v109
  %v371 = vpop.f32.mrb[0].mxu0
  %v372 = vadd.f32 %v170, %v371
  %v373 = vpop.f32.mrb[0].mxu0
  %v374 = vpop.f32.mrb[0].mxu0
  %v375 = vadd.f32 %v170, %v374
  %v376 = vpop.f32.mrb[0].mxu0
  %377 = vmatprep.mubr.bf16.mxu0 %v261
  %378 = vmatmul.mubr.bf16.gmra.mrb[0].mxu0 %v111
  %v379 = vpop.f32.mrb[0].mxu0
  %v380 = vadd.f32 %v170, %v379
  %v381 = vpop.f32.mrb[0].mxu0
  %v382 = vpop.f32.mrb[0].mxu0
  %v383 = vadd.f32 %v170, %v382
  %v384 = vpop.f32.mrb[0].mxu0
  %385 = vmatprep.mubr.bf16.mxu0 %v264
  %386 = vmatmul.mubr.bf16.gmra.mrb[0].mxu0 %v113
  %v387 = vpop.f32.mrb[0].mxu0
  %v388 = vadd.f32 %v170, %v387
  %v389 = vpop.f32.mrb[0].mxu0
  %v390 = vpop.f32.mrb[0].mxu0
  %v391 = vadd.f32 %v170, %v390
  %v392 = vpop.f32.mrb[0].mxu0
  %393 = vmatprep.mubr.bf16.mxu0 %v267
  %394 = vmatmul.mubr.bf16.gmra.mrb[0].mxu0 %v115
  %v395 = vpop.f32.mrb[0].mxu0
  %v396 = vadd.f32 %v170, %v395
  %v397 = vpop.f32.mrb[0].mxu0
  %v398 = vpop.f32.mrb[0].mxu0
  %v399 = vadd.f32 %v170, %v398
  %v400 = vpop.f32.mrb[0].mxu0
  %401 = vmatprep.mubr.bf16.mxu0 %v270
  %402 = vmatmul.mubr.bf16.gmra.mrb[0].mxu0 %v117
  %v403 = vpop.f32.mrb[0].mxu0
  %v404 = vadd.f32 %v170, %v403
  %v405 = vpop.f32.mrb[0].mxu0
  %v406 = vpop.f32.mrb[0].mxu0
  %v407 = vadd.f32 %v170, %v406
  %v408 = vpop.f32.mrb[0].mxu0
  %409 = vmatprep.mubr.bf16.mxu0 %v273
  %410 = vmatmul.mubr.bf16.gmra.mrb[0].mxu0 %v119
  %v411 = vpop.f32.mrb[0].mxu0
  %v412 = vadd.f32 %v170, %v411
  %v413 = vpop.f32.mrb[0].mxu0
  %v414 = vpop.f32.mrb[0].mxu0
  %v415 = vadd.f32 %v170, %v414
  %v416 = vpop.f32.mrb[0].mxu0
  %417 = vmatprep.mubr.bf16.mxu0 %v276
  %418 = vmatmul.mubr.bf16.gmra.mrb[0].mxu0 %v121
  %v419 = vpop.f32.mrb[0].mxu0
  %v420 = vadd.f32 %v170, %v419
  %v421 = vpop.f32.mrb[0].mxu0
  %v422 = vpop.f32.mrb[0].mxu0
  %v423 = vadd.f32 %v170, %v422
  %v424 = vpop.f32.mrb[0].mxu0
  %425 = vmatprep.mubr.bf16.mxu0 %v279
  %426 = vmatmul.mubr.bf16.gmra.mrb[0].mxu0 %v123
  %v427 = vpop.f32.mrb[0].mxu0
  %v428 = vadd.f32 %v170, %v427
  %v429 = vpop.f32.mrb[0].mxu0
  %v430 = vpop.f32.mrb[0].mxu0
  %v431 = vadd.f32 %v170, %v430
  %v432 = vpop.f32.mrb[0].mxu0
  %433 = vmatprep.mubr.bf16.mxu0 %v282
  %434 = vmatmul.mubr.bf16.gmra.mrb[0].mxu0 %v125
  %v435 = vpop.f32.mrb[0].mxu0
  %v436 = vadd.f32 %v170, %v435
  %v437 = vpop.f32.mrb[0].mxu0
  %v438 = vpop.f32.mrb[0].mxu0
  %v439 = vadd.f32 %v170, %v438
  %v440 = vpop.f32.mrb[0].mxu0
  %441 = vmatprep.mubr.bf16.mxu0 %v285
  %442 = vmatmul.mubr.bf16.gmra.mrb[0].mxu0 %v127
  %v443 = vpop.f32.mrb[0].mxu0
  %v444 = vadd.f32 %v170, %v443
  %v445 = vpop.f32.mrb[0].mxu0
  %v446 = vpop.f32.mrb[0].mxu0
  %v447 = vadd.f32 %v170, %v446
  %v448 = vpop.f32.mrb[0].mxu0
  %449 = vmatprep.mubr.bf16.mxu0 %v288
  %450 = vmatmul.mubr.bf16.gmra.mrb[0].mxu0 %v129
  %v451 = vpop.f32.mrb[0].mxu0
  %v452 = vadd.f32 %v170, %v451
  %v453 = vpop.f32.mrb[0].mxu0
  %v454 = vpop.f32.mrb[0].mxu0
  %v455 = vadd.f32 %v170, %v454
  %v456 = vpop.f32.mrb[0].mxu0
  %457 = vmatprep.mubr.bf16.mxu0 %v291
  %458 = vmatmul.mubr.bf16.gmra.mrb[0].mxu0 %v131
  %v459 = vpop.f32.mrb[0].mxu0
  %v460 = vadd.f32 %v170, %v459
  %v461 = vpop.f32.mrb[0].mxu0
  %v462 = vpop.f32.mrb[0].mxu0
  %v463 = vadd.f32 %v170, %v462
  %v464 = vpop.f32.mrb[0].mxu0
  %465 = vmatprep.mubr.bf16.mxu0 %v294
  %466 = vmatmul.mubr.bf16.gmra.mrb[0].mxu0 %v133
  %v467 = vpop.f32.mrb[0].mxu0
  %v468 = vadd.f32 %v170, %v467
  %v469 = vpop.f32.mrb[0].mxu0
  %v470 = vpop.f32.mrb[0].mxu0
  %v471 = vadd.f32 %v170, %v470
  %v472 = vpop.f32.mrb[0].mxu0
  %473 = vmatprep.mubr.bf16.mxu0 %v297
  %474 = vmatmul.mubr.bf16.gmra.mrb[0].mxu0 %v135
  %v475 = vpop.f32.mrb[0].mxu0
  %v476 = vadd.f32 %v170, %v475
  %v477 = vpop.f32.mrb[0].mxu0
  %v478 = vpop.f32.mrb[0].mxu0
  %v479 = vadd.f32 %v170, %v478
  %v480 = vpop.f32.mrb[0].mxu0
  %481 = vmatprep.mubr.bf16.mxu0 %v300
  %482 = vmatmul.mubr.bf16.gmra.mrb[0].mxu0 %v137
  %v483 = vpop.f32.mrb[0].mxu0
  %v484 = vadd.f32 %v170, %v483
  %v485 = vpop.f32.mrb[0].mxu0
  %v486 = vpop.f32.mrb[0].mxu0
  %v487 = vadd.f32 %v170, %v486
  %v488 = vpop.f32.mrb[0].mxu0
  %489 = vmatprep.mubr.bf16.mxu0 %v303
  %490 = vmatmul.mubr.bf16.gmra.mrb[0].mxu0 %v139
  %v491 = vpop.f32.mrb[0].mxu0
  %v492 = vadd.f32 %v170, %v491
  %v493 = vpop.f32.mrb[0].mxu0
  %v494 = vpop.f32.mrb[0].mxu0
  %v495 = vadd.f32 %v170, %v494
  %v496 = vpop.f32.mrb[0].mxu0
  %497 = vdwg.mxu0
  %v498 = vpack.c.bf16 %v343, %v340
  %v499 = vpack.c.bf16 %v351, %v348
  %v500 = vpack.c.bf16 %v359, %v356
  %v501 = vpack.c.bf16 %v367, %v364
  %v502 = vpack.c.bf16 %v375, %v372
  %v503 = vpack.c.bf16 %v383, %v380
  %v504 = vpack.c.bf16 %v391, %v388
  %v505 = vpack.c.bf16 %v399, %v396
  %v506 = vpack.c.bf16 %v407, %v404
  %v507 = vpack.c.bf16 %v415, %v412
  %v508 = vld [vmem:[%s3] sm:$0xf]
  %v509 = vld [vmem:[%s3 + $0x4] sm:$0xf]
  %v510 = vld [vmem:[%s3 + $0x8] sm:$0xf]
  %v511 = vld [vmem:[%s3 + $0xc] sm:$0xf]
  %v512 = vld [vmem:[%s4] sm:$0x1]
  %v514 = vlaneseq
  %v515 = vshrl.u32 %v514, 7
  %v516 = vsub.s32 0, %v515
  %v517 = vrot.slane %v512, %v516
  %v523 = vunpack.c.l.b16 %v508
  %v524 = vunpack.c.l.b16 %v509
  %v525 = vunpack.c.l.b16 %v510
  %v526 = vunpack.c.l.b16 %v511
  %v527 = vpack.c.b16 %v524, %v523
  %v528 = vpack.c.b16 %v526, %v525
  %vm531 = vcmask 261120
  %v533 = vsel %vm531, %v498, 0
  %v536 = vsel %vm531, %v499, 0
  %v539 = vsel %vm531, %v500, 0
  %v542 = vsel %vm531, %v501, 0
  %v545 = vsel %vm531, %v502, 0
  %v548 = vsel %vm531, %v503, 0
  %v551 = vsel %vm531, %v504, 0
  %v554 = vsel %vm531, %v505, 0
  %v557 = vsel %vm531, %v506, 0
  %v560 = vsel %vm531, %v507, 0
  %562 = vmatprep.subr.bf16.mxu0 0
  %563 = vmatpush1.bf16.msra.mxu0 %v527
  %564 = vmatprep.subr.bf16.mxu0 0
  %565 = vmatpush1.bf16.msra.mxu0 %v528
  %566 = vmatprep.subr.bf16.mxu0 0
  %567 = vmatpush1.bf16.msra.mxu0 0
  %568 = vmatprep.subr.bf16.mxu0 0
  %569 = vmatpush1.bf16.msra.mxu0 0
  %570 = vmatprep.subr.bf16.mxu0 0
  %571 = vmatpush1.bf16.msra.mxu0 0
  %572 = vmatprep.subr.bf16.mxu0 0
  %573 = vmatpush1.bf16.msra.mxu0 0
  %574 = vmatprep.subr.bf16.mxu0 0
  %575 = vmatpush1.bf16.msra.mxu0 0
  %576 = vmatprep.subr.bf16.mxu0 0
  %577 = vmatpush1.bf16.msra.mxu0 0
  %578 = vmatprep.subr.bf16.mxu0 0
  %579 = vmatpush1.bf16.msra.mxu0 0
  %580 = vmatprep.subr.bf16.mxu0 0
  %581 = vmatpush1.bf16.msra.mxu0 0
  %582 = vmatprep.subr.bf16.mxu0 0
  %583 = vmatpush1.bf16.msra.mxu0 0
  %584 = vmatprep.subr.bf16.mxu0 0
  %585 = vmatpush1.bf16.msra.mxu0 0
  %586 = vmatprep.subr.bf16.mxu0 0
  %587 = vmatpush1.bf16.msra.mxu0 0
  %588 = vmatprep.subr.bf16.mxu0 0
  %589 = vmatpush1.bf16.msra.mxu0 0
  %590 = vmatprep.subr.bf16.mxu0 0
  %591 = vmatpush1.bf16.msra.mxu0 0
  %592 = vmatprep.subr.bf16.mxu0 0
  %593 = vmatpush1.bf16.msra.mxu0 0
  %594 = vmatprep.mubr.bf16.mxu0 0
  %595 = vmatmul.mubr.bf16.gmra.mrb[0].mxu0 %v533
  %v596 = vpop.f32.mrb[0].mxu0
  %v597 = vadd.f32 %v517, %v596
  %v598 = vpop.f32.mrb[0].mxu0
  %v599 = vpop.f32.mrb[0].mxu0
  %v600 = vadd.f32 %v517, %v599
  %v601 = vpop.f32.mrb[0].mxu0
  %602 = vmatprep.mubr.bf16.mxu0 0
  %603 = vmatmul.mubr.bf16.gmra.mrb[0].mxu0 %v536
  %v604 = vpop.f32.mrb[0].mxu0
  %v605 = vadd.f32 %v517, %v604
  %v606 = vpop.f32.mrb[0].mxu0
  %v607 = vpop.f32.mrb[0].mxu0
  %v608 = vadd.f32 %v517, %v607
  %v609 = vpop.f32.mrb[0].mxu0
  %610 = vmatprep.mubr.bf16.mxu0 0
  %611 = vmatmul.mubr.bf16.gmra.mrb[0].mxu0 %v539
  %v612 = vpop.f32.mrb[0].mxu0
  %v613 = vadd.f32 %v517, %v612
  %v614 = vpop.f32.mrb[0].mxu0
  %v615 = vpop.f32.mrb[0].mxu0
  %v616 = vadd.f32 %v517, %v615
  %v617 = vpop.f32.mrb[0].mxu0
  %618 = vmatprep.mubr.bf16.mxu0 0
  %619 = vmatmul.mubr.bf16.gmra.mrb[0].mxu0 %v542
  %v620 = vpop.f32.mrb[0].mxu0
  %v621 = vadd.f32 %v517, %v620
  %v622 = vpop.f32.mrb[0].mxu0
  %v623 = vpop.f32.mrb[0].mxu0
  %v624 = vadd.f32 %v517, %v623
  %v625 = vpop.f32.mrb[0].mxu0
  %626 = vmatprep.mubr.bf16.mxu0 0
  %627 = vmatmul.mubr.bf16.gmra.mrb[0].mxu0 %v545
  %v628 = vpop.f32.mrb[0].mxu0
  %v629 = vadd.f32 %v517, %v628
  %v630 = vpop.f32.mrb[0].mxu0
  %v631 = vpop.f32.mrb[0].mxu0
  %v632 = vadd.f32 %v517, %v631
  %v633 = vpop.f32.mrb[0].mxu0
  %634 = vmatprep.mubr.bf16.mxu0 0
  %635 = vmatmul.mubr.bf16.gmra.mrb[0].mxu0 %v548
  %v636 = vpop.f32.mrb[0].mxu0
  %v637 = vadd.f32 %v517, %v636
  %v638 = vpop.f32.mrb[0].mxu0
  %v639 = vpop.f32.mrb[0].mxu0
  %v640 = vadd.f32 %v517, %v639
  %v641 = vpop.f32.mrb[0].mxu0
  %642 = vmatprep.mubr.bf16.mxu0 0
  %643 = vmatmul.mubr.bf16.gmra.mrb[0].mxu0 %v551
  %v644 = vpop.f32.mrb[0].mxu0
  %v645 = vadd.f32 %v517, %v644
  %v646 = vpop.f32.mrb[0].mxu0
  %v647 = vpop.f32.mrb[0].mxu0
  %v648 = vadd.f32 %v517, %v647
  %v649 = vpop.f32.mrb[0].mxu0
  %650 = vmatprep.mubr.bf16.mxu0 0
  %651 = vmatmul.mubr.bf16.gmra.mrb[0].mxu0 %v554
  %v652 = vpop.f32.mrb[0].mxu0
  %v653 = vadd.f32 %v517, %v652
  %v654 = vpop.f32.mrb[0].mxu0
  %v655 = vpop.f32.mrb[0].mxu0
  %v656 = vadd.f32 %v517, %v655
  %v657 = vpop.f32.mrb[0].mxu0
  %658 = vmatprep.mubr.bf16.mxu0 0
  %659 = vmatmul.mubr.bf16.gmra.mrb[0].mxu0 %v557
  %v660 = vpop.f32.mrb[0].mxu0
  %v661 = vadd.f32 %v517, %v660
  %v662 = vpop.f32.mrb[0].mxu0
  %v663 = vpop.f32.mrb[0].mxu0
  %v664 = vadd.f32 %v517, %v663
  %v665 = vpop.f32.mrb[0].mxu0
  %666 = vmatprep.mubr.bf16.mxu0 0
  %667 = vmatmul.mubr.bf16.gmra.mrb[0].mxu0 %v560
  %v668 = vpop.f32.mrb[0].mxu0
  %v669 = vadd.f32 %v517, %v668
  %v670 = vpop.f32.mrb[0].mxu0
  %v671 = vpop.f32.mrb[0].mxu0
  %v672 = vadd.f32 %v517, %v671
  %v673 = vpop.f32.mrb[0].mxu0
  %674 = vdwg.mxu0
  %695 = vrot.lane.b32.xlu0 %v597, 127
  %v696 = vpop.permute.xlu0 %695
  %697 = vrot.lane.b32.xlu0 %v600, 127
  %v698 = vpop.permute.xlu0 %697
  %699 = vrot.lane.b32.xlu0 %v605, 127
  %v700 = vpop.permute.xlu0 %699
  %701 = vrot.lane.b32.xlu0 %v608, 127
  %v702 = vpop.permute.xlu0 %701
  %703 = vrot.lane.b32.xlu0 %v613, 127
  %v704 = vpop.permute.xlu0 %703
  %705 = vrot.lane.b32.xlu0 %v616, 127
  %v706 = vpop.permute.xlu0 %705
  %707 = vrot.lane.b32.xlu0 %v621, 127
  %v708 = vpop.permute.xlu0 %707
  %709 = vrot.lane.b32.xlu0 %v624, 127
  %v710 = vpop.permute.xlu0 %709
  %711 = vrot.lane.b32.xlu0 %v629, 127
  %v712 = vpop.permute.xlu0 %711
  %713 = vrot.lane.b32.xlu0 %v632, 127
  %v714 = vpop.permute.xlu0 %713
  %715 = vrot.lane.b32.xlu0 %v637, 127
  %v716 = vpop.permute.xlu0 %715
  %717 = vrot.lane.b32.xlu0 %v640, 127
  %v718 = vpop.permute.xlu0 %717
  %719 = vrot.lane.b32.xlu0 %v645, 127
  %v720 = vpop.permute.xlu0 %719
  %721 = vrot.lane.b32.xlu0 %v648, 127
  %v722 = vpop.permute.xlu0 %721
  %723 = vrot.lane.b32.xlu0 %v653, 127
  %v724 = vpop.permute.xlu0 %723
  %725 = vrot.lane.b32.xlu0 %v656, 127
  %v726 = vpop.permute.xlu0 %725
  %727 = vrot.lane.b32.xlu0 %v661, 127
  %v728 = vpop.permute.xlu0 %727
  %729 = vrot.lane.b32.xlu0 %v664, 127
  %v730 = vpop.permute.xlu0 %729
  %731 = vrot.lane.b32.xlu0 %v669, 127
  %v732 = vpop.permute.xlu0 %731
  %733 = vrot.lane.b32.xlu0 %v672, 127
  %v734 = vpop.permute.xlu0 %733
  %v755 = vmax.f32 %v597, %v696
  %v756 = vmax.f32 %v600, %v698
  %v757 = vmax.f32 %v605, %v700
  %v758 = vmax.f32 %v608, %v702
  %v759 = vmax.f32 %v613, %v704
  %v760 = vmax.f32 %v616, %v706
  %v761 = vmax.f32 %v621, %v708
  %v762 = vmax.f32 %v624, %v710
  %v763 = vmax.f32 %v629, %v712
  %v764 = vmax.f32 %v632, %v714
  %v765 = vmax.f32 %v637, %v716
  %v766 = vmax.f32 %v640, %v718
  %v767 = vmax.f32 %v645, %v720
  %v768 = vmax.f32 %v648, %v722
  %v769 = vmax.f32 %v653, %v724
  %v770 = vmax.f32 %v656, %v726
  %v771 = vmax.f32 %v661, %v728
  %v772 = vmax.f32 %v664, %v730
  %v773 = vmax.f32 %v669, %v732
  %v774 = vmax.f32 %v672, %v734
  %775 = vrot.lane.b32.xlu0 %v597, 126
  %v776 = vpop.permute.xlu0 %775
  %777 = vrot.lane.b32.xlu0 %v600, 126
  %v778 = vpop.permute.xlu0 %777
  %779 = vrot.lane.b32.xlu0 %v605, 126
  %v780 = vpop.permute.xlu0 %779
  %781 = vrot.lane.b32.xlu0 %v608, 126
  %v782 = vpop.permute.xlu0 %781
  %783 = vrot.lane.b32.xlu0 %v613, 126
  %v784 = vpop.permute.xlu0 %783
  %785 = vrot.lane.b32.xlu0 %v616, 126
  %v786 = vpop.permute.xlu0 %785
  %787 = vrot.lane.b32.xlu0 %v621, 126
  %v788 = vpop.permute.xlu0 %787
  %789 = vrot.lane.b32.xlu0 %v624, 126
  %v790 = vpop.permute.xlu0 %789
  %791 = vrot.lane.b32.xlu0 %v629, 126
  %v792 = vpop.permute.xlu0 %791
  %793 = vrot.lane.b32.xlu0 %v632, 126
  %v794 = vpop.permute.xlu0 %793
  %795 = vrot.lane.b32.xlu0 %v637, 126
  %v796 = vpop.permute.xlu0 %795
  %797 = vrot.lane.b32.xlu0 %v640, 126
  %v798 = vpop.permute.xlu0 %797
  %799 = vrot.lane.b32.xlu0 %v645, 126
  %v800 = vpop.permute.xlu0 %799
  %801 = vrot.lane.b32.xlu0 %v648, 126
  %v802 = vpop.permute.xlu0 %801
  %803 = vrot.lane.b32.xlu0 %v653, 126
  %v804 = vpop.permute.xlu0 %803
  %805 = vrot.lane.b32.xlu0 %v656, 126
  %v806 = vpop.permute.xlu0 %805
  %807 = vrot.lane.b32.xlu0 %v661, 126
  %v808 = vpop.permute.xlu0 %807
  %809 = vrot.lane.b32.xlu0 %v664, 126
  %v810 = vpop.permute.xlu0 %809
  %811 = vrot.lane.b32.xlu0 %v669, 126
  %v812 = vpop.permute.xlu0 %811
  %813 = vrot.lane.b32.xlu0 %v672, 126
  %v814 = vpop.permute.xlu0 %813
  %v835 = vmax.f32 %v755, %v776
  %v836 = vmax.f32 %v756, %v778
  %v837 = vmax.f32 %v757, %v780
  %v838 = vmax.f32 %v758, %v782
  %v839 = vmax.f32 %v759, %v784
  %v840 = vmax.f32 %v760, %v786
  %v841 = vmax.f32 %v761, %v788
  %v842 = vmax.f32 %v762, %v790
  %v843 = vmax.f32 %v763, %v792
  %v844 = vmax.f32 %v764, %v794
  %v845 = vmax.f32 %v765, %v796
  %v846 = vmax.f32 %v766, %v798
  %v847 = vmax.f32 %v767, %v800
  %v848 = vmax.f32 %v768, %v802
  %v849 = vmax.f32 %v769, %v804
  %v850 = vmax.f32 %v770, %v806
  %v851 = vmax.f32 %v771, %v808
  %v852 = vmax.f32 %v772, %v810
  %v853 = vmax.f32 %v773, %v812
  %v854 = vmax.f32 %v774, %v814
  %v855 = vsub.f32 %v597, %v835
  %v856 = vsub.f32 %v600, %v836
  %v857 = vsub.f32 %v605, %v837
  %v858 = vsub.f32 %v608, %v838
  %v859 = vsub.f32 %v613, %v839
  %v860 = vsub.f32 %v616, %v840
  %v861 = vsub.f32 %v621, %v841
  %v862 = vsub.f32 %v624, %v842
  %v863 = vsub.f32 %v629, %v843
  %v864 = vsub.f32 %v632, %v844
  %v865 = vsub.f32 %v637, %v845
  %v866 = vsub.f32 %v640, %v846
  %v867 = vsub.f32 %v645, %v847
  %v868 = vsub.f32 %v648, %v848
  %v869 = vsub.f32 %v653, %v849
  %v870 = vsub.f32 %v656, %v850
  %v871 = vsub.f32 %v661, %v851
  %v872 = vsub.f32 %v664, %v852
  %v873 = vsub.f32 %v669, %v853
  %v874 = vsub.f32 %v672, %v854
  %v875 = vmul.f32 %v855, 1.442695
  %v876 = vpow.pop %v875
  %v877 = vmul.f32 %v856, 1.442695
  %v878 = vpow.pop %v877
  %v879 = vmul.f32 %v857, 1.442695
  %v880 = vpow.pop %v879
  %v881 = vmul.f32 %v858, 1.442695
  %v882 = vpow.pop %v881
  %v883 = vmul.f32 %v859, 1.442695
  %v884 = vpow.pop %v883
  %v885 = vmul.f32 %v860, 1.442695
  %v886 = vpow.pop %v885
  %v887 = vmul.f32 %v861, 1.442695
  %v888 = vpow.pop %v887
  %v889 = vmul.f32 %v862, 1.442695
  %v890 = vpow.pop %v889
  %v891 = vmul.f32 %v863, 1.442695
  %v892 = vpow.pop %v891
  %v893 = vmul.f32 %v864, 1.442695
  %v894 = vpow.pop %v893
  %v895 = vmul.f32 %v865, 1.442695
  %v896 = vpow.pop %v895
  %v897 = vmul.f32 %v866, 1.442695
  %v898 = vpow.pop %v897
  %v899 = vmul.f32 %v867, 1.442695
  %v900 = vpow.pop %v899
  %v901 = vmul.f32 %v868, 1.442695
  %v902 = vpow.pop %v901
  %v903 = vmul.f32 %v869, 1.442695
  %v904 = vpow.pop %v903
  %v905 = vmul.f32 %v870, 1.442695
  %v906 = vpow.pop %v905
  %v907 = vmul.f32 %v871, 1.442695
  %v908 = vpow.pop %v907
  %v909 = vmul.f32 %v872, 1.442695
  %v910 = vpow.pop %v909
  %v911 = vmul.f32 %v873, 1.442695
  %v912 = vpow.pop %v911
  %v913 = vmul.f32 %v874, 1.442695
  %v914 = vpow.pop %v913
  %935 = vrot.lane.b32.xlu0 %v835, 1
  %v936 = vpop.permute.xlu0 %935
  %937 = vrot.lane.b32.xlu0 %v836, 1
  %v938 = vpop.permute.xlu0 %937
  %939 = vrot.lane.b32.xlu0 %v837, 1
  %v940 = vpop.permute.xlu0 %939
  %941 = vrot.lane.b32.xlu0 %v838, 1
  %v942 = vpop.permute.xlu0 %941
  %943 = vrot.lane.b32.xlu0 %v839, 1
  %v944 = vpop.permute.xlu0 %943
  %945 = vrot.lane.b32.xlu0 %v840, 1
  %v946 = vpop.permute.xlu0 %945
  %947 = vrot.lane.b32.xlu0 %v841, 1
  %v948 = vpop.permute.xlu0 %947
  %949 = vrot.lane.b32.xlu0 %v842, 1
  %v950 = vpop.permute.xlu0 %949
  %951 = vrot.lane.b32.xlu0 %v843, 1
  %v952 = vpop.permute.xlu0 %951
  %953 = vrot.lane.b32.xlu0 %v844, 1
  %v954 = vpop.permute.xlu0 %953
  %955 = vrot.lane.b32.xlu0 %v845, 1
  %v956 = vpop.permute.xlu0 %955
  %957 = vrot.lane.b32.xlu0 %v846, 1
  %v958 = vpop.permute.xlu0 %957
  %959 = vrot.lane.b32.xlu0 %v847, 1
  %v960 = vpop.permute.xlu0 %959
  %961 = vrot.lane.b32.xlu0 %v848, 1
  %v962 = vpop.permute.xlu0 %961
  %963 = vrot.lane.b32.xlu0 %v849, 1
  %v964 = vpop.permute.xlu0 %963
  %965 = vrot.lane.b32.xlu0 %v850, 1
  %v966 = vpop.permute.xlu0 %965
  %967 = vrot.lane.b32.xlu0 %v851, 1
  %v968 = vpop.permute.xlu0 %967
  %969 = vrot.lane.b32.xlu0 %v852, 1
  %v970 = vpop.permute.xlu0 %969
  %971 = vrot.lane.b32.xlu0 %v853, 1
  %v972 = vpop.permute.xlu0 %971
  %973 = vrot.lane.b32.xlu0 %v854, 1
  %v974 = vpop.permute.xlu0 %973
  %v995 = vsub.f32 %v597, %v936
  %v996 = vsub.f32 %v600, %v938
  %v997 = vsub.f32 %v605, %v940
  %v998 = vsub.f32 %v608, %v942
  %v999 = vsub.f32 %v613, %v944
  %v1000 = vsub.f32 %v616, %v946
  %v1001 = vsub.f32 %v621, %v948
  %v1002 = vsub.f32 %v624, %v950
  %v1003 = vsub.f32 %v629, %v952
  %v1004 = vsub.f32 %v632, %v954
  %v1005 = vsub.f32 %v637, %v956
  %v1006 = vsub.f32 %v640, %v958
  %v1007 = vsub.f32 %v645, %v960
  %v1008 = vsub.f32 %v648, %v962
  %v1009 = vsub.f32 %v653, %v964
  %v1010 = vsub.f32 %v656, %v966
  %v1011 = vsub.f32 %v661, %v968
  %v1012 = vsub.f32 %v664, %v970
  %v1013 = vsub.f32 %v669, %v972
  %v1014 = vsub.f32 %v672, %v974
  %v1015 = vmul.f32 %v995, 1.442695
  %v1016 = vpow.pop %v1015
  %v1017 = vmul.f32 %v996, 1.442695
  %v1018 = vpow.pop %v1017
  %v1019 = vmul.f32 %v997, 1.442695
  %v1020 = vpow.pop %v1019
  %v1021 = vmul.f32 %v998, 1.442695
  %v1022 = vpow.pop %v1021
  %v1023 = vmul.f32 %v999, 1.442695
  %v1024 = vpow.pop %v1023
  %v1025 = vmul.f32 %v1000, 1.442695
  %v1026 = vpow.pop %v1025
  %v1027 = vmul.f32 %v1001, 1.442695
  %v1028 = vpow.pop %v1027
  %v1029 = vmul.f32 %v1002, 1.442695
  %v1030 = vpow.pop %v1029
  %v1031 = vmul.f32 %v1003, 1.442695
  %v1032 = vpow.pop %v1031
  %v1033 = vmul.f32 %v1004, 1.442695
  %v1034 = vpow.pop %v1033
  %v1035 = vmul.f32 %v1005, 1.442695
  %v1036 = vpow.pop %v1035
  %v1037 = vmul.f32 %v1006, 1.442695
  %v1038 = vpow.pop %v1037
  %v1039 = vmul.f32 %v1007, 1.442695
  %v1040 = vpow.pop %v1039
  %v1041 = vmul.f32 %v1008, 1.442695
  %v1042 = vpow.pop %v1041
  %v1043 = vmul.f32 %v1009, 1.442695
  %v1044 = vpow.pop %v1043
  %v1045 = vmul.f32 %v1010, 1.442695
  %v1046 = vpow.pop %v1045
  %v1047 = vmul.f32 %v1011, 1.442695
  %v1048 = vpow.pop %v1047
  %v1049 = vmul.f32 %v1012, 1.442695
  %v1050 = vpow.pop %v1049
  %v1051 = vmul.f32 %v1013, 1.442695
  %v1052 = vpow.pop %v1051
  %v1053 = vmul.f32 %v1014, 1.442695
  %v1054 = vpow.pop %v1053
  %1055 = vrot.lane.b32.xlu0 %v835, 2
  %v1056 = vpop.permute.xlu0 %1055
  %1057 = vrot.lane.b32.xlu0 %v836, 2
  %v1058 = vpop.permute.xlu0 %1057
  %1059 = vrot.lane.b32.xlu0 %v837, 2
  %v1060 = vpop.permute.xlu0 %1059
  %1061 = vrot.lane.b32.xlu0 %v838, 2
  %v1062 = vpop.permute.xlu0 %1061
  %1063 = vrot.lane.b32.xlu0 %v839, 2
  %v1064 = vpop.permute.xlu0 %1063
  %1065 = vrot.lane.b32.xlu0 %v840, 2
  %v1066 = vpop.permute.xlu0 %1065
  %1067 = vrot.lane.b32.xlu0 %v841, 2
  %v1068 = vpop.permute.xlu0 %1067
  %1069 = vrot.lane.b32.xlu0 %v842, 2
  %v1070 = vpop.permute.xlu0 %1069
  %1071 = vrot.lane.b32.xlu0 %v843, 2
  %v1072 = vpop.permute.xlu0 %1071
  %1073 = vrot.lane.b32.xlu0 %v844, 2
  %v1074 = vpop.permute.xlu0 %1073
  %1075 = vrot.lane.b32.xlu0 %v845, 2
  %v1076 = vpop.permute.xlu0 %1075
  %1077 = vrot.lane.b32.xlu0 %v846, 2
  %v1078 = vpop.permute.xlu0 %1077
  %1079 = vrot.lane.b32.xlu0 %v847, 2
  %v1080 = vpop.permute.xlu0 %1079
  %1081 = vrot.lane.b32.xlu0 %v848, 2
  %v1082 = vpop.permute.xlu0 %1081
  %1083 = vrot.lane.b32.xlu0 %v849, 2
  %v1084 = vpop.permute.xlu0 %1083
  %1085 = vrot.lane.b32.xlu0 %v850, 2
  %v1086 = vpop.permute.xlu0 %1085
  %1087 = vrot.lane.b32.xlu0 %v851, 2
  %v1088 = vpop.permute.xlu0 %1087
  %1089 = vrot.lane.b32.xlu0 %v852, 2
  %v1090 = vpop.permute.xlu0 %1089
  %1091 = vrot.lane.b32.xlu0 %v853, 2
  %v1092 = vpop.permute.xlu0 %1091
  %1093 = vrot.lane.b32.xlu0 %v854, 2
  %v1094 = vpop.permute.xlu0 %1093
  %v1115 = vsub.f32 %v597, %v1056
  %v1116 = vsub.f32 %v600, %v1058
  %v1117 = vsub.f32 %v605, %v1060
  %v1118 = vsub.f32 %v608, %v1062
  %v1119 = vsub.f32 %v613, %v1064
  %v1120 = vsub.f32 %v616, %v1066
  %v1121 = vsub.f32 %v621, %v1068
  %v1122 = vsub.f32 %v624, %v1070
  %v1123 = vsub.f32 %v629, %v1072
  %v1124 = vsub.f32 %v632, %v1074
  %v1125 = vsub.f32 %v637, %v1076
  %v1126 = vsub.f32 %v640, %v1078
  %v1127 = vsub.f32 %v645, %v1080
  %v1128 = vsub.f32 %v648, %v1082
  %v1129 = vsub.f32 %v653, %v1084
  %v1130 = vsub.f32 %v656, %v1086
  %v1131 = vsub.f32 %v661, %v1088
  %v1132 = vsub.f32 %v664, %v1090
  %v1133 = vsub.f32 %v669, %v1092
  %v1134 = vsub.f32 %v672, %v1094
  %v1135 = vmul.f32 %v1115, 1.442695
  %v1136 = vpow.pop %v1135
  %v1137 = vmul.f32 %v1116, 1.442695
  %v1138 = vpow.pop %v1137
  %v1139 = vmul.f32 %v1117, 1.442695
  %v1140 = vpow.pop %v1139
  %v1141 = vmul.f32 %v1118, 1.442695
  %v1142 = vpow.pop %v1141
  %v1143 = vmul.f32 %v1119, 1.442695
  %v1144 = vpow.pop %v1143
  %v1145 = vmul.f32 %v1120, 1.442695
  %v1146 = vpow.pop %v1145
  %v1147 = vmul.f32 %v1121, 1.442695
  %v1148 = vpow.pop %v1147
  %v1149 = vmul.f32 %v1122, 1.442695
  %v1150 = vpow.pop %v1149
  %v1151 = vmul.f32 %v1123, 1.442695
  %v1152 = vpow.pop %v1151
  %v1153 = vmul.f32 %v1124, 1.442695
  %v1154 = vpow.pop %v1153
  %v1155 = vmul.f32 %v1125, 1.442695
  %v1156 = vpow.pop %v1155
  %v1157 = vmul.f32 %v1126, 1.442695
  %v1158 = vpow.pop %v1157
  %v1159 = vmul.f32 %v1127, 1.442695
  %v1160 = vpow.pop %v1159
  %v1161 = vmul.f32 %v1128, 1.442695
  %v1162 = vpow.pop %v1161
  %v1163 = vmul.f32 %v1129, 1.442695
  %v1164 = vpow.pop %v1163
  %v1165 = vmul.f32 %v1130, 1.442695
  %v1166 = vpow.pop %v1165
  %v1167 = vmul.f32 %v1131, 1.442695
  %v1168 = vpow.pop %v1167
  %v1169 = vmul.f32 %v1132, 1.442695
  %v1170 = vpow.pop %v1169
  %v1171 = vmul.f32 %v1133, 1.442695
  %v1172 = vpow.pop %v1171
  %v1173 = vmul.f32 %v1134, 1.442695
  %v1174 = vpow.pop %v1173
  %1195 = vrot.lane.b32.xlu0 %v1016, 127
  %v1196 = vpop.permute.xlu0 %1195
  %1197 = vrot.lane.b32.xlu0 %v1018, 127
  %v1198 = vpop.permute.xlu0 %1197
  %1199 = vrot.lane.b32.xlu0 %v1020, 127
  %v1200 = vpop.permute.xlu0 %1199
  %1201 = vrot.lane.b32.xlu0 %v1022, 127
  %v1202 = vpop.permute.xlu0 %1201
  %1203 = vrot.lane.b32.xlu0 %v1024, 127
  %v1204 = vpop.permute.xlu0 %1203
  %1205 = vrot.lane.b32.xlu0 %v1026, 127
  %v1206 = vpop.permute.xlu0 %1205
  %1207 = vrot.lane.b32.xlu0 %v1028, 127
  %v1208 = vpop.permute.xlu0 %1207
  %1209 = vrot.lane.b32.xlu0 %v1030, 127
  %v1210 = vpop.permute.xlu0 %1209
  %1211 = vrot.lane.b32.xlu0 %v1032, 127
  %v1212 = vpop.permute.xlu0 %1211
  %1213 = vrot.lane.b32.xlu0 %v1034, 127
  %v1214 = vpop.permute.xlu0 %1213
  %1215 = vrot.lane.b32.xlu0 %v1036, 127
  %v1216 = vpop.permute.xlu0 %1215
  %1217 = vrot.lane.b32.xlu0 %v1038, 127
  %v1218 = vpop.permute.xlu0 %1217
  %1219 = vrot.lane.b32.xlu0 %v1040, 127
  %v1220 = vpop.permute.xlu0 %1219
  %1221 = vrot.lane.b32.xlu0 %v1042, 127
  %v1222 = vpop.permute.xlu0 %1221
  %1223 = vrot.lane.b32.xlu0 %v1044, 127
  %v1224 = vpop.permute.xlu0 %1223
  %1225 = vrot.lane.b32.xlu0 %v1046, 127
  %v1226 = vpop.permute.xlu0 %1225
  %1227 = vrot.lane.b32.xlu0 %v1048, 127
  %v1228 = vpop.permute.xlu0 %1227
  %1229 = vrot.lane.b32.xlu0 %v1050, 127
  %v1230 = vpop.permute.xlu0 %1229
  %1231 = vrot.lane.b32.xlu0 %v1052, 127
  %v1232 = vpop.permute.xlu0 %1231
  %1233 = vrot.lane.b32.xlu0 %v1054, 127
  %v1234 = vpop.permute.xlu0 %1233
  %v1255 = vadd.f32 %v876, %v1196
  %v1256 = vadd.f32 %v878, %v1198
  %v1257 = vadd.f32 %v880, %v1200
  %v1258 = vadd.f32 %v882, %v1202
  %v1259 = vadd.f32 %v884, %v1204
  %v1260 = vadd.f32 %v886, %v1206
  %v1261 = vadd.f32 %v888, %v1208
  %v1262 = vadd.f32 %v890, %v1210
  %v1263 = vadd.f32 %v892, %v1212
  %v1264 = vadd.f32 %v894, %v1214
  %v1265 = vadd.f32 %v896, %v1216
  %v1266 = vadd.f32 %v898, %v1218
  %v1267 = vadd.f32 %v900, %v1220
  %v1268 = vadd.f32 %v902, %v1222
  %v1269 = vadd.f32 %v904, %v1224
  %v1270 = vadd.f32 %v906, %v1226
  %v1271 = vadd.f32 %v908, %v1228
  %v1272 = vadd.f32 %v910, %v1230
  %v1273 = vadd.f32 %v912, %v1232
  %v1274 = vadd.f32 %v914, %v1234
  %1295 = vrot.lane.b32.xlu0 %v1136, 126
  %v1296 = vpop.permute.xlu0 %1295
  %1297 = vrot.lane.b32.xlu0 %v1138, 126
  %v1298 = vpop.permute.xlu0 %1297
  %1299 = vrot.lane.b32.xlu0 %v1140, 126
  %v1300 = vpop.permute.xlu0 %1299
  %1301 = vrot.lane.b32.xlu0 %v1142, 126
  %v1302 = vpop.permute.xlu0 %1301
  %1303 = vrot.lane.b32.xlu0 %v1144, 126
  %v1304 = vpop.permute.xlu0 %1303
  %1305 = vrot.lane.b32.xlu0 %v1146, 126
  %v1306 = vpop.permute.xlu0 %1305
  %1307 = vrot.lane.b32.xlu0 %v1148, 126
  %v1308 = vpop.permute.xlu0 %1307
  %1309 = vrot.lane.b32.xlu0 %v1150, 126
  %v1310 = vpop.permute.xlu0 %1309
  %1311 = vrot.lane.b32.xlu0 %v1152, 126
  %v1312 = vpop.permute.xlu0 %1311
  %1313 = vrot.lane.b32.xlu0 %v1154, 126
  %v1314 = vpop.permute.xlu0 %1313
  %1315 = vrot.lane.b32.xlu0 %v1156, 126
  %v1316 = vpop.permute.xlu0 %1315
  %1317 = vrot.lane.b32.xlu0 %v1158, 126
  %v1318 = vpop.permute.xlu0 %1317
  %1319 = vrot.lane.b32.xlu0 %v1160, 126
  %v1320 = vpop.permute.xlu0 %1319
  %1321 = vrot.lane.b32.xlu0 %v1162, 126
  %v1322 = vpop.permute.xlu0 %1321
  %1323 = vrot.lane.b32.xlu0 %v1164, 126
  %v1324 = vpop.permute.xlu0 %1323
  %1325 = vrot.lane.b32.xlu0 %v1166, 126
  %v1326 = vpop.permute.xlu0 %1325
  %1327 = vrot.lane.b32.xlu0 %v1168, 126
  %v1328 = vpop.permute.xlu0 %1327
  %1329 = vrot.lane.b32.xlu0 %v1170, 126
  %v1330 = vpop.permute.xlu0 %1329
  %1331 = vrot.lane.b32.xlu0 %v1172, 126
  %v1332 = vpop.permute.xlu0 %1331
  %1333 = vrot.lane.b32.xlu0 %v1174, 126
  %v1334 = vpop.permute.xlu0 %1333
  %v1355 = vadd.f32 %v1255, %v1296
  %v1356 = vadd.f32 %v1256, %v1298
  %v1357 = vadd.f32 %v1257, %v1300
  %v1358 = vadd.f32 %v1258, %v1302
  %v1359 = vadd.f32 %v1259, %v1304
  %v1360 = vadd.f32 %v1260, %v1306
  %v1361 = vadd.f32 %v1261, %v1308
  %v1362 = vadd.f32 %v1262, %v1310
  %v1363 = vadd.f32 %v1263, %v1312
  %v1364 = vadd.f32 %v1264, %v1314
  %v1365 = vadd.f32 %v1265, %v1316
  %v1366 = vadd.f32 %v1266, %v1318
  %v1367 = vadd.f32 %v1267, %v1320
  %v1368 = vadd.f32 %v1268, %v1322
  %v1369 = vadd.f32 %v1269, %v1324
  %v1370 = vadd.f32 %v1270, %v1326
  %v1371 = vadd.f32 %v1271, %v1328
  %v1372 = vadd.f32 %v1272, %v1330
  %v1373 = vadd.f32 %v1273, %v1332
  %v1374 = vadd.f32 %v1274, %v1334
  %v1375 = vrcp.pop %v1355
  %v1376 = vrcp.pop %v1356
  %v1377 = vrcp.pop %v1357
  %v1378 = vrcp.pop %v1358
  %v1379 = vrcp.pop %v1359
  %v1380 = vrcp.pop %v1360
  %v1381 = vrcp.pop %v1361
  %v1382 = vrcp.pop %v1362
  %v1383 = vrcp.pop %v1363
  %v1384 = vrcp.pop %v1364
  %v1385 = vrcp.pop %v1365
  %v1386 = vrcp.pop %v1366
  %v1387 = vrcp.pop %v1367
  %v1388 = vrcp.pop %v1368
  %v1389 = vrcp.pop %v1369
  %v1390 = vrcp.pop %v1370
  %v1391 = vrcp.pop %v1371
  %v1392 = vrcp.pop %v1372
  %v1393 = vrcp.pop %v1373
  %v1394 = vrcp.pop %v1374
  %v1395 = vmul.f32 %v876, %v1375
  %v1396 = vmul.f32 %v878, %v1376
  %v1397 = vmul.f32 %v880, %v1377
  %v1398 = vmul.f32 %v882, %v1378
  %v1399 = vmul.f32 %v884, %v1379
  %v1400 = vmul.f32 %v886, %v1380
  %v1401 = vmul.f32 %v888, %v1381
  %v1402 = vmul.f32 %v890, %v1382
  %v1403 = vmul.f32 %v892, %v1383
  %v1404 = vmul.f32 %v894, %v1384
  %v1405 = vmul.f32 %v896, %v1385
  %v1406 = vmul.f32 %v898, %v1386
  %v1407 = vmul.f32 %v900, %v1387
  %v1408 = vmul.f32 %v902, %v1388
  %v1409 = vmul.f32 %v904, %v1389
  %v1410 = vmul.f32 %v906, %v1390
  %v1411 = vmul.f32 %v908, %v1391
  %v1412 = vmul.f32 %v910, %v1392
  %v1413 = vmul.f32 %v912, %v1393
  %v1414 = vmul.f32 %v914, %v1394
  %1435 = vrot.lane.b32.xlu0 %v1375, 1
  %v1436 = vpop.permute.xlu0 %1435
  %1437 = vrot.lane.b32.xlu0 %v1376, 1
  %v1438 = vpop.permute.xlu0 %1437
  %1439 = vrot.lane.b32.xlu0 %v1377, 1
  %v1440 = vpop.permute.xlu0 %1439
  %1441 = vrot.lane.b32.xlu0 %v1378, 1
  %v1442 = vpop.permute.xlu0 %1441
  %1443 = vrot.lane.b32.xlu0 %v1379, 1
  %v1444 = vpop.permute.xlu0 %1443
  %1445 = vrot.lane.b32.xlu0 %v1380, 1
  %v1446 = vpop.permute.xlu0 %1445
  %1447 = vrot.lane.b32.xlu0 %v1381, 1
  %v1448 = vpop.permute.xlu0 %1447
  %1449 = vrot.lane.b32.xlu0 %v1382, 1
  %v1450 = vpop.permute.xlu0 %1449
  %1451 = vrot.lane.b32.xlu0 %v1383, 1
  %v1452 = vpop.permute.xlu0 %1451
  %1453 = vrot.lane.b32.xlu0 %v1384, 1
  %v1454 = vpop.permute.xlu0 %1453
  %1455 = vrot.lane.b32.xlu0 %v1385, 1
  %v1456 = vpop.permute.xlu0 %1455
  %1457 = vrot.lane.b32.xlu0 %v1386, 1
  %v1458 = vpop.permute.xlu0 %1457
  %1459 = vrot.lane.b32.xlu0 %v1387, 1
  %v1460 = vpop.permute.xlu0 %1459
  %1461 = vrot.lane.b32.xlu0 %v1388, 1
  %v1462 = vpop.permute.xlu0 %1461
  %1463 = vrot.lane.b32.xlu0 %v1389, 1
  %v1464 = vpop.permute.xlu0 %1463
  %1465 = vrot.lane.b32.xlu0 %v1390, 1
  %v1466 = vpop.permute.xlu0 %1465
  %1467 = vrot.lane.b32.xlu0 %v1391, 1
  %v1468 = vpop.permute.xlu0 %1467
  %1469 = vrot.lane.b32.xlu0 %v1392, 1
  %v1470 = vpop.permute.xlu0 %1469
  %1471 = vrot.lane.b32.xlu0 %v1393, 1
  %v1472 = vpop.permute.xlu0 %1471
  %1473 = vrot.lane.b32.xlu0 %v1394, 1
  %v1474 = vpop.permute.xlu0 %1473
  %v1495 = vmul.f32 %v1016, %v1436
  %v1496 = vmul.f32 %v1018, %v1438
  %v1497 = vmul.f32 %v1020, %v1440
  %v1498 = vmul.f32 %v1022, %v1442
  %v1499 = vmul.f32 %v1024, %v1444
  %v1500 = vmul.f32 %v1026, %v1446
  %v1501 = vmul.f32 %v1028, %v1448
  %v1502 = vmul.f32 %v1030, %v1450
  %v1503 = vmul.f32 %v1032, %v1452
  %v1504 = vmul.f32 %v1034, %v1454
  %v1505 = vmul.f32 %v1036, %v1456
  %v1506 = vmul.f32 %v1038, %v1458
  %v1507 = vmul.f32 %v1040, %v1460
  %v1508 = vmul.f32 %v1042, %v1462
  %v1509 = vmul.f32 %v1044, %v1464
  %v1510 = vmul.f32 %v1046, %v1466
  %v1511 = vmul.f32 %v1048, %v1468
  %v1512 = vmul.f32 %v1050, %v1470
  %v1513 = vmul.f32 %v1052, %v1472
  %v1514 = vmul.f32 %v1054, %v1474
  %1515 = vrot.lane.b32.xlu0 %v1375, 2
  %v1516 = vpop.permute.xlu0 %1515
  %1517 = vrot.lane.b32.xlu0 %v1376, 2
  %v1518 = vpop.permute.xlu0 %1517
  %1519 = vrot.lane.b32.xlu0 %v1377, 2
  %v1520 = vpop.permute.xlu0 %1519
  %1521 = vrot.lane.b32.xlu0 %v1378, 2
  %v1522 = vpop.permute.xlu0 %1521
  %1523 = vrot.lane.b32.xlu0 %v1379, 2
  %v1524 = vpop.permute.xlu0 %1523
  %1525 = vrot.lane.b32.xlu0 %v1380, 2
  %v1526 = vpop.permute.xlu0 %1525
  %1527 = vrot.lane.b32.xlu0 %v1381, 2
  %v1528 = vpop.permute.xlu0 %1527
  %1529 = vrot.lane.b32.xlu0 %v1382, 2
  %v1530 = vpop.permute.xlu0 %1529
  %1531 = vrot.lane.b32.xlu0 %v1383, 2
  %v1532 = vpop.permute.xlu0 %1531
  %1533 = vrot.lane.b32.xlu0 %v1384, 2
  %v1534 = vpop.permute.xlu0 %1533
  %1535 = vrot.lane.b32.xlu0 %v1385, 2
  %v1536 = vpop.permute.xlu0 %1535
  %1537 = vrot.lane.b32.xlu0 %v1386, 2
  %v1538 = vpop.permute.xlu0 %1537
  %1539 = vrot.lane.b32.xlu0 %v1387, 2
  %v1540 = vpop.permute.xlu0 %1539
  %1541 = vrot.lane.b32.xlu0 %v1388, 2
  %v1542 = vpop.permute.xlu0 %1541
  %1543 = vrot.lane.b32.xlu0 %v1389, 2
  %v1544 = vpop.permute.xlu0 %1543
  %1545 = vrot.lane.b32.xlu0 %v1390, 2
  %v1546 = vpop.permute.xlu0 %1545
  %1547 = vrot.lane.b32.xlu0 %v1391, 2
  %v1548 = vpop.permute.xlu0 %1547
  %1549 = vrot.lane.b32.xlu0 %v1392, 2
  %v1550 = vpop.permute.xlu0 %1549
  %1551 = vrot.lane.b32.xlu0 %v1393, 2
  %v1552 = vpop.permute.xlu0 %1551
  %1553 = vrot.lane.b32.xlu0 %v1394, 2
  %v1554 = vpop.permute.xlu0 %1553
  %v1575 = vmul.f32 %v1136, %v1516
  %v1576 = vmul.f32 %v1138, %v1518
  %v1577 = vmul.f32 %v1140, %v1520
  %v1578 = vmul.f32 %v1142, %v1522
  %v1579 = vmul.f32 %v1144, %v1524
  %v1580 = vmul.f32 %v1146, %v1526
  %v1581 = vmul.f32 %v1148, %v1528
  %v1582 = vmul.f32 %v1150, %v1530
  %v1583 = vmul.f32 %v1152, %v1532
  %v1584 = vmul.f32 %v1154, %v1534
  %v1585 = vmul.f32 %v1156, %v1536
  %v1586 = vmul.f32 %v1158, %v1538
  %v1587 = vmul.f32 %v1160, %v1540
  %v1588 = vmul.f32 %v1162, %v1542
  %v1589 = vmul.f32 %v1164, %v1544
  %v1590 = vmul.f32 %v1166, %v1546
  %v1591 = vmul.f32 %v1168, %v1548
  %v1592 = vmul.f32 %v1170, %v1550
  %v1593 = vmul.f32 %v1172, %v1552
  %v1594 = vmul.f32 %v1174, %v1554
  %v1595 = vmul.f32 %v340, 0.9
  %v1596 = vmul.f32 %v343, 0.9
  %v1597 = vmul.f32 %v348, 0.9
  %v1598 = vmul.f32 %v351, 0.9
  %v1599 = vmul.f32 %v356, 0.9
  %v1600 = vmul.f32 %v359, 0.9
  %v1601 = vmul.f32 %v364, 0.9
  %v1602 = vmul.f32 %v367, 0.9
  %v1603 = vmul.f32 %v372, 0.9
  %v1604 = vmul.f32 %v375, 0.9
  %v1605 = vmul.f32 %v380, 0.9
  %v1606 = vmul.f32 %v383, 0.9
  %v1607 = vmul.f32 %v388, 0.9
  %v1608 = vmul.f32 %v391, 0.9
  %v1609 = vmul.f32 %v396, 0.9
  %v1610 = vmul.f32 %v399, 0.9
  %v1611 = vmul.f32 %v404, 0.9
  %v1612 = vmul.f32 %v407, 0.9
  %v1613 = vmul.f32 %v412, 0.9
  %v1614 = vmul.f32 %v415, 0.9
  %v1615 = vmul.f32 %v420, 0.1
  %v1616 = vmul.f32 %v423, 0.1
  %v1617 = vmul.f32 %v428, 0.1
  %v1618 = vmul.f32 %v431, 0.1
  %v1619 = vmul.f32 %v436, 0.1
  %v1620 = vmul.f32 %v439, 0.1
  %v1621 = vmul.f32 %v444, 0.1
  %v1622 = vmul.f32 %v447, 0.1
  %v1623 = vmul.f32 %v452, 0.1
  %v1624 = vmul.f32 %v455, 0.1
  %v1625 = vmul.f32 %v460, 0.1
  %v1626 = vmul.f32 %v463, 0.1
  %v1627 = vmul.f32 %v468, 0.1
  %v1628 = vmul.f32 %v471, 0.1
  %v1629 = vmul.f32 %v476, 0.1
  %v1630 = vmul.f32 %v479, 0.1
  %v1631 = vmul.f32 %v484, 0.1
  %v1632 = vmul.f32 %v487, 0.1
  %v1633 = vmul.f32 %v492, 0.1
  %v1634 = vmul.f32 %v495, 0.1
  %v1635 = vadd.f32 %v1595, %v1615
  %v1636 = vadd.f32 %v1596, %v1616
  %v1637 = vadd.f32 %v1597, %v1617
  %v1638 = vadd.f32 %v1598, %v1618
  %v1639 = vadd.f32 %v1599, %v1619
  %v1640 = vadd.f32 %v1600, %v1620
  %v1641 = vadd.f32 %v1601, %v1621
  %v1642 = vadd.f32 %v1602, %v1622
  %v1643 = vadd.f32 %v1603, %v1623
  %v1644 = vadd.f32 %v1604, %v1624
  %v1645 = vadd.f32 %v1605, %v1625
  %v1646 = vadd.f32 %v1606, %v1626
  %v1647 = vadd.f32 %v1607, %v1627
  %v1648 = vadd.f32 %v1608, %v1628
  %v1649 = vadd.f32 %v1609, %v1629
  %v1650 = vadd.f32 %v1610, %v1630
  %v1651 = vadd.f32 %v1611, %v1631
  %v1652 = vadd.f32 %v1612, %v1632
  %v1653 = vadd.f32 %v1613, %v1633
  %v1654 = vadd.f32 %v1614, %v1634
  %1656 = vset.pattern.permute.xlu0 0
  %1657 = vperm.xlu0 %1656, %v1395
  %v1658 = vpop.permute.xlu0 %1657
  %1661 = vset.pattern.permute.xlu0 0
  %1662 = vperm.xlu0 %1661, %v1396
  %v1663 = vpop.permute.xlu0 %1662
  %1666 = vset.pattern.permute.xlu0 0
  %1667 = vperm.xlu0 %1666, %v1397
  %v1668 = vpop.permute.xlu0 %1667
  %1671 = vset.pattern.permute.xlu0 0
  %1672 = vperm.xlu0 %1671, %v1398
  %v1673 = vpop.permute.xlu0 %1672
  %1676 = vset.pattern.permute.xlu0 0
  %1677 = vperm.xlu0 %1676, %v1399
  %v1678 = vpop.permute.xlu0 %1677
  %1681 = vset.pattern.permute.xlu0 0
  %1682 = vperm.xlu0 %1681, %v1400
  %v1683 = vpop.permute.xlu0 %1682
  %1686 = vset.pattern.permute.xlu0 0
  %1687 = vperm.xlu0 %1686, %v1401
  %v1688 = vpop.permute.xlu0 %1687
  %1691 = vset.pattern.permute.xlu0 0
  %1692 = vperm.xlu0 %1691, %v1402
  %v1693 = vpop.permute.xlu0 %1692
  %1696 = vset.pattern.permute.xlu0 0
  %1697 = vperm.xlu0 %1696, %v1403
  %v1698 = vpop.permute.xlu0 %1697
  %1701 = vset.pattern.permute.xlu0 0
  %1702 = vperm.xlu0 %1701, %v1404
  %v1703 = vpop.permute.xlu0 %1702
  %1706 = vset.pattern.permute.xlu0 0
  %1707 = vperm.xlu0 %1706, %v1405
  %v1708 = vpop.permute.xlu0 %1707
  %1711 = vset.pattern.permute.xlu0 0
  %1712 = vperm.xlu0 %1711, %v1406
  %v1713 = vpop.permute.xlu0 %1712
  %1716 = vset.pattern.permute.xlu0 0
  %1717 = vperm.xlu0 %1716, %v1407
  %v1718 = vpop.permute.xlu0 %1717
  %1721 = vset.pattern.permute.xlu0 0
  %1722 = vperm.xlu0 %1721, %v1408
  %v1723 = vpop.permute.xlu0 %1722
  %1726 = vset.pattern.permute.xlu0 0
  %1727 = vperm.xlu0 %1726, %v1409
  %v1728 = vpop.permute.xlu0 %1727
  %1731 = vset.pattern.permute.xlu0 0
  %1732 = vperm.xlu0 %1731, %v1410
  %v1733 = vpop.permute.xlu0 %1732
  %1736 = vset.pattern.permute.xlu0 0
  %1737 = vperm.xlu0 %1736, %v1411
  %v1738 = vpop.permute.xlu0 %1737
  %1741 = vset.pattern.permute.xlu0 0
  %1742 = vperm.xlu0 %1741, %v1412
  %v1743 = vpop.permute.xlu0 %1742
  %1746 = vset.pattern.permute.xlu0 0
  %1747 = vperm.xlu0 %1746, %v1413
  %v1748 = vpop.permute.xlu0 %1747
  %1751 = vset.pattern.permute.xlu0 0
  %1752 = vperm.xlu0 %1751, %v1414
  %v1753 = vpop.permute.xlu0 %1752
  %v1755 = vmul.f32 %v1658, %v1635
  %v1756 = vmul.f32 %v1663, %v1636
  %v1757 = vmul.f32 %v1668, %v1637
  %v1758 = vmul.f32 %v1673, %v1638
  %v1759 = vmul.f32 %v1678, %v1639
  %v1760 = vmul.f32 %v1683, %v1640
  %v1761 = vmul.f32 %v1688, %v1641
  %v1762 = vmul.f32 %v1693, %v1642
  %v1763 = vmul.f32 %v1698, %v1643
  %v1764 = vmul.f32 %v1703, %v1644
  %v1765 = vmul.f32 %v1708, %v1645
  %v1766 = vmul.f32 %v1713, %v1646
  %v1767 = vmul.f32 %v1718, %v1647
  %v1768 = vmul.f32 %v1723, %v1648
  %v1769 = vmul.f32 %v1728, %v1649
  %v1770 = vmul.f32 %v1733, %v1650
  %v1771 = vmul.f32 %v1738, %v1651
  %v1772 = vmul.f32 %v1743, %v1652
  %v1773 = vmul.f32 %v1748, %v1653
  %v1774 = vmul.f32 %v1753, %v1654
  %v1775 = vmul.f32 %v340, 0.5
  %v1776 = vmul.f32 %v343, 0.5
  %v1777 = vmul.f32 %v348, 0.5
  %v1778 = vmul.f32 %v351, 0.5
  %v1779 = vmul.f32 %v356, 0.5
  %v1780 = vmul.f32 %v359, 0.5
  %v1781 = vmul.f32 %v364, 0.5
  %v1782 = vmul.f32 %v367, 0.5
  %v1783 = vmul.f32 %v372, 0.5
  %v1784 = vmul.f32 %v375, 0.5
  %v1785 = vmul.f32 %v380, 0.5
  %v1786 = vmul.f32 %v383, 0.5
  %v1787 = vmul.f32 %v388, 0.5
  %v1788 = vmul.f32 %v391, 0.5
  %v1789 = vmul.f32 %v396, 0.5
  %v1790 = vmul.f32 %v399, 0.5
  %v1791 = vmul.f32 %v404, 0.5
  %v1792 = vmul.f32 %v407, 0.5
  %v1793 = vmul.f32 %v412, 0.5
  %v1794 = vmul.f32 %v415, 0.5
  %v1795 = vmul.f32 %v420, 0.5
  %v1796 = vmul.f32 %v423, 0.5
  %v1797 = vmul.f32 %v428, 0.5
  %v1798 = vmul.f32 %v431, 0.5
  %v1799 = vmul.f32 %v436, 0.5
  %v1800 = vmul.f32 %v439, 0.5
  %v1801 = vmul.f32 %v444, 0.5
  %v1802 = vmul.f32 %v447, 0.5
  %v1803 = vmul.f32 %v452, 0.5
  %v1804 = vmul.f32 %v455, 0.5
  %v1805 = vmul.f32 %v460, 0.5
  %v1806 = vmul.f32 %v463, 0.5
  %v1807 = vmul.f32 %v468, 0.5
  %v1808 = vmul.f32 %v471, 0.5
  %v1809 = vmul.f32 %v476, 0.5
  %v1810 = vmul.f32 %v479, 0.5
  %v1811 = vmul.f32 %v484, 0.5
  %v1812 = vmul.f32 %v487, 0.5
  %v1813 = vmul.f32 %v492, 0.5
  %v1814 = vmul.f32 %v495, 0.5
  %v1815 = vadd.f32 %v1775, %v1795
  %v1816 = vadd.f32 %v1776, %v1796
  %v1817 = vadd.f32 %v1777, %v1797
  %v1818 = vadd.f32 %v1778, %v1798
  %v1819 = vadd.f32 %v1779, %v1799
  %v1820 = vadd.f32 %v1780, %v1800
  %v1821 = vadd.f32 %v1781, %v1801
  %v1822 = vadd.f32 %v1782, %v1802
  %v1823 = vadd.f32 %v1783, %v1803
  %v1824 = vadd.f32 %v1784, %v1804
  %v1825 = vadd.f32 %v1785, %v1805
  %v1826 = vadd.f32 %v1786, %v1806
  %v1827 = vadd.f32 %v1787, %v1807
  %v1828 = vadd.f32 %v1788, %v1808
  %v1829 = vadd.f32 %v1789, %v1809
  %v1830 = vadd.f32 %v1790, %v1810
  %v1831 = vadd.f32 %v1791, %v1811
  %v1832 = vadd.f32 %v1792, %v1812
  %v1833 = vadd.f32 %v1793, %v1813
  %v1834 = vadd.f32 %v1794, %v1814
  %1836 = vset.pattern.permute.xlu0 1
  %1837 = vperm.xlu0 %1836, %v1495
  %v1838 = vpop.permute.xlu0 %1837
  %1841 = vset.pattern.permute.xlu0 1
  %1842 = vperm.xlu0 %1841, %v1496
  %v1843 = vpop.permute.xlu0 %1842
  %1846 = vset.pattern.permute.xlu0 1
  %1847 = vperm.xlu0 %1846, %v1497
  %v1848 = vpop.permute.xlu0 %1847
  %1851 = vset.pattern.permute.xlu0 1
  %1852 = vperm.xlu0 %1851, %v1498
  %v1853 = vpop.permute.xlu0 %1852
  %1856 = vset.pattern.permute.xlu0 1
  %1857 = vperm.xlu0 %1856, %v1499
  %v1858 = vpop.permute.xlu0 %1857
  %1861 = vset.pattern.permute.xlu0 1
  %1862 = vperm.xlu0 %1861, %v1500
  %v1863 = vpop.permute.xlu0 %1862
  %1866 = vset.pattern.permute.xlu0 1
  %1867 = vperm.xlu0 %1866, %v1501
  %v1868 = vpop.permute.xlu0 %1867
  %1871 = vset.pattern.permute.xlu0 1
  %1872 = vperm.xlu0 %1871, %v1502
  %v1873 = vpop.permute.xlu0 %1872
  %1876 = vset.pattern.permute.xlu0 1
  %1877 = vperm.xlu0 %1876, %v1503
  %v1878 = vpop.permute.xlu0 %1877
  %1881 = vset.pattern.permute.xlu0 1
  %1882 = vperm.xlu0 %1881, %v1504
  %v1883 = vpop.permute.xlu0 %1882
  %1886 = vset.pattern.permute.xlu0 1
  %1887 = vperm.xlu0 %1886, %v1505
  %v1888 = vpop.permute.xlu0 %1887
  %1891 = vset.pattern.permute.xlu0 1
  %1892 = vperm.xlu0 %1891, %v1506
  %v1893 = vpop.permute.xlu0 %1892
  %1896 = vset.pattern.permute.xlu0 1
  %1897 = vperm.xlu0 %1896, %v1507
  %v1898 = vpop.permute.xlu0 %1897
  %1901 = vset.pattern.permute.xlu0 1
  %1902 = vperm.xlu0 %1901, %v1508
  %v1903 = vpop.permute.xlu0 %1902
  %1906 = vset.pattern.permute.xlu0 1
  %1907 = vperm.xlu0 %1906, %v1509
  %v1908 = vpop.permute.xlu0 %1907
  %1911 = vset.pattern.permute.xlu0 1
  %1912 = vperm.xlu0 %1911, %v1510
  %v1913 = vpop.permute.xlu0 %1912
  %1916 = vset.pattern.permute.xlu0 1
  %1917 = vperm.xlu0 %1916, %v1511
  %v1918 = vpop.permute.xlu0 %1917
  %1921 = vset.pattern.permute.xlu0 1
  %1922 = vperm.xlu0 %1921, %v1512
  %v1923 = vpop.permute.xlu0 %1922
  %1926 = vset.pattern.permute.xlu0 1
  %1927 = vperm.xlu0 %1926, %v1513
  %v1928 = vpop.permute.xlu0 %1927
  %1931 = vset.pattern.permute.xlu0 1
  %1932 = vperm.xlu0 %1931, %v1514
  %v1933 = vpop.permute.xlu0 %1932
  %v1935 = vmul.f32 %v1838, %v1815
  %v1936 = vmul.f32 %v1843, %v1816
  %v1937 = vmul.f32 %v1848, %v1817
  %v1938 = vmul.f32 %v1853, %v1818
  %v1939 = vmul.f32 %v1858, %v1819
  %v1940 = vmul.f32 %v1863, %v1820
  %v1941 = vmul.f32 %v1868, %v1821
  %v1942 = vmul.f32 %v1873, %v1822
  %v1943 = vmul.f32 %v1878, %v1823
  %v1944 = vmul.f32 %v1883, %v1824
  %v1945 = vmul.f32 %v1888, %v1825
  %v1946 = vmul.f32 %v1893, %v1826
  %v1947 = vmul.f32 %v1898, %v1827
  %v1948 = vmul.f32 %v1903, %v1828
  %v1949 = vmul.f32 %v1908, %v1829
  %v1950 = vmul.f32 %v1913, %v1830
  %v1951 = vmul.f32 %v1918, %v1831
  %v1952 = vmul.f32 %v1923, %v1832
  %v1953 = vmul.f32 %v1928, %v1833
  %v1954 = vmul.f32 %v1933, %v1834
  %v1955 = vadd.f32 %v1755, %v1935
  %v1956 = vadd.f32 %v1756, %v1936
  %v1957 = vadd.f32 %v1757, %v1937
  %v1958 = vadd.f32 %v1758, %v1938
  %v1959 = vadd.f32 %v1759, %v1939
  %v1960 = vadd.f32 %v1760, %v1940
  %v1961 = vadd.f32 %v1761, %v1941
  %v1962 = vadd.f32 %v1762, %v1942
  %v1963 = vadd.f32 %v1763, %v1943
  %v1964 = vadd.f32 %v1764, %v1944
  %v1965 = vadd.f32 %v1765, %v1945
  %v1966 = vadd.f32 %v1766, %v1946
  %v1967 = vadd.f32 %v1767, %v1947
  %v1968 = vadd.f32 %v1768, %v1948
  %v1969 = vadd.f32 %v1769, %v1949
  %v1970 = vadd.f32 %v1770, %v1950
  %v1971 = vadd.f32 %v1771, %v1951
  %v1972 = vadd.f32 %v1772, %v1952
  %v1973 = vadd.f32 %v1773, %v1953
  %v1974 = vadd.f32 %v1774, %v1954
  %v1975 = vmul.f32 %v340, 0.1
  %v1976 = vmul.f32 %v343, 0.1
  %v1977 = vmul.f32 %v348, 0.1
  %v1978 = vmul.f32 %v351, 0.1
  %v1979 = vmul.f32 %v356, 0.1
  %v1980 = vmul.f32 %v359, 0.1
  %v1981 = vmul.f32 %v364, 0.1
  %v1982 = vmul.f32 %v367, 0.1
  %v1983 = vmul.f32 %v372, 0.1
  %v1984 = vmul.f32 %v375, 0.1
  %v1985 = vmul.f32 %v380, 0.1
  %v1986 = vmul.f32 %v383, 0.1
  %v1987 = vmul.f32 %v388, 0.1
  %v1988 = vmul.f32 %v391, 0.1
  %v1989 = vmul.f32 %v396, 0.1
  %v1990 = vmul.f32 %v399, 0.1
  %v1991 = vmul.f32 %v404, 0.1
  %v1992 = vmul.f32 %v407, 0.1
  %v1993 = vmul.f32 %v412, 0.1
  %v1994 = vmul.f32 %v415, 0.1
  %v1995 = vmul.f32 %v420, 0.9
  %v1996 = vmul.f32 %v423, 0.9
  %v1997 = vmul.f32 %v428, 0.9
  %v1998 = vmul.f32 %v431, 0.9
  %v1999 = vmul.f32 %v436, 0.9
  %v2000 = vmul.f32 %v439, 0.9
  %v2001 = vmul.f32 %v444, 0.9
  %v2002 = vmul.f32 %v447, 0.9
  %v2003 = vmul.f32 %v452, 0.9
  %v2004 = vmul.f32 %v455, 0.9
  %v2005 = vmul.f32 %v460, 0.9
  %v2006 = vmul.f32 %v463, 0.9
  %v2007 = vmul.f32 %v468, 0.9
  %v2008 = vmul.f32 %v471, 0.9
  %v2009 = vmul.f32 %v476, 0.9
  %v2010 = vmul.f32 %v479, 0.9
  %v2011 = vmul.f32 %v484, 0.9
  %v2012 = vmul.f32 %v487, 0.9
  %v2013 = vmul.f32 %v492, 0.9
  %v2014 = vmul.f32 %v495, 0.9
  %v2015 = vadd.f32 %v1975, %v1995
  %v2016 = vadd.f32 %v1976, %v1996
  %v2017 = vadd.f32 %v1977, %v1997
  %v2018 = vadd.f32 %v1978, %v1998
  %v2019 = vadd.f32 %v1979, %v1999
  %v2020 = vadd.f32 %v1980, %v2000
  %v2021 = vadd.f32 %v1981, %v2001
  %v2022 = vadd.f32 %v1982, %v2002
  %v2023 = vadd.f32 %v1983, %v2003
  %v2024 = vadd.f32 %v1984, %v2004
  %v2025 = vadd.f32 %v1985, %v2005
  %v2026 = vadd.f32 %v1986, %v2006
  %v2027 = vadd.f32 %v1987, %v2007
  %v2028 = vadd.f32 %v1988, %v2008
  %v2029 = vadd.f32 %v1989, %v2009
  %v2030 = vadd.f32 %v1990, %v2010
  %v2031 = vadd.f32 %v1991, %v2011
  %v2032 = vadd.f32 %v1992, %v2012
  %v2033 = vadd.f32 %v1993, %v2013
  %v2034 = vadd.f32 %v1994, %v2014
  %2036 = vset.pattern.permute.xlu0 2
  %2037 = vperm.xlu0 %2036, %v1575
  %v2038 = vpop.permute.xlu0 %2037
  %2041 = vset.pattern.permute.xlu0 2
  %2042 = vperm.xlu0 %2041, %v1576
  %v2043 = vpop.permute.xlu0 %2042
  %2046 = vset.pattern.permute.xlu0 2
  %2047 = vperm.xlu0 %2046, %v1577
  %v2048 = vpop.permute.xlu0 %2047
  %2051 = vset.pattern.permute.xlu0 2
  %2052 = vperm.xlu0 %2051, %v1578
  %v2053 = vpop.permute.xlu0 %2052
  %2056 = vset.pattern.permute.xlu0 2
  %2057 = vperm.xlu0 %2056, %v1579
  %v2058 = vpop.permute.xlu0 %2057
  %2061 = vset.pattern.permute.xlu0 2
  %2062 = vperm.xlu0 %2061, %v1580
  %v2063 = vpop.permute.xlu0 %2062
  %2066 = vset.pattern.permute.xlu0 2
  %2067 = vperm.xlu0 %2066, %v1581
  %v2068 = vpop.permute.xlu0 %2067
  %2071 = vset.pattern.permute.xlu0 2
  %2072 = vperm.xlu0 %2071, %v1582
  %v2073 = vpop.permute.xlu0 %2072
  %2076 = vset.pattern.permute.xlu0 2
  %2077 = vperm.xlu0 %2076, %v1583
  %v2078 = vpop.permute.xlu0 %2077
  %2081 = vset.pattern.permute.xlu0 2
  %2082 = vperm.xlu0 %2081, %v1584
  %v2083 = vpop.permute.xlu0 %2082
  %2086 = vset.pattern.permute.xlu0 2
  %2087 = vperm.xlu0 %2086, %v1585
  %v2088 = vpop.permute.xlu0 %2087
  %2091 = vset.pattern.permute.xlu0 2
  %2092 = vperm.xlu0 %2091, %v1586
  %v2093 = vpop.permute.xlu0 %2092
  %2096 = vset.pattern.permute.xlu0 2
  %2097 = vperm.xlu0 %2096, %v1587
  %v2098 = vpop.permute.xlu0 %2097
  %2101 = vset.pattern.permute.xlu0 2
  %2102 = vperm.xlu0 %2101, %v1588
  %v2103 = vpop.permute.xlu0 %2102
  %2106 = vset.pattern.permute.xlu0 2
  %2107 = vperm.xlu0 %2106, %v1589
  %v2108 = vpop.permute.xlu0 %2107
  %2111 = vset.pattern.permute.xlu0 2
  %2112 = vperm.xlu0 %2111, %v1590
  %v2113 = vpop.permute.xlu0 %2112
  %2116 = vset.pattern.permute.xlu0 2
  %2117 = vperm.xlu0 %2116, %v1591
  %v2118 = vpop.permute.xlu0 %2117
  %2121 = vset.pattern.permute.xlu0 2
  %2122 = vperm.xlu0 %2121, %v1592
  %v2123 = vpop.permute.xlu0 %2122
  %2126 = vset.pattern.permute.xlu0 2
  %2127 = vperm.xlu0 %2126, %v1593
  %v2128 = vpop.permute.xlu0 %2127
  %2131 = vset.pattern.permute.xlu0 2
  %2132 = vperm.xlu0 %2131, %v1594
  %v2133 = vpop.permute.xlu0 %2132
  %v2135 = vmul.f32 %v2038, %v2015
  %v2136 = vmul.f32 %v2043, %v2016
  %v2137 = vmul.f32 %v2048, %v2017
  %v2138 = vmul.f32 %v2053, %v2018
  %v2139 = vmul.f32 %v2058, %v2019
  %v2140 = vmul.f32 %v2063, %v2020
  %v2141 = vmul.f32 %v2068, %v2021
  %v2142 = vmul.f32 %v2073, %v2022
  %v2143 = vmul.f32 %v2078, %v2023
  %v2144 = vmul.f32 %v2083, %v2024
  %v2145 = vmul.f32 %v2088, %v2025
  %v2146 = vmul.f32 %v2093, %v2026
  %v2147 = vmul.f32 %v2098, %v2027
  %v2148 = vmul.f32 %v2103, %v2028
  %v2149 = vmul.f32 %v2108, %v2029
  %v2150 = vmul.f32 %v2113, %v2030
  %v2151 = vmul.f32 %v2118, %v2031
  %v2152 = vmul.f32 %v2123, %v2032
  %v2153 = vmul.f32 %v2128, %v2033
  %v2154 = vmul.f32 %v2133, %v2034
  %v2155 = vadd.f32 %v1955, %v2135
  %v2156 = vadd.f32 %v1956, %v2136
  %v2157 = vadd.f32 %v1957, %v2137
  %v2158 = vadd.f32 %v1958, %v2138
  %v2159 = vadd.f32 %v1959, %v2139
  %v2160 = vadd.f32 %v1960, %v2140
  %v2161 = vadd.f32 %v1961, %v2141
  %v2162 = vadd.f32 %v1962, %v2142
  %v2163 = vadd.f32 %v1963, %v2143
  %v2164 = vadd.f32 %v1964, %v2144
  %v2165 = vadd.f32 %v1965, %v2145
  %v2166 = vadd.f32 %v1966, %v2146
  %v2167 = vadd.f32 %v1967, %v2147
  %v2168 = vadd.f32 %v1968, %v2148
  %v2169 = vadd.f32 %v1969, %v2149
  %v2170 = vadd.f32 %v1970, %v2150
  %v2171 = vadd.f32 %v1971, %v2151
  %v2172 = vadd.f32 %v1972, %v2152
  %v2173 = vadd.f32 %v1973, %v2153
  %v2174 = vadd.f32 %v1974, %v2154
  %2175 = vst.msk [vmem:[%s5] sm:$0xff] %vm531, %v2155
  %2176 = vst.msk [vmem:[%s5 + $0x8] sm:$0xff] %vm531, %v2156
  %2177 = vst.msk [vmem:[%s5 + $0x10] sm:$0xff] %vm531, %v2157
  %2178 = vst.msk [vmem:[%s5 + $0x18] sm:$0xff] %vm531, %v2158
  %2179 = vst.msk [vmem:[%s5 + $0x20] sm:$0xff] %vm531, %v2159
  %2180 = vst.msk [vmem:[%s5 + $0x28] sm:$0xff] %vm531, %v2160
  %2181 = vst.msk [vmem:[%s5 + $0x30] sm:$0xff] %vm531, %v2161
  %2182 = vst.msk [vmem:[%s5 + $0x38] sm:$0xff] %vm531, %v2162
  %2183 = vst.msk [vmem:[%s5 + $0x40] sm:$0xff] %vm531, %v2163
  %2184 = vst.msk [vmem:[%s5 + $0x48] sm:$0xff] %vm531, %v2164
  %2185 = vst.msk [vmem:[%s5 + $0x50] sm:$0xff] %vm531, %v2165
  %2186 = vst.msk [vmem:[%s5 + $0x58] sm:$0xff] %vm531, %v2166
  %2187 = vst.msk [vmem:[%s5 + $0x60] sm:$0xff] %vm531, %v2167
  %2188 = vst.msk [vmem:[%s5 + $0x68] sm:$0xff] %vm531, %v2168
  %2189 = vst.msk [vmem:[%s5 + $0x70] sm:$0xff] %vm531, %v2169
  %2190 = vst.msk [vmem:[%s5 + $0x78] sm:$0xff] %vm531, %v2170
  %2191 = vst.msk [vmem:[%s5 + $0x80] sm:$0xff] %vm531, %v2171
  %2192 = vst.msk [vmem:[%s5 + $0x88] sm:$0xff] %vm531, %v2172
  %2193 = vst.msk [vmem:[%s5 + $0x90] sm:$0xff] %vm531, %v2173
  %2194 = vst.msk [vmem:[%s5 + $0x98] sm:$0xff] %vm531, %v2174
  // Predicated region
  $region22: #{pure_rmt_forward.7} parent=0 // pred_check
    _
  $region23: #{pure_rmt_forward.7} parent=0 // pred_check_branch
    %2196 = sbr.rel (0) target = $region25
  $region24: #{pure_rmt_forward.7} parent=0 // pred_region
    _
  $region25: #{pure_rmt_forward.7} parent=0 // pred_fallthru
    _
  // Predicated region
  $region26: #{pure_rmt_forward.7} parent=0 // pred_check
    _
  $region27: #{pure_rmt_forward.7} parent=0 // pred_check_branch
    %2198 = sbr.rel (0) target = $region29
  $region28: #{pure_rmt_forward.7} parent=0 // pred_region
    _
  $region29: #{pure_rmt_forward.7} parent=0 // pred_fallthru
    _

// kernel: pure_rmt_forward.11
$region0: #{pure_rmt_forward.11}
  #allocation0 [shape = 'u32[]', space=smem, size = 0x4, offset = 0x4, fixed_abs, tag = 'smem constant byte address 0x4 - core index']
  #allocation1 [shape = 'u32[144,128]{1,0:T(1,128)}', space=vmem, size = 0x12000, scoped, tag = 'internal scratch']
  %s0 = inlined_call_operand.vmem [shape: f32[32,128], index: 0, kind: input, shape index: {}]
  %s1 = inlined_call_operand.vmem [shape: bf16[128,64], index: 1, kind: input, shape index: {}]
  %s2 = inlined_call_operand.vmem [shape: f32[1,64], index: 2, kind: input, shape index: {}]
  %s3 = inlined_call_operand.vmem [shape: f32[1,64], index: 3, kind: input, shape index: {}]
  %s4 = inlined_call_operand.vmem [shape: f32[1,64], index: 4, kind: input, shape index: {}]
  %s5 = inlined_call_operand.vmem [shape: f32[32,64], index: 5, kind: output, shape index: {}]
  %s6 = sld [smem:[#allocation0]]
  $region30: #{pure_rmt_forward.11} parent=0
    _
  %s8 = ssub.s32 1, %s6
  %s9 = scalar_select 0, %s8, %s6
  // Predicated region
  $region2: #{pure_rmt_forward.11} parent=0 // pred_check
    _
  $region3: #{pure_rmt_forward.11} parent=0 // pred_check_branch
    %11 = sbr.rel (0) target = $region5
  $region4: #{pure_rmt_forward.11} parent=0 // pred_region
    _
  $region5: #{pure_rmt_forward.11} parent=0 // pred_fallthru
    _
  // Predicated region
  $region6: #{pure_rmt_forward.11} parent=0 // pred_check
    _
  $region7: #{pure_rmt_forward.11} parent=0 // pred_check_branch
    %13 = sbr.rel (0) target = $region9
  $region8: #{pure_rmt_forward.11} parent=0 // pred_region
    _
  $region9: #{pure_rmt_forward.11} parent=0 // pred_fallthru
    _
  // Predicated region
  $region10: #{pure_rmt_forward.11} parent=0 // pred_check
    _
  $region11: #{pure_rmt_forward.11} parent=0 // pred_check_branch
    %15 = sbr.rel (0) target = $region13
  $region12: #{pure_rmt_forward.11} parent=0 // pred_region
    _
  $region13: #{pure_rmt_forward.11} parent=0 // pred_fallthru
    _
  // Predicated region
  $region14: #{pure_rmt_forward.11} parent=0 // pred_check
    _
  $region15: #{pure_rmt_forward.11} parent=0 // pred_check_branch
    %17 = sbr.rel (0) target = $region17
  $region16: #{pure_rmt_forward.11} parent=0 // pred_region
    _
  $region17: #{pure_rmt_forward.11} parent=0 // pred_fallthru
    _
  // Predicated region
  $region18: #{pure_rmt_forward.11} parent=0 // pred_check
    _
  $region19: #{pure_rmt_forward.11} parent=0 // pred_check_branch
    %19 = sbr.rel (0) target = $region21
  $region20: #{pure_rmt_forward.11} parent=0 // pred_region
    _
  $region21: #{pure_rmt_forward.11} parent=0 // pred_fallthru
    _
  %v21 = vld [vmem:[%s0] sm:$0xff]
  %v22 = vld [vmem:[%s0 + $0x8] sm:$0xff]
  %v23 = vld [vmem:[%s0 + $0x10] sm:$0xff]
  %v24 = vld [vmem:[%s0 + $0x18] sm:$0xff]
  %v25 = vpack.c.bf16 %v22, %v21
  %v26 = vpack.c.bf16 %v24, %v23
  %v27 = vld [vmem:[%s1] sm:$0xf]
  %v28 = vld [vmem:[%s1 + $0x4] sm:$0xf]
  %v29 = vld [vmem:[%s1 + $0x8] sm:$0xf]
  %v30 = vld [vmem:[%s1 + $0xc] sm:$0xf]
  %v31 = vld [vmem:[%s1 + $0x10] sm:$0xf]
  %v32 = vld [vmem:[%s1 + $0x14] sm:$0xf]
  %v33 = vld [vmem:[%s1 + $0x18] sm:$0xf]
  %v34 = vld [vmem:[%s1 + $0x1c] sm:$0xf]
  %v35 = vld [vmem:[%s1 + $0x20] sm:$0xf]
  %v36 = vld [vmem:[%s1 + $0x24] sm:$0xf]
  %v37 = vld [vmem:[%s1 + $0x28] sm:$0xf]
  %v38 = vld [vmem:[%s1 + $0x2c] sm:$0xf]
  %v39 = vld [vmem:[%s1 + $0x30] sm:$0xf]
  %v40 = vld [vmem:[%s1 + $0x34] sm:$0xf]
  %v41 = vld [vmem:[%s1 + $0x38] sm:$0xf]
  %v42 = vld [vmem:[%s1 + $0x3c] sm:$0xf]
  %v43 = vld [vmem:[%s2] sm:$0x1]
  %v45 = vlaneseq
  %v46 = vshrl.u32 %v45, 7
  %v47 = vsub.s32 0, %v46
  %v48 = vrot.slane %v43, %v47
  %v66 = vunpack.c.l.b16 %v27
  %v67 = vunpack.c.l.b16 %v28
  %v68 = vunpack.c.l.b16 %v29
  %v69 = vunpack.c.l.b16 %v30
  %v70 = vunpack.c.l.b16 %v31
  %v71 = vunpack.c.l.b16 %v32
  %v72 = vunpack.c.l.b16 %v33
  %v73 = vunpack.c.l.b16 %v34
  %v74 = vunpack.c.l.b16 %v35
  %v75 = vunpack.c.l.b16 %v36
  %v76 = vunpack.c.l.b16 %v37
  %v77 = vunpack.c.l.b16 %v38
  %v78 = vunpack.c.l.b16 %v39
  %v79 = vunpack.c.l.b16 %v40
  %v80 = vunpack.c.l.b16 %v41
  %v81 = vunpack.c.l.b16 %v42
  %v82 = vpack.c.b16 %v67, %v66
  %v83 = vpack.c.b16 %v69, %v68
  %v84 = vpack.c.b16 %v71, %v70
  %v85 = vpack.c.b16 %v73, %v72
  %v86 = vpack.c.b16 %v75, %v74
  %v87 = vpack.c.b16 %v77, %v76
  %v88 = vpack.c.b16 %v79, %v78
  %v89 = vpack.c.b16 %v81, %v80
  %98 = vmatprep.subr.bf16.mxu0 0
  %99 = vmatpush1.bf16.msra.mxu0 %v82
  %100 = vmatprep.subr.bf16.mxu0 0
  %101 = vmatpush1.bf16.msra.mxu0 %v83
  %102 = vmatprep.subr.bf16.mxu0 0
  %103 = vmatpush1.bf16.msra.mxu0 %v84
  %104 = vmatprep.subr.bf16.mxu0 0
  %105 = vmatpush1.bf16.msra.mxu0 %v85
  %106 = vmatprep.subr.bf16.mxu0 0
  %107 = vmatpush1.bf16.msra.mxu0 %v86
  %108 = vmatprep.subr.bf16.mxu0 0
  %109 = vmatpush1.bf16.msra.mxu0 %v87
  %110 = vmatprep.subr.bf16.mxu0 0
  %111 = vmatpush1.bf16.msra.mxu0 %v88
  %112 = vmatprep.subr.bf16.mxu0 0
  %113 = vmatpush1.bf16.msra.mxu0 %v89
  %114 = vmatprep.subr.bf16.mxu0 0
  %115 = vmatpush1.bf16.msra.mxu0 0
  %116 = vmatprep.subr.bf16.mxu0 0
  %117 = vmatpush1.bf16.msra.mxu0 0
  %118 = vmatprep.subr.bf16.mxu0 0
  %119 = vmatpush1.bf16.msra.mxu0 0
  %120 = vmatprep.subr.bf16.mxu0 0
  %121 = vmatpush1.bf16.msra.mxu0 0
  %122 = vmatprep.subr.bf16.mxu0 0
  %123 = vmatpush1.bf16.msra.mxu0 0
  %124 = vmatprep.subr.bf16.mxu0 0
  %125 = vmatpush1.bf16.msra.mxu0 0
  %126 = vmatprep.subr.bf16.mxu0 0
  %127 = vmatpush1.bf16.msra.mxu0 0
  %128 = vmatprep.subr.bf16.mxu0 0
  %129 = vmatpush1.bf16.msra.mxu0 0
  %130 = vmatprep.mubr.bf16.mxu0 0
  %131 = vmatmul.mubr.bf16.gmra.mrb[0].mxu0 %v25
  %v132 = vpop.f32.mrb[0].mxu0
  %v133 = vadd.f32 %v48, %v132
  %v134 = vpop.f32.mrb[0].mxu0
  %v135 = vpop.f32.mrb[0].mxu0
  %v136 = vadd.f32 %v48, %v135
  %v137 = vpop.f32.mrb[0].mxu0
  %138 = vmatprep.mubr.bf16.mxu0 0
  %139 = vmatmul.mubr.bf16.gmra.mrb[0].mxu0 %v26
  %v140 = vpop.f32.mrb[0].mxu0
  %v141 = vadd.f32 %v48, %v140
  %v142 = vpop.f32.mrb[0].mxu0
  %v143 = vpop.f32.mrb[0].mxu0
  %v144 = vadd.f32 %v48, %v143
  %v145 = vpop.f32.mrb[0].mxu0
  %146 = vdwg.mxu0
  %v147 = vld [vmem:[%s3] sm:$0x1]
  %v148 = vld [vmem:[%s4] sm:$0x1]
  %vm149 = vcmask 523264
  %v150 = vsel %vm149, %v133, 0.0
  %151 = vadd.xlane.f32.xlu0 %v150
  %v152 = vpop.xlane.xlu0 %151
  %v153 = vsel %vm149, %v136, 0.0
  %154 = vadd.xlane.f32.xlu0 %v153
  %v155 = vpop.xlane.xlu0 %154
  %v156 = vsel %vm149, %v141, 0.0
  %157 = vadd.xlane.f32.xlu0 %v156
  %v158 = vpop.xlane.xlu0 %157
  %v159 = vsel %vm149, %v144, 0.0
  %160 = vadd.xlane.f32.xlu0 %v159
  %v161 = vpop.xlane.xlu0 %160
  %v162 = vrcp.pop 64.0
  %v163 = vmul.f32 %v152, %v162
  %v164 = vmul.f32 %v155, %v162
  %v165 = vmul.f32 %v158, %v162
  %v166 = vmul.f32 %v161, %v162
  %v167 = vsub.f32 %v133, %v163
  %v168 = vsub.f32 %v136, %v164
  %v169 = vsub.f32 %v141, %v165
  %v170 = vsub.f32 %v144, %v166
  %v171 = vmul.f32 %v167, %v167
  %v172 = vmul.f32 %v168, %v168
  %v173 = vmul.f32 %v169, %v169
  %v174 = vmul.f32 %v170, %v170
  %v175 = vsel %vm149, %v171, 0.0
  %176 = vadd.xlane.f32.xlu0 %v175
  %v177 = vpop.xlane.xlu0 %176
  %v178 = vsel %vm149, %v172, 0.0
  %179 = vadd.xlane.f32.xlu0 %v178
  %v180 = vpop.xlane.xlu0 %179
  %v181 = vsel %vm149, %v173, 0.0
  %182 = vadd.xlane.f32.xlu0 %v181
  %v183 = vpop.xlane.xlu0 %182
  %v184 = vsel %vm149, %v174, 0.0
  %185 = vadd.xlane.f32.xlu0 %v184
  %v186 = vpop.xlane.xlu0 %185
  %v187 = vmul.f32 %v177, %v162
  %v188 = vmul.f32 %v180, %v162
  %v189 = vmul.f32 %v183, %v162
  %v190 = vmul.f32 %v186, %v162
  %v191 = vadd.f32 %v187, 1e-05
  %v192 = vadd.f32 %v188, 1e-05
  %v193 = vadd.f32 %v189, 1e-05
  %v194 = vadd.f32 %v190, 1e-05
  %v195 = vrsqrt.pop %v191
  %v196 = vrsqrt.pop %v192
  %v197 = vrsqrt.pop %v193
  %v198 = vrsqrt.pop %v194
  %v199 = vmul.f32 %v167, %v195
  %v200 = vmul.f32 %v168, %v196
  %v201 = vmul.f32 %v169, %v197
  %v202 = vmul.f32 %v170, %v198
  %v204 = vlaneseq
  %v205 = vshrl.u32 %v204, 7
  %v206 = vsub.s32 0, %v205
  %v207 = vrot.slane %v147, %v206
  %v209 = vmul.f32 %v199, %v207
  %v210 = vmul.f32 %v200, %v207
  %v211 = vmul.f32 %v201, %v207
  %v212 = vmul.f32 %v202, %v207
  %v214 = vlaneseq
  %v215 = vshrl.u32 %v214, 7
  %v216 = vsub.s32 0, %v215
  %v217 = vrot.slane %v148, %v216
  %v219 = vadd.f32 %v209, %v217
  %v220 = vadd.f32 %v210, %v217
  %v221 = vadd.f32 %v211, %v217
  %v222 = vadd.f32 %v212, %v217
  %223 = vst.msk [vmem:[%s5] sm:$0xff] %vm149, %v219
  %224 = vst.msk [vmem:[%s5 + $0x8] sm:$0xff] %vm149, %v220
  %225 = vst.msk [vmem:[%s5 + $0x10] sm:$0xff] %vm149, %v221
  %226 = vst.msk [vmem:[%s5 + $0x18] sm:$0xff] %vm149, %v222
  // Predicated region
  $region22: #{pure_rmt_forward.11} parent=0 // pred_check
    _
  $region23: #{pure_rmt_forward.11} parent=0 // pred_check_branch
    %228 = sbr.rel (0) target = $region25
  $region24: #{pure_rmt_forward.11} parent=0 // pred_region
    _
  $region25: #{pure_rmt_forward.11} parent=0 // pred_fallthru
    _
  // Predicated region
  $region26: #{pure_rmt_forward.11} parent=0 // pred_check
    _
  $region27: #{pure_rmt_forward.11} parent=0 // pred_check_branch
    %230 = sbr.rel (0) target = $region29
  $region28: #{pure_rmt_forward.11} parent=0 // pred_region
    _
  $region29: #{pure_rmt_forward.11} parent=0 // pred_fallthru
    _

// kernel: pure_rmt_forward.9
$region0: #{pure_rmt_forward.9}
  #allocation0 [shape = 'u32[]', space=smem, size = 0x4, offset = 0x4, fixed_abs, tag = 'smem constant byte address 0x4 - core index']
  #allocation1 [shape = 'u32[144,128]{1,0:T(1,128)}', space=vmem, size = 0x12000, scoped, tag = 'internal scratch']
  %s0 = inlined_call_operand.vmem [shape: f32[8,128], index: 0, kind: input, shape index: {}]
  %s1 = inlined_call_operand.vmem [shape: bf16[128,64], index: 1, kind: input, shape index: {}]
  %s2 = inlined_call_operand.vmem [shape: f32[1,64], index: 2, kind: input, shape index: {}]
  %s3 = inlined_call_operand.vmem [shape: f32[1,64], index: 3, kind: input, shape index: {}]
  %s4 = inlined_call_operand.vmem [shape: f32[1,64], index: 4, kind: input, shape index: {}]
  %s5 = inlined_call_operand.vmem [shape: f32[8,64], index: 5, kind: output, shape index: {}]
  %s6 = sld [smem:[#allocation0]]
  $region30: #{pure_rmt_forward.9} parent=0
    _
  %s8 = ssub.s32 1, %s6
  %s9 = scalar_select 0, %s8, %s6
  // Predicated region
  $region2: #{pure_rmt_forward.9} parent=0 // pred_check
    _
  $region3: #{pure_rmt_forward.9} parent=0 // pred_check_branch
    %11 = sbr.rel (0) target = $region5
  $region4: #{pure_rmt_forward.9} parent=0 // pred_region
    _
  $region5: #{pure_rmt_forward.9} parent=0 // pred_fallthru
    _
  // Predicated region
  $region6: #{pure_rmt_forward.9} parent=0 // pred_check
    _
  $region7: #{pure_rmt_forward.9} parent=0 // pred_check_branch
    %13 = sbr.rel (0) target = $region9
  $region8: #{pure_rmt_forward.9} parent=0 // pred_region
    _
  $region9: #{pure_rmt_forward.9} parent=0 // pred_fallthru
    _
  // Predicated region
  $region10: #{pure_rmt_forward.9} parent=0 // pred_check
    _
  $region11: #{pure_rmt_forward.9} parent=0 // pred_check_branch
    %15 = sbr.rel (0) target = $region13
  $region12: #{pure_rmt_forward.9} parent=0 // pred_region
    _
  $region13: #{pure_rmt_forward.9} parent=0 // pred_fallthru
    _
  // Predicated region
  $region14: #{pure_rmt_forward.9} parent=0 // pred_check
    _
  $region15: #{pure_rmt_forward.9} parent=0 // pred_check_branch
    %17 = sbr.rel (0) target = $region17
  $region16: #{pure_rmt_forward.9} parent=0 // pred_region
    _
  $region17: #{pure_rmt_forward.9} parent=0 // pred_fallthru
    _
  // Predicated region
  $region18: #{pure_rmt_forward.9} parent=0 // pred_check
    _
  $region19: #{pure_rmt_forward.9} parent=0 // pred_check_branch
    %19 = sbr.rel (0) target = $region21
  $region20: #{pure_rmt_forward.9} parent=0 // pred_region
    _
  $region21: #{pure_rmt_forward.9} parent=0 // pred_fallthru
    _
  %v21 = vld [vmem:[%s0] sm:$0xff]
  %v22 = vpack.c.bf16 %v21, %v21
  %v23 = vld [vmem:[%s1] sm:$0xf]
  %v24 = vld [vmem:[%s1 + $0x4] sm:$0xf]
  %v25 = vld [vmem:[%s1 + $0x8] sm:$0xf]
  %v26 = vld [vmem:[%s1 + $0xc] sm:$0xf]
  %v27 = vld [vmem:[%s1 + $0x10] sm:$0xf]
  %v28 = vld [vmem:[%s1 + $0x14] sm:$0xf]
  %v29 = vld [vmem:[%s1 + $0x18] sm:$0xf]
  %v30 = vld [vmem:[%s1 + $0x1c] sm:$0xf]
  %v31 = vld [vmem:[%s1 + $0x20] sm:$0xf]
  %v32 = vld [vmem:[%s1 + $0x24] sm:$0xf]
  %v33 = vld [vmem:[%s1 + $0x28] sm:$0xf]
  %v34 = vld [vmem:[%s1 + $0x2c] sm:$0xf]
  %v35 = vld [vmem:[%s1 + $0x30] sm:$0xf]
  %v36 = vld [vmem:[%s1 + $0x34] sm:$0xf]
  %v37 = vld [vmem:[%s1 + $0x38] sm:$0xf]
  %v38 = vld [vmem:[%s1 + $0x3c] sm:$0xf]
  %v39 = vld [vmem:[%s2] sm:$0x1]
  %v41 = vlaneseq
  %v42 = vshrl.u32 %v41, 7
  %v43 = vsub.s32 0, %v42
  %v44 = vrot.slane %v39, %v43
  %v62 = vunpack.c.l.b16 %v23
  %v63 = vunpack.c.l.b16 %v24
  %v64 = vunpack.c.l.b16 %v25
  %v65 = vunpack.c.l.b16 %v26
  %v66 = vunpack.c.l.b16 %v27
  %v67 = vunpack.c.l.b16 %v28
  %v68 = vunpack.c.l.b16 %v29
  %v69 = vunpack.c.l.b16 %v30
  %v70 = vunpack.c.l.b16 %v31
  %v71 = vunpack.c.l.b16 %v32
  %v72 = vunpack.c.l.b16 %v33
  %v73 = vunpack.c.l.b16 %v34
  %v74 = vunpack.c.l.b16 %v35
  %v75 = vunpack.c.l.b16 %v36
  %v76 = vunpack.c.l.b16 %v37
  %v77 = vunpack.c.l.b16 %v38
  %v78 = vpack.c.b16 %v63, %v62
  %v79 = vpack.c.b16 %v65, %v64
  %v80 = vpack.c.b16 %v67, %v66
  %v81 = vpack.c.b16 %v69, %v68
  %v82 = vpack.c.b16 %v71, %v70
  %v83 = vpack.c.b16 %v73, %v72
  %v84 = vpack.c.b16 %v75, %v74
  %v85 = vpack.c.b16 %v77, %v76
  %94 = vmatprep.subr.bf16.mxu0 0
  %95 = vmatpush1.bf16.msra.mxu0 %v78
  %96 = vmatprep.subr.bf16.mxu0 0
  %97 = vmatpush1.bf16.msra.mxu0 %v79
  %98 = vmatprep.subr.bf16.mxu0 0
  %99 = vmatpush1.bf16.msra.mxu0 %v80
  %100 = vmatprep.subr.bf16.mxu0 0
  %101 = vmatpush1.bf16.msra.mxu0 %v81
  %102 = vmatprep.subr.bf16.mxu0 0
  %103 = vmatpush1.bf16.msra.mxu0 %v82
  %104 = vmatprep.subr.bf16.mxu0 0
  %105 = vmatpush1.bf16.msra.mxu0 %v83
  %106 = vmatprep.subr.bf16.mxu0 0
  %107 = vmatpush1.bf16.msra.mxu0 %v84
  %108 = vmatprep.subr.bf16.mxu0 0
  %109 = vmatpush1.bf16.msra.mxu0 %v85
  %110 = vmatprep.subr.bf16.mxu0 0
  %111 = vmatpush1.bf16.msra.mxu0 0
  %112 = vmatprep.subr.bf16.mxu0 0
  %113 = vmatpush1.bf16.msra.mxu0 0
  %114 = vmatprep.subr.bf16.mxu0 0
  %115 = vmatpush1.bf16.msra.mxu0 0
  %116 = vmatprep.subr.bf16.mxu0 0
  %117 = vmatpush1.bf16.msra.mxu0 0
  %118 = vmatprep.subr.bf16.mxu0 0
  %119 = vmatpush1.bf16.msra.mxu0 0
  %120 = vmatprep.subr.bf16.mxu0 0
  %121 = vmatpush1.bf16.msra.mxu0 0
  %122 = vmatprep.subr.bf16.mxu0 0
  %123 = vmatpush1.bf16.msra.mxu0 0
  %124 = vmatprep.subr.bf16.mxu0 0
  %125 = vmatpush1.bf16.msra.mxu0 0
  %126 = vmatprep.mubr.bf16.mxu0 0
  %127 = vmatmul.mubr.bf16.gmra.mrb[0].mxu0 %v22
  %v128 = vpop.f32.mrb[0].mxu0
  %v129 = vadd.f32 %v44, %v128
  %v130 = vpop.f32.mrb[0].mxu0
  %v131 = vpop.f32.mrb[0].mxu0
  %v132 = vpop.f32.mrb[0].mxu0
  %133 = vdwg.mxu0
  %v134 = vld [vmem:[%s3] sm:$0x1]
  %v135 = vld [vmem:[%s4] sm:$0x1]
  %vm136 = vcmask 523264
  %v137 = vsel %vm136, %v129, 0.0
  %138 = vadd.xlane.f32.xlu0 %v137
  %v139 = vpop.xlane.xlu0 %138
  %v140 = vrcp.pop 64.0
  %v141 = vmul.f32 %v139, %v140
  %v142 = vsub.f32 %v129, %v141
  %v143 = vmul.f32 %v142, %v142
  %v144 = vsel %vm136, %v143, 0.0
  %145 = vadd.xlane.f32.xlu0 %v144
  %v146 = vpop.xlane.xlu0 %145
  %v147 = vmul.f32 %v146, %v140
  %v148 = vadd.f32 %v147, 1e-05
  %v149 = vrsqrt.pop %v148
  %v150 = vmul.f32 %v142, %v149
  %v152 = vlaneseq
  %v153 = vshrl.u32 %v152, 7
  %v154 = vsub.s32 0, %v153
  %v155 = vrot.slane %v134, %v154
  %v157 = vmul.f32 %v150, %v155
  %v159 = vlaneseq
  %v160 = vshrl.u32 %v159, 7
  %v161 = vsub.s32 0, %v160
  %v162 = vrot.slane %v135, %v161
  %v164 = vadd.f32 %v157, %v162
  %165 = vst.msk [vmem:[%s5] sm:$0xff] %vm136, %v164
  // Predicated region
  $region22: #{pure_rmt_forward.9} parent=0 // pred_check
    _
  $region23: #{pure_rmt_forward.9} parent=0 // pred_check_branch
    %167 = sbr.rel (0) target = $region25
  $region24: #{pure_rmt_forward.9} parent=0 // pred_region
    _
  $region25: #{pure_rmt_forward.9} parent=0 // pred_fallthru
    _
  // Predicated region
  $region26: #{pure_rmt_forward.9} parent=0 // pred_check
    _
  $region27: #{pure_rmt_forward.9} parent=0 // pred_check_branch
    %169 = sbr.rel (0) target = $region29
  $region28: #{pure_rmt_forward.9} parent=0 // pred_region
    _
  $region29: #{pure_rmt_forward.9} parent=0 // pred_fallthru
    _

// kernel: pure_rmt_forward.13
$region0: #{pure_rmt_forward.13}
  #allocation0 [shape = 'u32[]', space=smem, size = 0x4, offset = 0x4, fixed_abs, tag = 'smem constant byte address 0x4 - core index']
  #allocation1 [shape = 'u32[144,128]{1,0:T(1,128)}', space=vmem, size = 0x12000, scoped, tag = 'internal scratch']
  %s0 = inlined_call_operand.vmem [shape: f32[2,16,64], index: 0, kind: input, shape index: {}]
  %s1 = inlined_call_operand.vmem [shape: f32[4,16,16], index: 1, kind: input, shape index: {}]
  %s2 = inlined_call_operand.vmem [shape: f32[1,64], index: 2, kind: input, shape index: {}]
  %s3 = inlined_call_operand.vmem [shape: f32[1,64], index: 3, kind: input, shape index: {}]
  %s4 = inlined_call_operand.vmem [shape: bf16[64,192], index: 4, kind: input, shape index: {}]
  %s5 = inlined_call_operand.vmem [shape: f32[1,192], index: 5, kind: input, shape index: {}]
  %s6 = inlined_call_operand.vmem [shape: bf16[64,64], index: 6, kind: input, shape index: {}]
  %s7 = inlined_call_operand.vmem [shape: f32[1,64], index: 7, kind: input, shape index: {}]
  %s8 = inlined_call_operand.vmem [shape: f32[1,64], index: 8, kind: input, shape index: {}]
  %s9 = inlined_call_operand.vmem [shape: f32[1,64], index: 9, kind: input, shape index: {}]
  %s10 = inlined_call_operand.vmem [shape: bf16[64,128], index: 10, kind: input, shape index: {}]
  %s11 = inlined_call_operand.vmem [shape: f32[1,128], index: 11, kind: input, shape index: {}]
  %s12 = inlined_call_operand.vmem [shape: bf16[128,64], index: 12, kind: input, shape index: {}]
  %s13 = inlined_call_operand.vmem [shape: f32[1,64], index: 13, kind: input, shape index: {}]
  %s14 = inlined_call_operand.vmem [shape: f32[2,16,64], index: 14, kind: output, shape index: {}]
  %s15 = sld [smem:[#allocation0]]
  $region89: #{pure_rmt_forward.13} parent=0
    _
  %s17 = ssub.s32 1, %s15
  %s18 = scalar_select 0, %s17, %s15
  loop: start=0, step=1, limit=4
  $region2: #{pure_rmt_forward.13} parent=0 // loop_pre_header
    _
  $region3: #{pure_rmt_forward.13} parent=0 // loop_header
    %s20 = sphi 0, %s24
    %p21 = scmp.ge.s32.totalorder %s20, 4
    %s30 = sphi 0, %s32
    %s33 = sphi 0, %s30
    %s34 = sphi 0, %s33
    %s50 = sphi 0, %s34
    %s54 = sphi 0, %s54
    %s56 = sphi 0, %s54
    %s57 = sphi 0, %s56
    %s71 = sphi 0, %s57
    %s75 = sphi 0, %s75
    %s77 = sphi 0, %s75
    %s78 = sphi 0, %s77
    %s92 = sphi 0, %s78
    %s96 = sphi 0, %s96
    %s98 = sphi 0, %s96
    %s99 = sphi 0, %s98
    %s113 = sphi 0, %s99
    %s117 = sphi 0, %s117
    %s119 = sphi 0, %s117
    %s120 = sphi 0, %s119
    %s134 = sphi 0, %s120
    %s138 = sphi 0, %s138
    %s140 = sphi 0, %s138
    %s141 = sphi 0, %s140
    %s155 = sphi 0, %s141
    %s159 = sphi 0, %s159
    %s161 = sphi 0, %s159
    %s162 = sphi 0, %s161
    %s176 = sphi 0, %s162
    %s180 = sphi 0, %s180
    %s182 = sphi 0, %s180
    %s183 = sphi 0, %s182
    %s197 = sphi 0, %s183
    %s201 = sphi 0, %s201
    %s203 = sphi 0, %s201
    %s204 = sphi 0, %s203
    %s218 = sphi 0, %s204
    %s222 = sphi 0, %s222
    %s224 = sphi 0, %s222
    %s225 = sphi 0, %s224
    %s239 = sphi 0, %s225
    %s243 = sphi 0, %s243
    %s245 = sphi 0, %s243
    %s246 = sphi 0, %s245
    %s260 = sphi 0, %s246
    %s264 = sphi 0, %s264
    %s266 = sphi 0, %s264
    %s267 = sphi 0, %s266
    %s281 = sphi 0, %s267
    %s285 = sphi 0, %s285
    %s287 = sphi 0, %s285
    %s288 = sphi 0, %s287
    %s302 = sphi 0, %s288
    %s306 = sphi 0, %s306
    %s308 = sphi 0, %s306
    %s309 = sphi 0, %s308
    %s323 = sphi 0, %s309
    %s329 = sphi 0, %s331
    %s332 = sphi 0, %s329
    %s333 = sphi 0, %s332
    %s349 = sphi 0, %s333
  $region4: #{pure_rmt_forward.13} parent=0 // loop_header_branch
    %23 = sbr.rel (%p21) target = $region8
  $region5: #{pure_rmt_forward.13} parent=0 // loop_body
    %s25 = ssub.s32 %s20, 1
    %s26 = ssub.s32 %s20, 2
    %s27 = sadd.s32 %s20, 1
    %s28 = ssub.s32 %s20, %s27
    %p29 = scmp.eq.s32.totalorder %s28, 0
    %s31 = sadd.s32 %s30, 1
    %s32 = scalar_select %p29, %s30, %s31
    %p35 = pneg %p29
    %p36 = scmp.eq.s32.totalorder %s20, 1
    %p37 = por %p35, %p36
    %p38 = scmp.ne.s32.totalorder %s30, %s33
    %p39 = scmp.eq.s32.totalorder %s20, 0
    %p40 = por %p38, %p39
    %p41 = scmp.ne.s32.totalorder %s30, %s33
    %p42 = scmp.eq.s32.totalorder %s25, 1
    %p43 = por %p41, %p42
    %p44 = scmp.ne.s32.totalorder %s33, %s34
    %p45 = scmp.eq.s32.totalorder %s25, 0
    %p46 = por %p44, %p45
    %p47 = scmp.ne.s32.totalorder %s33, %s34
    %p48 = scmp.eq.s32.totalorder %s26, 1
    %p49 = por %p47, %p48
    %p51 = scmp.ne.s32.totalorder %s34, %s50
    %p52 = scmp.eq.s32.totalorder %s26, 0
    %p53 = por %p51, %p52
    %s55 = sadd.s32 %s54, 1
    %p58 = scmp.eq.s32.totalorder %s20, 1
    %p59 = scmp.ne.s32.totalorder %s54, %s56
    %p60 = scmp.eq.s32.totalorder %s20, 0
    %p61 = por %p59, %p60
    %p62 = scmp.ne.s32.totalorder %s54, %s56
    %p63 = scmp.eq.s32.totalorder %s25, 1
    %p64 = por %p62, %p63
    %p65 = scmp.ne.s32.totalorder %s56, %s57
    %p66 = scmp.eq.s32.totalorder %s25, 0
    %p67 = por %p65, %p66
    %p68 = scmp.ne.s32.totalorder %s56, %s57
    %p69 = scmp.eq.s32.totalorder %s26, 1
    %p70 = por %p68, %p69
    %p72 = scmp.ne.s32.totalorder %s57, %s71
    %p73 = scmp.eq.s32.totalorder %s26, 0
    %p74 = por %p72, %p73
    %s76 = sadd.s32 %s75, 1
    %p79 = scmp.eq.s32.totalorder %s20, 1
    %p80 = scmp.ne.s32.totalorder %s75, %s77
    %p81 = scmp.eq.s32.totalorder %s20, 0
    %p82 = por %p80, %p81
    %p83 = scmp.ne.s32.totalorder %s75, %s77
    %p84 = scmp.eq.s32.totalorder %s25, 1
    %p85 = por %p83, %p84
    %p86 = scmp.ne.s32.totalorder %s77, %s78
    %p87 = scmp.eq.s32.totalorder %s25, 0
    %p88 = por %p86, %p87
    %p89 = scmp.ne.s32.totalorder %s77, %s78
    %p90 = scmp.eq.s32.totalorder %s26, 1
    %p91 = por %p89, %p90
    %p93 = scmp.ne.s32.totalorder %s78, %s92
    %p94 = scmp.eq.s32.totalorder %s26, 0
    %p95 = por %p93, %p94
    %s97 = sadd.s32 %s96, 1
    %p100 = scmp.eq.s32.totalorder %s20, 1
    %p101 = scmp.ne.s32.totalorder %s96, %s98
    %p102 = scmp.eq.s32.totalorder %s20, 0
    %p103 = por %p101, %p102
    %p104 = scmp.ne.s32.totalorder %s96, %s98
    %p105 = scmp.eq.s32.totalorder %s25, 1
    %p106 = por %p104, %p105
    %p107 = scmp.ne.s32.totalorder %s98, %s99
    %p108 = scmp.eq.s32.totalorder %s25, 0
    %p109 = por %p107, %p108
    %p110 = scmp.ne.s32.totalorder %s98, %s99
    %p111 = scmp.eq.s32.totalorder %s26, 1
    %p112 = por %p110, %p111
    %p114 = scmp.ne.s32.totalorder %s99, %s113
    %p115 = scmp.eq.s32.totalorder %s26, 0
    %p116 = por %p114, %p115
    %s118 = sadd.s32 %s117, 1
    %p121 = scmp.eq.s32.totalorder %s20, 1
    %p122 = scmp.ne.s32.totalorder %s117, %s119
    %p123 = scmp.eq.s32.totalorder %s20, 0
    %p124 = por %p122, %p123
    %p125 = scmp.ne.s32.totalorder %s117, %s119
    %p126 = scmp.eq.s32.totalorder %s25, 1
    %p127 = por %p125, %p126
    %p128 = scmp.ne.s32.totalorder %s119, %s120
    %p129 = scmp.eq.s32.totalorder %s25, 0
    %p130 = por %p128, %p129
    %p131 = scmp.ne.s32.totalorder %s119, %s120
    %p132 = scmp.eq.s32.totalorder %s26, 1
    %p133 = por %p131, %p132
    %p135 = scmp.ne.s32.totalorder %s120, %s134
    %p136 = scmp.eq.s32.totalorder %s26, 0
    %p137 = por %p135, %p136
    %s139 = sadd.s32 %s138, 1
    %p142 = scmp.eq.s32.totalorder %s20, 1
    %p143 = scmp.ne.s32.totalorder %s138, %s140
    %p144 = scmp.eq.s32.totalorder %s20, 0
    %p145 = por %p143, %p144
    %p146 = scmp.ne.s32.totalorder %s138, %s140
    %p147 = scmp.eq.s32.totalorder %s25, 1
    %p148 = por %p146, %p147
    %p149 = scmp.ne.s32.totalorder %s140, %s141
    %p150 = scmp.eq.s32.totalorder %s25, 0
    %p151 = por %p149, %p150
    %p152 = scmp.ne.s32.totalorder %s140, %s141
    %p153 = scmp.eq.s32.totalorder %s26, 1
    %p154 = por %p152, %p153
    %p156 = scmp.ne.s32.totalorder %s141, %s155
    %p157 = scmp.eq.s32.totalorder %s26, 0
    %p158 = por %p156, %p157
    %s160 = sadd.s32 %s159, 1
    %p163 = scmp.eq.s32.totalorder %s20, 1
    %p164 = scmp.ne.s32.totalorder %s159, %s161
    %p165 = scmp.eq.s32.totalorder %s20, 0
    %p166 = por %p164, %p165
    %p167 = scmp.ne.s32.totalorder %s159, %s161
    %p168 = scmp.eq.s32.totalorder %s25, 1
    %p169 = por %p167, %p168
    %p170 = scmp.ne.s32.totalorder %s161, %s162
    %p171 = scmp.eq.s32.totalorder %s25, 0
    %p172 = por %p170, %p171
    %p173 = scmp.ne.s32.totalorder %s161, %s162
    %p174 = scmp.eq.s32.totalorder %s26, 1
    %p175 = por %p173, %p174
    %p177 = scmp.ne.s32.totalorder %s162, %s176
    %p178 = scmp.eq.s32.totalorder %s26, 0
    %p179 = por %p177, %p178
    %s181 = sadd.s32 %s180, 1
    %p184 = scmp.eq.s32.totalorder %s20, 1
    %p185 = scmp.ne.s32.totalorder %s180, %s182
    %p186 = scmp.eq.s32.totalorder %s20, 0
    %p187 = por %p185, %p186
    %p188 = scmp.ne.s32.totalorder %s180, %s182
    %p189 = scmp.eq.s32.totalorder %s25, 1
    %p190 = por %p188, %p189
    %p191 = scmp.ne.s32.totalorder %s182, %s183
    %p192 = scmp.eq.s32.totalorder %s25, 0
    %p193 = por %p191, %p192
    %p194 = scmp.ne.s32.totalorder %s182, %s183
    %p195 = scmp.eq.s32.totalorder %s26, 1
    %p196 = por %p194, %p195
    %p198 = scmp.ne.s32.totalorder %s183, %s197
    %p199 = scmp.eq.s32.totalorder %s26, 0
    %p200 = por %p198, %p199
    %s202 = sadd.s32 %s201, 1
    %p205 = scmp.eq.s32.totalorder %s20, 1
    %p206 = scmp.ne.s32.totalorder %s201, %s203
    %p207 = scmp.eq.s32.totalorder %s20, 0
    %p208 = por %p206, %p207
    %p209 = scmp.ne.s32.totalorder %s201, %s203
    %p210 = scmp.eq.s32.totalorder %s25, 1
    %p211 = por %p209, %p210
    %p212 = scmp.ne.s32.totalorder %s203, %s204
    %p213 = scmp.eq.s32.totalorder %s25, 0
    %p214 = por %p212, %p213
    %p215 = scmp.ne.s32.totalorder %s203, %s204
    %p216 = scmp.eq.s32.totalorder %s26, 1
    %p217 = por %p215, %p216
    %p219 = scmp.ne.s32.totalorder %s204, %s218
    %p220 = scmp.eq.s32.totalorder %s26, 0
    %p221 = por %p219, %p220
    %s223 = sadd.s32 %s222, 1
    %p226 = scmp.eq.s32.totalorder %s20, 1
    %p227 = scmp.ne.s32.totalorder %s222, %s224
    %p228 = scmp.eq.s32.totalorder %s20, 0
    %p229 = por %p227, %p228
    %p230 = scmp.ne.s32.totalorder %s222, %s224
    %p231 = scmp.eq.s32.totalorder %s25, 1
    %p232 = por %p230, %p231
    %p233 = scmp.ne.s32.totalorder %s224, %s225
    %p234 = scmp.eq.s32.totalorder %s25, 0
    %p235 = por %p233, %p234
    %p236 = scmp.ne.s32.totalorder %s224, %s225
    %p237 = scmp.eq.s32.totalorder %s26, 1
    %p238 = por %p236, %p237
    %p240 = scmp.ne.s32.totalorder %s225, %s239
    %p241 = scmp.eq.s32.totalorder %s26, 0
    %p242 = por %p240, %p241
    %s244 = sadd.s32 %s243, 1
    %p247 = scmp.eq.s32.totalorder %s20, 1
    %p248 = scmp.ne.s32.totalorder %s243, %s245
    %p249 = scmp.eq.s32.totalorder %s20, 0
    %p250 = por %p248, %p249
    %p251 = scmp.ne.s32.totalorder %s243, %s245
    %p252 = scmp.eq.s32.totalorder %s25, 1
    %p253 = por %p251, %p252
    %p254 = scmp.ne.s32.totalorder %s245, %s246
    %p255 = scmp.eq.s32.totalorder %s25, 0
    %p256 = por %p254, %p255
    %p257 = scmp.ne.s32.totalorder %s245, %s246
    %p258 = scmp.eq.s32.totalorder %s26, 1
    %p259 = por %p257, %p258
    %p261 = scmp.ne.s32.totalorder %s246, %s260
    %p262 = scmp.eq.s32.totalorder %s26, 0
    %p263 = por %p261, %p262
    %s265 = sadd.s32 %s264, 1
    %p268 = scmp.eq.s32.totalorder %s20, 1
    %p269 = scmp.ne.s32.totalorder %s264, %s266
    %p270 = scmp.eq.s32.totalorder %s20, 0
    %p271 = por %p269, %p270
    %p272 = scmp.ne.s32.totalorder %s264, %s266
    %p273 = scmp.eq.s32.totalorder %s25, 1
    %p274 = por %p272, %p273
    %p275 = scmp.ne.s32.totalorder %s266, %s267
    %p276 = scmp.eq.s32.totalorder %s25, 0
    %p277 = por %p275, %p276
    %p278 = scmp.ne.s32.totalorder %s266, %s267
    %p279 = scmp.eq.s32.totalorder %s26, 1
    %p280 = por %p278, %p279
    %p282 = scmp.ne.s32.totalorder %s267, %s281
    %p283 = scmp.eq.s32.totalorder %s26, 0
    %p284 = por %p282, %p283
    %s286 = sadd.s32 %s285, 1
    %p289 = scmp.eq.s32.totalorder %s20, 1
    %p290 = scmp.ne.s32.totalorder %s285, %s287
    %p291 = scmp.eq.s32.totalorder %s20, 0
    %p292 = por %p290, %p291
    %p293 = scmp.ne.s32.totalorder %s285, %s287
    %p294 = scmp.eq.s32.totalorder %s25, 1
    %p295 = por %p293, %p294
    %p296 = scmp.ne.s32.totalorder %s287, %s288
    %p297 = scmp.eq.s32.totalorder %s25, 0
    %p298 = por %p296, %p297
    %p299 = scmp.ne.s32.totalorder %s287, %s288
    %p300 = scmp.eq.s32.totalorder %s26, 1
    %p301 = por %p299, %p300
    %p303 = scmp.ne.s32.totalorder %s288, %s302
    %p304 = scmp.eq.s32.totalorder %s26, 0
    %p305 = por %p303, %p304
    %s307 = sadd.s32 %s306, 1
    %p310 = scmp.eq.s32.totalorder %s20, 1
    %p311 = scmp.ne.s32.totalorder %s306, %s308
    %p312 = scmp.eq.s32.totalorder %s20, 0
    %p313 = por %p311, %p312
    %p314 = scmp.ne.s32.totalorder %s306, %s308
    %p315 = scmp.eq.s32.totalorder %s25, 1
    %p316 = por %p314, %p315
    %p317 = scmp.ne.s32.totalorder %s308, %s309
    %p318 = scmp.eq.s32.totalorder %s25, 0
    %p319 = por %p317, %p318
    %p320 = scmp.ne.s32.totalorder %s308, %s309
    %p321 = scmp.eq.s32.totalorder %s26, 1
    %p322 = por %p320, %p321
    %p324 = scmp.ne.s32.totalorder %s309, %s323
    %p325 = scmp.eq.s32.totalorder %s26, 0
    %p326 = por %p324, %p325
    %s327 = ssub.s32 %s20, %s27
    %p328 = scmp.eq.s32.totalorder %s327, 0
    %s330 = sadd.s32 %s329, 1
    %s331 = scalar_select %p328, %s329, %s330
    %p334 = pneg %p328
    %p335 = scmp.eq.s32.totalorder %s20, 1
    %p336 = por %p334, %p335
    %p337 = scmp.ne.s32.totalorder %s329, %s332
    %p338 = scmp.eq.s32.totalorder %s20, 0
    %p339 = por %p337, %p338
    %p340 = scmp.ne.s32.totalorder %s329, %s332
    %p341 = scmp.eq.s32.totalorder %s25, 1
    %p342 = por %p340, %p341
    %p343 = scmp.ne.s32.totalorder %s332, %s333
    %p344 = scmp.eq.s32.totalorder %s25, 0
    %p345 = por %p343, %p344
    %p346 = scmp.ne.s32.totalorder %s332, %s333
    %p347 = scmp.eq.s32.totalorder %s26, 1
    %p348 = por %p346, %p347
    %p350 = scmp.ne.s32.totalorder %s333, %s349
    %p351 = scmp.eq.s32.totalorder %s26, 0
    %p352 = por %p350, %p351
    %p353 = scmp.le.s32.totalorder 1, %s20
    %p354 = scmp.lt.s32.totalorder %s20, 3
    %p355 = pnand %p353, %p354
    %p356 = pneg %p355
    // Predicated region
    $region9: #{pure_rmt_forward.13} parent=5 // pred_check
      _
    $region10: #{pure_rmt_forward.13} parent=5 // pred_check_branch
      %358 = sbr.rel (%p355) target = $region12
    $region11: #{pure_rmt_forward.13} parent=5 // pred_region
      %s359 = ssub.s32 %s20, 1
      // Predicated region
      $region13: #{pure_rmt_forward.13} parent=11 // pred_check
        %p360 = pneg %p67
      $region14: #{pure_rmt_forward.13} parent=11 // pred_check_branch
        %362 = sbr.rel (%p360) target = $region16
      $region15: #{pure_rmt_forward.13} parent=11 // pred_region
        _
      $region16: #{pure_rmt_forward.13} parent=11 // pred_fallthru
        _
      // Predicated region
      $region17: #{pure_rmt_forward.13} parent=11 // pred_check
        %p363 = pneg %p88
      $region18: #{pure_rmt_forward.13} parent=11 // pred_check_branch
        %365 = sbr.rel (%p363) target = $region20
      $region19: #{pure_rmt_forward.13} parent=11 // pred_region
        _
      $region20: #{pure_rmt_forward.13} parent=11 // pred_fallthru
        _
      // Predicated region
      $region21: #{pure_rmt_forward.13} parent=11 // pred_check
        %p366 = pneg %p109
      $region22: #{pure_rmt_forward.13} parent=11 // pred_check_branch
        %368 = sbr.rel (%p366) target = $region24
      $region23: #{pure_rmt_forward.13} parent=11 // pred_region
        _
      $region24: #{pure_rmt_forward.13} parent=11 // pred_fallthru
        _
      // Predicated region
      $region25: #{pure_rmt_forward.13} parent=11 // pred_check
        %p369 = pneg %p130
      $region26: #{pure_rmt_forward.13} parent=11 // pred_check_branch
        %371 = sbr.rel (%p369) target = $region28
      $region27: #{pure_rmt_forward.13} parent=11 // pred_region
        _
      $region28: #{pure_rmt_forward.13} parent=11 // pred_fallthru
        _
      // Predicated region
      $region29: #{pure_rmt_forward.13} parent=11 // pred_check
        %p372 = pneg %p151
      $region30: #{pure_rmt_forward.13} parent=11 // pred_check_branch
        %374 = sbr.rel (%p372) target = $region32
      $region31: #{pure_rmt_forward.13} parent=11 // pred_region
        _
      $region32: #{pure_rmt_forward.13} parent=11 // pred_fallthru
        _
      // Predicated region
      $region33: #{pure_rmt_forward.13} parent=11 // pred_check
        %p375 = pneg %p172
      $region34: #{pure_rmt_forward.13} parent=11 // pred_check_branch
        %377 = sbr.rel (%p375) target = $region36
      $region35: #{pure_rmt_forward.13} parent=11 // pred_region
        _
      $region36: #{pure_rmt_forward.13} parent=11 // pred_fallthru
        _
      // Predicated region
      $region37: #{pure_rmt_forward.13} parent=11 // pred_check
        %p378 = pneg %p193
      $region38: #{pure_rmt_forward.13} parent=11 // pred_check_branch
        %380 = sbr.rel (%p378) target = $region40
      $region39: #{pure_rmt_forward.13} parent=11 // pred_region
        _
      $region40: #{pure_rmt_forward.13} parent=11 // pred_fallthru
        _
      // Predicated region
      $region41: #{pure_rmt_forward.13} parent=11 // pred_check
        %p381 = pneg %p214
      $region42: #{pure_rmt_forward.13} parent=11 // pred_check_branch
        %383 = sbr.rel (%p381) target = $region44
      $region43: #{pure_rmt_forward.13} parent=11 // pred_region
        _
      $region44: #{pure_rmt_forward.13} parent=11 // pred_fallthru
        _
      // Predicated region
      $region45: #{pure_rmt_forward.13} parent=11 // pred_check
        %p384 = pneg %p235
      $region46: #{pure_rmt_forward.13} parent=11 // pred_check_branch
        %386 = sbr.rel (%p384) target = $region48
      $region47: #{pure_rmt_forward.13} parent=11 // pred_region
        _
      $region48: #{pure_rmt_forward.13} parent=11 // pred_fallthru
        _
      // Predicated region
      $region49: #{pure_rmt_forward.13} parent=11 // pred_check
        %p387 = pneg %p256
      $region50: #{pure_rmt_forward.13} parent=11 // pred_check_branch
        %389 = sbr.rel (%p387) target = $region52
      $region51: #{pure_rmt_forward.13} parent=11 // pred_region
        _
      $region52: #{pure_rmt_forward.13} parent=11 // pred_fallthru
        _
      // Predicated region
      $region53: #{pure_rmt_forward.13} parent=11 // pred_check
        %p390 = pneg %p277
      $region54: #{pure_rmt_forward.13} parent=11 // pred_check_branch
        %392 = sbr.rel (%p390) target = $region56
      $region55: #{pure_rmt_forward.13} parent=11 // pred_region
        _
      $region56: #{pure_rmt_forward.13} parent=11 // pred_fallthru
        _
      // Predicated region
      $region57: #{pure_rmt_forward.13} parent=11 // pred_check
        %p393 = pneg %p298
      $region58: #{pure_rmt_forward.13} parent=11 // pred_check_branch
        %395 = sbr.rel (%p393) target = $region60
      $region59: #{pure_rmt_forward.13} parent=11 // pred_region
        _
      $region60: #{pure_rmt_forward.13} parent=11 // pred_fallthru
        _
      // Predicated region
      $region61: #{pure_rmt_forward.13} parent=11 // pred_check
        %p396 = pneg %p319
      $region62: #{pure_rmt_forward.13} parent=11 // pred_check_branch
        %398 = sbr.rel (%p396) target = $region64
      $region63: #{pure_rmt_forward.13} parent=11 // pred_region
        _
      $region64: #{pure_rmt_forward.13} parent=11 // pred_fallthru
        _
    $region12: #{pure_rmt_forward.13} parent=5 // pred_fallthru
      _
    %p399 = scmp.lt.s32.totalorder %s20, 2
    // Predicated region
    $region65: #{pure_rmt_forward.13} parent=5 // pred_check
      %p400 = pneg %p399
    $region66: #{pure_rmt_forward.13} parent=5 // pred_check_branch
      %402 = sbr.rel (%p400) target = $region68
    $region67: #{pure_rmt_forward.13} parent=5 // pred_region
      // Predicated region
      $region69: #{pure_rmt_forward.13} parent=67 // pred_check
        %p403 = pneg %p40
      $region70: #{pure_rmt_forward.13} parent=67 // pred_check_branch
        %405 = sbr.rel (%p403) target = $region72
      $region71: #{pure_rmt_forward.13} parent=67 // pred_region
        %p406 = scmp.lt.s32.totalorder %s20, 1
        %s407 = scalar_select %p406, %s20, 1
        %s408 = smul.addr %s407, 2
        %s409 = smul.addr %s408, 8
        %s410 = scalar_lea.vmem %s0, %s409
      $region72: #{pure_rmt_forward.13} parent=67 // pred_fallthru
        _
    $region68: #{pure_rmt_forward.13} parent=5 // pred_fallthru
      _
    %p411 = scmp.le.s32.totalorder 1, %s20
    %p412 = scmp.lt.s32.totalorder %s20, 3
    %p413 = pnand %p411, %p412
    %p414 = pneg %p413
    // Predicated region
    $region73: #{pure_rmt_forward.13} parent=5 // pred_check
      _
    $region74: #{pure_rmt_forward.13} parent=5 // pred_check_branch
      %416 = sbr.rel (%p413) target = $region76
    $region75: #{pure_rmt_forward.13} parent=5 // pred_region
      %s417 = ssub.s32 %s20, 1
      %p418 = scmp.lt.s32.totalorder %s25, 1
      %s419 = scalar_select %p418, %s25, 1
      %s420 = smul.addr %s419, 2
      %s421 = smul.addr %s420, 8
      %s422 = scalar_lea.vmem %s0, %s421
      %p423 = pneg %p46
      %p424 = pneg %p43
      %p425 = pneg %p67
      %p426 = pneg %p64
      %p427 = pneg %p88
      %p428 = pneg %p85
      %p429 = pneg %p109
      %p430 = pneg %p106
      %p431 = pneg %p130
      %p432 = pneg %p127
      %p433 = pneg %p151
      %p434 = pneg %p148
      %p435 = pneg %p172
      %p436 = pneg %p169
      %p437 = pneg %p193
      %p438 = pneg %p190
      %p439 = pneg %p214
      %p440 = pneg %p211
      %p441 = pneg %p235
      %p442 = pneg %p232
      %p443 = pneg %p256
      %p444 = pneg %p253
      %p445 = pneg %p277
      %p446 = pneg %p274
      %p447 = pneg %p298
      %p448 = pneg %p295
      %p449 = pneg %p319
      %p450 = pneg %p316
      %p451 = pneg %p345
      %p452 = pneg %p342
      %p453 = scmp.lt.s32.totalorder %s25, 1
      %s454 = scalar_select %p453, %s25, 1
      %s455 = smul.addr %s454, 2
      %s456 = smul.addr %s455, 8
      %s457 = scalar_lea.vmem %s14, %s456
      %p458 = scmp.lt.s32.totalorder %s25, 1
      %s459 = scalar_select %p458, %s25, 1
      %s460 = smul.addr %s459, 2
      %s461 = smul.addr %s460, 8
      %s462 = scalar_lea.vmem %s0, %s461
      %p463 = scmp.lt.s32.totalorder %s25, 1
      %s464 = scalar_select %p463, %s25, 1
      %s465 = smul.addr %s464, 2
      %s466 = smul.addr %s465, 8
      %s467 = scalar_lea.vmem %s14, %s466
      %v469 = vld [vmem:[%s462] sm:$0xff]
      %v470 = vld [vmem:[%s462 + $0x8] sm:$0xff]
      %v471 = vld [vmem:[%s2] sm:$0x1]
      %v472 = vld [vmem:[%s3] sm:$0x1]
      %vm473 = vcmask 523264
      %v474 = vsel %vm473, %v469, 0.0
      %475 = vadd.xlane.f32.xlu0 %v474
      %v476 = vpop.xlane.xlu0 %475
      %v477 = vsel %vm473, %v470, 0.0
      %478 = vadd.xlane.f32.xlu0 %v477
      %v479 = vpop.xlane.xlu0 %478
      %v480 = vrcp.pop 64.0
      %v481 = vmul.f32 %v476, %v480
      %v482 = vmul.f32 %v479, %v480
      %v483 = vsub.f32 %v469, %v481
      %v484 = vsub.f32 %v470, %v482
      %v485 = vmul.f32 %v483, %v483
      %v486 = vmul.f32 %v484, %v484
      %v487 = vsel %vm473, %v485, 0.0
      %488 = vadd.xlane.f32.xlu0 %v487
      %v489 = vpop.xlane.xlu0 %488
      %v490 = vsel %vm473, %v486, 0.0
      %491 = vadd.xlane.f32.xlu0 %v490
      %v492 = vpop.xlane.xlu0 %491
      %v493 = vmul.f32 %v489, %v480
      %v494 = vmul.f32 %v492, %v480
      %v495 = vadd.f32 %v493, 1e-05
      %v496 = vadd.f32 %v494, 1e-05
      %v497 = vrsqrt.pop %v495
      %v498 = vrsqrt.pop %v496
      %v499 = vmul.f32 %v483, %v497
      %v500 = vmul.f32 %v484, %v498
      %v502 = vlaneseq
      %v503 = vshrl.u32 %v502, 7
      %v504 = vsub.s32 0, %v503
      %v505 = vrot.slane %v471, %v504
      %v507 = vmul.f32 %v499, %v505
      %v508 = vmul.f32 %v500, %v505
      %v510 = vlaneseq
      %v511 = vshrl.u32 %v510, 7
      %v512 = vsub.s32 0, %v511
      %v513 = vrot.slane %v472, %v512
      %v515 = vadd.f32 %v507, %v513
      %v516 = vadd.f32 %v508, %v513
      %v517 = vpack.c.bf16 %v516, %v515
      %v518 = vld [vmem:[%s4] sm:$0xff]
      %v519 = vld [vmem:[%s4 + $0x8] sm:$0xff]
      %v520 = vld [vmem:[%s4 + $0x10] sm:$0xff]
      %v521 = vld [vmem:[%s4 + $0x18] sm:$0xff]
      %v522 = vld [vmem:[%s4 + $0x20] sm:$0xff]
      %v523 = vld [vmem:[%s4 + $0x28] sm:$0xff]
      %v524 = vld [vmem:[%s4 + $0x30] sm:$0xff]
      %v525 = vld [vmem:[%s4 + $0x38] sm:$0xff]
      %v526 = vld [vmem:[%s5] sm:$0x3]
      %v528 = vlaneseq
      %v529 = vshrl.u32 %v528, 7
      %v530 = vsub.s32 0, %v529
      %v531 = vrot.slane %v526, %v530
      %v532 = vlaneseq
      %v533 = vshrl.u32 %v532, 7
      %v534 = vsub.s32 1, %v533
      %v535 = vrot.slane %v526, %v534
      %v546 = vunpack.c.l.b16 %v518
      %v547 = vunpack.c.h.b16 %v518
      %v548 = vunpack.c.l.b16 %v519
      %v549 = vunpack.c.h.b16 %v519
      %v550 = vunpack.c.l.b16 %v520
      %v551 = vunpack.c.h.b16 %v520
      %v552 = vunpack.c.l.b16 %v521
      %v553 = vunpack.c.h.b16 %v521
      %v554 = vunpack.c.l.b16 %v522
      %v555 = vunpack.c.h.b16 %v522
      %v556 = vunpack.c.l.b16 %v523
      %v557 = vunpack.c.h.b16 %v523
      %v558 = vunpack.c.l.b16 %v524
      %v559 = vunpack.c.h.b16 %v524
      %v560 = vunpack.c.l.b16 %v525
      %v561 = vunpack.c.h.b16 %v525
      %v562 = vpack.c.b16 %v548, %v546
      %v563 = vpack.c.b16 %v549, %v547
      %v564 = vpack.c.b16 %v552, %v550
      %v565 = vpack.c.b16 %v553, %v551
      %v566 = vpack.c.b16 %v556, %v554
      %v567 = vpack.c.b16 %v557, %v555
      %v568 = vpack.c.b16 %v560, %v558
      %v569 = vpack.c.b16 %v561, %v559
      %v579 = vsel %vm473, %v517, 0
      %581 = vmatprep.subr.bf16.mxu0 %v563
      %582 = vmatpush1.bf16.msra.mxu0 %v562
      %583 = vmatprep.subr.bf16.mxu0 %v565
      %584 = vmatpush1.bf16.msra.mxu0 %v564
      %585 = vmatprep.subr.bf16.mxu0 %v567
      %586 = vmatpush1.bf16.msra.mxu0 %v566
      %587 = vmatprep.subr.bf16.mxu0 %v569
      %588 = vmatpush1.bf16.msra.mxu0 %v568
      %589 = vmatprep.subr.bf16.mxu0 0
      %590 = vmatpush1.bf16.msra.mxu0 0
      %591 = vmatprep.subr.bf16.mxu0 0
      %592 = vmatpush1.bf16.msra.mxu0 0
      %593 = vmatprep.subr.bf16.mxu0 0
      %594 = vmatpush1.bf16.msra.mxu0 0
      %595 = vmatprep.subr.bf16.mxu0 0
      %596 = vmatpush1.bf16.msra.mxu0 0
      %597 = vmatprep.subr.bf16.mxu0 0
      %598 = vmatpush1.bf16.msra.mxu0 0
      %599 = vmatprep.subr.bf16.mxu0 0
      %600 = vmatpush1.bf16.msra.mxu0 0
      %601 = vmatprep.subr.bf16.mxu0 0
      %602 = vmatpush1.bf16.msra.mxu0 0
      %603 = vmatprep.subr.bf16.mxu0 0
      %604 = vmatpush1.bf16.msra.mxu0 0
      %605 = vmatprep.subr.bf16.mxu0 0
      %606 = vmatpush1.bf16.msra.mxu0 0
      %607 = vmatprep.subr.bf16.mxu0 0
      %608 = vmatpush1.bf16.msra.mxu0 0
      %609 = vmatprep.subr.bf16.mxu0 0
      %610 = vmatpush1.bf16.msra.mxu0 0
      %611 = vmatprep.subr.bf16.mxu0 0
      %612 = vmatpush1.bf16.msra.mxu0 0
      %613 = vmatprep.mubr.bf16.mxu0 0
      %614 = vmatmul.mubr.bf16.gmra.mrb[0].mxu0 %v579
      %v615 = vpop.f32.mrb[0].mxu0
      %v616 = vadd.f32 %v531, %v615
      %v617 = vpop.f32.mrb[0].mxu0
      %v618 = vadd.f32 %v535, %v617
      %v619 = vpop.f32.mrb[0].mxu0
      %v620 = vadd.f32 %v531, %v619
      %v621 = vpop.f32.mrb[0].mxu0
      %v622 = vadd.f32 %v535, %v621
      %623 = vdwg.mxu0
      %v624 = vmul.f32 %v616, 0.25
      %v625 = vmul.f32 %v620, 0.25
      %v626 = vpack.c.bf16 %v625, %v624
      %v627 = vpack.c.bf16 %v620, %v616
      %v628 = vpack.c.bf16 %v622, %v618
      %v629 = vld [vmem:[%s1] sm:$0xff]
      %v630 = vld [vmem:[%s1 + $0x8] sm:$0xff]
      %632 = vrot.lane.b32.xlu0 %v627, 64
      %v633 = vpop.permute.xlu0 %632
      %vm634 = vcmask 130048
      %v636 = vsel %vm634, %v626, 0
      %v639 = vsel %vm634, %v633, 0
      %641 = vmatprep.subr.bf16.mxu0 0
      %642 = vmatpush1.bf16.xpose.msra.mxu0 %v639
      %643 = vmatprep.subr.bf16.mxu0 0
      %644 = vmatpush1.bf16.xpose.msra.mxu0 0
      %645 = vmatprep.subr.bf16.mxu0 0
      %646 = vmatpush1.bf16.xpose.msra.mxu0 0
      %647 = vmatprep.subr.bf16.mxu0 0
      %648 = vmatpush1.bf16.xpose.msra.mxu0 0
      %649 = vmatprep.subr.bf16.mxu0 0
      %650 = vmatpush1.bf16.xpose.msra.mxu0 0
      %651 = vmatprep.subr.bf16.mxu0 0
      %652 = vmatpush1.bf16.xpose.msra.mxu0 0
      %653 = vmatprep.subr.bf16.mxu0 0
      %654 = vmatpush1.bf16.xpose.msra.mxu0 0
      %655 = vmatprep.subr.bf16.mxu0 0
      %656 = vmatpush1.bf16.xpose.msra.mxu0 0
      %657 = vmatprep.subr.bf16.mxu0 0
      %658 = vmatpush1.bf16.xpose.msra.mxu0 0
      %659 = vmatprep.subr.bf16.mxu0 0
      %660 = vmatpush1.bf16.xpose.msra.mxu0 0
      %661 = vmatprep.subr.bf16.mxu0 0
      %662 = vmatpush1.bf16.xpose.msra.mxu0 0
      %663 = vmatprep.subr.bf16.mxu0 0
      %664 = vmatpush1.bf16.xpose.msra.mxu0 0
      %665 = vmatprep.subr.bf16.mxu0 0
      %666 = vmatpush1.bf16.xpose.msra.mxu0 0
      %667 = vmatprep.subr.bf16.mxu0 0
      %668 = vmatpush1.bf16.xpose.msra.mxu0 0
      %669 = vmatprep.subr.bf16.mxu0 0
      %670 = vmatpush1.bf16.xpose.msra.mxu0 0
      %671 = vmatprep.subr.bf16.mxu0 0
      %672 = vmatpush1.bf16.xpose.msra.mxu0 0
      %673 = vmatprep.mubr.bf16.mxu0 0
      %674 = vmatmul.mubr.bf16.gmra.mrb[0].mxu0 %v636
      %v675 = vpop.f32.mrb[0].mxu0
      %v676 = vadd.f32 %v629, %v675
      %v677 = vpop.f32.mrb[0].mxu0
      %v678 = vpop.f32.mrb[0].mxu0
      %v679 = vadd.f32 %v630, %v678
      %v680 = vpop.f32.mrb[0].mxu0
      %681 = vdwg.mxu0
      %v682 = vsel %vm634, %v676, -inf
      %683 = vmax.xlane.f32.xlu0 %v682
      %v684 = vpop.xlane.xlu0 %683
      %v685 = vsel %vm634, %v679, -inf
      %686 = vmax.xlane.f32.xlu0 %v685
      %v687 = vpop.xlane.xlu0 %686
      %v688 = vsub.f32 %v676, %v684
      %v689 = vsub.f32 %v679, %v687
      %v690 = vmul.f32 %v688, 1.442695
      %v691 = vpow.pop %v690
      %v692 = vmul.f32 %v689, 1.442695
      %v693 = vpow.pop %v692
      %v694 = vsel %vm634, %v691, 0.0
      %695 = vadd.xlane.f32.xlu0 %v694
      %v696 = vpop.xlane.xlu0 %695
      %v697 = vsel %vm634, %v693, 0.0
      %698 = vadd.xlane.f32.xlu0 %v697
      %v699 = vpop.xlane.xlu0 %698
      %v700 = vrcp.pop %v696
      %v701 = vrcp.pop %v699
      %v702 = vmul.f32 %v691, %v700
      %v703 = vmul.f32 %v693, %v701
      %v704 = vpack.c.bf16 %v703, %v702
      %v706 = vsel %vm634, %v704, 0
      %708 = vmatprep.subr.bf16.mxu0 0
      %709 = vmatpush1.bf16.msra.mxu0 %v628
      %710 = vmatprep.subr.bf16.mxu0 0
      %711 = vmatpush1.bf16.msra.mxu0 0
      %712 = vmatprep.subr.bf16.mxu0 0
      %713 = vmatpush1.bf16.msra.mxu0 0
      %714 = vmatprep.subr.bf16.mxu0 0
      %715 = vmatpush1.bf16.msra.mxu0 0
      %716 = vmatprep.subr.bf16.mxu0 0
      %717 = vmatpush1.bf16.msra.mxu0 0
      %718 = vmatprep.subr.bf16.mxu0 0
      %719 = vmatpush1.bf16.msra.mxu0 0
      %720 = vmatprep.subr.bf16.mxu0 0
      %721 = vmatpush1.bf16.msra.mxu0 0
      %722 = vmatprep.subr.bf16.mxu0 0
      %723 = vmatpush1.bf16.msra.mxu0 0
      %724 = vmatprep.subr.bf16.mxu0 0
      %725 = vmatpush1.bf16.msra.mxu0 0
      %726 = vmatprep.subr.bf16.mxu0 0
      %727 = vmatpush1.bf16.msra.mxu0 0
      %728 = vmatprep.subr.bf16.mxu0 0
      %729 = vmatpush1.bf16.msra.mxu0 0
      %730 = vmatprep.subr.bf16.mxu0 0
      %731 = vmatpush1.bf16.msra.mxu0 0
      %732 = vmatprep.subr.bf16.mxu0 0
      %733 = vmatpush1.bf16.msra.mxu0 0
      %734 = vmatprep.subr.bf16.mxu0 0
      %735 = vmatpush1.bf16.msra.mxu0 0
      %736 = vmatprep.subr.bf16.mxu0 0
      %737 = vmatpush1.bf16.msra.mxu0 0
      %738 = vmatprep.subr.bf16.mxu0 0
      %739 = vmatpush1.bf16.msra.mxu0 0
      %740 = vmatprep.mubr.bf16.mxu0 0
      %741 = vmatmul.mubr.bf16.gmra.mrb[0].mxu0 %v706
      %v742 = vpop.f32.mrb[0].mxu0
      %v743 = vadd.f32 0.0, %v742
      %v744 = vpop.f32.mrb[0].mxu0
      %v745 = vpop.f32.mrb[0].mxu0
      %v746 = vadd.f32 0.0, %v745
      %v747 = vpop.f32.mrb[0].mxu0
      %748 = vdwg.mxu0
      %s749 = scalar_lea.vmem %s1, 16
      %v750 = vld [vmem:[%s749] sm:$0xff]
      %v751 = vld [vmem:[%s749 + $0x8] sm:$0xff]
      %753 = vrot.lane.b32.xlu0 %v626, 112
      %v754 = vpop.permute.xlu0 %753
      %755 = vrot.lane.b32.xlu0 %v627, 48
      %v756 = vpop.permute.xlu0 %755
      %v758 = vsel %vm634, %v754, 0
      %v761 = vsel %vm634, %v756, 0
      %763 = vmatprep.subr.bf16.mxu0 0
      %764 = vmatpush1.bf16.xpose.msra.mxu0 %v761
      %765 = vmatprep.subr.bf16.mxu0 0
      %766 = vmatpush1.bf16.xpose.msra.mxu0 0
      %767 = vmatprep.subr.bf16.mxu0 0
      %768 = vmatpush1.bf16.xpose.msra.mxu0 0
      %769 = vmatprep.subr.bf16.mxu0 0
      %770 = vmatpush1.bf16.xpose.msra.mxu0 0
      %771 = vmatprep.subr.bf16.mxu0 0
      %772 = vmatpush1.bf16.xpose.msra.mxu0 0
      %773 = vmatprep.subr.bf16.mxu0 0
      %774 = vmatpush1.bf16.xpose.msra.mxu0 0
      %775 = vmatprep.subr.bf16.mxu0 0
      %776 = vmatpush1.bf16.xpose.msra.mxu0 0
      %777 = vmatprep.subr.bf16.mxu0 0
      %778 = vmatpush1.bf16.xpose.msra.mxu0 0
      %779 = vmatprep.subr.bf16.mxu0 0
      %780 = vmatpush1.bf16.xpose.msra.mxu0 0
      %781 = vmatprep.subr.bf16.mxu0 0
      %782 = vmatpush1.bf16.xpose.msra.mxu0 0
      %783 = vmatprep.subr.bf16.mxu0 0
      %784 = vmatpush1.bf16.xpose.msra.mxu0 0
      %785 = vmatprep.subr.bf16.mxu0 0
      %786 = vmatpush1.bf16.xpose.msra.mxu0 0
      %787 = vmatprep.subr.bf16.mxu0 0
      %788 = vmatpush1.bf16.xpose.msra.mxu0 0
      %789 = vmatprep.subr.bf16.mxu0 0
      %790 = vmatpush1.bf16.xpose.msra.mxu0 0
      %791 = vmatprep.subr.bf16.mxu0 0
      %792 = vmatpush1.bf16.xpose.msra.mxu0 0
      %793 = vmatprep.subr.bf16.mxu0 0
      %794 = vmatpush1.bf16.xpose.msra.mxu0 0
      %795 = vmatprep.mubr.bf16.mxu0 0
      %796 = vmatmul.mubr.bf16.gmra.mrb[0].mxu0 %v758
      %v797 = vpop.f32.mrb[0].mxu0
      %v798 = vadd.f32 %v750, %v797
      %v799 = vpop.f32.mrb[0].mxu0
      %v800 = vpop.f32.mrb[0].mxu0
      %v801 = vadd.f32 %v751, %v800
      %v802 = vpop.f32.mrb[0].mxu0
      %803 = vdwg.mxu0
      %v804 = vsel %vm634, %v798, -inf
      %805 = vmax.xlane.f32.xlu0 %v804
      %v806 = vpop.xlane.xlu0 %805
      %v807 = vsel %vm634, %v801, -inf
      %808 = vmax.xlane.f32.xlu0 %v807
      %v809 = vpop.xlane.xlu0 %808
      %v810 = vsub.f32 %v798, %v806
      %v811 = vsub.f32 %v801, %v809
      %v812 = vmul.f32 %v810, 1.442695
      %v813 = vpow.pop %v812
      %v814 = vmul.f32 %v811, 1.442695
      %v815 = vpow.pop %v814
      %v816 = vsel %vm634, %v813, 0.0
      %817 = vadd.xlane.f32.xlu0 %v816
      %v818 = vpop.xlane.xlu0 %817
      %v819 = vsel %vm634, %v815, 0.0
      %820 = vadd.xlane.f32.xlu0 %v819
      %v821 = vpop.xlane.xlu0 %820
      %v822 = vrcp.pop %v818
      %v823 = vrcp.pop %v821
      %v824 = vmul.f32 %v813, %v822
      %v825 = vmul.f32 %v815, %v823
      %v826 = vpack.c.bf16 %v825, %v824
      %828 = vrot.lane.b32.xlu0 %v628, 112
      %v829 = vpop.permute.xlu0 %828
      %v832 = vsel %vm634, %v826, 0
      %834 = vmatprep.subr.bf16.mxu0 0
      %835 = vmatpush1.bf16.msra.mxu0 %v829
      %836 = vmatprep.subr.bf16.mxu0 0
      %837 = vmatpush1.bf16.msra.mxu0 0
      %838 = vmatprep.subr.bf16.mxu0 0
      %839 = vmatpush1.bf16.msra.mxu0 0
      %840 = vmatprep.subr.bf16.mxu0 0
      %841 = vmatpush1.bf16.msra.mxu0 0
      %842 = vmatprep.subr.bf16.mxu0 0
      %843 = vmatpush1.bf16.msra.mxu0 0
      %844 = vmatprep.subr.bf16.mxu0 0
      %845 = vmatpush1.bf16.msra.mxu0 0
      %846 = vmatprep.subr.bf16.mxu0 0
      %847 = vmatpush1.bf16.msra.mxu0 0
      %848 = vmatprep.subr.bf16.mxu0 0
      %849 = vmatpush1.bf16.msra.mxu0 0
      %850 = vmatprep.subr.bf16.mxu0 0
      %851 = vmatpush1.bf16.msra.mxu0 0
      %852 = vmatprep.subr.bf16.mxu0 0
      %853 = vmatpush1.bf16.msra.mxu0 0
      %854 = vmatprep.subr.bf16.mxu0 0
      %855 = vmatpush1.bf16.msra.mxu0 0
      %856 = vmatprep.subr.bf16.mxu0 0
      %857 = vmatpush1.bf16.msra.mxu0 0
      %858 = vmatprep.subr.bf16.mxu0 0
      %859 = vmatpush1.bf16.msra.mxu0 0
      %860 = vmatprep.subr.bf16.mxu0 0
      %861 = vmatpush1.bf16.msra.mxu0 0
      %862 = vmatprep.subr.bf16.mxu0 0
      %863 = vmatpush1.bf16.msra.mxu0 0
      %864 = vmatprep.subr.bf16.mxu0 0
      %865 = vmatpush1.bf16.msra.mxu0 0
      %866 = vmatprep.mubr.bf16.mxu0 0
      %867 = vmatmul.mubr.bf16.gmra.mrb[0].mxu0 %v832
      %v868 = vpop.f32.mrb[0].mxu0
      %v869 = vadd.f32 0.0, %v868
      %v870 = vpop.f32.mrb[0].mxu0
      %v871 = vpop.f32.mrb[0].mxu0
      %v872 = vadd.f32 0.0, %v871
      %v873 = vpop.f32.mrb[0].mxu0
      %874 = vdwg.mxu0
      %s875 = scalar_lea.vmem %s1, 32
      %v876 = vld [vmem:[%s875] sm:$0xff]
      %v877 = vld [vmem:[%s875 + $0x8] sm:$0xff]
      %878 = vrot.lane.b32.xlu0 %v626, 96
      %v879 = vpop.permute.xlu0 %878
      %880 = vrot.lane.b32.xlu0 %v627, 32
      %v881 = vpop.permute.xlu0 %880
      %v883 = vsel %vm634, %v879, 0
      %v886 = vsel %vm634, %v881, 0
      %888 = vmatprep.subr.bf16.mxu0 0
      %889 = vmatpush1.bf16.xpose.msra.mxu0 %v886
      %890 = vmatprep.subr.bf16.mxu0 0
      %891 = vmatpush1.bf16.xpose.msra.mxu0 0
      %892 = vmatprep.subr.bf16.mxu0 0
      %893 = vmatpush1.bf16.xpose.msra.mxu0 0
      %894 = vmatprep.subr.bf16.mxu0 0
      %895 = vmatpush1.bf16.xpose.msra.mxu0 0
      %896 = vmatprep.subr.bf16.mxu0 0
      %897 = vmatpush1.bf16.xpose.msra.mxu0 0
      %898 = vmatprep.subr.bf16.mxu0 0
      %899 = vmatpush1.bf16.xpose.msra.mxu0 0
      %900 = vmatprep.subr.bf16.mxu0 0
      %901 = vmatpush1.bf16.xpose.msra.mxu0 0
      %902 = vmatprep.subr.bf16.mxu0 0
      %903 = vmatpush1.bf16.xpose.msra.mxu0 0
      %904 = vmatprep.subr.bf16.mxu0 0
      %905 = vmatpush1.bf16.xpose.msra.mxu0 0
      %906 = vmatprep.subr.bf16.mxu0 0
      %907 = vmatpush1.bf16.xpose.msra.mxu0 0
      %908 = vmatprep.subr.bf16.mxu0 0
      %909 = vmatpush1.bf16.xpose.msra.mxu0 0
      %910 = vmatprep.subr.bf16.mxu0 0
      %911 = vmatpush1.bf16.xpose.msra.mxu0 0
      %912 = vmatprep.subr.bf16.mxu0 0
      %913 = vmatpush1.bf16.xpose.msra.mxu0 0
      %914 = vmatprep.subr.bf16.mxu0 0
      %915 = vmatpush1.bf16.xpose.msra.mxu0 0
      %916 = vmatprep.subr.bf16.mxu0 0
      %917 = vmatpush1.bf16.xpose.msra.mxu0 0
      %918 = vmatprep.subr.bf16.mxu0 0
      %919 = vmatpush1.bf16.xpose.msra.mxu0 0
      %920 = vmatprep.mubr.bf16.mxu0 0
      %921 = vmatmul.mubr.bf16.gmra.mrb[0].mxu0 %v883
      %v922 = vpop.f32.mrb[0].mxu0
      %v923 = vadd.f32 %v876, %v922
      %v924 = vpop.f32.mrb[0].mxu0
      %v925 = vpop.f32.mrb[0].mxu0
      %v926 = vadd.f32 %v877, %v925
      %v927 = vpop.f32.mrb[0].mxu0
      %928 = vdwg.mxu0
      %v929 = vsel %vm634, %v923, -inf
      %930 = vmax.xlane.f32.xlu0 %v929
      %v931 = vpop.xlane.xlu0 %930
      %v932 = vsel %vm634, %v926, -inf
      %933 = vmax.xlane.f32.xlu0 %v932
      %v934 = vpop.xlane.xlu0 %933
      %v935 = vsub.f32 %v923, %v931
      %v936 = vsub.f32 %v926, %v934
      %v937 = vmul.f32 %v935, 1.442695
      %v938 = vpow.pop %v937
      %v939 = vmul.f32 %v936, 1.442695
      %v940 = vpow.pop %v939
      %v941 = vsel %vm634, %v938, 0.0
      %942 = vadd.xlane.f32.xlu0 %v941
      %v943 = vpop.xlane.xlu0 %942
      %v944 = vsel %vm634, %v940, 0.0
      %945 = vadd.xlane.f32.xlu0 %v944
      %v946 = vpop.xlane.xlu0 %945
      %v947 = vrcp.pop %v943
      %v948 = vrcp.pop %v946
      %v949 = vmul.f32 %v938, %v947
      %v950 = vmul.f32 %v940, %v948
      %v951 = vpack.c.bf16 %v950, %v949
      %952 = vrot.lane.b32.xlu0 %v628, 96
      %v953 = vpop.permute.xlu0 %952
      %v956 = vsel %vm634, %v951, 0
      %958 = vmatprep.subr.bf16.mxu0 0
      %959 = vmatpush1.bf16.msra.mxu0 %v953
      %960 = vmatprep.subr.bf16.mxu0 0
      %961 = vmatpush1.bf16.msra.mxu0 0
      %962 = vmatprep.subr.bf16.mxu0 0
      %963 = vmatpush1.bf16.msra.mxu0 0
      %964 = vmatprep.subr.bf16.mxu0 0
      %965 = vmatpush1.bf16.msra.mxu0 0
      %966 = vmatprep.subr.bf16.mxu0 0
      %967 = vmatpush1.bf16.msra.mxu0 0
      %968 = vmatprep.subr.bf16.mxu0 0
      %969 = vmatpush1.bf16.msra.mxu0 0
      %970 = vmatprep.subr.bf16.mxu0 0
      %971 = vmatpush1.bf16.msra.mxu0 0
      %972 = vmatprep.subr.bf16.mxu0 0
      %973 = vmatpush1.bf16.msra.mxu0 0
      %974 = vmatprep.subr.bf16.mxu0 0
      %975 = vmatpush1.bf16.msra.mxu0 0
      %976 = vmatprep.subr.bf16.mxu0 0
      %977 = vmatpush1.bf16.msra.mxu0 0
      %978 = vmatprep.subr.bf16.mxu0 0
      %979 = vmatpush1.bf16.msra.mxu0 0
      %980 = vmatprep.subr.bf16.mxu0 0
      %981 = vmatpush1.bf16.msra.mxu0 0
      %982 = vmatprep.subr.bf16.mxu0 0
      %983 = vmatpush1.bf16.msra.mxu0 0
      %984 = vmatprep.subr.bf16.mxu0 0
      %985 = vmatpush1.bf16.msra.mxu0 0
      %986 = vmatprep.subr.bf16.mxu0 0
      %987 = vmatpush1.bf16.msra.mxu0 0
      %988 = vmatprep.subr.bf16.mxu0 0
      %989 = vmatpush1.bf16.msra.mxu0 0
      %990 = vmatprep.mubr.bf16.mxu0 0
      %991 = vmatmul.mubr.bf16.gmra.mrb[0].mxu0 %v956
      %v992 = vpop.f32.mrb[0].mxu0
      %v993 = vadd.f32 0.0, %v992
      %v994 = vpop.f32.mrb[0].mxu0
      %v995 = vpop.f32.mrb[0].mxu0
      %v996 = vadd.f32 0.0, %v995
      %v997 = vpop.f32.mrb[0].mxu0
      %998 = vdwg.mxu0
      %s999 = scalar_lea.vmem %s1, 48
      %v1000 = vld [vmem:[%s999] sm:$0xff]
      %v1001 = vld [vmem:[%s999 + $0x8] sm:$0xff]
      %1002 = vrot.lane.b32.xlu0 %v626, 80
      %v1003 = vpop.permute.xlu0 %1002
      %1004 = vrot.lane.b32.xlu0 %v627, 16
      %v1005 = vpop.permute.xlu0 %1004
      %v1007 = vsel %vm634, %v1003, 0
      %v1010 = vsel %vm634, %v1005, 0
      %1012 = vmatprep.subr.bf16.mxu0 0
      %1013 = vmatpush1.bf16.xpose.msra.mxu0 %v1010
      %1014 = vmatprep.subr.bf16.mxu0 0
      %1015 = vmatpush1.bf16.xpose.msra.mxu0 0
      %1016 = vmatprep.subr.bf16.mxu0 0
      %1017 = vmatpush1.bf16.xpose.msra.mxu0 0
      %1018 = vmatprep.subr.bf16.mxu0 0
      %1019 = vmatpush1.bf16.xpose.msra.mxu0 0
      %1020 = vmatprep.subr.bf16.mxu0 0
      %1021 = vmatpush1.bf16.xpose.msra.mxu0 0
      %1022 = vmatprep.subr.bf16.mxu0 0
      %1023 = vmatpush1.bf16.xpose.msra.mxu0 0
      %1024 = vmatprep.subr.bf16.mxu0 0
      %1025 = vmatpush1.bf16.xpose.msra.mxu0 0
      %1026 = vmatprep.subr.bf16.mxu0 0
      %1027 = vmatpush1.bf16.xpose.msra.mxu0 0
      %1028 = vmatprep.subr.bf16.mxu0 0
      %1029 = vmatpush1.bf16.xpose.msra.mxu0 0
      %1030 = vmatprep.subr.bf16.mxu0 0
      %1031 = vmatpush1.bf16.xpose.msra.mxu0 0
      %1032 = vmatprep.subr.bf16.mxu0 0
      %1033 = vmatpush1.bf16.xpose.msra.mxu0 0
      %1034 = vmatprep.subr.bf16.mxu0 0
      %1035 = vmatpush1.bf16.xpose.msra.mxu0 0
      %1036 = vmatprep.subr.bf16.mxu0 0
      %1037 = vmatpush1.bf16.xpose.msra.mxu0 0
      %1038 = vmatprep.subr.bf16.mxu0 0
      %1039 = vmatpush1.bf16.xpose.msra.mxu0 0
      %1040 = vmatprep.subr.bf16.mxu0 0
      %1041 = vmatpush1.bf16.xpose.msra.mxu0 0
      %1042 = vmatprep.subr.bf16.mxu0 0
      %1043 = vmatpush1.bf16.xpose.msra.mxu0 0
      %1044 = vmatprep.mubr.bf16.mxu0 0
      %1045 = vmatmul.mubr.bf16.gmra.mrb[0].mxu0 %v1007
      %v1046 = vpop.f32.mrb[0].mxu0
      %v1047 = vadd.f32 %v1000, %v1046
      %v1048 = vpop.f32.mrb[0].mxu0
      %v1049 = vpop.f32.mrb[0].mxu0
      %v1050 = vadd.f32 %v1001, %v1049
      %v1051 = vpop.f32.mrb[0].mxu0
      %1052 = vdwg.mxu0
      %v1053 = vsel %vm634, %v1047, -inf
      %1054 = vmax.xlane.f32.xlu0 %v1053
      %v1055 = vpop.xlane.xlu0 %1054
      %v1056 = vsel %vm634, %v1050, -inf
      %1057 = vmax.xlane.f32.xlu0 %v1056
      %v1058 = vpop.xlane.xlu0 %1057
      %v1059 = vsub.f32 %v1047, %v1055
      %v1060 = vsub.f32 %v1050, %v1058
      %v1061 = vmul.f32 %v1059, 1.442695
      %v1062 = vpow.pop %v1061
      %v1063 = vmul.f32 %v1060, 1.442695
      %v1064 = vpow.pop %v1063
      %v1065 = vsel %vm634, %v1062, 0.0
      %1066 = vadd.xlane.f32.xlu0 %v1065
      %v1067 = vpop.xlane.xlu0 %1066
      %v1068 = vsel %vm634, %v1064, 0.0
      %1069 = vadd.xlane.f32.xlu0 %v1068
      %v1070 = vpop.xlane.xlu0 %1069
      %v1071 = vrcp.pop %v1067
      %v1072 = vrcp.pop %v1070
      %v1073 = vmul.f32 %v1062, %v1071
      %v1074 = vmul.f32 %v1064, %v1072
      %v1075 = vpack.c.bf16 %v1074, %v1073
      %1076 = vrot.lane.b32.xlu0 %v628, 80
      %v1077 = vpop.permute.xlu0 %1076
      %v1080 = vsel %vm634, %v1075, 0
      %1082 = vmatprep.subr.bf16.mxu0 0
      %1083 = vmatpush1.bf16.msra.mxu0 %v1077
      %1084 = vmatprep.subr.bf16.mxu0 0
      %1085 = vmatpush1.bf16.msra.mxu0 0
      %1086 = vmatprep.subr.bf16.mxu0 0
      %1087 = vmatpush1.bf16.msra.mxu0 0
      %1088 = vmatprep.subr.bf16.mxu0 0
      %1089 = vmatpush1.bf16.msra.mxu0 0
      %1090 = vmatprep.subr.bf16.mxu0 0
      %1091 = vmatpush1.bf16.msra.mxu0 0
      %1092 = vmatprep.subr.bf16.mxu0 0
      %1093 = vmatpush1.bf16.msra.mxu0 0
      %1094 = vmatprep.subr.bf16.mxu0 0
      %1095 = vmatpush1.bf16.msra.mxu0 0
      %1096 = vmatprep.subr.bf16.mxu0 0
      %1097 = vmatpush1.bf16.msra.mxu0 0
      %1098 = vmatprep.subr.bf16.mxu0 0
      %1099 = vmatpush1.bf16.msra.mxu0 0
      %1100 = vmatprep.subr.bf16.mxu0 0
      %1101 = vmatpush1.bf16.msra.mxu0 0
      %1102 = vmatprep.subr.bf16.mxu0 0
      %1103 = vmatpush1.bf16.msra.mxu0 0
      %1104 = vmatprep.subr.bf16.mxu0 0
      %1105 = vmatpush1.bf16.msra.mxu0 0
      %1106 = vmatprep.subr.bf16.mxu0 0
      %1107 = vmatpush1.bf16.msra.mxu0 0
      %1108 = vmatprep.subr.bf16.mxu0 0
      %1109 = vmatpush1.bf16.msra.mxu0 0
      %1110 = vmatprep.subr.bf16.mxu0 0
      %1111 = vmatpush1.bf16.msra.mxu0 0
      %1112 = vmatprep.subr.bf16.mxu0 0
      %1113 = vmatpush1.bf16.msra.mxu0 0
      %1114 = vmatprep.mubr.bf16.mxu0 0
      %1115 = vmatmul.mubr.bf16.gmra.mrb[0].mxu0 %v1080
      %v1116 = vpop.f32.mrb[0].mxu0
      %v1117 = vadd.f32 0.0, %v1116
      %v1118 = vpop.f32.mrb[0].mxu0
      %v1119 = vpop.f32.mrb[0].mxu0
      %v1120 = vadd.f32 0.0, %v1119
      %v1121 = vpop.f32.mrb[0].mxu0
      %1122 = vdwg.mxu0
      %1125 = vrot.lane.b32.xlu0 %v869, 16
      %v1126 = vpop.permute.xlu0 %1125
      %1127 = vrot.lane.b32.xlu0 %v872, 16
      %v1128 = vpop.permute.xlu0 %1127
      %1133 = vrot.lane.b32.xlu0 %v993, 32
      %v1134 = vpop.permute.xlu0 %1133
      %1135 = vrot.lane.b32.xlu0 %v996, 32
      %v1136 = vpop.permute.xlu0 %1135
      %1141 = vrot.lane.b32.xlu0 %v1117, 48
      %v1142 = vpop.permute.xlu0 %1141
      %1143 = vrot.lane.b32.xlu0 %v1120, 48
      %v1144 = vpop.permute.xlu0 %1143
      %v1147 = vsel %vm634, %v743, %v1126
      %v1148 = vsel %vm634, %v746, %v1128
      %vm1149 = vcmask 261120
      %v1150 = vsel %vm1149, %v1147, %v1134
      %v1151 = vsel %vm1149, %v1148, %v1136
      %vm1152 = vcmask 392192
      %v1153 = vsel %vm1152, %v1150, %v1142
      %v1154 = vsel %vm1152, %v1151, %v1144
      %v1155 = vpack.c.bf16 %v1154, %v1153
      %v1156 = vld [vmem:[%s6] sm:$0xf]
      %v1157 = vld [vmem:[%s6 + $0x4] sm:$0xf]
      %v1158 = vld [vmem:[%s6 + $0x8] sm:$0xf]
      %v1159 = vld [vmem:[%s6 + $0xc] sm:$0xf]
      %v1160 = vld [vmem:[%s6 + $0x10] sm:$0xf]
      %v1161 = vld [vmem:[%s6 + $0x14] sm:$0xf]
      %v1162 = vld [vmem:[%s6 + $0x18] sm:$0xf]
      %v1163 = vld [vmem:[%s6 + $0x1c] sm:$0xf]
      %v1164 = vld [vmem:[%s7] sm:$0x1]
      %v1166 = vlaneseq
      %v1167 = vshrl.u32 %v1166, 7
      %v1168 = vsub.s32 0, %v1167
      %v1169 = vrot.slane %v1164, %v1168
      %v1179 = vunpack.c.l.b16 %v1156
      %v1180 = vunpack.c.l.b16 %v1157
      %v1181 = vunpack.c.l.b16 %v1158
      %v1182 = vunpack.c.l.b16 %v1159
      %v1183 = vunpack.c.l.b16 %v1160
      %v1184 = vunpack.c.l.b16 %v1161
      %v1185 = vunpack.c.l.b16 %v1162
      %v1186 = vunpack.c.l.b16 %v1163
      %v1187 = vpack.c.b16 %v1180, %v1179
      %v1188 = vpack.c.b16 %v1182, %v1181
      %v1189 = vpack.c.b16 %v1184, %v1183
      %v1190 = vpack.c.b16 %v1186, %v1185
      %v1196 = vsel %vm473, %v1155, 0
      %1198 = vmatprep.subr.bf16.mxu0 0
      %1199 = vmatpush1.bf16.msra.mxu0 %v1187
      %1200 = vmatprep.subr.bf16.mxu0 0
      %1201 = vmatpush1.bf16.msra.mxu0 %v1188
      %1202 = vmatprep.subr.bf16.mxu0 0
      %1203 = vmatpush1.bf16.msra.mxu0 %v1189
      %1204 = vmatprep.subr.bf16.mxu0 0
      %1205 = vmatpush1.bf16.msra.mxu0 %v1190
      %1206 = vmatprep.subr.bf16.mxu0 0
      %1207 = vmatpush1.bf16.msra.mxu0 0
      %1208 = vmatprep.subr.bf16.mxu0 0
      %1209 = vmatpush1.bf16.msra.mxu0 0
      %1210 = vmatprep.subr.bf16.mxu0 0
      %1211 = vmatpush1.bf16.msra.mxu0 0
      %1212 = vmatprep.subr.bf16.mxu0 0
      %1213 = vmatpush1.bf16.msra.mxu0 0
      %1214 = vmatprep.subr.bf16.mxu0 0
      %1215 = vmatpush1.bf16.msra.mxu0 0
      %1216 = vmatprep.subr.bf16.mxu0 0
      %1217 = vmatpush1.bf16.msra.mxu0 0
      %1218 = vmatprep.subr.bf16.mxu0 0
      %1219 = vmatpush1.bf16.msra.mxu0 0
      %1220 = vmatprep.subr.bf16.mxu0 0
      %1221 = vmatpush1.bf16.msra.mxu0 0
      %1222 = vmatprep.subr.bf16.mxu0 0
      %1223 = vmatpush1.bf16.msra.mxu0 0
      %1224 = vmatprep.subr.bf16.mxu0 0
      %1225 = vmatpush1.bf16.msra.mxu0 0
      %1226 = vmatprep.subr.bf16.mxu0 0
      %1227 = vmatpush1.bf16.msra.mxu0 0
      %1228 = vmatprep.subr.bf16.mxu0 0
      %1229 = vmatpush1.bf16.msra.mxu0 0
      %1230 = vmatprep.mubr.bf16.mxu0 0
      %1231 = vmatmul.mubr.bf16.gmra.mrb[0].mxu0 %v1196
      %v1232 = vpop.f32.mrb[0].mxu0
      %v1233 = vadd.f32 %v1169, %v1232
      %v1234 = vpop.f32.mrb[0].mxu0
      %v1235 = vpop.f32.mrb[0].mxu0
      %v1236 = vadd.f32 %v1169, %v1235
      %v1237 = vpop.f32.mrb[0].mxu0
      %1238 = vdwg.mxu0
      %v1239 = vadd.f32 %v469, %v1233
      %v1240 = vadd.f32 %v470, %v1236
      %v1241 = vld [vmem:[%s8] sm:$0x1]
      %v1242 = vld [vmem:[%s9] sm:$0x1]
      %v1243 = vsel %vm473, %v1239, 0.0
      %1244 = vadd.xlane.f32.xlu0 %v1243
      %v1245 = vpop.xlane.xlu0 %1244
      %v1246 = vsel %vm473, %v1240, 0.0
      %1247 = vadd.xlane.f32.xlu0 %v1246
      %v1248 = vpop.xlane.xlu0 %1247
      %v1249 = vmul.f32 %v1245, %v480
      %v1250 = vmul.f32 %v1248, %v480
      %v1251 = vsub.f32 %v1239, %v1249
      %v1252 = vsub.f32 %v1240, %v1250
      %v1253 = vmul.f32 %v1251, %v1251
      %v1254 = vmul.f32 %v1252, %v1252
      %v1255 = vsel %vm473, %v1253, 0.0
      %1256 = vadd.xlane.f32.xlu0 %v1255
      %v1257 = vpop.xlane.xlu0 %1256
      %v1258 = vsel %vm473, %v1254, 0.0
      %1259 = vadd.xlane.f32.xlu0 %v1258
      %v1260 = vpop.xlane.xlu0 %1259
      %v1261 = vmul.f32 %v1257, %v480
      %v1262 = vmul.f32 %v1260, %v480
      %v1263 = vadd.f32 %v1261, 1e-05
      %v1264 = vadd.f32 %v1262, 1e-05
      %v1265 = vrsqrt.pop %v1263
      %v1266 = vrsqrt.pop %v1264
      %v1267 = vmul.f32 %v1251, %v1265
      %v1268 = vmul.f32 %v1252, %v1266
      %v1270 = vlaneseq
      %v1271 = vshrl.u32 %v1270, 7
      %v1272 = vsub.s32 0, %v1271
      %v1273 = vrot.slane %v1241, %v1272
      %v1275 = vmul.f32 %v1267, %v1273
      %v1276 = vmul.f32 %v1268, %v1273
      %v1278 = vlaneseq
      %v1279 = vshrl.u32 %v1278, 7
      %v1280 = vsub.s32 0, %v1279
      %v1281 = vrot.slane %v1242, %v1280
      %v1283 = vadd.f32 %v1275, %v1281
      %v1284 = vadd.f32 %v1276, %v1281
      %v1285 = vpack.c.bf16 %v1284, %v1283
      %v1286 = vld [vmem:[%s10] sm:$0xf]
      %v1287 = vld [vmem:[%s10 + $0x4] sm:$0xf]
      %v1288 = vld [vmem:[%s10 + $0x8] sm:$0xf]
      %v1289 = vld [vmem:[%s10 + $0xc] sm:$0xf]
      %v1290 = vld [vmem:[%s10 + $0x10] sm:$0xf]
      %v1291 = vld [vmem:[%s10 + $0x14] sm:$0xf]
      %v1292 = vld [vmem:[%s10 + $0x18] sm:$0xf]
      %v1293 = vld [vmem:[%s10 + $0x1c] sm:$0xf]
      %v1294 = vld [vmem:[%s11] sm:$0x1]
      %v1296 = vlaneseq
      %v1297 = vshrl.u32 %v1296, 7
      %v1298 = vsub.s32 0, %v1297
      %v1299 = vrot.slane %v1294, %v1298
      %v1309 = vunpack.c.l.b16 %v1286
      %v1310 = vunpack.c.l.b16 %v1287
      %v1311 = vunpack.c.l.b16 %v1288
      %v1312 = vunpack.c.l.b16 %v1289
      %v1313 = vunpack.c.l.b16 %v1290
      %v1314 = vunpack.c.l.b16 %v1291
      %v1315 = vunpack.c.l.b16 %v1292
      %v1316 = vunpack.c.l.b16 %v1293
      %v1317 = vpack.c.b16 %v1310, %v1309
      %v1318 = vpack.c.b16 %v1312, %v1311
      %v1319 = vpack.c.b16 %v1314, %v1313
      %v1320 = vpack.c.b16 %v1316, %v1315
      %v1326 = vsel %vm473, %v1285, 0
      %1328 = vmatprep.subr.bf16.mxu0 0
      %1329 = vmatpush1.bf16.msra.mxu0 %v1317
      %1330 = vmatprep.subr.bf16.mxu0 0
      %1331 = vmatpush1.bf16.msra.mxu0 %v1318
      %1332 = vmatprep.subr.bf16.mxu0 0
      %1333 = vmatpush1.bf16.msra.mxu0 %v1319
      %1334 = vmatprep.subr.bf16.mxu0 0
      %1335 = vmatpush1.bf16.msra.mxu0 %v1320
      %1336 = vmatprep.subr.bf16.mxu0 0
      %1337 = vmatpush1.bf16.msra.mxu0 0
      %1338 = vmatprep.subr.bf16.mxu0 0
      %1339 = vmatpush1.bf16.msra.mxu0 0
      %1340 = vmatprep.subr.bf16.mxu0 0
      %1341 = vmatpush1.bf16.msra.mxu0 0
      %1342 = vmatprep.subr.bf16.mxu0 0
      %1343 = vmatpush1.bf16.msra.mxu0 0
      %1344 = vmatprep.subr.bf16.mxu0 0
      %1345 = vmatpush1.bf16.msra.mxu0 0
      %1346 = vmatprep.subr.bf16.mxu0 0
      %1347 = vmatpush1.bf16.msra.mxu0 0
      %1348 = vmatprep.subr.bf16.mxu0 0
      %1349 = vmatpush1.bf16.msra.mxu0 0
      %1350 = vmatprep.subr.bf16.mxu0 0
      %1351 = vmatpush1.bf16.msra.mxu0 0
      %1352 = vmatprep.subr.bf16.mxu0 0
      %1353 = vmatpush1.bf16.msra.mxu0 0
      %1354 = vmatprep.subr.bf16.mxu0 0
      %1355 = vmatpush1.bf16.msra.mxu0 0
      %1356 = vmatprep.subr.bf16.mxu0 0
      %1357 = vmatpush1.bf16.msra.mxu0 0
      %1358 = vmatprep.subr.bf16.mxu0 0
      %1359 = vmatpush1.bf16.msra.mxu0 0
      %1360 = vmatprep.mubr.bf16.mxu0 0
      %1361 = vmatmul.mubr.bf16.gmra.mrb[0].mxu0 %v1326
      %v1362 = vpop.f32.mrb[0].mxu0
      %v1363 = vadd.f32 %v1299, %v1362
      %v1364 = vpop.f32.mrb[0].mxu0
      %v1365 = vpop.f32.mrb[0].mxu0
      %v1366 = vadd.f32 %v1299, %v1365
      %v1367 = vpop.f32.mrb[0].mxu0
      %1368 = vdwg.mxu0
      %v1369 = vmul.f32 %v1363, %v1363
      %v1370 = vmul.f32 %v1366, %v1366
      %v1371 = vmul.f32 %v1363, %v1369
      %v1372 = vmul.f32 %v1366, %v1370
      %v1373 = vmul.f32 %v1371, 0.044715
      %v1374 = vmul.f32 %v1372, 0.044715
      %v1375 = vadd.f32 %v1363, %v1373
      %v1376 = vadd.f32 %v1366, %v1374
      %v1377 = vmul.f32 %v1375, 0.7978846
      %v1378 = vmul.f32 %v1376, 0.7978846
      %v1379 = vtanh.pop %v1377
      %v1380 = vtanh.pop %v1378
      %v1381 = vadd.f32 %v1379, 1.0
      %v1382 = vadd.f32 %v1380, 1.0
      %v1383 = vmul.f32 %v1381, 0.5
      %v1384 = vmul.f32 %v1382, 0.5
      %v1385 = vmul.f32 %v1363, %v1383
      %v1386 = vmul.f32 %v1366, %v1384
      %v1387 = vpack.c.bf16 %v1386, %v1385
      %v1388 = vld [vmem:[%s12] sm:$0xf]
      %v1389 = vld [vmem:[%s12 + $0x4] sm:$0xf]
      %v1390 = vld [vmem:[%s12 + $0x8] sm:$0xf]
      %v1391 = vld [vmem:[%s12 + $0xc] sm:$0xf]
      %v1392 = vld [vmem:[%s12 + $0x10] sm:$0xf]
      %v1393 = vld [vmem:[%s12 + $0x14] sm:$0xf]
      %v1394 = vld [vmem:[%s12 + $0x18] sm:$0xf]
      %v1395 = vld [vmem:[%s12 + $0x1c] sm:$0xf]
      %v1396 = vld [vmem:[%s12 + $0x20] sm:$0xf]
      %v1397 = vld [vmem:[%s12 + $0x24] sm:$0xf]
      %v1398 = vld [vmem:[%s12 + $0x28] sm:$0xf]
      %v1399 = vld [vmem:[%s12 + $0x2c] sm:$0xf]
      %v1400 = vld [vmem:[%s12 + $0x30] sm:$0xf]
      %v1401 = vld [vmem:[%s12 + $0x34] sm:$0xf]
      %v1402 = vld [vmem:[%s12 + $0x38] sm:$0xf]
      %v1403 = vld [vmem:[%s12 + $0x3c] sm:$0xf]
      %v1404 = vld [vmem:[%s13] sm:$0x1]
      %v1406 = vlaneseq
      %v1407 = vshrl.u32 %v1406, 7
      %v1408 = vsub.s32 0, %v1407
      %v1409 = vrot.slane %v1404, %v1408
      %v1427 = vunpack.c.l.b16 %v1388
      %v1428 = vunpack.c.l.b16 %v1389
      %v1429 = vunpack.c.l.b16 %v1390
      %v1430 = vunpack.c.l.b16 %v1391
      %v1431 = vunpack.c.l.b16 %v1392
      %v1432 = vunpack.c.l.b16 %v1393
      %v1433 = vunpack.c.l.b16 %v1394
      %v1434 = vunpack.c.l.b16 %v1395
      %v1435 = vunpack.c.l.b16 %v1396
      %v1436 = vunpack.c.l.b16 %v1397
      %v1437 = vunpack.c.l.b16 %v1398
      %v1438 = vunpack.c.l.b16 %v1399
      %v1439 = vunpack.c.l.b16 %v1400
      %v1440 = vunpack.c.l.b16 %v1401
      %v1441 = vunpack.c.l.b16 %v1402
      %v1442 = vunpack.c.l.b16 %v1403
      %v1443 = vpack.c.b16 %v1428, %v1427
      %v1444 = vpack.c.b16 %v1430, %v1429
      %v1445 = vpack.c.b16 %v1432, %v1431
      %v1446 = vpack.c.b16 %v1434, %v1433
      %v1447 = vpack.c.b16 %v1436, %v1435
      %v1448 = vpack.c.b16 %v1438, %v1437
      %v1449 = vpack.c.b16 %v1440, %v1439
      %v1450 = vpack.c.b16 %v1442, %v1441
      %1459 = vmatprep.subr.bf16.mxu0 0
      %1460 = vmatpush1.bf16.msra.mxu0 %v1443
      %1461 = vmatprep.subr.bf16.mxu0 0
      %1462 = vmatpush1.bf16.msra.mxu0 %v1444
      %1463 = vmatprep.subr.bf16.mxu0 0
      %1464 = vmatpush1.bf16.msra.mxu0 %v1445
      %1465 = vmatprep.subr.bf16.mxu0 0
      %1466 = vmatpush1.bf16.msra.mxu0 %v1446
      %1467 = vmatprep.subr.bf16.mxu0 0
      %1468 = vmatpush1.bf16.msra.mxu0 %v1447
      %1469 = vmatprep.subr.bf16.mxu0 0
      %1470 = vmatpush1.bf16.msra.mxu0 %v1448
      %1471 = vmatprep.subr.bf16.mxu0 0
      %1472 = vmatpush1.bf16.msra.mxu0 %v1449
      %1473 = vmatprep.subr.bf16.mxu0 0
      %1474 = vmatpush1.bf16.msra.mxu0 %v1450
      %1475 = vmatprep.subr.bf16.mxu0 0
      %1476 = vmatpush1.bf16.msra.mxu0 0
      %1477 = vmatprep.subr.bf16.mxu0 0
      %1478 = vmatpush1.bf16.msra.mxu0 0
      %1479 = vmatprep.subr.bf16.mxu0 0
      %1480 = vmatpush1.bf16.msra.mxu0 0
      %1481 = vmatprep.subr.bf16.mxu0 0
      %1482 = vmatpush1.bf16.msra.mxu0 0
      %1483 = vmatprep.subr.bf16.mxu0 0
      %1484 = vmatpush1.bf16.msra.mxu0 0
      %1485 = vmatprep.subr.bf16.mxu0 0
      %1486 = vmatpush1.bf16.msra.mxu0 0
      %1487 = vmatprep.subr.bf16.mxu0 0
      %1488 = vmatpush1.bf16.msra.mxu0 0
      %1489 = vmatprep.subr.bf16.mxu0 0
      %1490 = vmatpush1.bf16.msra.mxu0 0
      %1491 = vmatprep.mubr.bf16.mxu0 0
      %1492 = vmatmul.mubr.bf16.gmra.mrb[0].mxu0 %v1387
      %v1493 = vpop.f32.mrb[0].mxu0
      %v1494 = vadd.f32 %v1409, %v1493
      %v1495 = vpop.f32.mrb[0].mxu0
      %v1496 = vpop.f32.mrb[0].mxu0
      %v1497 = vadd.f32 %v1409, %v1496
      %v1498 = vpop.f32.mrb[0].mxu0
      %1499 = vdwg.mxu0
      %v1500 = vadd.f32 %v1239, %v1494
      %v1501 = vadd.f32 %v1240, %v1497
      %1502 = vst.msk [vmem:[%s467] sm:$0xff] %vm473, %v1500
      %1503 = vst.msk [vmem:[%s467 + $0x8] sm:$0xff] %vm473, %v1501
      %p1504 = scmp.lt.s32.totalorder %s25, 1
      %s1505 = scalar_select %p1504, %s25, 1
      %s1506 = smul.addr %s1505, 2
      %s1507 = smul.addr %s1506, 8
      %s1508 = scalar_lea.vmem %s14, %s1507
      // Predicated region
      $region77: #{pure_rmt_forward.13} parent=75 // pred_check
        %p1509 = pneg %p342
      $region78: #{pure_rmt_forward.13} parent=75 // pred_check_branch
        %1511 = sbr.rel (%p1509) target = $region80
      $region79: #{pure_rmt_forward.13} parent=75 // pred_region
        _
      $region80: #{pure_rmt_forward.13} parent=75 // pred_fallthru
        _
    $region76: #{pure_rmt_forward.13} parent=5 // pred_fallthru
      _
    %p1512 = scmp.le.s32.totalorder 2, %s20
    // Predicated region
    $region81: #{pure_rmt_forward.13} parent=5 // pred_check
      %p1513 = pneg %p1512
    $region82: #{pure_rmt_forward.13} parent=5 // pred_check_branch
      %1515 = sbr.rel (%p1513) target = $region84
    $region83: #{pure_rmt_forward.13} parent=5 // pred_region
      %s1516 = ssub.s32 %s20, 2
      // Predicated region
      $region85: #{pure_rmt_forward.13} parent=83 // pred_check
        %p1517 = pneg %p348
      $region86: #{pure_rmt_forward.13} parent=83 // pred_check_branch
        %1519 = sbr.rel (%p1517) target = $region88
      $region87: #{pure_rmt_forward.13} parent=83 // pred_region
        %p1520 = scmp.lt.s32.totalorder %s26, 1
        %s1521 = scalar_select %p1520, %s26, 1
        %s1522 = smul.addr %s1521, 2
        %s1523 = smul.addr %s1522, 8
        %s1524 = scalar_lea.vmem %s14, %s1523
      $region88: #{pure_rmt_forward.13} parent=83 // pred_fallthru
        _
    $region84: #{pure_rmt_forward.13} parent=5 // pred_fallthru
      _
  $region6: #{pure_rmt_forward.13} parent=0 // loop_footer
    %s24 = sadd.s32 1, %s20
  $region7: #{pure_rmt_forward.13} parent=0 // loop_footer_branch
    %19 = sbr.rel target = $region3
  $region8: #{pure_rmt_forward.13} parent=0 // loop_exit
    _

// kernel: pure_rmt_forward.8
$region0: #{pure_rmt_forward.8}
  #allocation0 [shape = 'u32[]', space=smem, size = 0x4, offset = 0x4, fixed_abs, tag = 'smem constant byte address 0x4 - core index']
  #allocation1 [shape = 'u32[144,128]{1,0:T(1,128)}', space=vmem, size = 0x12000, scoped, tag = 'internal scratch']
  %s0 = inlined_call_operand.vmem [shape: f32[2,16,32], index: 0, kind: input, shape index: {}]
  %s1 = inlined_call_operand.vmem [shape: f32[2,16,16], index: 1, kind: input, shape index: {}]
  %s2 = inlined_call_operand.vmem [shape: f32[1,32], index: 2, kind: input, shape index: {}]
  %s3 = inlined_call_operand.vmem [shape: f32[1,32], index: 3, kind: input, shape index: {}]
  %s4 = inlined_call_operand.vmem [shape: bf16[32,96], index: 4, kind: input, shape index: {}]
  %s5 = inlined_call_operand.vmem [shape: f32[1,96], index: 5, kind: input, shape index: {}]
  %s6 = inlined_call_operand.vmem [shape: bf16[32,32], index: 6, kind: input, shape index: {}]
  %s7 = inlined_call_operand.vmem [shape: f32[1,32], index: 7, kind: input, shape index: {}]
  %s8 = inlined_call_operand.vmem [shape: f32[1,32], index: 8, kind: input, shape index: {}]
  %s9 = inlined_call_operand.vmem [shape: f32[1,32], index: 9, kind: input, shape index: {}]
  %s10 = inlined_call_operand.vmem [shape: bf16[32,64], index: 10, kind: input, shape index: {}]
  %s11 = inlined_call_operand.vmem [shape: f32[1,64], index: 11, kind: input, shape index: {}]
  %s12 = inlined_call_operand.vmem [shape: bf16[64,32], index: 12, kind: input, shape index: {}]
  %s13 = inlined_call_operand.vmem [shape: f32[1,32], index: 13, kind: input, shape index: {}]
  %s14 = inlined_call_operand.vmem [shape: f32[2,16,32], index: 14, kind: output, shape index: {}]
  %s15 = sld [smem:[#allocation0]]
  $region89: #{pure_rmt_forward.8} parent=0
    _
  %s17 = ssub.s32 1, %s15
  %s18 = scalar_select 0, %s17, %s15
  loop: start=0, step=1, limit=4
  $region2: #{pure_rmt_forward.8} parent=0 // loop_pre_header
    _
  $region3: #{pure_rmt_forward.8} parent=0 // loop_header
    %s20 = sphi 0, %s24
    %p21 = scmp.ge.s32.totalorder %s20, 4
    %s30 = sphi 0, %s32
    %s33 = sphi 0, %s30
    %s34 = sphi 0, %s33
    %s50 = sphi 0, %s34
    %s54 = sphi 0, %s54
    %s56 = sphi 0, %s54
    %s57 = sphi 0, %s56
    %s71 = sphi 0, %s57
    %s75 = sphi 0, %s75
    %s77 = sphi 0, %s75
    %s78 = sphi 0, %s77
    %s92 = sphi 0, %s78
    %s96 = sphi 0, %s96
    %s98 = sphi 0, %s96
    %s99 = sphi 0, %s98
    %s113 = sphi 0, %s99
    %s117 = sphi 0, %s117
    %s119 = sphi 0, %s117
    %s120 = sphi 0, %s119
    %s134 = sphi 0, %s120
    %s138 = sphi 0, %s138
    %s140 = sphi 0, %s138
    %s141 = sphi 0, %s140
    %s155 = sphi 0, %s141
    %s159 = sphi 0, %s159
    %s161 = sphi 0, %s159
    %s162 = sphi 0, %s161
    %s176 = sphi 0, %s162
    %s180 = sphi 0, %s180
    %s182 = sphi 0, %s180
    %s183 = sphi 0, %s182
    %s197 = sphi 0, %s183
    %s201 = sphi 0, %s201
    %s203 = sphi 0, %s201
    %s204 = sphi 0, %s203
    %s218 = sphi 0, %s204
    %s222 = sphi 0, %s222
    %s224 = sphi 0, %s222
    %s225 = sphi 0, %s224
    %s239 = sphi 0, %s225
    %s243 = sphi 0, %s243
    %s245 = sphi 0, %s243
    %s246 = sphi 0, %s245
    %s260 = sphi 0, %s246
    %s264 = sphi 0, %s264
    %s266 = sphi 0, %s264
    %s267 = sphi 0, %s266
    %s281 = sphi 0, %s267
    %s285 = sphi 0, %s285
    %s287 = sphi 0, %s285
    %s288 = sphi 0, %s287
    %s302 = sphi 0, %s288
    %s306 = sphi 0, %s306
    %s308 = sphi 0, %s306
    %s309 = sphi 0, %s308
    %s323 = sphi 0, %s309
    %s329 = sphi 0, %s331
    %s332 = sphi 0, %s329
    %s333 = sphi 0, %s332
    %s349 = sphi 0, %s333
  $region4: #{pure_rmt_forward.8} parent=0 // loop_header_branch
    %23 = sbr.rel (%p21) target = $region8
  $region5: #{pure_rmt_forward.8} parent=0 // loop_body
    %s25 = ssub.s32 %s20, 1
    %s26 = ssub.s32 %s20, 2
    %s27 = sadd.s32 %s20, 1
    %s28 = ssub.s32 %s20, %s27
    %p29 = scmp.eq.s32.totalorder %s28, 0
    %s31 = sadd.s32 %s30, 1
    %s32 = scalar_select %p29, %s30, %s31
    %p35 = pneg %p29
    %p36 = scmp.eq.s32.totalorder %s20, 1
    %p37 = por %p35, %p36
    %p38 = scmp.ne.s32.totalorder %s30, %s33
    %p39 = scmp.eq.s32.totalorder %s20, 0
    %p40 = por %p38, %p39
    %p41 = scmp.ne.s32.totalorder %s30, %s33
    %p42 = scmp.eq.s32.totalorder %s25, 1
    %p43 = por %p41, %p42
    %p44 = scmp.ne.s32.totalorder %s33, %s34
    %p45 = scmp.eq.s32.totalorder %s25, 0
    %p46 = por %p44, %p45
    %p47 = scmp.ne.s32.totalorder %s33, %s34
    %p48 = scmp.eq.s32.totalorder %s26, 1
    %p49 = por %p47, %p48
    %p51 = scmp.ne.s32.totalorder %s34, %s50
    %p52 = scmp.eq.s32.totalorder %s26, 0
    %p53 = por %p51, %p52
    %s55 = sadd.s32 %s54, 1
    %p58 = scmp.eq.s32.totalorder %s20, 1
    %p59 = scmp.ne.s32.totalorder %s54, %s56
    %p60 = scmp.eq.s32.totalorder %s20, 0
    %p61 = por %p59, %p60
    %p62 = scmp.ne.s32.totalorder %s54, %s56
    %p63 = scmp.eq.s32.totalorder %s25, 1
    %p64 = por %p62, %p63
    %p65 = scmp.ne.s32.totalorder %s56, %s57
    %p66 = scmp.eq.s32.totalorder %s25, 0
    %p67 = por %p65, %p66
    %p68 = scmp.ne.s32.totalorder %s56, %s57
    %p69 = scmp.eq.s32.totalorder %s26, 1
    %p70 = por %p68, %p69
    %p72 = scmp.ne.s32.totalorder %s57, %s71
    %p73 = scmp.eq.s32.totalorder %s26, 0
    %p74 = por %p72, %p73
    %s76 = sadd.s32 %s75, 1
    %p79 = scmp.eq.s32.totalorder %s20, 1
    %p80 = scmp.ne.s32.totalorder %s75, %s77
    %p81 = scmp.eq.s32.totalorder %s20, 0
    %p82 = por %p80, %p81
    %p83 = scmp.ne.s32.totalorder %s75, %s77
    %p84 = scmp.eq.s32.totalorder %s25, 1
    %p85 = por %p83, %p84
    %p86 = scmp.ne.s32.totalorder %s77, %s78
    %p87 = scmp.eq.s32.totalorder %s25, 0
    %p88 = por %p86, %p87
    %p89 = scmp.ne.s32.totalorder %s77, %s78
    %p90 = scmp.eq.s32.totalorder %s26, 1
    %p91 = por %p89, %p90
    %p93 = scmp.ne.s32.totalorder %s78, %s92
    %p94 = scmp.eq.s32.totalorder %s26, 0
    %p95 = por %p93, %p94
    %s97 = sadd.s32 %s96, 1
    %p100 = scmp.eq.s32.totalorder %s20, 1
    %p101 = scmp.ne.s32.totalorder %s96, %s98
    %p102 = scmp.eq.s32.totalorder %s20, 0
    %p103 = por %p101, %p102
    %p104 = scmp.ne.s32.totalorder %s96, %s98
    %p105 = scmp.eq.s32.totalorder %s25, 1
    %p106 = por %p104, %p105
    %p107 = scmp.ne.s32.totalorder %s98, %s99
    %p108 = scmp.eq.s32.totalorder %s25, 0
    %p109 = por %p107, %p108
    %p110 = scmp.ne.s32.totalorder %s98, %s99
    %p111 = scmp.eq.s32.totalorder %s26, 1
    %p112 = por %p110, %p111
    %p114 = scmp.ne.s32.totalorder %s99, %s113
    %p115 = scmp.eq.s32.totalorder %s26, 0
    %p116 = por %p114, %p115
    %s118 = sadd.s32 %s117, 1
    %p121 = scmp.eq.s32.totalorder %s20, 1
    %p122 = scmp.ne.s32.totalorder %s117, %s119
    %p123 = scmp.eq.s32.totalorder %s20, 0
    %p124 = por %p122, %p123
    %p125 = scmp.ne.s32.totalorder %s117, %s119
    %p126 = scmp.eq.s32.totalorder %s25, 1
    %p127 = por %p125, %p126
    %p128 = scmp.ne.s32.totalorder %s119, %s120
    %p129 = scmp.eq.s32.totalorder %s25, 0
    %p130 = por %p128, %p129
    %p131 = scmp.ne.s32.totalorder %s119, %s120
    %p132 = scmp.eq.s32.totalorder %s26, 1
    %p133 = por %p131, %p132
    %p135 = scmp.ne.s32.totalorder %s120, %s134
    %p136 = scmp.eq.s32.totalorder %s26, 0
    %p137 = por %p135, %p136
    %s139 = sadd.s32 %s138, 1
    %p142 = scmp.eq.s32.totalorder %s20, 1
    %p143 = scmp.ne.s32.totalorder %s138, %s140
    %p144 = scmp.eq.s32.totalorder %s20, 0
    %p145 = por %p143, %p144
    %p146 = scmp.ne.s32.totalorder %s138, %s140
    %p147 = scmp.eq.s32.totalorder %s25, 1
    %p148 = por %p146, %p147
    %p149 = scmp.ne.s32.totalorder %s140, %s141
    %p150 = scmp.eq.s32.totalorder %s25, 0
    %p151 = por %p149, %p150
    %p152 = scmp.ne.s32.totalorder %s140, %s141
    %p153 = scmp.eq.s32.totalorder %s26, 1
    %p154 = por %p152, %p153
    %p156 = scmp.ne.s32.totalorder %s141, %s155
    %p157 = scmp.eq.s32.totalorder %s26, 0
    %p158 = por %p156, %p157
    %s160 = sadd.s32 %s159, 1
    %p163 = scmp.eq.s32.totalorder %s20, 1
    %p164 = scmp.ne.s32.totalorder %s159, %s161
    %p165 = scmp.eq.s32.totalorder %s20, 0
    %p166 = por %p164, %p165
    %p167 = scmp.ne.s32.totalorder %s159, %s161
    %p168 = scmp.eq.s32.totalorder %s25, 1
    %p169 = por %p167, %p168
    %p170 = scmp.ne.s32.totalorder %s161, %s162
    %p171 = scmp.eq.s32.totalorder %s25, 0
    %p172 = por %p170, %p171
    %p173 = scmp.ne.s32.totalorder %s161, %s162
    %p174 = scmp.eq.s32.totalorder %s26, 1
    %p175 = por %p173, %p174
    %p177 = scmp.ne.s32.totalorder %s162, %s176
    %p178 = scmp.eq.s32.totalorder %s26, 0
    %p179 = por %p177, %p178
    %s181 = sadd.s32 %s180, 1
    %p184 = scmp.eq.s32.totalorder %s20, 1
    %p185 = scmp.ne.s32.totalorder %s180, %s182
    %p186 = scmp.eq.s32.totalorder %s20, 0
    %p187 = por %p185, %p186
    %p188 = scmp.ne.s32.totalorder %s180, %s182
    %p189 = scmp.eq.s32.totalorder %s25, 1
    %p190 = por %p188, %p189
    %p191 = scmp.ne.s32.totalorder %s182, %s183
    %p192 = scmp.eq.s32.totalorder %s25, 0
    %p193 = por %p191, %p192
    %p194 = scmp.ne.s32.totalorder %s182, %s183
    %p195 = scmp.eq.s32.totalorder %s26, 1
    %p196 = por %p194, %p195
    %p198 = scmp.ne.s32.totalorder %s183, %s197
    %p199 = scmp.eq.s32.totalorder %s26, 0
    %p200 = por %p198, %p199
    %s202 = sadd.s32 %s201, 1
    %p205 = scmp.eq.s32.totalorder %s20, 1
    %p206 = scmp.ne.s32.totalorder %s201, %s203
    %p207 = scmp.eq.s32.totalorder %s20, 0
    %p208 = por %p206, %p207
    %p209 = scmp.ne.s32.totalorder %s201, %s203
    %p210 = scmp.eq.s32.totalorder %s25, 1
    %p211 = por %p209, %p210
    %p212 = scmp.ne.s32.totalorder %s203, %s204
    %p213 = scmp.eq.s32.totalorder %s25, 0
    %p214 = por %p212, %p213
    %p215 = scmp.ne.s32.totalorder %s203, %s204
    %p216 = scmp.eq.s32.totalorder %s26, 1
    %p217 = por %p215, %p216
    %p219 = scmp.ne.s32.totalorder %s204, %s218
    %p220 = scmp.eq.s32.totalorder %s26, 0
    %p221 = por %p219, %p220
    %s223 = sadd.s32 %s222, 1
    %p226 = scmp.eq.s32.totalorder %s20, 1
    %p227 = scmp.ne.s32.totalorder %s222, %s224
    %p228 = scmp.eq.s32.totalorder %s20, 0
    %p229 = por %p227, %p228
    %p230 = scmp.ne.s32.totalorder %s222, %s224
    %p231 = scmp.eq.s32.totalorder %s25, 1
    %p232 = por %p230, %p231
    %p233 = scmp.ne.s32.totalorder %s224, %s225
    %p234 = scmp.eq.s32.totalorder %s25, 0
    %p235 = por %p233, %p234
    %p236 = scmp.ne.s32.totalorder %s224, %s225
    %p237 = scmp.eq.s32.totalorder %s26, 1
    %p238 = por %p236, %p237
    %p240 = scmp.ne.s32.totalorder %s225, %s239
    %p241 = scmp.eq.s32.totalorder %s26, 0
    %p242 = por %p240, %p241
    %s244 = sadd.s32 %s243, 1
    %p247 = scmp.eq.s32.totalorder %s20, 1
    %p248 = scmp.ne.s32.totalorder %s243, %s245
    %p249 = scmp.eq.s32.totalorder %s20, 0
    %p250 = por %p248, %p249
    %p251 = scmp.ne.s32.totalorder %s243, %s245
    %p252 = scmp.eq.s32.totalorder %s25, 1
    %p253 = por %p251, %p252
    %p254 = scmp.ne.s32.totalorder %s245, %s246
    %p255 = scmp.eq.s32.totalorder %s25, 0
    %p256 = por %p254, %p255
    %p257 = scmp.ne.s32.totalorder %s245, %s246
    %p258 = scmp.eq.s32.totalorder %s26, 1
    %p259 = por %p257, %p258
    %p261 = scmp.ne.s32.totalorder %s246, %s260
    %p262 = scmp.eq.s32.totalorder %s26, 0
    %p263 = por %p261, %p262
    %s265 = sadd.s32 %s264, 1
    %p268 = scmp.eq.s32.totalorder %s20, 1
    %p269 = scmp.ne.s32.totalorder %s264, %s266
    %p270 = scmp.eq.s32.totalorder %s20, 0
    %p271 = por %p269, %p270
    %p272 = scmp.ne.s32.totalorder %s264, %s266
    %p273 = scmp.eq.s32.totalorder %s25, 1
    %p274 = por %p272, %p273
    %p275 = scmp.ne.s32.totalorder %s266, %s267
    %p276 = scmp.eq.s32.totalorder %s25, 0
    %p277 = por %p275, %p276
    %p278 = scmp.ne.s32.totalorder %s266, %s267
    %p279 = scmp.eq.s32.totalorder %s26, 1
    %p280 = por %p278, %p279
    %p282 = scmp.ne.s32.totalorder %s267, %s281
    %p283 = scmp.eq.s32.totalorder %s26, 0
    %p284 = por %p282, %p283
    %s286 = sadd.s32 %s285, 1
    %p289 = scmp.eq.s32.totalorder %s20, 1
    %p290 = scmp.ne.s32.totalorder %s285, %s287
    %p291 = scmp.eq.s32.totalorder %s20, 0
    %p292 = por %p290, %p291
    %p293 = scmp.ne.s32.totalorder %s285, %s287
    %p294 = scmp.eq.s32.totalorder %s25, 1
    %p295 = por %p293, %p294
    %p296 = scmp.ne.s32.totalorder %s287, %s288
    %p297 = scmp.eq.s32.totalorder %s25, 0
    %p298 = por %p296, %p297
    %p299 = scmp.ne.s32.totalorder %s287, %s288
    %p300 = scmp.eq.s32.totalorder %s26, 1
    %p301 = por %p299, %p300
    %p303 = scmp.ne.s32.totalorder %s288, %s302
    %p304 = scmp.eq.s32.totalorder %s26, 0
    %p305 = por %p303, %p304
    %s307 = sadd.s32 %s306, 1
    %p310 = scmp.eq.s32.totalorder %s20, 1
    %p311 = scmp.ne.s32.totalorder %s306, %s308
    %p312 = scmp.eq.s32.totalorder %s20, 0
    %p313 = por %p311, %p312
    %p314 = scmp.ne.s32.totalorder %s306, %s308
    %p315 = scmp.eq.s32.totalorder %s25, 1
    %p316 = por %p314, %p315
    %p317 = scmp.ne.s32.totalorder %s308, %s309
    %p318 = scmp.eq.s32.totalorder %s25, 0
    %p319 = por %p317, %p318
    %p320 = scmp.ne.s32.totalorder %s308, %s309
    %p321 = scmp.eq.s32.totalorder %s26, 1
    %p322 = por %p320, %p321
    %p324 = scmp.ne.s32.totalorder %s309, %s323
    %p325 = scmp.eq.s32.totalorder %s26, 0
    %p326 = por %p324, %p325
    %s327 = ssub.s32 %s20, %s27
    %p328 = scmp.eq.s32.totalorder %s327, 0
    %s330 = sadd.s32 %s329, 1
    %s331 = scalar_select %p328, %s329, %s330
    %p334 = pneg %p328
    %p335 = scmp.eq.s32.totalorder %s20, 1
    %p336 = por %p334, %p335
    %p337 = scmp.ne.s32.totalorder %s329, %s332
    %p338 = scmp.eq.s32.totalorder %s20, 0
    %p339 = por %p337, %p338
    %p340 = scmp.ne.s32.totalorder %s329, %s332
    %p341 = scmp.eq.s32.totalorder %s25, 1
    %p342 = por %p340, %p341
    %p343 = scmp.ne.s32.totalorder %s332, %s333
    %p344 = scmp.eq.s32.totalorder %s25, 0
    %p345 = por %p343, %p344
    %p346 = scmp.ne.s32.totalorder %s332, %s333
    %p347 = scmp.eq.s32.totalorder %s26, 1
    %p348 = por %p346, %p347
    %p350 = scmp.ne.s32.totalorder %s333, %s349
    %p351 = scmp.eq.s32.totalorder %s26, 0
    %p352 = por %p350, %p351
    %p353 = scmp.le.s32.totalorder 1, %s20
    %p354 = scmp.lt.s32.totalorder %s20, 3
    %p355 = pnand %p353, %p354
    %p356 = pneg %p355
    // Predicated region
    $region9: #{pure_rmt_forward.8} parent=5 // pred_check
      _
    $region10: #{pure_rmt_forward.8} parent=5 // pred_check_branch
      %358 = sbr.rel (%p355) target = $region12
    $region11: #{pure_rmt_forward.8} parent=5 // pred_region
      %s359 = ssub.s32 %s20, 1
      // Predicated region
      $region13: #{pure_rmt_forward.8} parent=11 // pred_check
        %p360 = pneg %p67
      $region14: #{pure_rmt_forward.8} parent=11 // pred_check_branch
        %362 = sbr.rel (%p360) target = $region16
      $region15: #{pure_rmt_forward.8} parent=11 // pred_region
        _
      $region16: #{pure_rmt_forward.8} parent=11 // pred_fallthru
        _
      // Predicated region
      $region17: #{pure_rmt_forward.8} parent=11 // pred_check
        %p363 = pneg %p88
      $region18: #{pure_rmt_forward.8} parent=11 // pred_check_branch
        %365 = sbr.rel (%p363) target = $region20
      $region19: #{pure_rmt_forward.8} parent=11 // pred_region
        _
      $region20: #{pure_rmt_forward.8} parent=11 // pred_fallthru
        _
      // Predicated region
      $region21: #{pure_rmt_forward.8} parent=11 // pred_check
        %p366 = pneg %p109
      $region22: #{pure_rmt_forward.8} parent=11 // pred_check_branch
        %368 = sbr.rel (%p366) target = $region24
      $region23: #{pure_rmt_forward.8} parent=11 // pred_region
        _
      $region24: #{pure_rmt_forward.8} parent=11 // pred_fallthru
        _
      // Predicated region
      $region25: #{pure_rmt_forward.8} parent=11 // pred_check
        %p369 = pneg %p130
      $region26: #{pure_rmt_forward.8} parent=11 // pred_check_branch
        %371 = sbr.rel (%p369) target = $region28
      $region27: #{pure_rmt_forward.8} parent=11 // pred_region
        _
      $region28: #{pure_rmt_forward.8} parent=11 // pred_fallthru
        _
      // Predicated region
      $region29: #{pure_rmt_forward.8} parent=11 // pred_check
        %p372 = pneg %p151
      $region30: #{pure_rmt_forward.8} parent=11 // pred_check_branch
        %374 = sbr.rel (%p372) target = $region32
      $region31: #{pure_rmt_forward.8} parent=11 // pred_region
        _
      $region32: #{pure_rmt_forward.8} parent=11 // pred_fallthru
        _
      // Predicated region
      $region33: #{pure_rmt_forward.8} parent=11 // pred_check
        %p375 = pneg %p172
      $region34: #{pure_rmt_forward.8} parent=11 // pred_check_branch
        %377 = sbr.rel (%p375) target = $region36
      $region35: #{pure_rmt_forward.8} parent=11 // pred_region
        _
      $region36: #{pure_rmt_forward.8} parent=11 // pred_fallthru
        _
      // Predicated region
      $region37: #{pure_rmt_forward.8} parent=11 // pred_check
        %p378 = pneg %p193
      $region38: #{pure_rmt_forward.8} parent=11 // pred_check_branch
        %380 = sbr.rel (%p378) target = $region40
      $region39: #{pure_rmt_forward.8} parent=11 // pred_region
        _
      $region40: #{pure_rmt_forward.8} parent=11 // pred_fallthru
        _
      // Predicated region
      $region41: #{pure_rmt_forward.8} parent=11 // pred_check
        %p381 = pneg %p214
      $region42: #{pure_rmt_forward.8} parent=11 // pred_check_branch
        %383 = sbr.rel (%p381) target = $region44
      $region43: #{pure_rmt_forward.8} parent=11 // pred_region
        _
      $region44: #{pure_rmt_forward.8} parent=11 // pred_fallthru
        _
      // Predicated region
      $region45: #{pure_rmt_forward.8} parent=11 // pred_check
        %p384 = pneg %p235
      $region46: #{pure_rmt_forward.8} parent=11 // pred_check_branch
        %386 = sbr.rel (%p384) target = $region48
      $region47: #{pure_rmt_forward.8} parent=11 // pred_region
        _
      $region48: #{pure_rmt_forward.8} parent=11 // pred_fallthru
        _
      // Predicated region
      $region49: #{pure_rmt_forward.8} parent=11 // pred_check
        %p387 = pneg %p256
      $region50: #{pure_rmt_forward.8} parent=11 // pred_check_branch
        %389 = sbr.rel (%p387) target = $region52
      $region51: #{pure_rmt_forward.8} parent=11 // pred_region
        _
      $region52: #{pure_rmt_forward.8} parent=11 // pred_fallthru
        _
      // Predicated region
      $region53: #{pure_rmt_forward.8} parent=11 // pred_check
        %p390 = pneg %p277
      $region54: #{pure_rmt_forward.8} parent=11 // pred_check_branch
        %392 = sbr.rel (%p390) target = $region56
      $region55: #{pure_rmt_forward.8} parent=11 // pred_region
        _
      $region56: #{pure_rmt_forward.8} parent=11 // pred_fallthru
        _
      // Predicated region
      $region57: #{pure_rmt_forward.8} parent=11 // pred_check
        %p393 = pneg %p298
      $region58: #{pure_rmt_forward.8} parent=11 // pred_check_branch
        %395 = sbr.rel (%p393) target = $region60
      $region59: #{pure_rmt_forward.8} parent=11 // pred_region
        _
      $region60: #{pure_rmt_forward.8} parent=11 // pred_fallthru
        _
      // Predicated region
      $region61: #{pure_rmt_forward.8} parent=11 // pred_check
        %p396 = pneg %p319
      $region62: #{pure_rmt_forward.8} parent=11 // pred_check_branch
        %398 = sbr.rel (%p396) target = $region64
      $region63: #{pure_rmt_forward.8} parent=11 // pred_region
        _
      $region64: #{pure_rmt_forward.8} parent=11 // pred_fallthru
        _
    $region12: #{pure_rmt_forward.8} parent=5 // pred_fallthru
      _
    %p399 = scmp.lt.s32.totalorder %s20, 2
    // Predicated region
    $region65: #{pure_rmt_forward.8} parent=5 // pred_check
      %p400 = pneg %p399
    $region66: #{pure_rmt_forward.8} parent=5 // pred_check_branch
      %402 = sbr.rel (%p400) target = $region68
    $region67: #{pure_rmt_forward.8} parent=5 // pred_region
      // Predicated region
      $region69: #{pure_rmt_forward.8} parent=67 // pred_check
        %p403 = pneg %p40
      $region70: #{pure_rmt_forward.8} parent=67 // pred_check_branch
        %405 = sbr.rel (%p403) target = $region72
      $region71: #{pure_rmt_forward.8} parent=67 // pred_region
        %p406 = scmp.lt.s32.totalorder %s20, 1
        %s407 = scalar_select %p406, %s20, 1
        %s408 = smul.addr %s407, 2
        %s409 = smul.addr %s408, 8
        %s410 = scalar_lea.vmem %s0, %s409
      $region72: #{pure_rmt_forward.8} parent=67 // pred_fallthru
        _
    $region68: #{pure_rmt_forward.8} parent=5 // pred_fallthru
      _
    %p411 = scmp.le.s32.totalorder 1, %s20
    %p412 = scmp.lt.s32.totalorder %s20, 3
    %p413 = pnand %p411, %p412
    %p414 = pneg %p413
    // Predicated region
    $region73: #{pure_rmt_forward.8} parent=5 // pred_check
      _
    $region74: #{pure_rmt_forward.8} parent=5 // pred_check_branch
      %416 = sbr.rel (%p413) target = $region76
    $region75: #{pure_rmt_forward.8} parent=5 // pred_region
      %s417 = ssub.s32 %s20, 1
      %p418 = scmp.lt.s32.totalorder %s25, 1
      %s419 = scalar_select %p418, %s25, 1
      %s420 = smul.addr %s419, 2
      %s421 = smul.addr %s420, 8
      %s422 = scalar_lea.vmem %s0, %s421
      %p423 = pneg %p46
      %p424 = pneg %p43
      %p425 = pneg %p67
      %p426 = pneg %p64
      %p427 = pneg %p88
      %p428 = pneg %p85
      %p429 = pneg %p109
      %p430 = pneg %p106
      %p431 = pneg %p130
      %p432 = pneg %p127
      %p433 = pneg %p151
      %p434 = pneg %p148
      %p435 = pneg %p172
      %p436 = pneg %p169
      %p437 = pneg %p193
      %p438 = pneg %p190
      %p439 = pneg %p214
      %p440 = pneg %p211
      %p441 = pneg %p235
      %p442 = pneg %p232
      %p443 = pneg %p256
      %p444 = pneg %p253
      %p445 = pneg %p277
      %p446 = pneg %p274
      %p447 = pneg %p298
      %p448 = pneg %p295
      %p449 = pneg %p319
      %p450 = pneg %p316
      %p451 = pneg %p345
      %p452 = pneg %p342
      %p453 = scmp.lt.s32.totalorder %s25, 1
      %s454 = scalar_select %p453, %s25, 1
      %s455 = smul.addr %s454, 2
      %s456 = smul.addr %s455, 8
      %s457 = scalar_lea.vmem %s14, %s456
      %p458 = scmp.lt.s32.totalorder %s25, 1
      %s459 = scalar_select %p458, %s25, 1
      %s460 = smul.addr %s459, 2
      %s461 = smul.addr %s460, 8
      %s462 = scalar_lea.vmem %s0, %s461
      %p463 = scmp.lt.s32.totalorder %s25, 1
      %s464 = scalar_select %p463, %s25, 1
      %s465 = smul.addr %s464, 2
      %s466 = smul.addr %s465, 8
      %s467 = scalar_lea.vmem %s14, %s466
      %v469 = vld [vmem:[%s462] sm:$0xff]
      %v470 = vld [vmem:[%s462 + $0x8] sm:$0xff]
      %v471 = vld [vmem:[%s2] sm:$0x1]
      %v472 = vld [vmem:[%s3] sm:$0x1]
      %vm473 = vcmask 261120
      %v474 = vsel %vm473, %v469, 0.0
      %475 = vadd.xlane.f32.xlu0 %v474
      %v476 = vpop.xlane.xlu0 %475
      %v477 = vsel %vm473, %v470, 0.0
      %478 = vadd.xlane.f32.xlu0 %v477
      %v479 = vpop.xlane.xlu0 %478
      %v480 = vrcp.pop 32.0
      %v481 = vmul.f32 %v476, %v480
      %v482 = vmul.f32 %v479, %v480
      %v483 = vsub.f32 %v469, %v481
      %v484 = vsub.f32 %v470, %v482
      %v485 = vmul.f32 %v483, %v483
      %v486 = vmul.f32 %v484, %v484
      %v487 = vsel %vm473, %v485, 0.0
      %488 = vadd.xlane.f32.xlu0 %v487
      %v489 = vpop.xlane.xlu0 %488
      %v490 = vsel %vm473, %v486, 0.0
      %491 = vadd.xlane.f32.xlu0 %v490
      %v492 = vpop.xlane.xlu0 %491
      %v493 = vmul.f32 %v489, %v480
      %v494 = vmul.f32 %v492, %v480
      %v495 = vadd.f32 %v493, 1e-05
      %v496 = vadd.f32 %v494, 1e-05
      %v497 = vrsqrt.pop %v495
      %v498 = vrsqrt.pop %v496
      %v499 = vmul.f32 %v483, %v497
      %v500 = vmul.f32 %v484, %v498
      %v502 = vlaneseq
      %v503 = vshrl.u32 %v502, 7
      %v504 = vsub.s32 0, %v503
      %v505 = vrot.slane %v471, %v504
      %v507 = vmul.f32 %v499, %v505
      %v508 = vmul.f32 %v500, %v505
      %v510 = vlaneseq
      %v511 = vshrl.u32 %v510, 7
      %v512 = vsub.s32 0, %v511
      %v513 = vrot.slane %v472, %v512
      %v515 = vadd.f32 %v507, %v513
      %v516 = vadd.f32 %v508, %v513
      %v517 = vpack.c.bf16 %v516, %v515
      %v518 = vld [vmem:[%s4] sm:$0xf]
      %v519 = vld [vmem:[%s4 + $0x4] sm:$0xf]
      %v520 = vld [vmem:[%s4 + $0x8] sm:$0xf]
      %v521 = vld [vmem:[%s4 + $0xc] sm:$0xf]
      %v522 = vld [vmem:[%s5] sm:$0x1]
      %v524 = vlaneseq
      %v525 = vshrl.u32 %v524, 7
      %v526 = vsub.s32 0, %v525
      %v527 = vrot.slane %v522, %v526
      %v533 = vunpack.c.l.b16 %v518
      %v534 = vunpack.c.l.b16 %v519
      %v535 = vunpack.c.l.b16 %v520
      %v536 = vunpack.c.l.b16 %v521
      %v537 = vpack.c.b16 %v534, %v533
      %v538 = vpack.c.b16 %v536, %v535
      %v542 = vsel %vm473, %v517, 0
      %544 = vmatprep.subr.bf16.mxu0 0
      %545 = vmatpush1.bf16.msra.mxu0 %v537
      %546 = vmatprep.subr.bf16.mxu0 0
      %547 = vmatpush1.bf16.msra.mxu0 %v538
      %548 = vmatprep.subr.bf16.mxu0 0
      %549 = vmatpush1.bf16.msra.mxu0 0
      %550 = vmatprep.subr.bf16.mxu0 0
      %551 = vmatpush1.bf16.msra.mxu0 0
      %552 = vmatprep.subr.bf16.mxu0 0
      %553 = vmatpush1.bf16.msra.mxu0 0
      %554 = vmatprep.subr.bf16.mxu0 0
      %555 = vmatpush1.bf16.msra.mxu0 0
      %556 = vmatprep.subr.bf16.mxu0 0
      %557 = vmatpush1.bf16.msra.mxu0 0
      %558 = vmatprep.subr.bf16.mxu0 0
      %559 = vmatpush1.bf16.msra.mxu0 0
      %560 = vmatprep.subr.bf16.mxu0 0
      %561 = vmatpush1.bf16.msra.mxu0 0
      %562 = vmatprep.subr.bf16.mxu0 0
      %563 = vmatpush1.bf16.msra.mxu0 0
      %564 = vmatprep.subr.bf16.mxu0 0
      %565 = vmatpush1.bf16.msra.mxu0 0
      %566 = vmatprep.subr.bf16.mxu0 0
      %567 = vmatpush1.bf16.msra.mxu0 0
      %568 = vmatprep.subr.bf16.mxu0 0
      %569 = vmatpush1.bf16.msra.mxu0 0
      %570 = vmatprep.subr.bf16.mxu0 0
      %571 = vmatpush1.bf16.msra.mxu0 0
      %572 = vmatprep.subr.bf16.mxu0 0
      %573 = vmatpush1.bf16.msra.mxu0 0
      %574 = vmatprep.subr.bf16.mxu0 0
      %575 = vmatpush1.bf16.msra.mxu0 0
      %576 = vmatprep.mubr.bf16.mxu0 0
      %577 = vmatmul.mubr.bf16.gmra.mrb[0].mxu0 %v542
      %v578 = vpop.f32.mrb[0].mxu0
      %v579 = vadd.f32 %v527, %v578
      %v580 = vpop.f32.mrb[0].mxu0
      %v581 = vpop.f32.mrb[0].mxu0
      %v582 = vadd.f32 %v527, %v581
      %v583 = vpop.f32.mrb[0].mxu0
      %584 = vdwg.mxu0
      %v585 = vmul.f32 %v579, 0.25
      %v586 = vmul.f32 %v582, 0.25
      %v587 = vpack.c.bf16 %v586, %v585
      %v588 = vpack.c.bf16 %v582, %v579
      %v589 = vld [vmem:[%s1] sm:$0xff]
      %v590 = vld [vmem:[%s1 + $0x8] sm:$0xff]
      %592 = vrot.lane.b32.xlu0 %v588, 96
      %v593 = vpop.permute.xlu0 %592
      %vm594 = vcmask 130048
      %v596 = vsel %vm594, %v587, 0
      %v599 = vsel %vm594, %v593, 0
      %601 = vmatprep.subr.bf16.mxu0 0
      %602 = vmatpush1.bf16.xpose.msra.mxu0 %v599
      %603 = vmatprep.subr.bf16.mxu0 0
      %604 = vmatpush1.bf16.xpose.msra.mxu0 0
      %605 = vmatprep.subr.bf16.mxu0 0
      %606 = vmatpush1.bf16.xpose.msra.mxu0 0
      %607 = vmatprep.subr.bf16.mxu0 0
      %608 = vmatpush1.bf16.xpose.msra.mxu0 0
      %609 = vmatprep.subr.bf16.mxu0 0
      %610 = vmatpush1.bf16.xpose.msra.mxu0 0
      %611 = vmatprep.subr.bf16.mxu0 0
      %612 = vmatpush1.bf16.xpose.msra.mxu0 0
      %613 = vmatprep.subr.bf16.mxu0 0
      %614 = vmatpush1.bf16.xpose.msra.mxu0 0
      %615 = vmatprep.subr.bf16.mxu0 0
      %616 = vmatpush1.bf16.xpose.msra.mxu0 0
      %617 = vmatprep.subr.bf16.mxu0 0
      %618 = vmatpush1.bf16.xpose.msra.mxu0 0
      %619 = vmatprep.subr.bf16.mxu0 0
      %620 = vmatpush1.bf16.xpose.msra.mxu0 0
      %621 = vmatprep.subr.bf16.mxu0 0
      %622 = vmatpush1.bf16.xpose.msra.mxu0 0
      %623 = vmatprep.subr.bf16.mxu0 0
      %624 = vmatpush1.bf16.xpose.msra.mxu0 0
      %625 = vmatprep.subr.bf16.mxu0 0
      %626 = vmatpush1.bf16.xpose.msra.mxu0 0
      %627 = vmatprep.subr.bf16.mxu0 0
      %628 = vmatpush1.bf16.xpose.msra.mxu0 0
      %629 = vmatprep.subr.bf16.mxu0 0
      %630 = vmatpush1.bf16.xpose.msra.mxu0 0
      %631 = vmatprep.subr.bf16.mxu0 0
      %632 = vmatpush1.bf16.xpose.msra.mxu0 0
      %633 = vmatprep.mubr.bf16.mxu0 0
      %634 = vmatmul.mubr.bf16.gmra.mrb[0].mxu0 %v596
      %v635 = vpop.f32.mrb[0].mxu0
      %v636 = vadd.f32 %v589, %v635
      %v637 = vpop.f32.mrb[0].mxu0
      %v638 = vpop.f32.mrb[0].mxu0
      %v639 = vadd.f32 %v590, %v638
      %v640 = vpop.f32.mrb[0].mxu0
      %641 = vdwg.mxu0
      %v642 = vsel %vm594, %v636, -inf
      %643 = vmax.xlane.f32.xlu0 %v642
      %v644 = vpop.xlane.xlu0 %643
      %v645 = vsel %vm594, %v639, -inf
      %646 = vmax.xlane.f32.xlu0 %v645
      %v647 = vpop.xlane.xlu0 %646
      %v648 = vsub.f32 %v636, %v644
      %v649 = vsub.f32 %v639, %v647
      %v650 = vmul.f32 %v648, 1.442695
      %v651 = vpow.pop %v650
      %v652 = vmul.f32 %v649, 1.442695
      %v653 = vpow.pop %v652
      %v654 = vsel %vm594, %v651, 0.0
      %655 = vadd.xlane.f32.xlu0 %v654
      %v656 = vpop.xlane.xlu0 %655
      %v657 = vsel %vm594, %v653, 0.0
      %658 = vadd.xlane.f32.xlu0 %v657
      %v659 = vpop.xlane.xlu0 %658
      %v660 = vrcp.pop %v656
      %v661 = vrcp.pop %v659
      %v662 = vmul.f32 %v651, %v660
      %v663 = vmul.f32 %v653, %v661
      %v664 = vpack.c.bf16 %v663, %v662
      %665 = vrot.lane.b32.xlu0 %v588, 64
      %v666 = vpop.permute.xlu0 %665
      %v669 = vsel %vm594, %v664, 0
      %671 = vmatprep.subr.bf16.mxu0 0
      %672 = vmatpush1.bf16.msra.mxu0 %v666
      %673 = vmatprep.subr.bf16.mxu0 0
      %674 = vmatpush1.bf16.msra.mxu0 0
      %675 = vmatprep.subr.bf16.mxu0 0
      %676 = vmatpush1.bf16.msra.mxu0 0
      %677 = vmatprep.subr.bf16.mxu0 0
      %678 = vmatpush1.bf16.msra.mxu0 0
      %679 = vmatprep.subr.bf16.mxu0 0
      %680 = vmatpush1.bf16.msra.mxu0 0
      %681 = vmatprep.subr.bf16.mxu0 0
      %682 = vmatpush1.bf16.msra.mxu0 0
      %683 = vmatprep.subr.bf16.mxu0 0
      %684 = vmatpush1.bf16.msra.mxu0 0
      %685 = vmatprep.subr.bf16.mxu0 0
      %686 = vmatpush1.bf16.msra.mxu0 0
      %687 = vmatprep.subr.bf16.mxu0 0
      %688 = vmatpush1.bf16.msra.mxu0 0
      %689 = vmatprep.subr.bf16.mxu0 0
      %690 = vmatpush1.bf16.msra.mxu0 0
      %691 = vmatprep.subr.bf16.mxu0 0
      %692 = vmatpush1.bf16.msra.mxu0 0
      %693 = vmatprep.subr.bf16.mxu0 0
      %694 = vmatpush1.bf16.msra.mxu0 0
      %695 = vmatprep.subr.bf16.mxu0 0
      %696 = vmatpush1.bf16.msra.mxu0 0
      %697 = vmatprep.subr.bf16.mxu0 0
      %698 = vmatpush1.bf16.msra.mxu0 0
      %699 = vmatprep.subr.bf16.mxu0 0
      %700 = vmatpush1.bf16.msra.mxu0 0
      %701 = vmatprep.subr.bf16.mxu0 0
      %702 = vmatpush1.bf16.msra.mxu0 0
      %703 = vmatprep.mubr.bf16.mxu0 0
      %704 = vmatmul.mubr.bf16.gmra.mrb[0].mxu0 %v669
      %v705 = vpop.f32.mrb[0].mxu0
      %v706 = vadd.f32 0.0, %v705
      %v707 = vpop.f32.mrb[0].mxu0
      %v708 = vpop.f32.mrb[0].mxu0
      %v709 = vadd.f32 0.0, %v708
      %v710 = vpop.f32.mrb[0].mxu0
      %711 = vdwg.mxu0
      %s712 = scalar_lea.vmem %s1, 16
      %v713 = vld [vmem:[%s712] sm:$0xff]
      %v714 = vld [vmem:[%s712 + $0x8] sm:$0xff]
      %716 = vrot.lane.b32.xlu0 %v587, 112
      %v717 = vpop.permute.xlu0 %716
      %718 = vrot.lane.b32.xlu0 %v588, 80
      %v719 = vpop.permute.xlu0 %718
      %v721 = vsel %vm594, %v717, 0
      %v724 = vsel %vm594, %v719, 0
      %726 = vmatprep.subr.bf16.mxu0 0
      %727 = vmatpush1.bf16.xpose.msra.mxu0 %v724
      %728 = vmatprep.subr.bf16.mxu0 0
      %729 = vmatpush1.bf16.xpose.msra.mxu0 0
      %730 = vmatprep.subr.bf16.mxu0 0
      %731 = vmatpush1.bf16.xpose.msra.mxu0 0
      %732 = vmatprep.subr.bf16.mxu0 0
      %733 = vmatpush1.bf16.xpose.msra.mxu0 0
      %734 = vmatprep.subr.bf16.mxu0 0
      %735 = vmatpush1.bf16.xpose.msra.mxu0 0
      %736 = vmatprep.subr.bf16.mxu0 0
      %737 = vmatpush1.bf16.xpose.msra.mxu0 0
      %738 = vmatprep.subr.bf16.mxu0 0
      %739 = vmatpush1.bf16.xpose.msra.mxu0 0
      %740 = vmatprep.subr.bf16.mxu0 0
      %741 = vmatpush1.bf16.xpose.msra.mxu0 0
      %742 = vmatprep.subr.bf16.mxu0 0
      %743 = vmatpush1.bf16.xpose.msra.mxu0 0
      %744 = vmatprep.subr.bf16.mxu0 0
      %745 = vmatpush1.bf16.xpose.msra.mxu0 0
      %746 = vmatprep.subr.bf16.mxu0 0
      %747 = vmatpush1.bf16.xpose.msra.mxu0 0
      %748 = vmatprep.subr.bf16.mxu0 0
      %749 = vmatpush1.bf16.xpose.msra.mxu0 0
      %750 = vmatprep.subr.bf16.mxu0 0
      %751 = vmatpush1.bf16.xpose.msra.mxu0 0
      %752 = vmatprep.subr.bf16.mxu0 0
      %753 = vmatpush1.bf16.xpose.msra.mxu0 0
      %754 = vmatprep.subr.bf16.mxu0 0
      %755 = vmatpush1.bf16.xpose.msra.mxu0 0
      %756 = vmatprep.subr.bf16.mxu0 0
      %757 = vmatpush1.bf16.xpose.msra.mxu0 0
      %758 = vmatprep.mubr.bf16.mxu0 0
      %759 = vmatmul.mubr.bf16.gmra.mrb[0].mxu0 %v721
      %v760 = vpop.f32.mrb[0].mxu0
      %v761 = vadd.f32 %v713, %v760
      %v762 = vpop.f32.mrb[0].mxu0
      %v763 = vpop.f32.mrb[0].mxu0
      %v764 = vadd.f32 %v714, %v763
      %v765 = vpop.f32.mrb[0].mxu0
      %766 = vdwg.mxu0
      %v767 = vsel %vm594, %v761, -inf
      %768 = vmax.xlane.f32.xlu0 %v767
      %v769 = vpop.xlane.xlu0 %768
      %v770 = vsel %vm594, %v764, -inf
      %771 = vmax.xlane.f32.xlu0 %v770
      %v772 = vpop.xlane.xlu0 %771
      %v773 = vsub.f32 %v761, %v769
      %v774 = vsub.f32 %v764, %v772
      %v775 = vmul.f32 %v773, 1.442695
      %v776 = vpow.pop %v775
      %v777 = vmul.f32 %v774, 1.442695
      %v778 = vpow.pop %v777
      %v779 = vsel %vm594, %v776, 0.0
      %780 = vadd.xlane.f32.xlu0 %v779
      %v781 = vpop.xlane.xlu0 %780
      %v782 = vsel %vm594, %v778, 0.0
      %783 = vadd.xlane.f32.xlu0 %v782
      %v784 = vpop.xlane.xlu0 %783
      %v785 = vrcp.pop %v781
      %v786 = vrcp.pop %v784
      %v787 = vmul.f32 %v776, %v785
      %v788 = vmul.f32 %v778, %v786
      %v789 = vpack.c.bf16 %v788, %v787
      %790 = vrot.lane.b32.xlu0 %v588, 48
      %v791 = vpop.permute.xlu0 %790
      %v794 = vsel %vm594, %v789, 0
      %796 = vmatprep.subr.bf16.mxu0 0
      %797 = vmatpush1.bf16.msra.mxu0 %v791
      %798 = vmatprep.subr.bf16.mxu0 0
      %799 = vmatpush1.bf16.msra.mxu0 0
      %800 = vmatprep.subr.bf16.mxu0 0
      %801 = vmatpush1.bf16.msra.mxu0 0
      %802 = vmatprep.subr.bf16.mxu0 0
      %803 = vmatpush1.bf16.msra.mxu0 0
      %804 = vmatprep.subr.bf16.mxu0 0
      %805 = vmatpush1.bf16.msra.mxu0 0
      %806 = vmatprep.subr.bf16.mxu0 0
      %807 = vmatpush1.bf16.msra.mxu0 0
      %808 = vmatprep.subr.bf16.mxu0 0
      %809 = vmatpush1.bf16.msra.mxu0 0
      %810 = vmatprep.subr.bf16.mxu0 0
      %811 = vmatpush1.bf16.msra.mxu0 0
      %812 = vmatprep.subr.bf16.mxu0 0
      %813 = vmatpush1.bf16.msra.mxu0 0
      %814 = vmatprep.subr.bf16.mxu0 0
      %815 = vmatpush1.bf16.msra.mxu0 0
      %816 = vmatprep.subr.bf16.mxu0 0
      %817 = vmatpush1.bf16.msra.mxu0 0
      %818 = vmatprep.subr.bf16.mxu0 0
      %819 = vmatpush1.bf16.msra.mxu0 0
      %820 = vmatprep.subr.bf16.mxu0 0
      %821 = vmatpush1.bf16.msra.mxu0 0
      %822 = vmatprep.subr.bf16.mxu0 0
      %823 = vmatpush1.bf16.msra.mxu0 0
      %824 = vmatprep.subr.bf16.mxu0 0
      %825 = vmatpush1.bf16.msra.mxu0 0
      %826 = vmatprep.subr.bf16.mxu0 0
      %827 = vmatpush1.bf16.msra.mxu0 0
      %828 = vmatprep.mubr.bf16.mxu0 0
      %829 = vmatmul.mubr.bf16.gmra.mrb[0].mxu0 %v794
      %v830 = vpop.f32.mrb[0].mxu0
      %v831 = vadd.f32 0.0, %v830
      %v832 = vpop.f32.mrb[0].mxu0
      %v833 = vpop.f32.mrb[0].mxu0
      %v834 = vadd.f32 0.0, %v833
      %v835 = vpop.f32.mrb[0].mxu0
      %836 = vdwg.mxu0
      %839 = vrot.lane.b32.xlu0 %v831, 16
      %v840 = vpop.permute.xlu0 %839
      %841 = vrot.lane.b32.xlu0 %v834, 16
      %v842 = vpop.permute.xlu0 %841
      %v845 = vsel %vm594, %v706, %v840
      %v846 = vsel %vm594, %v709, %v842
      %v847 = vpack.c.bf16 %v846, %v845
      %v848 = vld [vmem:[%s6] sm:$0xf]
      %v849 = vld [vmem:[%s6 + $0x4] sm:$0xf]
      %v850 = vld [vmem:[%s6 + $0x8] sm:$0xf]
      %v851 = vld [vmem:[%s6 + $0xc] sm:$0xf]
      %v852 = vld [vmem:[%s7] sm:$0x1]
      %v854 = vlaneseq
      %v855 = vshrl.u32 %v854, 7
      %v856 = vsub.s32 0, %v855
      %v857 = vrot.slane %v852, %v856
      %v863 = vunpack.c.l.b16 %v848
      %v864 = vunpack.c.l.b16 %v849
      %v865 = vunpack.c.l.b16 %v850
      %v866 = vunpack.c.l.b16 %v851
      %v867 = vpack.c.b16 %v864, %v863
      %v868 = vpack.c.b16 %v866, %v865
      %v872 = vsel %vm473, %v847, 0
      %874 = vmatprep.subr.bf16.mxu0 0
      %875 = vmatpush1.bf16.msra.mxu0 %v867
      %876 = vmatprep.subr.bf16.mxu0 0
      %877 = vmatpush1.bf16.msra.mxu0 %v868
      %878 = vmatprep.subr.bf16.mxu0 0
      %879 = vmatpush1.bf16.msra.mxu0 0
      %880 = vmatprep.subr.bf16.mxu0 0
      %881 = vmatpush1.bf16.msra.mxu0 0
      %882 = vmatprep.subr.bf16.mxu0 0
      %883 = vmatpush1.bf16.msra.mxu0 0
      %884 = vmatprep.subr.bf16.mxu0 0
      %885 = vmatpush1.bf16.msra.mxu0 0
      %886 = vmatprep.subr.bf16.mxu0 0
      %887 = vmatpush1.bf16.msra.mxu0 0
      %888 = vmatprep.subr.bf16.mxu0 0
      %889 = vmatpush1.bf16.msra.mxu0 0
      %890 = vmatprep.subr.bf16.mxu0 0
      %891 = vmatpush1.bf16.msra.mxu0 0
      %892 = vmatprep.subr.bf16.mxu0 0
      %893 = vmatpush1.bf16.msra.mxu0 0
      %894 = vmatprep.subr.bf16.mxu0 0
      %895 = vmatpush1.bf16.msra.mxu0 0
      %896 = vmatprep.subr.bf16.mxu0 0
      %897 = vmatpush1.bf16.msra.mxu0 0
      %898 = vmatprep.subr.bf16.mxu0 0
      %899 = vmatpush1.bf16.msra.mxu0 0
      %900 = vmatprep.subr.bf16.mxu0 0
      %901 = vmatpush1.bf16.msra.mxu0 0
      %902 = vmatprep.subr.bf16.mxu0 0
      %903 = vmatpush1.bf16.msra.mxu0 0
      %904 = vmatprep.subr.bf16.mxu0 0
      %905 = vmatpush1.bf16.msra.mxu0 0
      %906 = vmatprep.mubr.bf16.mxu0 0
      %907 = vmatmul.mubr.bf16.gmra.mrb[0].mxu0 %v872
      %v908 = vpop.f32.mrb[0].mxu0
      %v909 = vadd.f32 %v857, %v908
      %v910 = vpop.f32.mrb[0].mxu0
      %v911 = vpop.f32.mrb[0].mxu0
      %v912 = vadd.f32 %v857, %v911
      %v913 = vpop.f32.mrb[0].mxu0
      %914 = vdwg.mxu0
      %v915 = vadd.f32 %v469, %v909
      %v916 = vadd.f32 %v470, %v912
      %v917 = vld [vmem:[%s8] sm:$0x1]
      %v918 = vld [vmem:[%s9] sm:$0x1]
      %v919 = vsel %vm473, %v915, 0.0
      %920 = vadd.xlane.f32.xlu0 %v919
      %v921 = vpop.xlane.xlu0 %920
      %v922 = vsel %vm473, %v916, 0.0
      %923 = vadd.xlane.f32.xlu0 %v922
      %v924 = vpop.xlane.xlu0 %923
      %v925 = vmul.f32 %v921, %v480
      %v926 = vmul.f32 %v924, %v480
      %v927 = vsub.f32 %v915, %v925
      %v928 = vsub.f32 %v916, %v926
      %v929 = vmul.f32 %v927, %v927
      %v930 = vmul.f32 %v928, %v928
      %v931 = vsel %vm473, %v929, 0.0
      %932 = vadd.xlane.f32.xlu0 %v931
      %v933 = vpop.xlane.xlu0 %932
      %v934 = vsel %vm473, %v930, 0.0
      %935 = vadd.xlane.f32.xlu0 %v934
      %v936 = vpop.xlane.xlu0 %935
      %v937 = vmul.f32 %v933, %v480
      %v938 = vmul.f32 %v936, %v480
      %v939 = vadd.f32 %v937, 1e-05
      %v940 = vadd.f32 %v938, 1e-05
      %v941 = vrsqrt.pop %v939
      %v942 = vrsqrt.pop %v940
      %v943 = vmul.f32 %v927, %v941
      %v944 = vmul.f32 %v928, %v942
      %v946 = vlaneseq
      %v947 = vshrl.u32 %v946, 7
      %v948 = vsub.s32 0, %v947
      %v949 = vrot.slane %v917, %v948
      %v951 = vmul.f32 %v943, %v949
      %v952 = vmul.f32 %v944, %v949
      %v954 = vlaneseq
      %v955 = vshrl.u32 %v954, 7
      %v956 = vsub.s32 0, %v955
      %v957 = vrot.slane %v918, %v956
      %v959 = vadd.f32 %v951, %v957
      %v960 = vadd.f32 %v952, %v957
      %v961 = vpack.c.bf16 %v960, %v959
      %v962 = vld [vmem:[%s10] sm:$0xf]
      %v963 = vld [vmem:[%s10 + $0x4] sm:$0xf]
      %v964 = vld [vmem:[%s10 + $0x8] sm:$0xf]
      %v965 = vld [vmem:[%s10 + $0xc] sm:$0xf]
      %v966 = vld [vmem:[%s11] sm:$0x1]
      %v968 = vlaneseq
      %v969 = vshrl.u32 %v968, 7
      %v970 = vsub.s32 0, %v969
      %v971 = vrot.slane %v966, %v970
      %v977 = vunpack.c.l.b16 %v962
      %v978 = vunpack.c.l.b16 %v963
      %v979 = vunpack.c.l.b16 %v964
      %v980 = vunpack.c.l.b16 %v965
      %v981 = vpack.c.b16 %v978, %v977
      %v982 = vpack.c.b16 %v980, %v979
      %v986 = vsel %vm473, %v961, 0
      %988 = vmatprep.subr.bf16.mxu0 0
      %989 = vmatpush1.bf16.msra.mxu0 %v981
      %990 = vmatprep.subr.bf16.mxu0 0
      %991 = vmatpush1.bf16.msra.mxu0 %v982
      %992 = vmatprep.subr.bf16.mxu0 0
      %993 = vmatpush1.bf16.msra.mxu0 0
      %994 = vmatprep.subr.bf16.mxu0 0
      %995 = vmatpush1.bf16.msra.mxu0 0
      %996 = vmatprep.subr.bf16.mxu0 0
      %997 = vmatpush1.bf16.msra.mxu0 0
      %998 = vmatprep.subr.bf16.mxu0 0
      %999 = vmatpush1.bf16.msra.mxu0 0
      %1000 = vmatprep.subr.bf16.mxu0 0
      %1001 = vmatpush1.bf16.msra.mxu0 0
      %1002 = vmatprep.subr.bf16.mxu0 0
      %1003 = vmatpush1.bf16.msra.mxu0 0
      %1004 = vmatprep.subr.bf16.mxu0 0
      %1005 = vmatpush1.bf16.msra.mxu0 0
      %1006 = vmatprep.subr.bf16.mxu0 0
      %1007 = vmatpush1.bf16.msra.mxu0 0
      %1008 = vmatprep.subr.bf16.mxu0 0
      %1009 = vmatpush1.bf16.msra.mxu0 0
      %1010 = vmatprep.subr.bf16.mxu0 0
      %1011 = vmatpush1.bf16.msra.mxu0 0
      %1012 = vmatprep.subr.bf16.mxu0 0
      %1013 = vmatpush1.bf16.msra.mxu0 0
      %1014 = vmatprep.subr.bf16.mxu0 0
      %1015 = vmatpush1.bf16.msra.mxu0 0
      %1016 = vmatprep.subr.bf16.mxu0 0
      %1017 = vmatpush1.bf16.msra.mxu0 0
      %1018 = vmatprep.subr.bf16.mxu0 0
      %1019 = vmatpush1.bf16.msra.mxu0 0
      %1020 = vmatprep.mubr.bf16.mxu0 0
      %1021 = vmatmul.mubr.bf16.gmra.mrb[0].mxu0 %v986
      %v1022 = vpop.f32.mrb[0].mxu0
      %v1023 = vadd.f32 %v971, %v1022
      %v1024 = vpop.f32.mrb[0].mxu0
      %v1025 = vpop.f32.mrb[0].mxu0
      %v1026 = vadd.f32 %v971, %v1025
      %v1027 = vpop.f32.mrb[0].mxu0
      %1028 = vdwg.mxu0
      %v1029 = vmul.f32 %v1023, %v1023
      %v1030 = vmul.f32 %v1026, %v1026
      %v1031 = vmul.f32 %v1023, %v1029
      %v1032 = vmul.f32 %v1026, %v1030
      %v1033 = vmul.f32 %v1031, 0.044715
      %v1034 = vmul.f32 %v1032, 0.044715
      %v1035 = vadd.f32 %v1023, %v1033
      %v1036 = vadd.f32 %v1026, %v1034
      %v1037 = vmul.f32 %v1035, 0.7978846
      %v1038 = vmul.f32 %v1036, 0.7978846
      %v1039 = vtanh.pop %v1037
      %v1040 = vtanh.pop %v1038
      %v1041 = vadd.f32 %v1039, 1.0
      %v1042 = vadd.f32 %v1040, 1.0
      %v1043 = vmul.f32 %v1041, 0.5
      %v1044 = vmul.f32 %v1042, 0.5
      %v1045 = vmul.f32 %v1023, %v1043
      %v1046 = vmul.f32 %v1026, %v1044
      %v1047 = vpack.c.bf16 %v1046, %v1045
      %v1048 = vld [vmem:[%s12] sm:$0xf]
      %v1049 = vld [vmem:[%s12 + $0x4] sm:$0xf]
      %v1050 = vld [vmem:[%s12 + $0x8] sm:$0xf]
      %v1051 = vld [vmem:[%s12 + $0xc] sm:$0xf]
      %v1052 = vld [vmem:[%s12 + $0x10] sm:$0xf]
      %v1053 = vld [vmem:[%s12 + $0x14] sm:$0xf]
      %v1054 = vld [vmem:[%s12 + $0x18] sm:$0xf]
      %v1055 = vld [vmem:[%s12 + $0x1c] sm:$0xf]
      %v1056 = vld [vmem:[%s13] sm:$0x1]
      %v1058 = vlaneseq
      %v1059 = vshrl.u32 %v1058, 7
      %v1060 = vsub.s32 0, %v1059
      %v1061 = vrot.slane %v1056, %v1060
      %v1071 = vunpack.c.l.b16 %v1048
      %v1072 = vunpack.c.l.b16 %v1049
      %v1073 = vunpack.c.l.b16 %v1050
      %v1074 = vunpack.c.l.b16 %v1051
      %v1075 = vunpack.c.l.b16 %v1052
      %v1076 = vunpack.c.l.b16 %v1053
      %v1077 = vunpack.c.l.b16 %v1054
      %v1078 = vunpack.c.l.b16 %v1055
      %v1079 = vpack.c.b16 %v1072, %v1071
      %v1080 = vpack.c.b16 %v1074, %v1073
      %v1081 = vpack.c.b16 %v1076, %v1075
      %v1082 = vpack.c.b16 %v1078, %v1077
      %vm1087 = vcmask 523264
      %v1089 = vsel %vm1087, %v1047, 0
      %1091 = vmatprep.subr.bf16.mxu0 0
      %1092 = vmatpush1.bf16.msra.mxu0 %v1079
      %1093 = vmatprep.subr.bf16.mxu0 0
      %1094 = vmatpush1.bf16.msra.mxu0 %v1080
      %1095 = vmatprep.subr.bf16.mxu0 0
      %1096 = vmatpush1.bf16.msra.mxu0 %v1081
      %1097 = vmatprep.subr.bf16.mxu0 0
      %1098 = vmatpush1.bf16.msra.mxu0 %v1082
      %1099 = vmatprep.subr.bf16.mxu0 0
      %1100 = vmatpush1.bf16.msra.mxu0 0
      %1101 = vmatprep.subr.bf16.mxu0 0
      %1102 = vmatpush1.bf16.msra.mxu0 0
      %1103 = vmatprep.subr.bf16.mxu0 0
      %1104 = vmatpush1.bf16.msra.mxu0 0
      %1105 = vmatprep.subr.bf16.mxu0 0
      %1106 = vmatpush1.bf16.msra.mxu0 0
      %1107 = vmatprep.subr.bf16.mxu0 0
      %1108 = vmatpush1.bf16.msra.mxu0 0
      %1109 = vmatprep.subr.bf16.mxu0 0
      %1110 = vmatpush1.bf16.msra.mxu0 0
      %1111 = vmatprep.subr.bf16.mxu0 0
      %1112 = vmatpush1.bf16.msra.mxu0 0
      %1113 = vmatprep.subr.bf16.mxu0 0
      %1114 = vmatpush1.bf16.msra.mxu0 0
      %1115 = vmatprep.subr.bf16.mxu0 0
      %1116 = vmatpush1.bf16.msra.mxu0 0
      %1117 = vmatprep.subr.bf16.mxu0 0
      %1118 = vmatpush1.bf16.msra.mxu0 0
      %1119 = vmatprep.subr.bf16.mxu0 0
      %1120 = vmatpush1.bf16.msra.mxu0 0
      %1121 = vmatprep.subr.bf16.mxu0 0
      %1122 = vmatpush1.bf16.msra.mxu0 0
      %1123 = vmatprep.mubr.bf16.mxu0 0
      %1124 = vmatmul.mubr.bf16.gmra.mrb[0].mxu0 %v1089
      %v1125 = vpop.f32.mrb[0].mxu0
      %v1126 = vadd.f32 %v1061, %v1125
      %v1127 = vpop.f32.mrb[0].mxu0
      %v1128 = vpop.f32.mrb[0].mxu0
      %v1129 = vadd.f32 %v1061, %v1128
      %v1130 = vpop.f32.mrb[0].mxu0
      %1131 = vdwg.mxu0
      %v1132 = vadd.f32 %v915, %v1126
      %v1133 = vadd.f32 %v916, %v1129
      %1134 = vst.msk [vmem:[%s467] sm:$0xff] %vm473, %v1132
      %1135 = vst.msk [vmem:[%s467 + $0x8] sm:$0xff] %vm473, %v1133
      %p1136 = scmp.lt.s32.totalorder %s25, 1
      %s1137 = scalar_select %p1136, %s25, 1
      %s1138 = smul.addr %s1137, 2
      %s1139 = smul.addr %s1138, 8
      %s1140 = scalar_lea.vmem %s14, %s1139
      // Predicated region
      $region77: #{pure_rmt_forward.8} parent=75 // pred_check
        %p1141 = pneg %p342
      $region78: #{pure_rmt_forward.8} parent=75 // pred_check_branch
        %1143 = sbr.rel (%p1141) target = $region80
      $region79: #{pure_rmt_forward.8} parent=75 // pred_region
        _
      $region80: #{pure_rmt_forward.8} parent=75 // pred_fallthru
        _
    $region76: #{pure_rmt_forward.8} parent=5 // pred_fallthru
      _
    %p1144 = scmp.le.s32.totalorder 2, %s20
    // Predicated region
    $region81: #{pure_rmt_forward.8} parent=5 // pred_check
      %p1145 = pneg %p1144
    $region82: #{pure_rmt_forward.8} parent=5 // pred_check_branch
      %1147 = sbr.rel (%p1145) target = $region84
    $region83: #{pure_rmt_forward.8} parent=5 // pred_region
      %s1148 = ssub.s32 %s20, 2
      // Predicated region
      $region85: #{pure_rmt_forward.8} parent=83 // pred_check
        %p1149 = pneg %p348
      $region86: #{pure_rmt_forward.8} parent=83 // pred_check_branch
        %1151 = sbr.rel (%p1149) target = $region88
      $region87: #{pure_rmt_forward.8} parent=83 // pred_region
        %p1152 = scmp.lt.s32.totalorder %s26, 1
        %s1153 = scalar_select %p1152, %s26, 1
        %s1154 = smul.addr %s1153, 2
        %s1155 = smul.addr %s1154, 8
        %s1156 = scalar_lea.vmem %s14, %s1155
      $region88: #{pure_rmt_forward.8} parent=83 // pred_fallthru
        _
    $region84: #{pure_rmt_forward.8} parent=5 // pred_fallthru
      _
  $region6: #{pure_rmt_forward.8} parent=0 // loop_footer
    %s24 = sadd.s32 1, %s20
  $region7: #{pure_rmt_forward.8} parent=0 // loop_footer_branch
    %19 = sbr.rel target = $region3
  $region8: #{pure_rmt_forward.8} parent=0 // loop_exit
    _

// kernel: pure_rmt_forward.12
$region0: #{pure_rmt_forward.12}
  #allocation0 [shape = 'u32[]', space=smem, size = 0x4, offset = 0x4, fixed_abs, tag = 'smem constant byte address 0x4 - core index']
  #allocation1 [shape = 'u32[144,128]{1,0:T(1,128)}', space=vmem, size = 0x12000, scoped, tag = 'internal scratch']
  %s0 = inlined_call_operand.vmem [shape: f32[2,4,64], index: 0, kind: input, shape index: {}]
  %s1 = inlined_call_operand.vmem [shape: f32[4,4,4], index: 1, kind: input, shape index: {}]
  %s2 = inlined_call_operand.vmem [shape: f32[1,64], index: 2, kind: input, shape index: {}]
  %s3 = inlined_call_operand.vmem [shape: f32[1,64], index: 3, kind: input, shape index: {}]
  %s4 = inlined_call_operand.vmem [shape: bf16[64,192], index: 4, kind: input, shape index: {}]
  %s5 = inlined_call_operand.vmem [shape: f32[1,192], index: 5, kind: input, shape index: {}]
  %s6 = inlined_call_operand.vmem [shape: bf16[64,64], index: 6, kind: input, shape index: {}]
  %s7 = inlined_call_operand.vmem [shape: f32[1,64], index: 7, kind: input, shape index: {}]
  %s8 = inlined_call_operand.vmem [shape: f32[1,64], index: 8, kind: input, shape index: {}]
  %s9 = inlined_call_operand.vmem [shape: f32[1,64], index: 9, kind: input, shape index: {}]
  %s10 = inlined_call_operand.vmem [shape: bf16[64,128], index: 10, kind: input, shape index: {}]
  %s11 = inlined_call_operand.vmem [shape: f32[1,128], index: 11, kind: input, shape index: {}]
  %s12 = inlined_call_operand.vmem [shape: bf16[128,64], index: 12, kind: input, shape index: {}]
  %s13 = inlined_call_operand.vmem [shape: f32[1,64], index: 13, kind: input, shape index: {}]
  %s14 = inlined_call_operand.vmem [shape: f32[2,4,64], index: 14, kind: output, shape index: {}]
  %s15 = sld [smem:[#allocation0]]
  $region89: #{pure_rmt_forward.12} parent=0
    _
  %s17 = ssub.s32 1, %s15
  %s18 = scalar_select 0, %s17, %s15
  loop: start=0, step=1, limit=4
  $region2: #{pure_rmt_forward.12} parent=0 // loop_pre_header
    _
  $region3: #{pure_rmt_forward.12} parent=0 // loop_header
    %s20 = sphi 0, %s24
    %p21 = scmp.ge.s32.totalorder %s20, 4
    %s30 = sphi 0, %s32
    %s33 = sphi 0, %s30
    %s34 = sphi 0, %s33
    %s50 = sphi 0, %s34
    %s54 = sphi 0, %s54
    %s56 = sphi 0, %s54
    %s57 = sphi 0, %s56
    %s71 = sphi 0, %s57
    %s75 = sphi 0, %s75
    %s77 = sphi 0, %s75
    %s78 = sphi 0, %s77
    %s92 = sphi 0, %s78
    %s96 = sphi 0, %s96
    %s98 = sphi 0, %s96
    %s99 = sphi 0, %s98
    %s113 = sphi 0, %s99
    %s117 = sphi 0, %s117
    %s119 = sphi 0, %s117
    %s120 = sphi 0, %s119
    %s134 = sphi 0, %s120
    %s138 = sphi 0, %s138
    %s140 = sphi 0, %s138
    %s141 = sphi 0, %s140
    %s155 = sphi 0, %s141
    %s159 = sphi 0, %s159
    %s161 = sphi 0, %s159
    %s162 = sphi 0, %s161
    %s176 = sphi 0, %s162
    %s180 = sphi 0, %s180
    %s182 = sphi 0, %s180
    %s183 = sphi 0, %s182
    %s197 = sphi 0, %s183
    %s201 = sphi 0, %s201
    %s203 = sphi 0, %s201
    %s204 = sphi 0, %s203
    %s218 = sphi 0, %s204
    %s222 = sphi 0, %s222
    %s224 = sphi 0, %s222
    %s225 = sphi 0, %s224
    %s239 = sphi 0, %s225
    %s243 = sphi 0, %s243
    %s245 = sphi 0, %s243
    %s246 = sphi 0, %s245
    %s260 = sphi 0, %s246
    %s264 = sphi 0, %s264
    %s266 = sphi 0, %s264
    %s267 = sphi 0, %s266
    %s281 = sphi 0, %s267
    %s285 = sphi 0, %s285
    %s287 = sphi 0, %s285
    %s288 = sphi 0, %s287
    %s302 = sphi 0, %s288
    %s306 = sphi 0, %s306
    %s308 = sphi 0, %s306
    %s309 = sphi 0, %s308
    %s323 = sphi 0, %s309
    %s329 = sphi 0, %s331
    %s332 = sphi 0, %s329
    %s333 = sphi 0, %s332
    %s349 = sphi 0, %s333
  $region4: #{pure_rmt_forward.12} parent=0 // loop_header_branch
    %23 = sbr.rel (%p21) target = $region8
  $region5: #{pure_rmt_forward.12} parent=0 // loop_body
    %s25 = ssub.s32 %s20, 1
    %s26 = ssub.s32 %s20, 2
    %s27 = sadd.s32 %s20, 1
    %s28 = ssub.s32 %s20, %s27
    %p29 = scmp.eq.s32.totalorder %s28, 0
    %s31 = sadd.s32 %s30, 1
    %s32 = scalar_select %p29, %s30, %s31
    %p35 = pneg %p29
    %p36 = scmp.eq.s32.totalorder %s20, 1
    %p37 = por %p35, %p36
    %p38 = scmp.ne.s32.totalorder %s30, %s33
    %p39 = scmp.eq.s32.totalorder %s20, 0
    %p40 = por %p38, %p39
    %p41 = scmp.ne.s32.totalorder %s30, %s33
    %p42 = scmp.eq.s32.totalorder %s25, 1
    %p43 = por %p41, %p42
    %p44 = scmp.ne.s32.totalorder %s33, %s34
    %p45 = scmp.eq.s32.totalorder %s25, 0
    %p46 = por %p44, %p45
    %p47 = scmp.ne.s32.totalorder %s33, %s34
    %p48 = scmp.eq.s32.totalorder %s26, 1
    %p49 = por %p47, %p48
    %p51 = scmp.ne.s32.totalorder %s34, %s50
    %p52 = scmp.eq.s32.totalorder %s26, 0
    %p53 = por %p51, %p52
    %s55 = sadd.s32 %s54, 1
    %p58 = scmp.eq.s32.totalorder %s20, 1
    %p59 = scmp.ne.s32.totalorder %s54, %s56
    %p60 = scmp.eq.s32.totalorder %s20, 0
    %p61 = por %p59, %p60
    %p62 = scmp.ne.s32.totalorder %s54, %s56
    %p63 = scmp.eq.s32.totalorder %s25, 1
    %p64 = por %p62, %p63
    %p65 = scmp.ne.s32.totalorder %s56, %s57
    %p66 = scmp.eq.s32.totalorder %s25, 0
    %p67 = por %p65, %p66
    %p68 = scmp.ne.s32.totalorder %s56, %s57
    %p69 = scmp.eq.s32.totalorder %s26, 1
    %p70 = por %p68, %p69
    %p72 = scmp.ne.s32.totalorder %s57, %s71
    %p73 = scmp.eq.s32.totalorder %s26, 0
    %p74 = por %p72, %p73
    %s76 = sadd.s32 %s75, 1
    %p79 = scmp.eq.s32.totalorder %s20, 1
    %p80 = scmp.ne.s32.totalorder %s75, %s77
    %p81 = scmp.eq.s32.totalorder %s20, 0
    %p82 = por %p80, %p81
    %p83 = scmp.ne.s32.totalorder %s75, %s77
    %p84 = scmp.eq.s32.totalorder %s25, 1
    %p85 = por %p83, %p84
    %p86 = scmp.ne.s32.totalorder %s77, %s78
    %p87 = scmp.eq.s32.totalorder %s25, 0
    %p88 = por %p86, %p87
    %p89 = scmp.ne.s32.totalorder %s77, %s78
    %p90 = scmp.eq.s32.totalorder %s26, 1
    %p91 = por %p89, %p90
    %p93 = scmp.ne.s32.totalorder %s78, %s92
    %p94 = scmp.eq.s32.totalorder %s26, 0
    %p95 = por %p93, %p94
    %s97 = sadd.s32 %s96, 1
    %p100 = scmp.eq.s32.totalorder %s20, 1
    %p101 = scmp.ne.s32.totalorder %s96, %s98
    %p102 = scmp.eq.s32.totalorder %s20, 0
    %p103 = por %p101, %p102
    %p104 = scmp.ne.s32.totalorder %s96, %s98
    %p105 = scmp.eq.s32.totalorder %s25, 1
    %p106 = por %p104, %p105
    %p107 = scmp.ne.s32.totalorder %s98, %s99
    %p108 = scmp.eq.s32.totalorder %s25, 0
    %p109 = por %p107, %p108
    %p110 = scmp.ne.s32.totalorder %s98, %s99
    %p111 = scmp.eq.s32.totalorder %s26, 1
    %p112 = por %p110, %p111
    %p114 = scmp.ne.s32.totalorder %s99, %s113
    %p115 = scmp.eq.s32.totalorder %s26, 0
    %p116 = por %p114, %p115
    %s118 = sadd.s32 %s117, 1
    %p121 = scmp.eq.s32.totalorder %s20, 1
    %p122 = scmp.ne.s32.totalorder %s117, %s119
    %p123 = scmp.eq.s32.totalorder %s20, 0
    %p124 = por %p122, %p123
    %p125 = scmp.ne.s32.totalorder %s117, %s119
    %p126 = scmp.eq.s32.totalorder %s25, 1
    %p127 = por %p125, %p126
    %p128 = scmp.ne.s32.totalorder %s119, %s120
    %p129 = scmp.eq.s32.totalorder %s25, 0
    %p130 = por %p128, %p129
    %p131 = scmp.ne.s32.totalorder %s119, %s120
    %p132 = scmp.eq.s32.totalorder %s26, 1
    %p133 = por %p131, %p132
    %p135 = scmp.ne.s32.totalorder %s120, %s134
    %p136 = scmp.eq.s32.totalorder %s26, 0
    %p137 = por %p135, %p136
    %s139 = sadd.s32 %s138, 1
    %p142 = scmp.eq.s32.totalorder %s20, 1
    %p143 = scmp.ne.s32.totalorder %s138, %s140
    %p144 = scmp.eq.s32.totalorder %s20, 0
    %p145 = por %p143, %p144
    %p146 = scmp.ne.s32.totalorder %s138, %s140
    %p147 = scmp.eq.s32.totalorder %s25, 1
    %p148 = por %p146, %p147
    %p149 = scmp.ne.s32.totalorder %s140, %s141
    %p150 = scmp.eq.s32.totalorder %s25, 0
    %p151 = por %p149, %p150
    %p152 = scmp.ne.s32.totalorder %s140, %s141
    %p153 = scmp.eq.s32.totalorder %s26, 1
    %p154 = por %p152, %p153
    %p156 = scmp.ne.s32.totalorder %s141, %s155
    %p157 = scmp.eq.s32.totalorder %s26, 0
    %p158 = por %p156, %p157
    %s160 = sadd.s32 %s159, 1
    %p163 = scmp.eq.s32.totalorder %s20, 1
    %p164 = scmp.ne.s32.totalorder %s159, %s161
    %p165 = scmp.eq.s32.totalorder %s20, 0
    %p166 = por %p164, %p165
    %p167 = scmp.ne.s32.totalorder %s159, %s161
    %p168 = scmp.eq.s32.totalorder %s25, 1
    %p169 = por %p167, %p168
    %p170 = scmp.ne.s32.totalorder %s161, %s162
    %p171 = scmp.eq.s32.totalorder %s25, 0
    %p172 = por %p170, %p171
    %p173 = scmp.ne.s32.totalorder %s161, %s162
    %p174 = scmp.eq.s32.totalorder %s26, 1
    %p175 = por %p173, %p174
    %p177 = scmp.ne.s32.totalorder %s162, %s176
    %p178 = scmp.eq.s32.totalorder %s26, 0
    %p179 = por %p177, %p178
    %s181 = sadd.s32 %s180, 1
    %p184 = scmp.eq.s32.totalorder %s20, 1
    %p185 = scmp.ne.s32.totalorder %s180, %s182
    %p186 = scmp.eq.s32.totalorder %s20, 0
    %p187 = por %p185, %p186
    %p188 = scmp.ne.s32.totalorder %s180, %s182
    %p189 = scmp.eq.s32.totalorder %s25, 1
    %p190 = por %p188, %p189
    %p191 = scmp.ne.s32.totalorder %s182, %s183
    %p192 = scmp.eq.s32.totalorder %s25, 0
    %p193 = por %p191, %p192
    %p194 = scmp.ne.s32.totalorder %s182, %s183
    %p195 = scmp.eq.s32.totalorder %s26, 1
    %p196 = por %p194, %p195
    %p198 = scmp.ne.s32.totalorder %s183, %s197
    %p199 = scmp.eq.s32.totalorder %s26, 0
    %p200 = por %p198, %p199
    %s202 = sadd.s32 %s201, 1
    %p205 = scmp.eq.s32.totalorder %s20, 1
    %p206 = scmp.ne.s32.totalorder %s201, %s203
    %p207 = scmp.eq.s32.totalorder %s20, 0
    %p208 = por %p206, %p207
    %p209 = scmp.ne.s32.totalorder %s201, %s203
    %p210 = scmp.eq.s32.totalorder %s25, 1
    %p211 = por %p209, %p210
    %p212 = scmp.ne.s32.totalorder %s203, %s204
    %p213 = scmp.eq.s32.totalorder %s25, 0
    %p214 = por %p212, %p213
    %p215 = scmp.ne.s32.totalorder %s203, %s204
    %p216 = scmp.eq.s32.totalorder %s26, 1
    %p217 = por %p215, %p216
    %p219 = scmp.ne.s32.totalorder %s204, %s218
    %p220 = scmp.eq.s32.totalorder %s26, 0
    %p221 = por %p219, %p220
    %s223 = sadd.s32 %s222, 1
    %p226 = scmp.eq.s32.totalorder %s20, 1
    %p227 = scmp.ne.s32.totalorder %s222, %s224
    %p228 = scmp.eq.s32.totalorder %s20, 0
    %p229 = por %p227, %p228
    %p230 = scmp.ne.s32.totalorder %s222, %s224
    %p231 = scmp.eq.s32.totalorder %s25, 1
    %p232 = por %p230, %p231
    %p233 = scmp.ne.s32.totalorder %s224, %s225
    %p234 = scmp.eq.s32.totalorder %s25, 0
    %p235 = por %p233, %p234
    %p236 = scmp.ne.s32.totalorder %s224, %s225
    %p237 = scmp.eq.s32.totalorder %s26, 1
    %p238 = por %p236, %p237
    %p240 = scmp.ne.s32.totalorder %s225, %s239
    %p241 = scmp.eq.s32.totalorder %s26, 0
    %p242 = por %p240, %p241
    %s244 = sadd.s32 %s243, 1
    %p247 = scmp.eq.s32.totalorder %s20, 1
    %p248 = scmp.ne.s32.totalorder %s243, %s245
    %p249 = scmp.eq.s32.totalorder %s20, 0
    %p250 = por %p248, %p249
    %p251 = scmp.ne.s32.totalorder %s243, %s245
    %p252 = scmp.eq.s32.totalorder %s25, 1
    %p253 = por %p251, %p252
    %p254 = scmp.ne.s32.totalorder %s245, %s246
    %p255 = scmp.eq.s32.totalorder %s25, 0
    %p256 = por %p254, %p255
    %p257 = scmp.ne.s32.totalorder %s245, %s246
    %p258 = scmp.eq.s32.totalorder %s26, 1
    %p259 = por %p257, %p258
    %p261 = scmp.ne.s32.totalorder %s246, %s260
    %p262 = scmp.eq.s32.totalorder %s26, 0
    %p263 = por %p261, %p262
    %s265 = sadd.s32 %s264, 1
    %p268 = scmp.eq.s32.totalorder %s20, 1
    %p269 = scmp.ne.s32.totalorder %s264, %s266
    %p270 = scmp.eq.s32.totalorder %s20, 0
    %p271 = por %p269, %p270
    %p272 = scmp.ne.s32.totalorder %s264, %s266
    %p273 = scmp.eq.s32.totalorder %s25, 1
    %p274 = por %p272, %p273
    %p275 = scmp.ne.s32.totalorder %s266, %s267
    %p276 = scmp.eq.s32.totalorder %s25, 0
    %p277 = por %p275, %p276
    %p278 = scmp.ne.s32.totalorder %s266, %s267
    %p279 = scmp.eq.s32.totalorder %s26, 1
    %p280 = por %p278, %p279
    %p282 = scmp.ne.s32.totalorder %s267, %s281
    %p283 = scmp.eq.s32.totalorder %s26, 0
    %p284 = por %p282, %p283
    %s286 = sadd.s32 %s285, 1
    %p289 = scmp.eq.s32.totalorder %s20, 1
    %p290 = scmp.ne.s32.totalorder %s285, %s287
    %p291 = scmp.eq.s32.totalorder %s20, 0
    %p292 = por %p290, %p291
    %p293 = scmp.ne.s32.totalorder %s285, %s287
    %p294 = scmp.eq.s32.totalorder %s25, 1
    %p295 = por %p293, %p294
    %p296 = scmp.ne.s32.totalorder %s287, %s288
    %p297 = scmp.eq.s32.totalorder %s25, 0
    %p298 = por %p296, %p297
    %p299 = scmp.ne.s32.totalorder %s287, %s288
    %p300 = scmp.eq.s32.totalorder %s26, 1
    %p301 = por %p299, %p300
    %p303 = scmp.ne.s32.totalorder %s288, %s302
    %p304 = scmp.eq.s32.totalorder %s26, 0
    %p305 = por %p303, %p304
    %s307 = sadd.s32 %s306, 1
    %p310 = scmp.eq.s32.totalorder %s20, 1
    %p311 = scmp.ne.s32.totalorder %s306, %s308
    %p312 = scmp.eq.s32.totalorder %s20, 0
    %p313 = por %p311, %p312
    %p314 = scmp.ne.s32.totalorder %s306, %s308
    %p315 = scmp.eq.s32.totalorder %s25, 1
    %p316 = por %p314, %p315
    %p317 = scmp.ne.s32.totalorder %s308, %s309
    %p318 = scmp.eq.s32.totalorder %s25, 0
    %p319 = por %p317, %p318
    %p320 = scmp.ne.s32.totalorder %s308, %s309
    %p321 = scmp.eq.s32.totalorder %s26, 1
    %p322 = por %p320, %p321
    %p324 = scmp.ne.s32.totalorder %s309, %s323
    %p325 = scmp.eq.s32.totalorder %s26, 0
    %p326 = por %p324, %p325
    %s327 = ssub.s32 %s20, %s27
    %p328 = scmp.eq.s32.totalorder %s327, 0
    %s330 = sadd.s32 %s329, 1
    %s331 = scalar_select %p328, %s329, %s330
    %p334 = pneg %p328
    %p335 = scmp.eq.s32.totalorder %s20, 1
    %p336 = por %p334, %p335
    %p337 = scmp.ne.s32.totalorder %s329, %s332
    %p338 = scmp.eq.s32.totalorder %s20, 0
    %p339 = por %p337, %p338
    %p340 = scmp.ne.s32.totalorder %s329, %s332
    %p341 = scmp.eq.s32.totalorder %s25, 1
    %p342 = por %p340, %p341
    %p343 = scmp.ne.s32.totalorder %s332, %s333
    %p344 = scmp.eq.s32.totalorder %s25, 0
    %p345 = por %p343, %p344
    %p346 = scmp.ne.s32.totalorder %s332, %s333
    %p347 = scmp.eq.s32.totalorder %s26, 1
    %p348 = por %p346, %p347
    %p350 = scmp.ne.s32.totalorder %s333, %s349
    %p351 = scmp.eq.s32.totalorder %s26, 0
    %p352 = por %p350, %p351
    %p353 = scmp.le.s32.totalorder 1, %s20
    %p354 = scmp.lt.s32.totalorder %s20, 3
    %p355 = pnand %p353, %p354
    %p356 = pneg %p355
    // Predicated region
    $region9: #{pure_rmt_forward.12} parent=5 // pred_check
      _
    $region10: #{pure_rmt_forward.12} parent=5 // pred_check_branch
      %358 = sbr.rel (%p355) target = $region12
    $region11: #{pure_rmt_forward.12} parent=5 // pred_region
      %s359 = ssub.s32 %s20, 1
      // Predicated region
      $region13: #{pure_rmt_forward.12} parent=11 // pred_check
        %p360 = pneg %p67
      $region14: #{pure_rmt_forward.12} parent=11 // pred_check_branch
        %362 = sbr.rel (%p360) target = $region16
      $region15: #{pure_rmt_forward.12} parent=11 // pred_region
        _
      $region16: #{pure_rmt_forward.12} parent=11 // pred_fallthru
        _
      // Predicated region
      $region17: #{pure_rmt_forward.12} parent=11 // pred_check
        %p363 = pneg %p88
      $region18: #{pure_rmt_forward.12} parent=11 // pred_check_branch
        %365 = sbr.rel (%p363) target = $region20
      $region19: #{pure_rmt_forward.12} parent=11 // pred_region
        _
      $region20: #{pure_rmt_forward.12} parent=11 // pred_fallthru
        _
      // Predicated region
      $region21: #{pure_rmt_forward.12} parent=11 // pred_check
        %p366 = pneg %p109
      $region22: #{pure_rmt_forward.12} parent=11 // pred_check_branch
        %368 = sbr.rel (%p366) target = $region24
      $region23: #{pure_rmt_forward.12} parent=11 // pred_region
        _
      $region24: #{pure_rmt_forward.12} parent=11 // pred_fallthru
        _
      // Predicated region
      $region25: #{pure_rmt_forward.12} parent=11 // pred_check
        %p369 = pneg %p130
      $region26: #{pure_rmt_forward.12} parent=11 // pred_check_branch
        %371 = sbr.rel (%p369) target = $region28
      $region27: #{pure_rmt_forward.12} parent=11 // pred_region
        _
      $region28: #{pure_rmt_forward.12} parent=11 // pred_fallthru
        _
      // Predicated region
      $region29: #{pure_rmt_forward.12} parent=11 // pred_check
        %p372 = pneg %p151
      $region30: #{pure_rmt_forward.12} parent=11 // pred_check_branch
        %374 = sbr.rel (%p372) target = $region32
      $region31: #{pure_rmt_forward.12} parent=11 // pred_region
        _
      $region32: #{pure_rmt_forward.12} parent=11 // pred_fallthru
        _
      // Predicated region
      $region33: #{pure_rmt_forward.12} parent=11 // pred_check
        %p375 = pneg %p172
      $region34: #{pure_rmt_forward.12} parent=11 // pred_check_branch
        %377 = sbr.rel (%p375) target = $region36
      $region35: #{pure_rmt_forward.12} parent=11 // pred_region
        _
      $region36: #{pure_rmt_forward.12} parent=11 // pred_fallthru
        _
      // Predicated region
      $region37: #{pure_rmt_forward.12} parent=11 // pred_check
        %p378 = pneg %p193
      $region38: #{pure_rmt_forward.12} parent=11 // pred_check_branch
        %380 = sbr.rel (%p378) target = $region40
      $region39: #{pure_rmt_forward.12} parent=11 // pred_region
        _
      $region40: #{pure_rmt_forward.12} parent=11 // pred_fallthru
        _
      // Predicated region
      $region41: #{pure_rmt_forward.12} parent=11 // pred_check
        %p381 = pneg %p214
      $region42: #{pure_rmt_forward.12} parent=11 // pred_check_branch
        %383 = sbr.rel (%p381) target = $region44
      $region43: #{pure_rmt_forward.12} parent=11 // pred_region
        _
      $region44: #{pure_rmt_forward.12} parent=11 // pred_fallthru
        _
      // Predicated region
      $region45: #{pure_rmt_forward.12} parent=11 // pred_check
        %p384 = pneg %p235
      $region46: #{pure_rmt_forward.12} parent=11 // pred_check_branch
        %386 = sbr.rel (%p384) target = $region48
      $region47: #{pure_rmt_forward.12} parent=11 // pred_region
        _
      $region48: #{pure_rmt_forward.12} parent=11 // pred_fallthru
        _
      // Predicated region
      $region49: #{pure_rmt_forward.12} parent=11 // pred_check
        %p387 = pneg %p256
      $region50: #{pure_rmt_forward.12} parent=11 // pred_check_branch
        %389 = sbr.rel (%p387) target = $region52
      $region51: #{pure_rmt_forward.12} parent=11 // pred_region
        _
      $region52: #{pure_rmt_forward.12} parent=11 // pred_fallthru
        _
      // Predicated region
      $region53: #{pure_rmt_forward.12} parent=11 // pred_check
        %p390 = pneg %p277
      $region54: #{pure_rmt_forward.12} parent=11 // pred_check_branch
        %392 = sbr.rel (%p390) target = $region56
      $region55: #{pure_rmt_forward.12} parent=11 // pred_region
        _
      $region56: #{pure_rmt_forward.12} parent=11 // pred_fallthru
        _
      // Predicated region
      $region57: #{pure_rmt_forward.12} parent=11 // pred_check
        %p393 = pneg %p298
      $region58: #{pure_rmt_forward.12} parent=11 // pred_check_branch
        %395 = sbr.rel (%p393) target = $region60
      $region59: #{pure_rmt_forward.12} parent=11 // pred_region
        _
      $region60: #{pure_rmt_forward.12} parent=11 // pred_fallthru
        _
      // Predicated region
      $region61: #{pure_rmt_forward.12} parent=11 // pred_check
        %p396 = pneg %p319
      $region62: #{pure_rmt_forward.12} parent=11 // pred_check_branch
        %398 = sbr.rel (%p396) target = $region64
      $region63: #{pure_rmt_forward.12} parent=11 // pred_region
        _
      $region64: #{pure_rmt_forward.12} parent=11 // pred_fallthru
        _
    $region12: #{pure_rmt_forward.12} parent=5 // pred_fallthru
      _
    %p399 = scmp.lt.s32.totalorder %s20, 2
    // Predicated region
    $region65: #{pure_rmt_forward.12} parent=5 // pred_check
      %p400 = pneg %p399
    $region66: #{pure_rmt_forward.12} parent=5 // pred_check_branch
      %402 = sbr.rel (%p400) target = $region68
    $region67: #{pure_rmt_forward.12} parent=5 // pred_region
      // Predicated region
      $region69: #{pure_rmt_forward.12} parent=67 // pred_check
        %p403 = pneg %p40
      $region70: #{pure_rmt_forward.12} parent=67 // pred_check_branch
        %405 = sbr.rel (%p403) target = $region72
      $region71: #{pure_rmt_forward.12} parent=67 // pred_region
        %p406 = scmp.lt.s32.totalorder %s20, 1
        %s407 = scalar_select %p406, %s20, 1
        %s408 = smul.addr %s407, 4
        %s409 = scalar_lea.vmem %s0, %s408
      $region72: #{pure_rmt_forward.12} parent=67 // pred_fallthru
        _
    $region68: #{pure_rmt_forward.12} parent=5 // pred_fallthru
      _
    %p410 = scmp.le.s32.totalorder 1, %s20
    %p411 = scmp.lt.s32.totalorder %s20, 3
    %p412 = pnand %p410, %p411
    %p413 = pneg %p412
    // Predicated region
    $region73: #{pure_rmt_forward.12} parent=5 // pred_check
      _
    $region74: #{pure_rmt_forward.12} parent=5 // pred_check_branch
      %415 = sbr.rel (%p412) target = $region76
    $region75: #{pure_rmt_forward.12} parent=5 // pred_region
      %s416 = ssub.s32 %s20, 1
      %p417 = scmp.lt.s32.totalorder %s25, 1
      %s418 = scalar_select %p417, %s25, 1
      %s419 = smul.addr %s418, 4
      %s420 = scalar_lea.vmem %s0, %s419
      %p421 = pneg %p46
      %p422 = pneg %p43
      %p423 = pneg %p67
      %p424 = pneg %p64
      %p425 = pneg %p88
      %p426 = pneg %p85
      %p427 = pneg %p109
      %p428 = pneg %p106
      %p429 = pneg %p130
      %p430 = pneg %p127
      %p431 = pneg %p151
      %p432 = pneg %p148
      %p433 = pneg %p172
      %p434 = pneg %p169
      %p435 = pneg %p193
      %p436 = pneg %p190
      %p437 = pneg %p214
      %p438 = pneg %p211
      %p439 = pneg %p235
      %p440 = pneg %p232
      %p441 = pneg %p256
      %p442 = pneg %p253
      %p443 = pneg %p277
      %p444 = pneg %p274
      %p445 = pneg %p298
      %p446 = pneg %p295
      %p447 = pneg %p319
      %p448 = pneg %p316
      %p449 = pneg %p345
      %p450 = pneg %p342
      %p451 = scmp.lt.s32.totalorder %s25, 1
      %s452 = scalar_select %p451, %s25, 1
      %s453 = smul.addr %s452, 4
      %s454 = scalar_lea.vmem %s14, %s453
      %p455 = scmp.lt.s32.totalorder %s25, 1
      %s456 = scalar_select %p455, %s25, 1
      %s457 = smul.addr %s456, 4
      %s458 = scalar_lea.vmem %s0, %s457
      %p459 = scmp.lt.s32.totalorder %s25, 1
      %s460 = scalar_select %p459, %s25, 1
      %s461 = smul.addr %s460, 4
      %s462 = scalar_lea.vmem %s14, %s461
      %v464 = vld [vmem:[%s458] sm:$0xf]
      %v465 = vld [vmem:[%s2] sm:$0x1]
      %v466 = vld [vmem:[%s3] sm:$0x1]
      %vm467 = vcmask 519168
      %v468 = vsel %vm467, %v464, 0.0
      %469 = vadd.xlane.f32.xlu0 %v468
      %v470 = vpop.xlane.xlu0 %469
      %v471 = vrcp.pop 64.0
      %v472 = vmul.f32 %v470, %v471
      %v473 = vsub.f32 %v464, %v472
      %v474 = vmul.f32 %v473, %v473
      %v475 = vsel %vm467, %v474, 0.0
      %476 = vadd.xlane.f32.xlu0 %v475
      %v477 = vpop.xlane.xlu0 %476
      %v478 = vmul.f32 %v477, %v471
      %v479 = vadd.f32 %v478, 1e-05
      %v480 = vrsqrt.pop %v479
      %v481 = vmul.f32 %v473, %v480
      %v483 = vlaneseq
      %v484 = vshrl.u32 %v483, 7
      %v485 = vsub.s32 0, %v484
      %v486 = vrot.slane %v465, %v485
      %v488 = vmul.f32 %v481, %v486
      %v490 = vlaneseq
      %v491 = vshrl.u32 %v490, 7
      %v492 = vsub.s32 0, %v491
      %v493 = vrot.slane %v466, %v492
      %v495 = vadd.f32 %v488, %v493
      %v496 = vpack.c.bf16 %v495, %v495
      %v497 = vld [vmem:[%s4] sm:$0xff]
      %v498 = vld [vmem:[%s4 + $0x8] sm:$0xff]
      %v499 = vld [vmem:[%s4 + $0x10] sm:$0xff]
      %v500 = vld [vmem:[%s4 + $0x18] sm:$0xff]
      %v501 = vld [vmem:[%s4 + $0x20] sm:$0xff]
      %v502 = vld [vmem:[%s4 + $0x28] sm:$0xff]
      %v503 = vld [vmem:[%s4 + $0x30] sm:$0xff]
      %v504 = vld [vmem:[%s4 + $0x38] sm:$0xff]
      %v505 = vld [vmem:[%s5] sm:$0x3]
      %v507 = vlaneseq
      %v508 = vshrl.u32 %v507, 7
      %v509 = vsub.s32 0, %v508
      %v510 = vrot.slane %v505, %v509
      %v511 = vlaneseq
      %v512 = vshrl.u32 %v511, 7
      %v513 = vsub.s32 1, %v512
      %v514 = vrot.slane %v505, %v513
      %v525 = vunpack.c.l.b16 %v497
      %v526 = vunpack.c.h.b16 %v497
      %v527 = vunpack.c.l.b16 %v498
      %v528 = vunpack.c.h.b16 %v498
      %v529 = vunpack.c.l.b16 %v499
      %v530 = vunpack.c.h.b16 %v499
      %v531 = vunpack.c.l.b16 %v500
      %v532 = vunpack.c.h.b16 %v500
      %v533 = vunpack.c.l.b16 %v501
      %v534 = vunpack.c.h.b16 %v501
      %v535 = vunpack.c.l.b16 %v502
      %v536 = vunpack.c.h.b16 %v502
      %v537 = vunpack.c.l.b16 %v503
      %v538 = vunpack.c.h.b16 %v503
      %v539 = vunpack.c.l.b16 %v504
      %v540 = vunpack.c.h.b16 %v504
      %v541 = vpack.c.b16 %v527, %v525
      %v542 = vpack.c.b16 %v528, %v526
      %v543 = vpack.c.b16 %v531, %v529
      %v544 = vpack.c.b16 %v532, %v530
      %v545 = vpack.c.b16 %v535, %v533
      %v546 = vpack.c.b16 %v536, %v534
      %v547 = vpack.c.b16 %v539, %v537
      %v548 = vpack.c.b16 %v540, %v538
      %vm557 = vcmask 523264
      %v559 = vsel %vm557, %v496, 0
      %561 = vmatprep.subr.bf16.mxu0 %v542
      %562 = vmatpush1.bf16.msra.mxu0 %v541
      %563 = vmatprep.subr.bf16.mxu0 %v544
      %564 = vmatpush1.bf16.msra.mxu0 %v543
      %565 = vmatprep.subr.bf16.mxu0 %v546
      %566 = vmatpush1.bf16.msra.mxu0 %v545
      %567 = vmatprep.subr.bf16.mxu0 %v548
      %568 = vmatpush1.bf16.msra.mxu0 %v547
      %569 = vmatprep.subr.bf16.mxu0 0
      %570 = vmatpush1.bf16.msra.mxu0 0
      %571 = vmatprep.subr.bf16.mxu0 0
      %572 = vmatpush1.bf16.msra.mxu0 0
      %573 = vmatprep.subr.bf16.mxu0 0
      %574 = vmatpush1.bf16.msra.mxu0 0
      %575 = vmatprep.subr.bf16.mxu0 0
      %576 = vmatpush1.bf16.msra.mxu0 0
      %577 = vmatprep.subr.bf16.mxu0 0
      %578 = vmatpush1.bf16.msra.mxu0 0
      %579 = vmatprep.subr.bf16.mxu0 0
      %580 = vmatpush1.bf16.msra.mxu0 0
      %581 = vmatprep.subr.bf16.mxu0 0
      %582 = vmatpush1.bf16.msra.mxu0 0
      %583 = vmatprep.subr.bf16.mxu0 0
      %584 = vmatpush1.bf16.msra.mxu0 0
      %585 = vmatprep.subr.bf16.mxu0 0
      %586 = vmatpush1.bf16.msra.mxu0 0
      %587 = vmatprep.subr.bf16.mxu0 0
      %588 = vmatpush1.bf16.msra.mxu0 0
      %589 = vmatprep.subr.bf16.mxu0 0
      %590 = vmatpush1.bf16.msra.mxu0 0
      %591 = vmatprep.subr.bf16.mxu0 0
      %592 = vmatpush1.bf16.msra.mxu0 0
      %593 = vmatprep.mubr.bf16.mxu0 0
      %594 = vmatmul.mubr.bf16.gmra.mrb[0].mxu0 %v559
      %v595 = vpop.f32.mrb[0].mxu0
      %v596 = vadd.f32 %v510, %v595
      %v597 = vpop.f32.mrb[0].mxu0
      %v598 = vadd.f32 %v514, %v597
      %v599 = vpop.f32.mrb[0].mxu0
      %v600 = vpop.f32.mrb[0].mxu0
      %601 = vdwg.mxu0
      %v602 = vmul.f32 %v596, 0.25
      %v603 = vpack.c.bf16 %v602, %v602
      %v604 = vpack.c.bf16 %v596, %v596
      %v605 = vpack.c.bf16 %v598, %v598
      %v606 = vld [vmem:[%s1] sm:$0xf]
      %608 = vrot.lane.b32.xlu0 %v604, 64
      %v609 = vpop.permute.xlu0 %608
      %vm610 = vcmask 130048
      %v612 = vsel %vm610, %v603, 0
      %v615 = vsel %vm610, %v609, 0
      %617 = vmatprep.subr.bf16.mxu0 0
      %618 = vmatpush1.bf16.xpose.msra.mxu0 %v615
      %619 = vmatprep.subr.bf16.mxu0 0
      %620 = vmatpush1.bf16.xpose.msra.mxu0 0
      %621 = vmatprep.subr.bf16.mxu0 0
      %622 = vmatpush1.bf16.xpose.msra.mxu0 0
      %623 = vmatprep.subr.bf16.mxu0 0
      %624 = vmatpush1.bf16.xpose.msra.mxu0 0
      %625 = vmatprep.subr.bf16.mxu0 0
      %626 = vmatpush1.bf16.xpose.msra.mxu0 0
      %627 = vmatprep.subr.bf16.mxu0 0
      %628 = vmatpush1.bf16.xpose.msra.mxu0 0
      %629 = vmatprep.subr.bf16.mxu0 0
      %630 = vmatpush1.bf16.xpose.msra.mxu0 0
      %631 = vmatprep.subr.bf16.mxu0 0
      %632 = vmatpush1.bf16.xpose.msra.mxu0 0
      %633 = vmatprep.subr.bf16.mxu0 0
      %634 = vmatpush1.bf16.xpose.msra.mxu0 0
      %635 = vmatprep.subr.bf16.mxu0 0
      %636 = vmatpush1.bf16.xpose.msra.mxu0 0
      %637 = vmatprep.subr.bf16.mxu0 0
      %638 = vmatpush1.bf16.xpose.msra.mxu0 0
      %639 = vmatprep.subr.bf16.mxu0 0
      %640 = vmatpush1.bf16.xpose.msra.mxu0 0
      %641 = vmatprep.subr.bf16.mxu0 0
      %642 = vmatpush1.bf16.xpose.msra.mxu0 0
      %643 = vmatprep.subr.bf16.mxu0 0
      %644 = vmatpush1.bf16.xpose.msra.mxu0 0
      %645 = vmatprep.subr.bf16.mxu0 0
      %646 = vmatpush1.bf16.xpose.msra.mxu0 0
      %647 = vmatprep.subr.bf16.mxu0 0
      %648 = vmatpush1.bf16.xpose.msra.mxu0 0
      %649 = vmatprep.mubr.bf16.mxu0 0
      %650 = vmatmul.mubr.bf16.gmra.mrb[0].mxu0 %v612
      %v651 = vpop.f32.mrb[0].mxu0
      %v652 = vadd.f32 %v606, %v651
      %v653 = vpop.f32.mrb[0].mxu0
      %v654 = vpop.f32.mrb[0].mxu0
      %v655 = vpop.f32.mrb[0].mxu0
      %656 = vdwg.mxu0
      %vm657 = vcmask 27648
      %v658 = vsel %vm657, %v652, -inf
      %659 = vmax.xlane.f32.xlu0 %v658
      %v660 = vpop.xlane.xlu0 %659
      %v661 = vsub.f32 %v652, %v660
      %v662 = vmul.f32 %v661, 1.442695
      %v663 = vpow.pop %v662
      %v664 = vsel %vm657, %v663, 0.0
      %665 = vadd.xlane.f32.xlu0 %v664
      %v666 = vpop.xlane.xlu0 %665
      %v667 = vrcp.pop %v666
      %v668 = vmul.f32 %v663, %v667
      %v669 = vpack.c.bf16 %v668, %v668
      %vm670 = vcmask 31744
      %v672 = vsel %vm670, %v669, 0
      %vm674 = vcmask 1041408
      %v676 = vsel %vm674, %v605, 0
      %678 = vmatprep.subr.bf16.mxu0 0
      %679 = vmatpush1.bf16.msra.mxu0 %v676
      %680 = vmatprep.subr.bf16.mxu0 0
      %681 = vmatpush1.bf16.msra.mxu0 0
      %682 = vmatprep.subr.bf16.mxu0 0
      %683 = vmatpush1.bf16.msra.mxu0 0
      %684 = vmatprep.subr.bf16.mxu0 0
      %685 = vmatpush1.bf16.msra.mxu0 0
      %686 = vmatprep.subr.bf16.mxu0 0
      %687 = vmatpush1.bf16.msra.mxu0 0
      %688 = vmatprep.subr.bf16.mxu0 0
      %689 = vmatpush1.bf16.msra.mxu0 0
      %690 = vmatprep.subr.bf16.mxu0 0
      %691 = vmatpush1.bf16.msra.mxu0 0
      %692 = vmatprep.subr.bf16.mxu0 0
      %693 = vmatpush1.bf16.msra.mxu0 0
      %694 = vmatprep.subr.bf16.mxu0 0
      %695 = vmatpush1.bf16.msra.mxu0 0
      %696 = vmatprep.subr.bf16.mxu0 0
      %697 = vmatpush1.bf16.msra.mxu0 0
      %698 = vmatprep.subr.bf16.mxu0 0
      %699 = vmatpush1.bf16.msra.mxu0 0
      %700 = vmatprep.subr.bf16.mxu0 0
      %701 = vmatpush1.bf16.msra.mxu0 0
      %702 = vmatprep.subr.bf16.mxu0 0
      %703 = vmatpush1.bf16.msra.mxu0 0
      %704 = vmatprep.subr.bf16.mxu0 0
      %705 = vmatpush1.bf16.msra.mxu0 0
      %706 = vmatprep.subr.bf16.mxu0 0
      %707 = vmatpush1.bf16.msra.mxu0 0
      %708 = vmatprep.subr.bf16.mxu0 0
      %709 = vmatpush1.bf16.msra.mxu0 0
      %710 = vmatprep.mubr.bf16.mxu0 0
      %711 = vmatmul.mubr.bf16.gmra.mrb[0].mxu0 %v672
      %v712 = vpop.f32.mrb[0].mxu0
      %v713 = vadd.f32 0.0, %v712
      %v714 = vpop.f32.mrb[0].mxu0
      %v715 = vpop.f32.mrb[0].mxu0
      %v716 = vpop.f32.mrb[0].mxu0
      %717 = vdwg.mxu0
      %s718 = scalar_lea.vmem %s1, 4
      %v719 = vld [vmem:[%s718] sm:$0xf]
      %721 = vrot.lane.b32.xlu0 %v603, 112
      %v722 = vpop.permute.xlu0 %721
      %723 = vrot.lane.b32.xlu0 %v604, 48
      %v724 = vpop.permute.xlu0 %723
      %v726 = vsel %vm610, %v722, 0
      %v729 = vsel %vm610, %v724, 0
      %731 = vmatprep.subr.bf16.mxu0 0
      %732 = vmatpush1.bf16.xpose.msra.mxu0 %v729
      %733 = vmatprep.subr.bf16.mxu0 0
      %734 = vmatpush1.bf16.xpose.msra.mxu0 0
      %735 = vmatprep.subr.bf16.mxu0 0
      %736 = vmatpush1.bf16.xpose.msra.mxu0 0
      %737 = vmatprep.subr.bf16.mxu0 0
      %738 = vmatpush1.bf16.xpose.msra.mxu0 0
      %739 = vmatprep.subr.bf16.mxu0 0
      %740 = vmatpush1.bf16.xpose.msra.mxu0 0
      %741 = vmatprep.subr.bf16.mxu0 0
      %742 = vmatpush1.bf16.xpose.msra.mxu0 0
      %743 = vmatprep.subr.bf16.mxu0 0
      %744 = vmatpush1.bf16.xpose.msra.mxu0 0
      %745 = vmatprep.subr.bf16.mxu0 0
      %746 = vmatpush1.bf16.xpose.msra.mxu0 0
      %747 = vmatprep.subr.bf16.mxu0 0
      %748 = vmatpush1.bf16.xpose.msra.mxu0 0
      %749 = vmatprep.subr.bf16.mxu0 0
      %750 = vmatpush1.bf16.xpose.msra.mxu0 0
      %751 = vmatprep.subr.bf16.mxu0 0
      %752 = vmatpush1.bf16.xpose.msra.mxu0 0
      %753 = vmatprep.subr.bf16.mxu0 0
      %754 = vmatpush1.bf16.xpose.msra.mxu0 0
      %755 = vmatprep.subr.bf16.mxu0 0
      %756 = vmatpush1.bf16.xpose.msra.mxu0 0
      %757 = vmatprep.subr.bf16.mxu0 0
      %758 = vmatpush1.bf16.xpose.msra.mxu0 0
      %759 = vmatprep.subr.bf16.mxu0 0
      %760 = vmatpush1.bf16.xpose.msra.mxu0 0
      %761 = vmatprep.subr.bf16.mxu0 0
      %762 = vmatpush1.bf16.xpose.msra.mxu0 0
      %763 = vmatprep.mubr.bf16.mxu0 0
      %764 = vmatmul.mubr.bf16.gmra.mrb[0].mxu0 %v726
      %v765 = vpop.f32.mrb[0].mxu0
      %v766 = vadd.f32 %v719, %v765
      %v767 = vpop.f32.mrb[0].mxu0
      %v768 = vpop.f32.mrb[0].mxu0
      %v769 = vpop.f32.mrb[0].mxu0
      %770 = vdwg.mxu0
      %v771 = vsel %vm657, %v766, -inf
      %772 = vmax.xlane.f32.xlu0 %v771
      %v773 = vpop.xlane.xlu0 %772
      %v774 = vsub.f32 %v766, %v773
      %v775 = vmul.f32 %v774, 1.442695
      %v776 = vpow.pop %v775
      %v777 = vsel %vm657, %v776, 0.0
      %778 = vadd.xlane.f32.xlu0 %v777
      %v779 = vpop.xlane.xlu0 %778
      %v780 = vrcp.pop %v779
      %v781 = vmul.f32 %v776, %v780
      %v782 = vpack.c.bf16 %v781, %v781
      %784 = vrot.lane.b32.xlu0 %v605, 112
      %v785 = vpop.permute.xlu0 %784
      %v787 = vsel %vm670, %v782, 0
      %v790 = vsel %vm674, %v785, 0
      %792 = vmatprep.subr.bf16.mxu0 0
      %793 = vmatpush1.bf16.msra.mxu0 %v790
      %794 = vmatprep.subr.bf16.mxu0 0
      %795 = vmatpush1.bf16.msra.mxu0 0
      %796 = vmatprep.subr.bf16.mxu0 0
      %797 = vmatpush1.bf16.msra.mxu0 0
      %798 = vmatprep.subr.bf16.mxu0 0
      %799 = vmatpush1.bf16.msra.mxu0 0
      %800 = vmatprep.subr.bf16.mxu0 0
      %801 = vmatpush1.bf16.msra.mxu0 0
      %802 = vmatprep.subr.bf16.mxu0 0
      %803 = vmatpush1.bf16.msra.mxu0 0
      %804 = vmatprep.subr.bf16.mxu0 0
      %805 = vmatpush1.bf16.msra.mxu0 0
      %806 = vmatprep.subr.bf16.mxu0 0
      %807 = vmatpush1.bf16.msra.mxu0 0
      %808 = vmatprep.subr.bf16.mxu0 0
      %809 = vmatpush1.bf16.msra.mxu0 0
      %810 = vmatprep.subr.bf16.mxu0 0
      %811 = vmatpush1.bf16.msra.mxu0 0
      %812 = vmatprep.subr.bf16.mxu0 0
      %813 = vmatpush1.bf16.msra.mxu0 0
      %814 = vmatprep.subr.bf16.mxu0 0
      %815 = vmatpush1.bf16.msra.mxu0 0
      %816 = vmatprep.subr.bf16.mxu0 0
      %817 = vmatpush1.bf16.msra.mxu0 0
      %818 = vmatprep.subr.bf16.mxu0 0
      %819 = vmatpush1.bf16.msra.mxu0 0
      %820 = vmatprep.subr.bf16.mxu0 0
      %821 = vmatpush1.bf16.msra.mxu0 0
      %822 = vmatprep.subr.bf16.mxu0 0
      %823 = vmatpush1.bf16.msra.mxu0 0
      %824 = vmatprep.mubr.bf16.mxu0 0
      %825 = vmatmul.mubr.bf16.gmra.mrb[0].mxu0 %v787
      %v826 = vpop.f32.mrb[0].mxu0
      %v827 = vadd.f32 0.0, %v826
      %v828 = vpop.f32.mrb[0].mxu0
      %v829 = vpop.f32.mrb[0].mxu0
      %v830 = vpop.f32.mrb[0].mxu0
      %831 = vdwg.mxu0
      %s832 = scalar_lea.vmem %s1, 8
      %v833 = vld [vmem:[%s832] sm:$0xf]
      %834 = vrot.lane.b32.xlu0 %v603, 96
      %v835 = vpop.permute.xlu0 %834
      %836 = vrot.lane.b32.xlu0 %v604, 32
      %v837 = vpop.permute.xlu0 %836
      %v839 = vsel %vm610, %v835, 0
      %v842 = vsel %vm610, %v837, 0
      %844 = vmatprep.subr.bf16.mxu0 0
      %845 = vmatpush1.bf16.xpose.msra.mxu0 %v842
      %846 = vmatprep.subr.bf16.mxu0 0
      %847 = vmatpush1.bf16.xpose.msra.mxu0 0
      %848 = vmatprep.subr.bf16.mxu0 0
      %849 = vmatpush1.bf16.xpose.msra.mxu0 0
      %850 = vmatprep.subr.bf16.mxu0 0
      %851 = vmatpush1.bf16.xpose.msra.mxu0 0
      %852 = vmatprep.subr.bf16.mxu0 0
      %853 = vmatpush1.bf16.xpose.msra.mxu0 0
      %854 = vmatprep.subr.bf16.mxu0 0
      %855 = vmatpush1.bf16.xpose.msra.mxu0 0
      %856 = vmatprep.subr.bf16.mxu0 0
      %857 = vmatpush1.bf16.xpose.msra.mxu0 0
      %858 = vmatprep.subr.bf16.mxu0 0
      %859 = vmatpush1.bf16.xpose.msra.mxu0 0
      %860 = vmatprep.subr.bf16.mxu0 0
      %861 = vmatpush1.bf16.xpose.msra.mxu0 0
      %862 = vmatprep.subr.bf16.mxu0 0
      %863 = vmatpush1.bf16.xpose.msra.mxu0 0
      %864 = vmatprep.subr.bf16.mxu0 0
      %865 = vmatpush1.bf16.xpose.msra.mxu0 0
      %866 = vmatprep.subr.bf16.mxu0 0
      %867 = vmatpush1.bf16.xpose.msra.mxu0 0
      %868 = vmatprep.subr.bf16.mxu0 0
      %869 = vmatpush1.bf16.xpose.msra.mxu0 0
      %870 = vmatprep.subr.bf16.mxu0 0
      %871 = vmatpush1.bf16.xpose.msra.mxu0 0
      %872 = vmatprep.subr.bf16.mxu0 0
      %873 = vmatpush1.bf16.xpose.msra.mxu0 0
      %874 = vmatprep.subr.bf16.mxu0 0
      %875 = vmatpush1.bf16.xpose.msra.mxu0 0
      %876 = vmatprep.mubr.bf16.mxu0 0
      %877 = vmatmul.mubr.bf16.gmra.mrb[0].mxu0 %v839
      %v878 = vpop.f32.mrb[0].mxu0
      %v879 = vadd.f32 %v833, %v878
      %v880 = vpop.f32.mrb[0].mxu0
      %v881 = vpop.f32.mrb[0].mxu0
      %v882 = vpop.f32.mrb[0].mxu0
      %883 = vdwg.mxu0
      %v884 = vsel %vm657, %v879, -inf
      %885 = vmax.xlane.f32.xlu0 %v884
      %v886 = vpop.xlane.xlu0 %885
      %v887 = vsub.f32 %v879, %v886
      %v888 = vmul.f32 %v887, 1.442695
      %v889 = vpow.pop %v888
      %v890 = vsel %vm657, %v889, 0.0
      %891 = vadd.xlane.f32.xlu0 %v890
      %v892 = vpop.xlane.xlu0 %891
      %v893 = vrcp.pop %v892
      %v894 = vmul.f32 %v889, %v893
      %v895 = vpack.c.bf16 %v894, %v894
      %896 = vrot.lane.b32.xlu0 %v605, 96
      %v897 = vpop.permute.xlu0 %896
      %v899 = vsel %vm670, %v895, 0
      %v902 = vsel %vm674, %v897, 0
      %904 = vmatprep.subr.bf16.mxu0 0
      %905 = vmatpush1.bf16.msra.mxu0 %v902
      %906 = vmatprep.subr.bf16.mxu0 0
      %907 = vmatpush1.bf16.msra.mxu0 0
      %908 = vmatprep.subr.bf16.mxu0 0
      %909 = vmatpush1.bf16.msra.mxu0 0
      %910 = vmatprep.subr.bf16.mxu0 0
      %911 = vmatpush1.bf16.msra.mxu0 0
      %912 = vmatprep.subr.bf16.mxu0 0
      %913 = vmatpush1.bf16.msra.mxu0 0
      %914 = vmatprep.subr.bf16.mxu0 0
      %915 = vmatpush1.bf16.msra.mxu0 0
      %916 = vmatprep.subr.bf16.mxu0 0
      %917 = vmatpush1.bf16.msra.mxu0 0
      %918 = vmatprep.subr.bf16.mxu0 0
      %919 = vmatpush1.bf16.msra.mxu0 0
      %920 = vmatprep.subr.bf16.mxu0 0
      %921 = vmatpush1.bf16.msra.mxu0 0
      %922 = vmatprep.subr.bf16.mxu0 0
      %923 = vmatpush1.bf16.msra.mxu0 0
      %924 = vmatprep.subr.bf16.mxu0 0
      %925 = vmatpush1.bf16.msra.mxu0 0
      %926 = vmatprep.subr.bf16.mxu0 0
      %927 = vmatpush1.bf16.msra.mxu0 0
      %928 = vmatprep.subr.bf16.mxu0 0
      %929 = vmatpush1.bf16.msra.mxu0 0
      %930 = vmatprep.subr.bf16.mxu0 0
      %931 = vmatpush1.bf16.msra.mxu0 0
      %932 = vmatprep.subr.bf16.mxu0 0
      %933 = vmatpush1.bf16.msra.mxu0 0
      %934 = vmatprep.subr.bf16.mxu0 0
      %935 = vmatpush1.bf16.msra.mxu0 0
      %936 = vmatprep.mubr.bf16.mxu0 0
      %937 = vmatmul.mubr.bf16.gmra.mrb[0].mxu0 %v899
      %v938 = vpop.f32.mrb[0].mxu0
      %v939 = vadd.f32 0.0, %v938
      %v940 = vpop.f32.mrb[0].mxu0
      %v941 = vpop.f32.mrb[0].mxu0
      %v942 = vpop.f32.mrb[0].mxu0
      %943 = vdwg.mxu0
      %s944 = scalar_lea.vmem %s1, 12
      %v945 = vld [vmem:[%s944] sm:$0xf]
      %946 = vrot.lane.b32.xlu0 %v603, 80
      %v947 = vpop.permute.xlu0 %946
      %948 = vrot.lane.b32.xlu0 %v604, 16
      %v949 = vpop.permute.xlu0 %948
      %v951 = vsel %vm610, %v947, 0
      %v954 = vsel %vm610, %v949, 0
      %956 = vmatprep.subr.bf16.mxu0 0
      %957 = vmatpush1.bf16.xpose.msra.mxu0 %v954
      %958 = vmatprep.subr.bf16.mxu0 0
      %959 = vmatpush1.bf16.xpose.msra.mxu0 0
      %960 = vmatprep.subr.bf16.mxu0 0
      %961 = vmatpush1.bf16.xpose.msra.mxu0 0
      %962 = vmatprep.subr.bf16.mxu0 0
      %963 = vmatpush1.bf16.xpose.msra.mxu0 0
      %964 = vmatprep.subr.bf16.mxu0 0
      %965 = vmatpush1.bf16.xpose.msra.mxu0 0
      %966 = vmatprep.subr.bf16.mxu0 0
      %967 = vmatpush1.bf16.xpose.msra.mxu0 0
      %968 = vmatprep.subr.bf16.mxu0 0
      %969 = vmatpush1.bf16.xpose.msra.mxu0 0
      %970 = vmatprep.subr.bf16.mxu0 0
      %971 = vmatpush1.bf16.xpose.msra.mxu0 0
      %972 = vmatprep.subr.bf16.mxu0 0
      %973 = vmatpush1.bf16.xpose.msra.mxu0 0
      %974 = vmatprep.subr.bf16.mxu0 0
      %975 = vmatpush1.bf16.xpose.msra.mxu0 0
      %976 = vmatprep.subr.bf16.mxu0 0
      %977 = vmatpush1.bf16.xpose.msra.mxu0 0
      %978 = vmatprep.subr.bf16.mxu0 0
      %979 = vmatpush1.bf16.xpose.msra.mxu0 0
      %980 = vmatprep.subr.bf16.mxu0 0
      %981 = vmatpush1.bf16.xpose.msra.mxu0 0
      %982 = vmatprep.subr.bf16.mxu0 0
      %983 = vmatpush1.bf16.xpose.msra.mxu0 0
      %984 = vmatprep.subr.bf16.mxu0 0
      %985 = vmatpush1.bf16.xpose.msra.mxu0 0
      %986 = vmatprep.subr.bf16.mxu0 0
      %987 = vmatpush1.bf16.xpose.msra.mxu0 0
      %988 = vmatprep.mubr.bf16.mxu0 0
      %989 = vmatmul.mubr.bf16.gmra.mrb[0].mxu0 %v951
      %v990 = vpop.f32.mrb[0].mxu0
      %v991 = vadd.f32 %v945, %v990
      %v992 = vpop.f32.mrb[0].mxu0
      %v993 = vpop.f32.mrb[0].mxu0
      %v994 = vpop.f32.mrb[0].mxu0
      %995 = vdwg.mxu0
      %v996 = vsel %vm657, %v991, -inf
      %997 = vmax.xlane.f32.xlu0 %v996
      %v998 = vpop.xlane.xlu0 %997
      %v999 = vsub.f32 %v991, %v998
      %v1000 = vmul.f32 %v999, 1.442695
      %v1001 = vpow.pop %v1000
      %v1002 = vsel %vm657, %v1001, 0.0
      %1003 = vadd.xlane.f32.xlu0 %v1002
      %v1004 = vpop.xlane.xlu0 %1003
      %v1005 = vrcp.pop %v1004
      %v1006 = vmul.f32 %v1001, %v1005
      %v1007 = vpack.c.bf16 %v1006, %v1006
      %1008 = vrot.lane.b32.xlu0 %v605, 80
      %v1009 = vpop.permute.xlu0 %1008
      %v1011 = vsel %vm670, %v1007, 0
      %v1014 = vsel %vm674, %v1009, 0
      %1016 = vmatprep.subr.bf16.mxu0 0
      %1017 = vmatpush1.bf16.msra.mxu0 %v1014
      %1018 = vmatprep.subr.bf16.mxu0 0
      %1019 = vmatpush1.bf16.msra.mxu0 0
      %1020 = vmatprep.subr.bf16.mxu0 0
      %1021 = vmatpush1.bf16.msra.mxu0 0
      %1022 = vmatprep.subr.bf16.mxu0 0
      %1023 = vmatpush1.bf16.msra.mxu0 0
      %1024 = vmatprep.subr.bf16.mxu0 0
      %1025 = vmatpush1.bf16.msra.mxu0 0
      %1026 = vmatprep.subr.bf16.mxu0 0
      %1027 = vmatpush1.bf16.msra.mxu0 0
      %1028 = vmatprep.subr.bf16.mxu0 0
      %1029 = vmatpush1.bf16.msra.mxu0 0
      %1030 = vmatprep.subr.bf16.mxu0 0
      %1031 = vmatpush1.bf16.msra.mxu0 0
      %1032 = vmatprep.subr.bf16.mxu0 0
      %1033 = vmatpush1.bf16.msra.mxu0 0
      %1034 = vmatprep.subr.bf16.mxu0 0
      %1035 = vmatpush1.bf16.msra.mxu0 0
      %1036 = vmatprep.subr.bf16.mxu0 0
      %1037 = vmatpush1.bf16.msra.mxu0 0
      %1038 = vmatprep.subr.bf16.mxu0 0
      %1039 = vmatpush1.bf16.msra.mxu0 0
      %1040 = vmatprep.subr.bf16.mxu0 0
      %1041 = vmatpush1.bf16.msra.mxu0 0
      %1042 = vmatprep.subr.bf16.mxu0 0
      %1043 = vmatpush1.bf16.msra.mxu0 0
      %1044 = vmatprep.subr.bf16.mxu0 0
      %1045 = vmatpush1.bf16.msra.mxu0 0
      %1046 = vmatprep.subr.bf16.mxu0 0
      %1047 = vmatpush1.bf16.msra.mxu0 0
      %1048 = vmatprep.mubr.bf16.mxu0 0
      %1049 = vmatmul.mubr.bf16.gmra.mrb[0].mxu0 %v1011
      %v1050 = vpop.f32.mrb[0].mxu0
      %v1051 = vadd.f32 0.0, %v1050
      %v1052 = vpop.f32.mrb[0].mxu0
      %v1053 = vpop.f32.mrb[0].mxu0
      %v1054 = vpop.f32.mrb[0].mxu0
      %1055 = vdwg.mxu0
      %1057 = vrot.lane.b32.xlu0 %v827, 16
      %v1058 = vpop.permute.xlu0 %1057
      %1061 = vrot.lane.b32.xlu0 %v939, 32
      %v1062 = vpop.permute.xlu0 %1061
      %1065 = vrot.lane.b32.xlu0 %v1051, 48
      %v1066 = vpop.permute.xlu0 %1065
      %v1068 = vsel %vm610, %v713, %v1058
      %vm1069 = vcmask 261120
      %v1070 = vsel %vm1069, %v1068, %v1062
      %vm1071 = vcmask 392192
      %v1072 = vsel %vm1071, %v1070, %v1066
      %v1073 = vpack.c.bf16 %v1072, %v1072
      %v1074 = vld [vmem:[%s6] sm:$0xf]
      %v1075 = vld [vmem:[%s6 + $0x4] sm:$0xf]
      %v1076 = vld [vmem:[%s6 + $0x8] sm:$0xf]
      %v1077 = vld [vmem:[%s6 + $0xc] sm:$0xf]
      %v1078 = vld [vmem:[%s6 + $0x10] sm:$0xf]
      %v1079 = vld [vmem:[%s6 + $0x14] sm:$0xf]
      %v1080 = vld [vmem:[%s6 + $0x18] sm:$0xf]
      %v1081 = vld [vmem:[%s6 + $0x1c] sm:$0xf]
      %v1082 = vld [vmem:[%s7] sm:$0x1]
      %v1084 = vlaneseq
      %v1085 = vshrl.u32 %v1084, 7
      %v1086 = vsub.s32 0, %v1085
      %v1087 = vrot.slane %v1082, %v1086
      %v1097 = vunpack.c.l.b16 %v1074
      %v1098 = vunpack.c.l.b16 %v1075
      %v1099 = vunpack.c.l.b16 %v1076
      %v1100 = vunpack.c.l.b16 %v1077
      %v1101 = vunpack.c.l.b16 %v1078
      %v1102 = vunpack.c.l.b16 %v1079
      %v1103 = vunpack.c.l.b16 %v1080
      %v1104 = vunpack.c.l.b16 %v1081
      %v1105 = vpack.c.b16 %v1098, %v1097
      %v1106 = vpack.c.b16 %v1100, %v1099
      %v1107 = vpack.c.b16 %v1102, %v1101
      %v1108 = vpack.c.b16 %v1104, %v1103
      %v1114 = vsel %vm557, %v1073, 0
      %1116 = vmatprep.subr.bf16.mxu0 0
      %1117 = vmatpush1.bf16.msra.mxu0 %v1105
      %1118 = vmatprep.subr.bf16.mxu0 0
      %1119 = vmatpush1.bf16.msra.mxu0 %v1106
      %1120 = vmatprep.subr.bf16.mxu0 0
      %1121 = vmatpush1.bf16.msra.mxu0 %v1107
      %1122 = vmatprep.subr.bf16.mxu0 0
      %1123 = vmatpush1.bf16.msra.mxu0 %v1108
      %1124 = vmatprep.subr.bf16.mxu0 0
      %1125 = vmatpush1.bf16.msra.mxu0 0
      %1126 = vmatprep.subr.bf16.mxu0 0
      %1127 = vmatpush1.bf16.msra.mxu0 0
      %1128 = vmatprep.subr.bf16.mxu0 0
      %1129 = vmatpush1.bf16.msra.mxu0 0
      %1130 = vmatprep.subr.bf16.mxu0 0
      %1131 = vmatpush1.bf16.msra.mxu0 0
      %1132 = vmatprep.subr.bf16.mxu0 0
      %1133 = vmatpush1.bf16.msra.mxu0 0
      %1134 = vmatprep.subr.bf16.mxu0 0
      %1135 = vmatpush1.bf16.msra.mxu0 0
      %1136 = vmatprep.subr.bf16.mxu0 0
      %1137 = vmatpush1.bf16.msra.mxu0 0
      %1138 = vmatprep.subr.bf16.mxu0 0
      %1139 = vmatpush1.bf16.msra.mxu0 0
      %1140 = vmatprep.subr.bf16.mxu0 0
      %1141 = vmatpush1.bf16.msra.mxu0 0
      %1142 = vmatprep.subr.bf16.mxu0 0
      %1143 = vmatpush1.bf16.msra.mxu0 0
      %1144 = vmatprep.subr.bf16.mxu0 0
      %1145 = vmatpush1.bf16.msra.mxu0 0
      %1146 = vmatprep.subr.bf16.mxu0 0
      %1147 = vmatpush1.bf16.msra.mxu0 0
      %1148 = vmatprep.mubr.bf16.mxu0 0
      %1149 = vmatmul.mubr.bf16.gmra.mrb[0].mxu0 %v1114
      %v1150 = vpop.f32.mrb[0].mxu0
      %v1151 = vadd.f32 %v1087, %v1150
      %v1152 = vpop.f32.mrb[0].mxu0
      %v1153 = vpop.f32.mrb[0].mxu0
      %v1154 = vpop.f32.mrb[0].mxu0
      %1155 = vdwg.mxu0
      %v1156 = vadd.f32 %v464, %v1151
      %v1157 = vld [vmem:[%s8] sm:$0x1]
      %v1158 = vld [vmem:[%s9] sm:$0x1]
      %v1159 = vsel %vm467, %v1156, 0.0
      %1160 = vadd.xlane.f32.xlu0 %v1159
      %v1161 = vpop.xlane.xlu0 %1160
      %v1162 = vmul.f32 %v1161, %v471
      %v1163 = vsub.f32 %v1156, %v1162
      %v1164 = vmul.f32 %v1163, %v1163
      %v1165 = vsel %vm467, %v1164, 0.0
      %1166 = vadd.xlane.f32.xlu0 %v1165
      %v1167 = vpop.xlane.xlu0 %1166
      %v1168 = vmul.f32 %v1167, %v471
      %v1169 = vadd.f32 %v1168, 1e-05
      %v1170 = vrsqrt.pop %v1169
      %v1171 = vmul.f32 %v1163, %v1170
      %v1173 = vlaneseq
      %v1174 = vshrl.u32 %v1173, 7
      %v1175 = vsub.s32 0, %v1174
      %v1176 = vrot.slane %v1157, %v1175
      %v1178 = vmul.f32 %v1171, %v1176
      %v1180 = vlaneseq
      %v1181 = vshrl.u32 %v1180, 7
      %v1182 = vsub.s32 0, %v1181
      %v1183 = vrot.slane %v1158, %v1182
      %v1185 = vadd.f32 %v1178, %v1183
      %v1186 = vpack.c.bf16 %v1185, %v1185
      %v1187 = vld [vmem:[%s10] sm:$0xf]
      %v1188 = vld [vmem:[%s10 + $0x4] sm:$0xf]
      %v1189 = vld [vmem:[%s10 + $0x8] sm:$0xf]
      %v1190 = vld [vmem:[%s10 + $0xc] sm:$0xf]
      %v1191 = vld [vmem:[%s10 + $0x10] sm:$0xf]
      %v1192 = vld [vmem:[%s10 + $0x14] sm:$0xf]
      %v1193 = vld [vmem:[%s10 + $0x18] sm:$0xf]
      %v1194 = vld [vmem:[%s10 + $0x1c] sm:$0xf]
      %v1195 = vld [vmem:[%s11] sm:$0x1]
      %v1197 = vlaneseq
      %v1198 = vshrl.u32 %v1197, 7
      %v1199 = vsub.s32 0, %v1198
      %v1200 = vrot.slane %v1195, %v1199
      %v1210 = vunpack.c.l.b16 %v1187
      %v1211 = vunpack.c.l.b16 %v1188
      %v1212 = vunpack.c.l.b16 %v1189
      %v1213 = vunpack.c.l.b16 %v1190
      %v1214 = vunpack.c.l.b16 %v1191
      %v1215 = vunpack.c.l.b16 %v1192
      %v1216 = vunpack.c.l.b16 %v1193
      %v1217 = vunpack.c.l.b16 %v1194
      %v1218 = vpack.c.b16 %v1211, %v1210
      %v1219 = vpack.c.b16 %v1213, %v1212
      %v1220 = vpack.c.b16 %v1215, %v1214
      %v1221 = vpack.c.b16 %v1217, %v1216
      %v1227 = vsel %vm557, %v1186, 0
      %1229 = vmatprep.subr.bf16.mxu0 0
      %1230 = vmatpush1.bf16.msra.mxu0 %v1218
      %1231 = vmatprep.subr.bf16.mxu0 0
      %1232 = vmatpush1.bf16.msra.mxu0 %v1219
      %1233 = vmatprep.subr.bf16.mxu0 0
      %1234 = vmatpush1.bf16.msra.mxu0 %v1220
      %1235 = vmatprep.subr.bf16.mxu0 0
      %1236 = vmatpush1.bf16.msra.mxu0 %v1221
      %1237 = vmatprep.subr.bf16.mxu0 0
      %1238 = vmatpush1.bf16.msra.mxu0 0
      %1239 = vmatprep.subr.bf16.mxu0 0
      %1240 = vmatpush1.bf16.msra.mxu0 0
      %1241 = vmatprep.subr.bf16.mxu0 0
      %1242 = vmatpush1.bf16.msra.mxu0 0
      %1243 = vmatprep.subr.bf16.mxu0 0
      %1244 = vmatpush1.bf16.msra.mxu0 0
      %1245 = vmatprep.subr.bf16.mxu0 0
      %1246 = vmatpush1.bf16.msra.mxu0 0
      %1247 = vmatprep.subr.bf16.mxu0 0
      %1248 = vmatpush1.bf16.msra.mxu0 0
      %1249 = vmatprep.subr.bf16.mxu0 0
      %1250 = vmatpush1.bf16.msra.mxu0 0
      %1251 = vmatprep.subr.bf16.mxu0 0
      %1252 = vmatpush1.bf16.msra.mxu0 0
      %1253 = vmatprep.subr.bf16.mxu0 0
      %1254 = vmatpush1.bf16.msra.mxu0 0
      %1255 = vmatprep.subr.bf16.mxu0 0
      %1256 = vmatpush1.bf16.msra.mxu0 0
      %1257 = vmatprep.subr.bf16.mxu0 0
      %1258 = vmatpush1.bf16.msra.mxu0 0
      %1259 = vmatprep.subr.bf16.mxu0 0
      %1260 = vmatpush1.bf16.msra.mxu0 0
      %1261 = vmatprep.mubr.bf16.mxu0 0
      %1262 = vmatmul.mubr.bf16.gmra.mrb[0].mxu0 %v1227
      %v1263 = vpop.f32.mrb[0].mxu0
      %v1264 = vadd.f32 %v1200, %v1263
      %v1265 = vpop.f32.mrb[0].mxu0
      %v1266 = vpop.f32.mrb[0].mxu0
      %v1267 = vpop.f32.mrb[0].mxu0
      %1268 = vdwg.mxu0
      %v1269 = vmul.f32 %v1264, %v1264
      %v1270 = vmul.f32 %v1264, %v1269
      %v1271 = vmul.f32 %v1270, 0.044715
      %v1272 = vadd.f32 %v1264, %v1271
      %v1273 = vmul.f32 %v1272, 0.7978846
      %v1274 = vtanh.pop %v1273
      %v1275 = vadd.f32 %v1274, 1.0
      %v1276 = vmul.f32 %v1275, 0.5
      %v1277 = vmul.f32 %v1264, %v1276
      %v1278 = vpack.c.bf16 %v1277, %v1277
      %v1279 = vld [vmem:[%s12] sm:$0xf]
      %v1280 = vld [vmem:[%s12 + $0x4] sm:$0xf]
      %v1281 = vld [vmem:[%s12 + $0x8] sm:$0xf]
      %v1282 = vld [vmem:[%s12 + $0xc] sm:$0xf]
      %v1283 = vld [vmem:[%s12 + $0x10] sm:$0xf]
      %v1284 = vld [vmem:[%s12 + $0x14] sm:$0xf]
      %v1285 = vld [vmem:[%s12 + $0x18] sm:$0xf]
      %v1286 = vld [vmem:[%s12 + $0x1c] sm:$0xf]
      %v1287 = vld [vmem:[%s12 + $0x20] sm:$0xf]
      %v1288 = vld [vmem:[%s12 + $0x24] sm:$0xf]
      %v1289 = vld [vmem:[%s12 + $0x28] sm:$0xf]
      %v1290 = vld [vmem:[%s12 + $0x2c] sm:$0xf]
      %v1291 = vld [vmem:[%s12 + $0x30] sm:$0xf]
      %v1292 = vld [vmem:[%s12 + $0x34] sm:$0xf]
      %v1293 = vld [vmem:[%s12 + $0x38] sm:$0xf]
      %v1294 = vld [vmem:[%s12 + $0x3c] sm:$0xf]
      %v1295 = vld [vmem:[%s13] sm:$0x1]
      %v1297 = vlaneseq
      %v1298 = vshrl.u32 %v1297, 7
      %v1299 = vsub.s32 0, %v1298
      %v1300 = vrot.slane %v1295, %v1299
      %v1318 = vunpack.c.l.b16 %v1279
      %v1319 = vunpack.c.l.b16 %v1280
      %v1320 = vunpack.c.l.b16 %v1281
      %v1321 = vunpack.c.l.b16 %v1282
      %v1322 = vunpack.c.l.b16 %v1283
      %v1323 = vunpack.c.l.b16 %v1284
      %v1324 = vunpack.c.l.b16 %v1285
      %v1325 = vunpack.c.l.b16 %v1286
      %v1326 = vunpack.c.l.b16 %v1287
      %v1327 = vunpack.c.l.b16 %v1288
      %v1328 = vunpack.c.l.b16 %v1289
      %v1329 = vunpack.c.l.b16 %v1290
      %v1330 = vunpack.c.l.b16 %v1291
      %v1331 = vunpack.c.l.b16 %v1292
      %v1332 = vunpack.c.l.b16 %v1293
      %v1333 = vunpack.c.l.b16 %v1294
      %v1334 = vpack.c.b16 %v1319, %v1318
      %v1335 = vpack.c.b16 %v1321, %v1320
      %v1336 = vpack.c.b16 %v1323, %v1322
      %v1337 = vpack.c.b16 %v1325, %v1324
      %v1338 = vpack.c.b16 %v1327, %v1326
      %v1339 = vpack.c.b16 %v1329, %v1328
      %v1340 = vpack.c.b16 %v1331, %v1330
      %v1341 = vpack.c.b16 %v1333, %v1332
      %1350 = vmatprep.subr.bf16.mxu0 0
      %1351 = vmatpush1.bf16.msra.mxu0 %v1334
      %1352 = vmatprep.subr.bf16.mxu0 0
      %1353 = vmatpush1.bf16.msra.mxu0 %v1335
      %1354 = vmatprep.subr.bf16.mxu0 0
      %1355 = vmatpush1.bf16.msra.mxu0 %v1336
      %1356 = vmatprep.subr.bf16.mxu0 0
      %1357 = vmatpush1.bf16.msra.mxu0 %v1337
      %1358 = vmatprep.subr.bf16.mxu0 0
      %1359 = vmatpush1.bf16.msra.mxu0 %v1338
      %1360 = vmatprep.subr.bf16.mxu0 0
      %1361 = vmatpush1.bf16.msra.mxu0 %v1339
      %1362 = vmatprep.subr.bf16.mxu0 0
      %1363 = vmatpush1.bf16.msra.mxu0 %v1340
      %1364 = vmatprep.subr.bf16.mxu0 0
      %1365 = vmatpush1.bf16.msra.mxu0 %v1341
      %1366 = vmatprep.subr.bf16.mxu0 0
      %1367 = vmatpush1.bf16.msra.mxu0 0
      %1368 = vmatprep.subr.bf16.mxu0 0
      %1369 = vmatpush1.bf16.msra.mxu0 0
      %1370 = vmatprep.subr.bf16.mxu0 0
      %1371 = vmatpush1.bf16.msra.mxu0 0
      %1372 = vmatprep.subr.bf16.mxu0 0
      %1373 = vmatpush1.bf16.msra.mxu0 0
      %1374 = vmatprep.subr.bf16.mxu0 0
      %1375 = vmatpush1.bf16.msra.mxu0 0
      %1376 = vmatprep.subr.bf16.mxu0 0
      %1377 = vmatpush1.bf16.msra.mxu0 0
      %1378 = vmatprep.subr.bf16.mxu0 0
      %1379 = vmatpush1.bf16.msra.mxu0 0
      %1380 = vmatprep.subr.bf16.mxu0 0
      %1381 = vmatpush1.bf16.msra.mxu0 0
      %1382 = vmatprep.mubr.bf16.mxu0 0
      %1383 = vmatmul.mubr.bf16.gmra.mrb[0].mxu0 %v1278
      %v1384 = vpop.f32.mrb[0].mxu0
      %v1385 = vadd.f32 %v1300, %v1384
      %v1386 = vpop.f32.mrb[0].mxu0
      %v1387 = vpop.f32.mrb[0].mxu0
      %v1388 = vpop.f32.mrb[0].mxu0
      %1389 = vdwg.mxu0
      %v1390 = vadd.f32 %v1156, %v1385
      %1391 = vst.msk [vmem:[%s462] sm:$0xf] %vm467, %v1390
      %p1392 = scmp.lt.s32.totalorder %s25, 1
      %s1393 = scalar_select %p1392, %s25, 1
      %s1394 = smul.addr %s1393, 4
      %s1395 = scalar_lea.vmem %s14, %s1394
      // Predicated region
      $region77: #{pure_rmt_forward.12} parent=75 // pred_check
        %p1396 = pneg %p342
      $region78: #{pure_rmt_forward.12} parent=75 // pred_check_branch
        %1398 = sbr.rel (%p1396) target = $region80
      $region79: #{pure_rmt_forward.12} parent=75 // pred_region
        _
      $region80: #{pure_rmt_forward.12} parent=75 // pred_fallthru
        _
    $region76: #{pure_rmt_forward.12} parent=5 // pred_fallthru
      _
    %p1399 = scmp.le.s32.totalorder 2, %s20
    // Predicated region
    $region81: #{pure_rmt_forward.12} parent=5 // pred_check
      %p1400 = pneg %p1399
    $region82: #{pure_rmt_forward.12} parent=5 // pred_check_branch
      %1402 = sbr.rel (%p1400) target = $region84
    $region83: #{pure_rmt_forward.12} parent=5 // pred_region
      %s1403 = ssub.s32 %s20, 2
      // Predicated region
      $region85: #{pure_rmt_forward.12} parent=83 // pred_check
        %p1404 = pneg %p348
      $region86: #{pure_rmt_forward.12} parent=83 // pred_check_branch
        %1406 = sbr.rel (%p1404) target = $region88
      $region87: #{pure_rmt_forward.12} parent=83 // pred_region
        %p1407 = scmp.lt.s32.totalorder %s26, 1
        %s1408 = scalar_select %p1407, %s26, 1
        %s1409 = smul.addr %s1408, 4
        %s1410 = scalar_lea.vmem %s14, %s1409
      $region88: #{pure_rmt_forward.12} parent=83 // pred_fallthru
        _
    $region84: #{pure_rmt_forward.12} parent=5 // pred_fallthru
      _
  $region6: #{pure_rmt_forward.12} parent=0 // loop_footer
    %s24 = sadd.s32 1, %s20
  $region7: #{pure_rmt_forward.12} parent=0 // loop_footer_branch
    %19 = sbr.rel target = $region3
  $region8: #{pure_rmt_forward.12} parent=0 // loop_exit
    _

</llo_original>
